<compile_context>
chip_gen: v7x
topology: tpu7x:2x2x1
jax: 0.10.0
libtpu: 0.0.40
codegen_flags: <defaults>
</compile_context>

<pallas_src>
import jax
import jax.numpy as jnp
from jax import lax
from jax.experimental import pallas as pl
from jax.experimental.pallas import tpu as pltpu


# ----------------------------- Pallas kernel --------------------------------
def cnn_generator_kernel(z_ref, w1_ref, b1_ref, w2_ref, b2_ref, w3_ref, b3_ref,
                         wlm_ref, blm_ref, logits_ref, hidden_ref, h3_scratch):
    n = pl.program_id(1)                      # vocab tile index (innermost axis)
    Bt, S, D = z_ref.shape
    M = Bt * S

    # Row index within the flattened (B_TILE*S) axis; used to zero the rows that
    # pltpu.roll wrapped across a sequence boundary (the conv's zero padding).
    row = lax.broadcasted_iota(jnp.int32, (M, 1), 0)
    first_row = (row % S) == 0
    last_row = (row % S) == (S - 1)

    def conv3(x, wf_ref, b_ref):
        # x: (M, Din) f32; wf_ref: (3*Din, Dout) bf16; b_ref: (1, Dout) f32.
        x_prev = jnp.where(first_row, 0.0, pltpu.roll(x, shift=1, axis=0))
        x_next = jnp.where(last_row, 0.0, pltpu.roll(x, shift=M - 1, axis=0))
        x_cat = jnp.concatenate([x_prev, x, x_next], axis=-1).astype(jnp.bfloat16)
        y = jnp.dot(x_cat, wf_ref[...], preferred_element_type=jnp.float32)
        return y + b_ref[...]                 # bias add in f32

    # The conv stack depends only on the batch block -> compute it once (on the
    # first vocab tile) and cache tanh(conv3) in VMEM scratch for the other tiles.
    @pl.when(n == 0)
    def _():
        x = z_ref[...].reshape(M, D)                              # f32
        h1 = jnp.maximum(conv3(x, w1_ref, b1_ref), 0.0)           # (M, C1p)
        h2 = jnp.maximum(conv3(h1, w2_ref, b2_ref), 0.0)          # (M, C2p)
        h3 = jnp.tanh(conv3(h2, w3_ref, b3_ref))                  # (M, H)
        h3_scratch[...] = h3
        hidden_ref[...] = h3.reshape(Bt, S, -1).astype(hidden_ref.dtype)

    h3 = h3_scratch[...]
    logits = (jnp.dot(h3.astype(jnp.bfloat16), wlm_ref[...],
                      preferred_element_type=jnp.float32) + blm_ref[...])
    logits_ref[...] = logits.reshape(Bt, S, -1).astype(logits_ref.dtype)


# ------------------------------ wrapper --------------------------------------
def _round_up(x, m):
    return (x + m - 1) // m * m


def _pad_to(a, axis, size):
    pad = size - a.shape[axis]
    if pad == 0:
        return a
    widths = [(0, 0)] * a.ndim
    widths[axis] = (0, pad)
    return jnp.pad(a, widths)


def _largest_divisor_leq(n, cap):
    for d in range(min(n, cap), 0, -1):
        if n % d == 0:
            return d
    return 1


def cnn_generator_forward(z, params, *, b_tile=32, lm_tile_n=512):
    """z: (B, S, inputdim) f32.  params = (w1, b1, w2, b2, w3, b3, wlm, blm) with
    conv weights stored as (3, Din, Dout) (W[k] == pytorch_weight[:, 0, k, :].T)
    and biases (1, Dout).  Returns (lm_logits (B,S,V) f32, hidden (B,S,768) f32)."""
    B, S, D = z.shape
    w1, b1, w2, b2, w3, b3, wlm, blm = params
    C1, C2, H = w1.shape[2], w2.shape[2], w3.shape[2]
    V = wlm.shape[1]

    # ---- one-time parameter prep: fuse taps, pad to 128 lanes, cast to bf16 ----
    C1p, C2p = _round_up(C1, 128), _round_up(C2, 128)
    Vp = _round_up(V, 128)
    if Vp <= lm_tile_n:
        tn = Vp
    else:
        Vp = _round_up(V, lm_tile_n)
        tn = lm_tile_n
    nv = Vp // tn

    w1f = _pad_to(w1, 2, C1p).reshape(3 * D, C1p).astype(jnp.bfloat16)
    b1p = _pad_to(b1, 1, C1p)
    w2f = _pad_to(_pad_to(w2, 1, C1p), 2, C2p).reshape(3 * C1p, C2p).astype(jnp.bfloat16)
    b2p = _pad_to(b2, 1, C2p)
    w3f = _pad_to(w3, 1, C2p).reshape(3 * C2p, H).astype(jnp.bfloat16)
    b3p = b3
    wlmp = _pad_to(wlm, 1, Vp).astype(jnp.bfloat16)
    blmp = _pad_to(blm, 1, Vp)

    bt = _largest_divisor_leq(B, b_tile)      # sequences per grid step
    nb = B // bt
    m = bt * S                                # matmul M dimension

    const = lambda shape: pl.BlockSpec(shape, lambda b, n: (0,) * len(shape))

    grid_spec = pltpu.PrefetchScalarGridSpec(
        num_scalar_prefetch=0,
        grid=(nb, nv),                                            # batch blocks x vocab tiles
        in_specs=[
            pl.BlockSpec((bt, S, D), lambda b, n: (b, 0, 0)),     # z
            const(w1f.shape), const(b1p.shape),                   # conv1 (fused taps)
            const(w2f.shape), const(b2p.shape),                   # conv2 (fused taps)
            const(w3f.shape), const(b3p.shape),                   # conv3 (fused taps)
            pl.BlockSpec((H, tn), lambda b, n: (0, n)),           # lm_head weight tile
            pl.BlockSpec((1, tn), lambda b, n: (0, n)),           # lm_head bias tile
        ],
        out_specs=[
            pl.BlockSpec((bt, S, tn), lambda b, n: (b, 0, n)),    # lm_logits (padded V)
            pl.BlockSpec((bt, S, H), lambda b, n: (b, 0, 0)),     # hidden_units
        ],
        scratch_shapes=[pltpu.VMEM((m, H), jnp.float32)],         # cached tanh(conv3)
    )

    logits_pad, hidden = pl.pallas_call(
        cnn_generator_kernel,
        out_shape=(
            jax.ShapeDtypeStruct((B, S, Vp), jnp.float32),
            jax.ShapeDtypeStruct((B, S, H), jnp.float32),
        ),
        grid_spec=grid_spec,
        compiler_params=pltpu.CompilerParams(
            # Batch blocks are independent (megacore-parallel); the vocab axis
            # reuses the h3 scratch and the resident hidden block -> "arbitrary".
            dimension_semantics=("parallel", "arbitrary"),
            vmem_limit_bytes=48 * 1024 * 1024,    # below v7x's 64 MiB physical VMEM
        ),
    )(z, w1f, b1p, w2f, b2p, w3f, b3p, wlmp, blmp)

    return logits_pad[:, :, :V], hidden


# --------------------------- plain-JAX reference ------------------------------
def ref_forward(z, params):
    w1, b1, w2, b2, w3, b3, wlm, blm = params

    def conv3(x, w, b):  # x: (B,S,Din), w: (3,Din,Dout), b: (1,Dout)
        xp = jnp.pad(x, ((0, 0), (1, 1), (0, 0)))
        return (jnp.einsum("bsd,do->bso", xp[:, :-2], w[0])
                + jnp.einsum("bsd,do->bso", xp[:, 1:-1], w[1])
                + jnp.einsum("bsd,do->bso", xp[:, 2:], w[2]) + b[0])

    h1 = jax.nn.relu(conv3(z, w1, b1))
    h2 = jax.nn.relu(conv3(h1, w2, b2))
    h3 = jnp.tanh(conv3(h2, w3, b3))
    logits = jnp.einsum("bsh,hv->bsv", h3, wlm) + blm[0]
    return logits, h3


# ------------------------------- main -----------------------------------------
if __name__ == "__main__":
    B, S, INPUTDIM, VOCAB = 4, 8, 16, 1000
    C1, C2, C3 = 200, 400, 768  # conv output channels from the module definition

    key = jax.random.PRNGKey(0)
    ks = jax.random.split(key, 9)

    # Conv weights stored as (3, Din, Dout): W[k] == pytorch_weight[:, 0, k, :].T
    scale = 0.02
    w1 = scale * jax.random.normal(ks[0], (3, INPUTDIM, C1), jnp.float32)
    b1 = scale * jax.random.normal(ks[1], (1, C1), jnp.float32)
    w2 = scale * jax.random.normal(ks[2], (3, C1, C2), jnp.float32)
    b2 = scale * jax.random.normal(ks[3], (1, C2), jnp.float32)
    w3 = scale * jax.random.normal(ks[4], (3, C2, C3), jnp.float32)
    b3 = scale * jax.random.normal(ks[5], (1, C3), jnp.float32)
    wlm = scale * jax.random.normal(ks[6], (C3, VOCAB), jnp.float32)   # lm_head: Linear(768, VOCAB)
    blm = scale * jax.random.normal(ks[7], (1, VOCAB), jnp.float32)
    params = (w1, b1, w2, b2, w3, b3, wlm, blm)

    z = jax.random.normal(ks[8], (B, S, INPUTDIM), jnp.float32)

    # b_tile=2 so the test exercises multiple batch blocks; VOCAB=1000 -> 2 vocab
    # tiles of 512, exercising the cached-h3 / gated-hidden-write path.
    logits, hidden = cnn_generator_forward(z, params, b_tile=2, lm_tile_n=512)
    jax.block_until_ready((logits, hidden))

    ref_logits, ref_hidden = ref_forward(z, params)
    assert logits.shape == (B, S, VOCAB) and hidden.shape == (B, S, C3)
    # bf16 matmuls (f32 accumulate) vs the f32 reference -> loose-ish tolerance.
    assert jnp.allclose(logits, ref_logits, atol=2e-2, rtol=2e-2)
    assert jnp.allclose(hidden, ref_hidden, atol=2e-2, rtol=2e-2)

    print("KERNEL_OK")
</pallas_src>

<mosaic_0001>
module attributes {stable_mosaic.version = 11 : i64} {
  func.func @cnn_generator_kernel(%arg0: i32, %arg1: i32, %arg2: memref<2x8x16xf32, #tpu.memory_space<vmem>>, %arg3: memref<48x256xbf16, #tpu.memory_space<vmem>>, %arg4: memref<1x256xf32, #tpu.memory_space<vmem>>, %arg5: memref<768x512xbf16, #tpu.memory_space<vmem>>, %arg6: memref<1x512xf32, #tpu.memory_space<vmem>>, %arg7: memref<1536x768xbf16, #tpu.memory_space<vmem>>, %arg8: memref<1x768xf32, #tpu.memory_space<vmem>>, %arg9: memref<768x512xbf16, #tpu.memory_space<vmem>>, %arg10: memref<1x512xf32, #tpu.memory_space<vmem>>, %arg11: memref<2x8x512xf32, #tpu.memory_space<vmem>>, %arg12: memref<2x8x768xf32, #tpu.memory_space<vmem>>, %arg13: memref<16x768xf32, #tpu.memory_space<vmem>>) attributes {dimension_semantics = [#tpu.dimension_semantics<parallel>, #tpu.dimension_semantics<arbitrary>], iteration_bounds = array<i64: 2, 2>, scalar_prefetch = 0 : i64, scratch_operands = 1 : i64, tpu.core_type = #tpu.core_type<tc>, window_params = [{transform_indices = @transform_0, window_bounds = array<i64: 2, 8, 16>}, {pipeline_mode = #tpu.pipeline_mode<synchronous>, transform_indices = @transform_1, window_bounds = array<i64: 48, 256>}, {pipeline_mode = #tpu.pipeline_mode<synchronous>, transform_indices = @transform_2, window_bounds = array<i64: 1, 256>}, {pipeline_mode = #tpu.pipeline_mode<synchronous>, transform_indices = @transform_3, window_bounds = array<i64: 768, 512>}, {pipeline_mode = #tpu.pipeline_mode<synchronous>, transform_indices = @transform_4, window_bounds = array<i64: 1, 512>}, {pipeline_mode = #tpu.pipeline_mode<synchronous>, transform_indices = @transform_5, window_bounds = array<i64: 1536, 768>}, {pipeline_mode = #tpu.pipeline_mode<synchronous>, transform_indices = @transform_6, window_bounds = array<i64: 1, 768>}, {transform_indices = @transform_7, window_bounds = array<i64: 768, 512>}, {transform_indices = @transform_8, window_bounds = array<i64: 1, 512>}, {transform_indices = @transform_9, window_bounds = array<i64: 2, 8, 512>}, {transform_indices = @transform_10, window_bounds = array<i64: 2, 8, 768>}]} {
    %0 = tpu.iota {dimensions = array<i32: 0>} : vector<16x1xi32>
    %c8_i32 = arith.constant 8 : i32
    %c0_i32 = arith.constant 0 : i32
    %1 = arith.cmpi eq, %c8_i32, %c0_i32 : i32
    %c1_i32 = arith.constant 1 : i32
    %2 = arith.select %1, %c1_i32, %c8_i32 : i32
    %3 = vector.broadcast %2 : i32 to vector<16x1xi32>
    %4 = arith.remsi %0, %3 : vector<16x1xi32>
    %c0_i32_0 = arith.constant 0 : i32
    %5 = vector.broadcast %c0_i32_0 : i32 to vector<16x1xi32>
    %6 = arith.cmpi ne, %4, %5 : vector<16x1xi32>
    %c0_i32_1 = arith.constant 0 : i32
    %7 = vector.broadcast %c0_i32_1 : i32 to vector<16x1xi32>
    %8 = arith.cmpi slt, %4, %7 : vector<16x1xi32>
    %c0_i32_2 = arith.constant 0 : i32
    %9 = arith.cmpi slt, %2, %c0_i32_2 : i32
    %10 = vector.broadcast %9 : i1 to vector<16x1xi1>
    %11 = vector.broadcast %10 : vector<16x1xi1> to vector<16x1xi1>
    %12 = arith.xori %8, %11 : vector<16x1xi1>
    %13 = arith.andi %12, %6 : vector<16x1xi1>
    %14 = vector.broadcast %2 : i32 to vector<16x1xi32>
    %15 = arith.addi %4, %14 : vector<16x1xi32>
    %16 = arith.select %13, %15, %4 : vector<16x1xi1>, vector<16x1xi32>
    %c0_i32_3 = arith.constant 0 : i32
    %17 = vector.broadcast %c0_i32_3 : i32 to vector<16x1xi32>
    %18 = arith.cmpi eq, %16, %17 : vector<16x1xi32>
    %c8_i32_4 = arith.constant 8 : i32
    %c0_i32_5 = arith.constant 0 : i32
    %19 = arith.cmpi eq, %c8_i32_4, %c0_i32_5 : i32
    %c1_i32_6 = arith.constant 1 : i32
    %20 = arith.select %19, %c1_i32_6, %c8_i32_4 : i32
    %21 = vector.broadcast %20 : i32 to vector<16x1xi32>
    %22 = arith.remsi %0, %21 : vector<16x1xi32>
    %c0_i32_7 = arith.constant 0 : i32
    %23 = vector.broadcast %c0_i32_7 : i32 to vector<16x1xi32>
    %24 = arith.cmpi ne, %22, %23 : vector<16x1xi32>
    %c0_i32_8 = arith.constant 0 : i32
    %25 = vector.broadcast %c0_i32_8 : i32 to vector<16x1xi32>
    %26 = arith.cmpi slt, %22, %25 : vector<16x1xi32>
    %c0_i32_9 = arith.constant 0 : i32
    %27 = arith.cmpi slt, %20, %c0_i32_9 : i32
    %28 = vector.broadcast %27 : i1 to vector<16x1xi1>
    %29 = vector.broadcast %28 : vector<16x1xi1> to vector<16x1xi1>
    %30 = arith.xori %26, %29 : vector<16x1xi1>
    %31 = arith.andi %30, %24 : vector<16x1xi1>
    %32 = vector.broadcast %20 : i32 to vector<16x1xi32>
    %33 = arith.addi %22, %32 : vector<16x1xi32>
    %34 = arith.select %31, %33, %22 : vector<16x1xi1>, vector<16x1xi32>
    %c7_i32 = arith.constant 7 : i32
    %35 = vector.broadcast %c7_i32 : i32 to vector<16x1xi32>
    %36 = arith.cmpi eq, %34, %35 : vector<16x1xi32>
    %c0_i32_10 = arith.constant 0 : i32
    %37 = arith.cmpi eq, %arg1, %c0_i32_10 : i32
    %38 = arith.extui %37 : i1 to i32
    %c0_i32_11 = arith.constant 0 : i32
    %39 = arith.cmpi ne, %38, %c0_i32_11 : i32
    scf.if %39 {
      %c0_20 = arith.constant 0 : index
      %c0_21 = arith.constant 0 : index
      %c0_22 = arith.constant 0 : index
      %49 = vector.load %arg2[%c0_20, %c0_21, %c0_22] : memref<2x8x16xf32, #tpu.memory_space<vmem>>, vector<2x8x16xf32>
      %50 = vector.shape_cast %49 : vector<2x8x16xf32> to vector<16x16xf32>
      %c1_i32_23 = arith.constant 1 : i32
      %51 = tpu.dynamic_rotate %50 by %c1_i32_23 dim 0 : vector<16x16xf32>, i32 -> vector<16x16xf32>
      %cst_24 = arith.constant 0.000000e+00 : f32
      %52 = vector.shape_cast %18 : vector<16x1xi1> to vector<16x1xi1>
      %53 = vector.broadcast %52 : vector<16x1xi1> to vector<16x16xi1>
      %54 = vector.broadcast %cst_24 : f32 to vector<16x16xf32>
      %55 = arith.select %53, %54, %51 : vector<16x16xi1>, vector<16x16xf32>
      %c15_i32 = arith.constant 15 : i32
      %56 = tpu.dynamic_rotate %50 by %c15_i32 dim 0 : vector<16x16xf32>, i32 -> vector<16x16xf32>
      %cst_25 = arith.constant 0.000000e+00 : f32
      %57 = vector.shape_cast %36 : vector<16x1xi1> to vector<16x1xi1>
      %58 = vector.broadcast %57 : vector<16x1xi1> to vector<16x16xi1>
      %59 = vector.broadcast %cst_25 : f32 to vector<16x16xf32>
      %60 = arith.select %58, %59, %56 : vector<16x16xi1>, vector<16x16xf32>
      %61 = tpu.concatenate %55, %50, %60 in 1 : vector<16x16xf32>, vector<16x16xf32>, vector<16x16xf32> -> vector<16x48xf32>
      %62 = arith.truncf %61 : vector<16x48xf32> to vector<16x48xbf16>
      %c0_26 = arith.constant 0 : index
      %c0_27 = arith.constant 0 : index
      %63 = vector.load %arg3[%c0_26, %c0_27] : memref<48x256xbf16, #tpu.memory_space<vmem>>, vector<48x256xbf16>
      %cst_28 = arith.constant dense<0.000000e+00> : vector<16x256xf32>
      %64 = tpu.matmul %62, %63, %cst_28 {dimension_numbers = #tpu.dot_dimension_numbers<[1], [0], [0], [1], [0, 0, 1, 1], [], []>} : vector<16x48xbf16>, vector<48x256xbf16>, vector<16x256xf32> -> vector<16x256xf32>
      %c0_29 = arith.constant 0 : index
      %c0_30 = arith.constant 0 : index
      %65 = vector.load %arg4[%c0_29, %c0_30] : memref<1x256xf32, #tpu.memory_space<vmem>>, vector<1x256xf32>
      %66 = vector.broadcast %65 : vector<1x256xf32> to vector<16x256xf32>
      %67 = arith.addf %64, %66 : vector<16x256xf32>
      %cst_31 = arith.constant 0.000000e+00 : f32
      %68 = vector.broadcast %cst_31 : f32 to vector<16x256xf32>
      %69 = arith.maximumf %67, %68 : vector<16x256xf32>
      %c1_i32_32 = arith.constant 1 : i32
      %70 = tpu.dynamic_rotate %69 by %c1_i32_32 dim 0 : vector<16x256xf32>, i32 -> vector<16x256xf32>
      %cst_33 = arith.constant 0.000000e+00 : f32
      %71 = vector.shape_cast %18 : vector<16x1xi1> to vector<16x1xi1>
      %72 = vector.broadcast %71 : vector<16x1xi1> to vector<16x256xi1>
      %73 = vector.broadcast %cst_33 : f32 to vector<16x256xf32>
      %74 = arith.select %72, %73, %70 : vector<16x256xi1>, vector<16x256xf32>
      %c15_i32_34 = arith.constant 15 : i32
      %75 = tpu.dynamic_rotate %69 by %c15_i32_34 dim 0 : vector<16x256xf32>, i32 -> vector<16x256xf32>
      %cst_35 = arith.constant 0.000000e+00 : f32
      %76 = vector.shape_cast %36 : vector<16x1xi1> to vector<16x1xi1>
      %77 = vector.broadcast %76 : vector<16x1xi1> to vector<16x256xi1>
      %78 = vector.broadcast %cst_35 : f32 to vector<16x256xf32>
      %79 = arith.select %77, %78, %75 : vector<16x256xi1>, vector<16x256xf32>
      %80 = tpu.concatenate %74, %69, %79 in 1 : vector<16x256xf32>, vector<16x256xf32>, vector<16x256xf32> -> vector<16x768xf32>
      %81 = arith.truncf %80 : vector<16x768xf32> to vector<16x768xbf16>
      %c0_36 = arith.constant 0 : index
      %c0_37 = arith.constant 0 : index
      %82 = vector.load %arg5[%c0_36, %c0_37] : memref<768x512xbf16, #tpu.memory_space<vmem>>, vector<768x512xbf16>
      %cst_38 = arith.constant dense<0.000000e+00> : vector<16x512xf32>
      %83 = tpu.matmul %81, %82, %cst_38 {dimension_numbers = #tpu.dot_dimension_numbers<[1], [0], [0], [1], [0, 0, 1, 1], [], []>} : vector<16x768xbf16>, vector<768x512xbf16>, vector<16x512xf32> -> vector<16x512xf32>
      %c0_39 = arith.constant 0 : index
      %c0_40 = arith.constant 0 : index
      %84 = vector.load %arg6[%c0_39, %c0_40] : memref<1x512xf32, #tpu.memory_space<vmem>>, vector<1x512xf32>
      %85 = vector.broadcast %84 : vector<1x512xf32> to vector<16x512xf32>
      %86 = arith.addf %83, %85 : vector<16x512xf32>
      %cst_41 = arith.constant 0.000000e+00 : f32
      %87 = vector.broadcast %cst_41 : f32 to vector<16x512xf32>
      %88 = arith.maximumf %86, %87 : vector<16x512xf32>
      %c1_i32_42 = arith.constant 1 : i32
      %89 = tpu.dynamic_rotate %88 by %c1_i32_42 dim 0 : vector<16x512xf32>, i32 -> vector<16x512xf32>
      %cst_43 = arith.constant 0.000000e+00 : f32
      %90 = vector.shape_cast %18 : vector<16x1xi1> to vector<16x1xi1>
      %91 = vector.broadcast %90 : vector<16x1xi1> to vector<16x512xi1>
      %92 = vector.broadcast %cst_43 : f32 to vector<16x512xf32>
      %93 = arith.select %91, %92, %89 : vector<16x512xi1>, vector<16x512xf32>
      %c15_i32_44 = arith.constant 15 : i32
      %94 = tpu.dynamic_rotate %88 by %c15_i32_44 dim 0 : vector<16x512xf32>, i32 -> vector<16x512xf32>
      %cst_45 = arith.constant 0.000000e+00 : f32
      %95 = vector.shape_cast %36 : vector<16x1xi1> to vector<16x1xi1>
      %96 = vector.broadcast %95 : vector<16x1xi1> to vector<16x512xi1>
      %97 = vector.broadcast %cst_45 : f32 to vector<16x512xf32>
      %98 = arith.select %96, %97, %94 : vector<16x512xi1>, vector<16x512xf32>
      %99 = tpu.concatenate %93, %88, %98 in 1 : vector<16x512xf32>, vector<16x512xf32>, vector<16x512xf32> -> vector<16x1536xf32>
      %100 = arith.truncf %99 : vector<16x1536xf32> to vector<16x1536xbf16>
      %c0_46 = arith.constant 0 : index
      %c0_47 = arith.constant 0 : index
      %101 = vector.load %arg7[%c0_46, %c0_47] : memref<1536x768xbf16, #tpu.memory_space<vmem>>, vector<1536x768xbf16>
      %cst_48 = arith.constant dense<0.000000e+00> : vector<16x768xf32>
      %102 = tpu.matmul %100, %101, %cst_48 {dimension_numbers = #tpu.dot_dimension_numbers<[1], [0], [0], [1], [0, 0, 1, 1], [], []>} : vector<16x1536xbf16>, vector<1536x768xbf16>, vector<16x768xf32> -> vector<16x768xf32>
      %c0_49 = arith.constant 0 : index
      %c0_50 = arith.constant 0 : index
      %103 = vector.load %arg8[%c0_49, %c0_50] : memref<1x768xf32, #tpu.memory_space<vmem>>, vector<1x768xf32>
      %104 = vector.broadcast %103 : vector<1x768xf32> to vector<16x768xf32>
      %105 = arith.addf %102, %104 : vector<16x768xf32>
      %106 = math.tanh %105 : vector<16x768xf32>
      %c0_51 = arith.constant 0 : index
      %c0_52 = arith.constant 0 : index
      %107 = vector.load %arg13[%c0_51, %c0_52] : memref<16x768xf32, #tpu.memory_space<vmem>>, vector<16x768xf32>
      tpu.vector_store %arg13[%c0_51, %c0_52], %106 {strides = array<i32>} : memref<16x768xf32, #tpu.memory_space<vmem>>, vector<16x768xf32>,
      %108 = vector.shape_cast %106 : vector<16x768xf32> to vector<2x8x768xf32>
      %c0_53 = arith.constant 0 : index
      %c0_54 = arith.constant 0 : index
      %c0_55 = arith.constant 0 : index
      %109 = vector.load %arg12[%c0_53, %c0_54, %c0_55] : memref<2x8x768xf32, #tpu.memory_space<vmem>>, vector<2x8x768xf32>
      tpu.vector_store %arg12[%c0_53, %c0_54, %c0_55], %108 {strides = array<i32>} : memref<2x8x768xf32, #tpu.memory_space<vmem>>, vector<2x8x768xf32>,
    } else {
    }
    %c0 = arith.constant 0 : index
    %c0_12 = arith.constant 0 : index
    %40 = vector.load %arg13[%c0, %c0_12] : memref<16x768xf32, #tpu.memory_space<vmem>>, vector<16x768xf32>
    %41 = arith.truncf %40 : vector<16x768xf32> to vector<16x768xbf16>
    %c0_13 = arith.constant 0 : index
    %c0_14 = arith.constant 0 : index
    %42 = vector.load %arg9[%c0_13, %c0_14] : memref<768x512xbf16, #tpu.memory_space<vmem>>, vector<768x512xbf16>
    %cst = arith.constant dense<0.000000e+00> : vector<16x512xf32>
    %43 = tpu.matmul %41, %42, %cst {dimension_numbers = #tpu.dot_dimension_numbers<[1], [0], [0], [1], [0, 0, 1, 1], [], []>} : vector<16x768xbf16>, vector<768x512xbf16>, vector<16x512xf32> -> vector<16x512xf32>
    %c0_15 = arith.constant 0 : index
    %c0_16 = arith.constant 0 : index
    %44 = vector.load %arg10[%c0_15, %c0_16] : memref<1x512xf32, #tpu.memory_space<vmem>>, vector<1x512xf32>
    %45 = vector.broadcast %44 : vector<1x512xf32> to vector<16x512xf32>
    %46 = arith.addf %43, %45 : vector<16x512xf32>
    %47 = vector.shape_cast %46 : vector<16x512xf32> to vector<2x8x512xf32>
    %c0_17 = arith.constant 0 : index
    %c0_18 = arith.constant 0 : index
    %c0_19 = arith.constant 0 : index
    %48 = vector.load %arg11[%c0_17, %c0_18, %c0_19] : memref<2x8x512xf32, #tpu.memory_space<vmem>>, vector<2x8x512xf32>
    tpu.vector_store %arg11[%c0_17, %c0_18, %c0_19], %47 {strides = array<i32>} : memref<2x8x512xf32, #tpu.memory_space<vmem>>, vector<2x8x512xf32>,
    return
  }
  func.func @transform_0(%arg0: i32, %arg1: i32) -> (i32, i32, i32) {
    %c0_i32 = arith.constant 0 : i32
    %c0_i32_0 = arith.constant 0 : i32
    %c0_i32_1 = arith.constant 0 : i32
    return %arg0, %c0_i32, %c0_i32_0 : i32, i32, i32
  }
  func.func @transform_1(%arg0: i32, %arg1: i32) -> (i32, i32) {
    %c0_i32 = arith.constant 0 : i32
    %c0_i32_0 = arith.constant 0 : i32
    %c0_i32_1 = arith.constant 0 : i32
    return %c0_i32, %c0_i32_0 : i32, i32
  }
  func.func @transform_2(%arg0: i32, %arg1: i32) -> (i32, i32) {
    %c0_i32 = arith.constant 0 : i32
    %c0_i32_0 = arith.constant 0 : i32
    %c0_i32_1 = arith.constant 0 : i32
    return %c0_i32, %c0_i32_0 : i32, i32
  }
  func.func @transform_3(%arg0: i32, %arg1: i32) -> (i32, i32) {
    %c0_i32 = arith.constant 0 : i32
    %c0_i32_0 = arith.constant 0 : i32
    %c0_i32_1 = arith.constant 0 : i32
    return %c0_i32, %c0_i32_0 : i32, i32
  }
  func.func @transform_4(%arg0: i32, %arg1: i32) -> (i32, i32) {
    %c0_i32 = arith.constant 0 : i32
    %c0_i32_0 = arith.constant 0 : i32
    %c0_i32_1 = arith.constant 0 : i32
    return %c0_i32, %c0_i32_0 : i32, i32
  }
  func.func @transform_5(%arg0: i32, %arg1: i32) -> (i32, i32) {
    %c0_i32 = arith.constant 0 : i32
    %c0_i32_0 = arith.constant 0 : i32
    %c0_i32_1 = arith.constant 0 : i32
    return %c0_i32, %c0_i32_0 : i32, i32
  }
  func.func @transform_6(%arg0: i32, %arg1: i32) -> (i32, i32) {
    %c0_i32 = arith.constant 0 : i32
    %c0_i32_0 = arith.constant 0 : i32
    %c0_i32_1 = arith.constant 0 : i32
    return %c0_i32, %c0_i32_0 : i32, i32
  }
  func.func @transform_7(%arg0: i32, %arg1: i32) -> (i32, i32) {
    %c0_i32 = arith.constant 0 : i32
    %c0_i32_0 = arith.constant 0 : i32
    return %c0_i32, %arg1 : i32, i32
  }
  func.func @transform_8(%arg0: i32, %arg1: i32) -> (i32, i32) {
    %c0_i32 = arith.constant 0 : i32
    %c0_i32_0 = arith.constant 0 : i32
    return %c0_i32, %arg1 : i32, i32
  }
  func.func @transform_9(%arg0: i32, %arg1: i32) -> (i32, i32, i32) {
    %c0_i32 = arith.constant 0 : i32
    %c0_i32_0 = arith.constant 0 : i32
    return %arg0, %c0_i32, %arg1 : i32, i32, i32
  }
  func.func @transform_10(%arg0: i32, %arg1: i32) -> (i32, i32, i32) {
    %c0_i32 = arith.constant 0 : i32
    %c0_i32_0 = arith.constant 0 : i32
    %c0_i32_1 = arith.constant 0 : i32
    return %arg0, %c0_i32, %c0_i32_0 : i32, i32, i32
  }
}

</mosaic_0001>

<llo_original>
// kernel: tpu_custom_call.1
$region0: #{tpu_custom_call.1}
  #allocation0 [shape = 'u32[]', space=smem, size = 0x4, offset = 0x4, fixed_abs, tag = 'smem constant byte address 0x4 - core index']
  #allocation1 [shape = 'u32[144,128]{1,0:T(1,128)}', space=vmem, size = 0x12000, scoped, tag = 'internal scratch']
  #allocation2 [shape = 'f32[16,768]{1,0:T(8,128)}', space=vmem, size = 0xc000, scoped, tag = 'scratch operand']
  %s0 = inlined_call_operand.hbm [shape: f32[4,8,16], index: 0, kind: input, shape index: {}]
  %s1 = inlined_call_operand.hbm [shape: bf16[48,256], index: 1, kind: input, shape index: {}]
  %s2 = inlined_call_operand.hbm [shape: f32[1,256], index: 2, kind: input, shape index: {}]
  %s3 = inlined_call_operand.hbm [shape: bf16[768,512], index: 3, kind: input, shape index: {}]
  %s4 = inlined_call_operand.hbm [shape: f32[1,512], index: 4, kind: input, shape index: {}]
  %s5 = inlined_call_operand.hbm [shape: bf16[1536,768], index: 5, kind: input, shape index: {}]
  %s6 = inlined_call_operand.hbm [shape: f32[1,768], index: 6, kind: input, shape index: {}]
  %s7 = inlined_call_operand.hbm [shape: bf16[768,1024], index: 7, kind: input, shape index: {}]
  %s8 = inlined_call_operand.hbm [shape: f32[1,1024], index: 8, kind: input, shape index: {}]
  %s9 = inlined_call_operand.hbm [shape: f32[4,8,1024], index: 9, kind: output, shape index: {0}]
  %s10 = inlined_call_operand.hbm [shape: f32[4,8,768], index: 10, kind: output, shape index: {1}]
  %11 = xla_tuple %s9, %s10
  %s12 = sld [smem:[#allocation0]]
  $region117: #{tpu_custom_call.1} parent=0
    _
  %s14 = ssub.s32 1, %s12
  %s15 = scalar_select 0, %s14, %s12
  $region1: #{tpu_custom_call.1} parent=0
    #allocation3 [shape = 'u8[16384]{0}', space=vmem, size = 0x4000, scoped, tag = 'input window, operand 0']
    #allocation4 [shape = 's32[2]{0}', space=sflag, size = 0x8, scoped, tag = 'scoped memory for tpu_custom_call.1']
    #allocation5 [shape = 's32[2]{0}', space=sflag, size = 0x8, scoped, tag = 'scoped memory for tpu_custom_call.1']
    #allocation6 [shape = 'u8[24576]{0}', space=vmem, size = 0x6000, scoped, tag = 'input window, operand 1, single buffered']
    #allocation7 [shape = 's32[1]{0}', space=sflag, size = 0x4, scoped, tag = 'scoped memory for tpu_custom_call.1']
    #allocation8 [shape = 'u8[1024]{0}', space=vmem, size = 0x400, scoped, tag = 'input window, operand 2, single buffered']
    #allocation9 [shape = 'u8[786432]{0}', space=vmem, size = 0xc0000, scoped, tag = 'input window, operand 3, single buffered']
    #allocation10 [shape = 's32[1]{0}', space=sflag, size = 0x4, scoped, tag = 'scoped memory for tpu_custom_call.1']
    #allocation11 [shape = 'u8[2048]{0}', space=vmem, size = 0x800, scoped, tag = 'input window, operand 4, single buffered']
    #allocation12 [shape = 'u8[2359296]{0}', space=vmem, size = 0x240000, scoped, tag = 'input window, operand 5, single buffered']
    #allocation13 [shape = 's32[1]{0}', space=sflag, size = 0x4, scoped, tag = 'scoped memory for tpu_custom_call.1']
    #allocation14 [shape = 'u8[3072]{0}', space=vmem, size = 0xc00, scoped, tag = 'input window, operand 6, single buffered']
    #allocation15 [shape = 'u8[1572864]{0}', space=vmem, size = 0x180000, scoped, tag = 'input window, operand 7']
    #allocation16 [shape = 's32[2]{0}', space=sflag, size = 0x8, scoped, tag = 'scoped memory for tpu_custom_call.1']
    #allocation17 [shape = 'u8[4096]{0}', space=vmem, size = 0x1000, scoped, tag = 'input window, operand 8']
    #allocation18 [shape = 'u8[65536]{0}', space=vmem, size = 0x10000, scoped, tag = 'output window, operand 0']
    #allocation19 [shape = 'u8[98304]{0}', space=vmem, size = 0x18000, scoped, tag = 'output window, operand 1']
    #allocation20 [shape = 's32[2]{0}', space=sflag, size = 0x8, scoped, tag = 'scoped memory for tpu_custom_call.1']
    %16 = vsyncpa [#allocation4], 0
    %s17 = scalar_lea.sflag [#allocation4], 1
    %18 = vsyncpa %s17, 0
    %19 = vsyncpa [#allocation7], 0
    %20 = vsyncpa [#allocation10], 0
    %21 = vsyncpa [#allocation13], 0
    %22 = vsyncpa [#allocation16], 0
    %s23 = scalar_lea.sflag [#allocation16], 1
    %24 = vsyncpa %s23, 0
    %25 = vsyncpa [#allocation5], 0
    %s26 = scalar_lea.sflag [#allocation5], 1
    %27 = vsyncpa %s26, 0
    %28 = vsyncpa [#allocation20], 0
    %s29 = scalar_lea.sflag [#allocation20], 1
    %30 = vsyncpa %s29, 0
    loop: start=0, step=1, limit=6
    $region2: #{tpu_custom_call.1} parent=1 // loop_pre_header
      _
    $region3: #{tpu_custom_call.1} parent=1 // loop_header
      %s32 = sphi 0, %s36
      %p33 = scmp.ge.s32.totalorder %s32, 6
      %s39 = sphi 0, %s51
      %s40 = sphi 0, %s47
      %s41 = sphi 0, %s39
      %s42 = sphi 0, %s40
      %s43 = sphi 0, %s41
      %s44 = sphi 0, %s42
      %s54 = sphi 0, %s56
      %s57 = sphi 0, %s54
      %s58 = sphi 0, %s57
      %s74 = sphi 0, %s58
      %s78 = sphi 0, %s78
      %s80 = sphi 0, %s78
      %s81 = sphi 0, %s80
      %s95 = sphi 0, %s81
      %s99 = sphi 0, %s99
      %s101 = sphi 0, %s99
      %s102 = sphi 0, %s101
      %s116 = sphi 0, %s102
      %s120 = sphi 0, %s120
      %s122 = sphi 0, %s120
      %s123 = sphi 0, %s122
      %s137 = sphi 0, %s123
      %s141 = sphi 0, %s141
      %s143 = sphi 0, %s141
      %s144 = sphi 0, %s143
      %s158 = sphi 0, %s144
      %s162 = sphi 0, %s162
      %s164 = sphi 0, %s162
      %s165 = sphi 0, %s164
      %s179 = sphi 0, %s165
      %s183 = sphi 0, %s183
      %s185 = sphi 0, %s183
      %s186 = sphi 0, %s185
      %s200 = sphi 0, %s186
      %s206 = sphi 0, %s208
      %s209 = sphi 0, %s206
      %s210 = sphi 0, %s209
      %s226 = sphi 0, %s210
      %s232 = sphi 0, %s234
      %s235 = sphi 0, %s232
      %s236 = sphi 0, %s235
      %s252 = sphi 0, %s236
      %s260 = sphi 0, %s262
      %s263 = sphi 0, %s260
      %s264 = sphi 0, %s263
      %s280 = sphi 0, %s264
      %s286 = sphi 0, %s288
      %s289 = sphi 0, %s286
      %s290 = sphi 0, %s289
      %s306 = sphi 0, %s290
    $region4: #{tpu_custom_call.1} parent=1 // loop_header_branch
      %35 = sbr.rel (%p33) target = $region8
    $region5: #{tpu_custom_call.1} parent=1 // loop_body
      %s37 = ssub.s32 %s32, 1
      %s38 = ssub.s32 %s32, 2
      %s45 = sadd.s32 1, %s40
      %p46 = scmp.ge.s32.totalorder %s45, 2
      %s47 = scalar_select %p46, 0, %s45
      %s48 = sadd.s32 1, %s39
      %s49 = scalar_select %p46, %s48, %s39
      %p50 = scmp.ge.s32.totalorder %s49, 2
      %s51 = scalar_select %p50, 0, %s49
      %s52 = ssub.s32 %s39, %s51
      %p53 = scmp.eq.s32.totalorder %s52, 0
      %s55 = sadd.s32 %s54, 1
      %s56 = scalar_select %p53, %s54, %s55
      %p59 = pneg %p53
      %p60 = scmp.eq.s32.totalorder %s32, 3
      %p61 = por %p59, %p60
      %p62 = scmp.ne.s32.totalorder %s54, %s57
      %p63 = scmp.eq.s32.totalorder %s32, 0
      %p64 = por %p62, %p63
      %p65 = scmp.ne.s32.totalorder %s54, %s57
      %p66 = scmp.eq.s32.totalorder %s37, 3
      %p67 = por %p65, %p66
      %p68 = scmp.ne.s32.totalorder %s57, %s58
      %p69 = scmp.eq.s32.totalorder %s37, 0
      %p70 = por %p68, %p69
      %p71 = scmp.ne.s32.totalorder %s57, %s58
      %p72 = scmp.eq.s32.totalorder %s38, 3
      %p73 = por %p71, %p72
      %p75 = scmp.ne.s32.totalorder %s58, %s74
      %p76 = scmp.eq.s32.totalorder %s38, 0
      %p77 = por %p75, %p76
      %s79 = sadd.s32 %s78, 1
      %p82 = scmp.eq.s32.totalorder %s32, 3
      %p83 = scmp.ne.s32.totalorder %s78, %s80
      %p84 = scmp.eq.s32.totalorder %s32, 0
      %p85 = por %p83, %p84
      %p86 = scmp.ne.s32.totalorder %s78, %s80
      %p87 = scmp.eq.s32.totalorder %s37, 3
      %p88 = por %p86, %p87
      %p89 = scmp.ne.s32.totalorder %s80, %s81
      %p90 = scmp.eq.s32.totalorder %s37, 0
      %p91 = por %p89, %p90
      %p92 = scmp.ne.s32.totalorder %s80, %s81
      %p93 = scmp.eq.s32.totalorder %s38, 3
      %p94 = por %p92, %p93
      %p96 = scmp.ne.s32.totalorder %s81, %s95
      %p97 = scmp.eq.s32.totalorder %s38, 0
      %p98 = por %p96, %p97
      %s100 = sadd.s32 %s99, 1
      %p103 = scmp.eq.s32.totalorder %s32, 3
      %p104 = scmp.ne.s32.totalorder %s99, %s101
      %p105 = scmp.eq.s32.totalorder %s32, 0
      %p106 = por %p104, %p105
      %p107 = scmp.ne.s32.totalorder %s99, %s101
      %p108 = scmp.eq.s32.totalorder %s37, 3
      %p109 = por %p107, %p108
      %p110 = scmp.ne.s32.totalorder %s101, %s102
      %p111 = scmp.eq.s32.totalorder %s37, 0
      %p112 = por %p110, %p111
      %p113 = scmp.ne.s32.totalorder %s101, %s102
      %p114 = scmp.eq.s32.totalorder %s38, 3
      %p115 = por %p113, %p114
      %p117 = scmp.ne.s32.totalorder %s102, %s116
      %p118 = scmp.eq.s32.totalorder %s38, 0
      %p119 = por %p117, %p118
      %s121 = sadd.s32 %s120, 1
      %p124 = scmp.eq.s32.totalorder %s32, 3
      %p125 = scmp.ne.s32.totalorder %s120, %s122
      %p126 = scmp.eq.s32.totalorder %s32, 0
      %p127 = por %p125, %p126
      %p128 = scmp.ne.s32.totalorder %s120, %s122
      %p129 = scmp.eq.s32.totalorder %s37, 3
      %p130 = por %p128, %p129
      %p131 = scmp.ne.s32.totalorder %s122, %s123
      %p132 = scmp.eq.s32.totalorder %s37, 0
      %p133 = por %p131, %p132
      %p134 = scmp.ne.s32.totalorder %s122, %s123
      %p135 = scmp.eq.s32.totalorder %s38, 3
      %p136 = por %p134, %p135
      %p138 = scmp.ne.s32.totalorder %s123, %s137
      %p139 = scmp.eq.s32.totalorder %s38, 0
      %p140 = por %p138, %p139
      %s142 = sadd.s32 %s141, 1
      %p145 = scmp.eq.s32.totalorder %s32, 3
      %p146 = scmp.ne.s32.totalorder %s141, %s143
      %p147 = scmp.eq.s32.totalorder %s32, 0
      %p148 = por %p146, %p147
      %p149 = scmp.ne.s32.totalorder %s141, %s143
      %p150 = scmp.eq.s32.totalorder %s37, 3
      %p151 = por %p149, %p150
      %p152 = scmp.ne.s32.totalorder %s143, %s144
      %p153 = scmp.eq.s32.totalorder %s37, 0
      %p154 = por %p152, %p153
      %p155 = scmp.ne.s32.totalorder %s143, %s144
      %p156 = scmp.eq.s32.totalorder %s38, 3
      %p157 = por %p155, %p156
      %p159 = scmp.ne.s32.totalorder %s144, %s158
      %p160 = scmp.eq.s32.totalorder %s38, 0
      %p161 = por %p159, %p160
      %s163 = sadd.s32 %s162, 1
      %p166 = scmp.eq.s32.totalorder %s32, 3
      %p167 = scmp.ne.s32.totalorder %s162, %s164
      %p168 = scmp.eq.s32.totalorder %s32, 0
      %p169 = por %p167, %p168
      %p170 = scmp.ne.s32.totalorder %s162, %s164
      %p171 = scmp.eq.s32.totalorder %s37, 3
      %p172 = por %p170, %p171
      %p173 = scmp.ne.s32.totalorder %s164, %s165
      %p174 = scmp.eq.s32.totalorder %s37, 0
      %p175 = por %p173, %p174
      %p176 = scmp.ne.s32.totalorder %s164, %s165
      %p177 = scmp.eq.s32.totalorder %s38, 3
      %p178 = por %p176, %p177
      %p180 = scmp.ne.s32.totalorder %s165, %s179
      %p181 = scmp.eq.s32.totalorder %s38, 0
      %p182 = por %p180, %p181
      %s184 = sadd.s32 %s183, 1
      %p187 = scmp.eq.s32.totalorder %s32, 3
      %p188 = scmp.ne.s32.totalorder %s183, %s185
      %p189 = scmp.eq.s32.totalorder %s32, 0
      %p190 = por %p188, %p189
      %p191 = scmp.ne.s32.totalorder %s183, %s185
      %p192 = scmp.eq.s32.totalorder %s37, 3
      %p193 = por %p191, %p192
      %p194 = scmp.ne.s32.totalorder %s185, %s186
      %p195 = scmp.eq.s32.totalorder %s37, 0
      %p196 = por %p194, %p195
      %p197 = scmp.ne.s32.totalorder %s185, %s186
      %p198 = scmp.eq.s32.totalorder %s38, 3
      %p199 = por %p197, %p198
      %p201 = scmp.ne.s32.totalorder %s186, %s200
      %p202 = scmp.eq.s32.totalorder %s38, 0
      %p203 = por %p201, %p202
      %s204 = ssub.s32 %s40, %s47
      %p205 = scmp.eq.s32.totalorder %s204, 0
      %s207 = sadd.s32 %s206, 1
      %s208 = scalar_select %p205, %s206, %s207
      %p211 = pneg %p205
      %p212 = scmp.eq.s32.totalorder %s32, 3
      %p213 = por %p211, %p212
      %p214 = scmp.ne.s32.totalorder %s206, %s209
      %p215 = scmp.eq.s32.totalorder %s32, 0
      %p216 = por %p214, %p215
      %p217 = scmp.ne.s32.totalorder %s206, %s209
      %p218 = scmp.eq.s32.totalorder %s37, 3
      %p219 = por %p217, %p218
      %p220 = scmp.ne.s32.totalorder %s209, %s210
      %p221 = scmp.eq.s32.totalorder %s37, 0
      %p222 = por %p220, %p221
      %p223 = scmp.ne.s32.totalorder %s209, %s210
      %p224 = scmp.eq.s32.totalorder %s38, 3
      %p225 = por %p223, %p224
      %p227 = scmp.ne.s32.totalorder %s210, %s226
      %p228 = scmp.eq.s32.totalorder %s38, 0
      %p229 = por %p227, %p228
      %s230 = ssub.s32 %s40, %s47
      %p231 = scmp.eq.s32.totalorder %s230, 0
      %s233 = sadd.s32 %s232, 1
      %s234 = scalar_select %p231, %s232, %s233
      %p237 = pneg %p231
      %p238 = scmp.eq.s32.totalorder %s32, 3
      %p239 = por %p237, %p238
      %p240 = scmp.ne.s32.totalorder %s232, %s235
      %p241 = scmp.eq.s32.totalorder %s32, 0
      %p242 = por %p240, %p241
      %p243 = scmp.ne.s32.totalorder %s232, %s235
      %p244 = scmp.eq.s32.totalorder %s37, 3
      %p245 = por %p243, %p244
      %p246 = scmp.ne.s32.totalorder %s235, %s236
      %p247 = scmp.eq.s32.totalorder %s37, 0
      %p248 = por %p246, %p247
      %p249 = scmp.ne.s32.totalorder %s235, %s236
      %p250 = scmp.eq.s32.totalorder %s38, 3
      %p251 = por %p249, %p250
      %p253 = scmp.ne.s32.totalorder %s236, %s252
      %p254 = scmp.eq.s32.totalorder %s38, 0
      %p255 = por %p253, %p254
      %s256 = ssub.s32 %s39, %s51
      %s257 = ssub.s32 %s40, %s47
      %s258 = sor.u32 %s256, %s257
      %p259 = scmp.eq.s32.totalorder %s258, 0
      %s261 = sadd.s32 %s260, 1
      %s262 = scalar_select %p259, %s260, %s261
      %p265 = pneg %p259
      %p266 = scmp.eq.s32.totalorder %s32, 3
      %p267 = por %p265, %p266
      %p268 = scmp.ne.s32.totalorder %s260, %s263
      %p269 = scmp.eq.s32.totalorder %s32, 0
      %p270 = por %p268, %p269
      %p271 = scmp.ne.s32.totalorder %s260, %s263
      %p272 = scmp.eq.s32.totalorder %s37, 3
      %p273 = por %p271, %p272
      %p274 = scmp.ne.s32.totalorder %s263, %s264
      %p275 = scmp.eq.s32.totalorder %s37, 0
      %p276 = por %p274, %p275
      %p277 = scmp.ne.s32.totalorder %s263, %s264
      %p278 = scmp.eq.s32.totalorder %s38, 3
      %p279 = por %p277, %p278
      %p281 = scmp.ne.s32.totalorder %s264, %s280
      %p282 = scmp.eq.s32.totalorder %s38, 0
      %p283 = por %p281, %p282
      %s284 = ssub.s32 %s39, %s51
      %p285 = scmp.eq.s32.totalorder %s284, 0
      %s287 = sadd.s32 %s286, 1
      %s288 = scalar_select %p285, %s286, %s287
      %p291 = pneg %p285
      %p292 = scmp.eq.s32.totalorder %s32, 3
      %p293 = por %p291, %p292
      %p294 = scmp.ne.s32.totalorder %s286, %s289
      %p295 = scmp.eq.s32.totalorder %s32, 0
      %p296 = por %p294, %p295
      %p297 = scmp.ne.s32.totalorder %s286, %s289
      %p298 = scmp.eq.s32.totalorder %s37, 3
      %p299 = por %p297, %p298
      %p300 = scmp.ne.s32.totalorder %s289, %s290
      %p301 = scmp.eq.s32.totalorder %s37, 0
      %p302 = por %p300, %p301
      %p303 = scmp.ne.s32.totalorder %s289, %s290
      %p304 = scmp.eq.s32.totalorder %s38, 3
      %p305 = por %p303, %p304
      %p307 = scmp.ne.s32.totalorder %s290, %s306
      %p308 = scmp.eq.s32.totalorder %s38, 0
      %p309 = por %p307, %p308
      %p310 = scmp.le.s32.totalorder 1, %s32
      %p311 = scmp.lt.s32.totalorder %s32, 5
      %p312 = pnand %p310, %p311
      %p313 = pneg %p312
      // Predicated region
      $region9: #{tpu_custom_call.1} parent=5 // pred_check
        _
      $region10: #{tpu_custom_call.1} parent=5 // pred_check_branch
        %315 = sbr.rel (%p312) target = $region12
      $region11: #{tpu_custom_call.1} parent=5 // pred_region
        %s316 = ssub.s32 %s32, 1
        // Predicated region
        $region13: #{tpu_custom_call.1} parent=11 // pred_check
          %p317 = pneg %p91
        $region14: #{tpu_custom_call.1} parent=11 // pred_check_branch
          %319 = sbr.rel (%p317) target = $region16
        $region15: #{tpu_custom_call.1} parent=11 // pred_region
          %s321 = ssub.s32 768, 768
          %322 = vsyncadd [#allocation7], %s321
          %s323 = sshll.u32 [#allocation6], 4
          %s324 = int_to_ptr.vmem [resolvable:$true] %s323
          %329 = dma.hbm_to_vmem [thread:$0]  %s1, 768, %s324, [#allocation7], 128, 128, 8
        $region16: #{tpu_custom_call.1} parent=11 // pred_fallthru
          _
        // Predicated region
        $region17: #{tpu_custom_call.1} parent=11 // pred_check
          %p330 = pneg %p112
        $region18: #{tpu_custom_call.1} parent=11 // pred_check_branch
          %332 = sbr.rel (%p330) target = $region20
        $region19: #{tpu_custom_call.1} parent=11 // pred_region
          %s334 = ssub.s32 32, 32
          %335 = vsyncadd [#allocation7], %s334
          %s337 = sshll.u32 [#allocation8], 4
          %s338 = int_to_ptr.vmem [resolvable:$true] %s337
          %340 = dma.hbm_to_vmem [thread:$0]  %s2, 32, %s338, [#allocation7]
        $region20: #{tpu_custom_call.1} parent=11 // pred_fallthru
          _
        // Predicated region
        $region21: #{tpu_custom_call.1} parent=11 // pred_check
          %p341 = pneg %p133
        $region22: #{tpu_custom_call.1} parent=11 // pred_check_branch
          %343 = sbr.rel (%p341) target = $region24
        $region23: #{tpu_custom_call.1} parent=11 // pred_region
          %s345 = ssub.s32 24576, 24576
          %346 = vsyncadd [#allocation10], %s345
          %s347 = sshll.u32 [#allocation9], 4
          %s348 = int_to_ptr.vmem [resolvable:$true] %s347
          %353 = dma.hbm_to_vmem [thread:$0]  %s3, 24576, %s348, [#allocation10], 256, 256, 16
        $region24: #{tpu_custom_call.1} parent=11 // pred_fallthru
          _
        // Predicated region
        $region25: #{tpu_custom_call.1} parent=11 // pred_check
          %p354 = pneg %p154
        $region26: #{tpu_custom_call.1} parent=11 // pred_check_branch
          %356 = sbr.rel (%p354) target = $region28
        $region27: #{tpu_custom_call.1} parent=11 // pred_region
          %s358 = ssub.s32 64, 64
          %359 = vsyncadd [#allocation10], %s358
          %s361 = sshll.u32 [#allocation11], 4
          %s362 = int_to_ptr.vmem [resolvable:$true] %s361
          %364 = dma.hbm_to_vmem [thread:$0]  %s4, 64, %s362, [#allocation10]
        $region28: #{tpu_custom_call.1} parent=11 // pred_fallthru
          _
        // Predicated region
        $region29: #{tpu_custom_call.1} parent=11 // pred_check
          %p365 = pneg %p175
        $region30: #{tpu_custom_call.1} parent=11 // pred_check_branch
          %367 = sbr.rel (%p365) target = $region32
        $region31: #{tpu_custom_call.1} parent=11 // pred_region
          %s369 = ssub.s32 73728, 73728
          %370 = vsyncadd [#allocation13], %s369
          %s371 = sshll.u32 [#allocation12], 4
          %s372 = int_to_ptr.vmem [resolvable:$true] %s371
          %377 = dma.hbm_to_vmem [thread:$0]  %s5, 73728, %s372, [#allocation13], 384, 384, 24
        $region32: #{tpu_custom_call.1} parent=11 // pred_fallthru
          _
        // Predicated region
        $region33: #{tpu_custom_call.1} parent=11 // pred_check
          %p378 = pneg %p196
        $region34: #{tpu_custom_call.1} parent=11 // pred_check_branch
          %380 = sbr.rel (%p378) target = $region36
        $region35: #{tpu_custom_call.1} parent=11 // pred_region
          %s382 = ssub.s32 96, 96
          %383 = vsyncadd [#allocation13], %s382
          %s385 = sshll.u32 [#allocation14], 4
          %s386 = int_to_ptr.vmem [resolvable:$true] %s385
          %388 = dma.hbm_to_vmem [thread:$0]  %s6, 96, %s386, [#allocation13]
        $region36: #{tpu_custom_call.1} parent=11 // pred_fallthru
          _
      $region12: #{tpu_custom_call.1} parent=5 // pred_fallthru
        _
      %p389 = scmp.lt.s32.totalorder %s32, 4
      // Predicated region
      $region37: #{tpu_custom_call.1} parent=5 // pred_check
        %p390 = pneg %p389
      $region38: #{tpu_custom_call.1} parent=5 // pred_check_branch
        %392 = sbr.rel (%p390) target = $region40
      $region39: #{tpu_custom_call.1} parent=5 // pred_region
        // Predicated region
        $region41: #{tpu_custom_call.1} parent=39 // pred_check
          %p393 = pneg %p64
        $region42: #{tpu_custom_call.1} parent=39 // pred_check_branch
          %395 = sbr.rel (%p393) target = $region44
        $region43: #{tpu_custom_call.1} parent=39 // pred_region
          %s396 = sand.u32 %s54, 1
          %s397 = scalar_lea.sflag [#allocation4], %s396
          %s398 = sand.u32 %s54, 1
          %s399 = smul.addr %s398, 16
          %s400 = scalar_lea.vmem [#allocation3], %s399
          %s401 = smul.u32 2, %s39
          %s403 = ssub.s32 256, 256
          %404 = vsyncadd %s397, %s403
          %s405 = smul.addr %s401, 128
          %s406 = scalar_lea.hbm %s0, %s405
          %s407 = sshll.u32 %s400, 4
          %s408 = int_to_ptr.vmem [resolvable:$true] %s407
          %413 = dma.hbm_to_vmem [thread:$0]  %s406, 256, %s408, %s397, 128, 128, 8
        $region44: #{tpu_custom_call.1} parent=39 // pred_fallthru
          _
        // Predicated region
        $region45: #{tpu_custom_call.1} parent=39 // pred_check
          %p414 = pneg %p216
        $region46: #{tpu_custom_call.1} parent=39 // pred_check_branch
          %416 = sbr.rel (%p414) target = $region48
        $region47: #{tpu_custom_call.1} parent=39 // pred_region
          %s417 = sand.u32 %s32, 1
          %s418 = scalar_lea.sflag [#allocation16], %s417
          %s419 = sand.u32 %s206, 1
          %s420 = smul.addr %s419, 1536
          %s421 = scalar_lea.vmem [#allocation15], %s420
          %s422 = smul.u32 4, %s40
          %s424 = ssub.s32 24576, 24576
          %425 = vsyncadd %s418, %s424
          %s426 = smul.addr %s422, 64
          %s427 = scalar_lea.hbm %s7, %s426
          %s428 = sshll.u32 %s421, 4
          %s429 = int_to_ptr.vmem [resolvable:$true] %s428
          %434 = dma.hbm_to_vmem [thread:$0]  %s427, 24576, %s429, %s418, 512, 256, 16
        $region48: #{tpu_custom_call.1} parent=39 // pred_fallthru
          _
        // Predicated region
        $region49: #{tpu_custom_call.1} parent=39 // pred_check
          %p435 = pneg %p242
        $region50: #{tpu_custom_call.1} parent=39 // pred_check_branch
          %437 = sbr.rel (%p435) target = $region52
        $region51: #{tpu_custom_call.1} parent=39 // pred_region
          %s438 = sand.u32 %s32, 1
          %s439 = scalar_lea.sflag [#allocation16], %s438
          %s440 = sand.u32 %s232, 1
          %s441 = smul.addr %s440, 4
          %s442 = scalar_lea.vmem [#allocation17], %s441
          %s443 = smul.u32 4, %s40
          %s445 = ssub.s32 64, 64
          %446 = vsyncadd %s439, %s445
          %s447 = smul.addr %s443, 16
          %s448 = scalar_lea.hbm %s8, %s447
          %s450 = sshll.u32 %s442, 4
          %s451 = int_to_ptr.vmem [resolvable:$true] %s450
          %453 = dma.hbm_to_vmem [thread:$0]  %s448, 64, %s451, %s439
        $region52: #{tpu_custom_call.1} parent=39 // pred_fallthru
          _
      $region40: #{tpu_custom_call.1} parent=5 // pred_fallthru
        _
      %p454 = scmp.le.s32.totalorder 1, %s32
      %p455 = scmp.lt.s32.totalorder %s32, 5
      %p456 = pnand %p454, %p455
      %p457 = pneg %p456
      // Predicated region
      $region53: #{tpu_custom_call.1} parent=5 // pred_check
        _
      $region54: #{tpu_custom_call.1} parent=5 // pred_check_branch
        %459 = sbr.rel (%p456) target = $region56
      $region55: #{tpu_custom_call.1} parent=5 // pred_region
        %s460 = ssub.s32 %s32, 1
        %s461 = sand.u32 %s57, 1
        %s462 = scalar_lea.sflag [#allocation4], %s461
        %s463 = sand.u32 %s57, 1
        %s464 = smul.addr %s463, 16
        %s465 = scalar_lea.vmem [#allocation3], %s464
        // Predicated region
        $region57: #{tpu_custom_call.1} parent=55 // pred_check
          %p466 = pneg %p70
        $region58: #{tpu_custom_call.1} parent=55 // pred_check_branch
          %468 = sbr.rel (%p466) target = $region60
        $region59: #{tpu_custom_call.1} parent=55 // pred_region
          %469 = dma.done %s462, 256
        $region60: #{tpu_custom_call.1} parent=55 // pred_fallthru
          _
        // Predicated region
        $region61: #{tpu_custom_call.1} parent=55 // pred_check
          %p470 = pneg %p91
        $region62: #{tpu_custom_call.1} parent=55 // pred_check_branch
          %472 = sbr.rel (%p470) target = $region64
        $region63: #{tpu_custom_call.1} parent=55 // pred_region
          %473 = dma.done [#allocation7], 768
        $region64: #{tpu_custom_call.1} parent=55 // pred_fallthru
          _
        // Predicated region
        $region65: #{tpu_custom_call.1} parent=55 // pred_check
          %p474 = pneg %p112
        $region66: #{tpu_custom_call.1} parent=55 // pred_check_branch
          %476 = sbr.rel (%p474) target = $region68
        $region67: #{tpu_custom_call.1} parent=55 // pred_region
          %477 = dma.done [#allocation7], 32
        $region68: #{tpu_custom_call.1} parent=55 // pred_fallthru
          _
        // Predicated region
        $region69: #{tpu_custom_call.1} parent=55 // pred_check
          %p478 = pneg %p133
        $region70: #{tpu_custom_call.1} parent=55 // pred_check_branch
          %480 = sbr.rel (%p478) target = $region72
        $region71: #{tpu_custom_call.1} parent=55 // pred_region
          %481 = dma.done [#allocation10], 24576
        $region72: #{tpu_custom_call.1} parent=55 // pred_fallthru
          _
        // Predicated region
        $region73: #{tpu_custom_call.1} parent=55 // pred_check
          %p482 = pneg %p154
        $region74: #{tpu_custom_call.1} parent=55 // pred_check_branch
          %484 = sbr.rel (%p482) target = $region76
        $region75: #{tpu_custom_call.1} parent=55 // pred_region
          %485 = dma.done [#allocation10], 64
        $region76: #{tpu_custom_call.1} parent=55 // pred_fallthru
          _
        // Predicated region
        $region77: #{tpu_custom_call.1} parent=55 // pred_check
          %p486 = pneg %p175
        $region78: #{tpu_custom_call.1} parent=55 // pred_check_branch
          %488 = sbr.rel (%p486) target = $region80
        $region79: #{tpu_custom_call.1} parent=55 // pred_region
          %489 = dma.done [#allocation13], 73728
        $region80: #{tpu_custom_call.1} parent=55 // pred_fallthru
          _
        // Predicated region
        $region81: #{tpu_custom_call.1} parent=55 // pred_check
          %p490 = pneg %p196
        $region82: #{tpu_custom_call.1} parent=55 // pred_check_branch
          %492 = sbr.rel (%p490) target = $region84
        $region83: #{tpu_custom_call.1} parent=55 // pred_region
          %493 = dma.done [#allocation13], 96
        $region84: #{tpu_custom_call.1} parent=55 // pred_fallthru
          _
        %s494 = sand.u32 %s37, 1
        %s495 = scalar_lea.sflag [#allocation16], %s494
        %s496 = sand.u32 %s209, 1
        %s497 = smul.addr %s496, 1536
        %s498 = scalar_lea.vmem [#allocation15], %s497
        // Predicated region
        $region85: #{tpu_custom_call.1} parent=55 // pred_check
          %p499 = pneg %p222
        $region86: #{tpu_custom_call.1} parent=55 // pred_check_branch
          %501 = sbr.rel (%p499) target = $region88
        $region87: #{tpu_custom_call.1} parent=55 // pred_region
          %502 = dma.done %s495, 24576
        $region88: #{tpu_custom_call.1} parent=55 // pred_fallthru
          _
        %s503 = sand.u32 %s37, 1
        %s504 = scalar_lea.sflag [#allocation16], %s503
        %s505 = sand.u32 %s235, 1
        %s506 = smul.addr %s505, 4
        %s507 = scalar_lea.vmem [#allocation17], %s506
        // Predicated region
        $region89: #{tpu_custom_call.1} parent=55 // pred_check
          %p508 = pneg %p248
        $region90: #{tpu_custom_call.1} parent=55 // pred_check_branch
          %510 = sbr.rel (%p508) target = $region92
        $region91: #{tpu_custom_call.1} parent=55 // pred_region
          %511 = dma.done %s504, 64
        $region92: #{tpu_custom_call.1} parent=55 // pred_fallthru
          _
        %s512 = sand.u32 %s57, 1
        %s513 = scalar_lea.sflag [#allocation4], %s512
        %s514 = sand.u32 %s57, 1
        %s515 = smul.addr %s514, 16
        %s516 = scalar_lea.vmem [#allocation3], %s515
        %p517 = pneg %p70
        %p518 = pneg %p67
        %p519 = pneg %p91
        %p520 = pneg %p88
        %p521 = pneg %p112
        %p522 = pneg %p109
        %p523 = pneg %p133
        %p524 = pneg %p130
        %p525 = pneg %p154
        %p526 = pneg %p151
        %p527 = pneg %p175
        %p528 = pneg %p172
        %p529 = pneg %p196
        %p530 = pneg %p193
        %s531 = sand.u32 %s37, 1
        %s532 = scalar_lea.sflag [#allocation16], %s531
        %s533 = sand.u32 %s209, 1
        %s534 = smul.addr %s533, 1536
        %s535 = scalar_lea.vmem [#allocation15], %s534
        %p536 = pneg %p222
        %p537 = pneg %p219
        %s538 = sand.u32 %s37, 1
        %s539 = scalar_lea.sflag [#allocation16], %s538
        %s540 = sand.u32 %s235, 1
        %s541 = smul.addr %s540, 4
        %s542 = scalar_lea.vmem [#allocation17], %s541
        %p543 = pneg %p248
        %p544 = pneg %p245
        %p545 = pneg %p276
        %p546 = pneg %p273
        %s547 = sand.u32 %s263, 1
        %s548 = scalar_lea.sflag [#allocation5], %s547
        %s549 = sand.u32 %s263, 1
        %s550 = smul.addr %s549, 64
        %s551 = scalar_lea.vmem [#allocation18], %s550
        %p552 = pneg %p302
        %p553 = pneg %p299
        %s554 = sand.u32 %s289, 1
        %s555 = scalar_lea.sflag [#allocation20], %s554
        %s556 = sand.u32 %s289, 1
        %s557 = smul.addr %s556, 96
        %s558 = scalar_lea.vmem [#allocation19], %s557
        %s559 = smul.u32 2, %s41
        %s560 = smul.u32 4, %s42
        %s561 = smul.u32 4, %s42
        %s562 = smul.u32 2, %s41
        %s563 = smul.u32 4, %s42
        %s564 = smul.u32 2, %s41
        %v566 = vlaneseq
        %v567 = vshrl.u32 %v566, 7
        %v568 = vadd.s32 %v567, 8
        %vm569 = vcmp.lt.s32.totalorder %v567, 0
        %v570 = vsub.s32 0, %v567
        %v571 = vsel %vm569, %v570, %v567
        %v572 = vshrl.u32 %v571, 3
        %v573 = vand.u32 %v571, 7
        %v574 = vsub.s32 0, %v573
        %v575 = vsel %vm569, %v574, %v573
        %vm576 = vcmp.lt.s32.totalorder %v568, 0
        %v577 = vsub.s32 0, %v568
        %v578 = vsel %vm576, %v577, %v568
        %v579 = vshrl.u32 %v578, 3
        %v580 = vand.u32 %v578, 7
        %v581 = vsub.s32 0, %v580
        %v582 = vsel %vm576, %v581, %v580
        %vm583 = vcmp.ne.s32.totalorder %v575, 0
        %vm584 = vcmp.ne.s32.totalorder %v582, 0
        %vm585 = vcmp.lt.s32.totalorder %v575, 0
        %vm586 = vcmp.lt.s32.totalorder %v582, 0
        %vm587 = vmand %vm585, %vm583
        %vm588 = vmand %vm586, %vm584
        %v589 = vadd.s32 %v575, 8
        %v590 = vadd.s32 %v582, 8
        %v591 = vsel %vm587, %v589, %v575
        %v592 = vsel %vm588, %v590, %v582
        %vm593 = vcmp.eq.s32.totalorder %v591, 0
        %vm594 = vcmp.eq.s32.totalorder %v592, 0
        %vm595 = vcmp.eq.s32.totalorder %v591, 7
        %vm596 = vcmp.eq.s32.totalorder %v592, 7
        %p597 = scmp.eq.s32.totalorder %s42, 0
        // Predicated region
        $region93: #{tpu_custom_call.1} parent=55 // pred_check
          %p598 = pneg %p597
        $region94: #{tpu_custom_call.1} parent=55 // pred_check_branch
          %600 = sbr.rel (%p598) target = $region96
        $region95: #{tpu_custom_call.1} parent=55 // pred_region
          %v601 = vld [vmem:[%s465] sm:$0xff]
          %v602 = vld [vmem:[%s465 + $0x8] sm:$0xff]
          %v603 = vrot.slane %v601, 7
          %v604 = vrot.slane %v602, 7
          %vm605 = vcmp.lt.s32.totalorder %v567, 1
          %v606 = vsel %vm605, %v603, %v604
          %v607 = vsel %vm605, %v604, %v603
          %v608 = vsel %vm593, 1, 0
          %v609 = vsel %vm594, 1, 0
          %vm610 = vcmp.eq.s32.totalorder %v608, 1
          %vm611 = vcmp.eq.s32.totalorder %v609, 1
          %v612 = vsel %vm610, 0.0, %v607
          %v613 = vsel %vm611, 0.0, %v606
          %v614 = vrot.slane %v601, 1
          %v615 = vrot.slane %v602, 1
          %vm616 = vcmp.lt.s32.totalorder %v567, 7
          %v617 = vsel %vm616, %v614, %v615
          %v618 = vsel %vm616, %v615, %v614
          %v619 = vsel %vm595, 1, 0
          %v620 = vsel %vm596, 1, 0
          %vm621 = vcmp.eq.s32.totalorder %v619, 1
          %vm622 = vcmp.eq.s32.totalorder %v620, 1
          %v623 = vsel %vm621, 0.0, %v617
          %v624 = vsel %vm622, 0.0, %v618
          %627 = vrot.lane.b32.xlu0 %v601, 16
          %v628 = vpop.permute.xlu0 %627
          %629 = vrot.lane.b32.xlu0 %v602, 16
          %v630 = vpop.permute.xlu0 %629
          %635 = vrot.lane.b32.xlu0 %v623, 32
          %v636 = vpop.permute.xlu0 %635
          %637 = vrot.lane.b32.xlu0 %v624, 32
          %v638 = vpop.permute.xlu0 %637
          %vm641 = vcmask 130048
          %v642 = vsel %vm641, %v612, %v628
          %v643 = vsel %vm641, %v613, %v630
          %vm644 = vcmask 261120
          %v645 = vsel %vm644, %v642, %v636
          %v646 = vsel %vm644, %v643, %v638
          %v647 = vpack.c.bf16 %v646, %v645
          %v648 = vld [vmem:[#allocation6] sm:$0xff]
          %v649 = vld [vmem:[#allocation6 + $0x8] sm:$0xff]
          %v650 = vld [vmem:[#allocation6 + $0x10] sm:$0xff]
          %v651 = vld [vmem:[#allocation6 + $0x18] sm:$0xff]
          %v652 = vld [vmem:[#allocation6 + $0x20] sm:$0xff]
          %v653 = vld [vmem:[#allocation6 + $0x28] sm:$0xff]
          %v654 = vld [vmem:[#allocation8] sm:$0x3]
          %v656 = vlaneseq
          %v657 = vshrl.u32 %v656, 7
          %v658 = vsub.s32 0, %v657
          %v659 = vrot.slane %v654, %v658
          %v660 = vlaneseq
          %v661 = vshrl.u32 %v660, 7
          %v662 = vsub.s32 1, %v661
          %v663 = vrot.slane %v654, %v662
          %v672 = vunpack.c.l.b16 %v648
          %v673 = vunpack.c.h.b16 %v648
          %v674 = vunpack.c.l.b16 %v649
          %v675 = vunpack.c.h.b16 %v649
          %v676 = vunpack.c.l.b16 %v650
          %v677 = vunpack.c.h.b16 %v650
          %v678 = vunpack.c.l.b16 %v651
          %v679 = vunpack.c.h.b16 %v651
          %v680 = vunpack.c.l.b16 %v652
          %v681 = vunpack.c.h.b16 %v652
          %v682 = vunpack.c.l.b16 %v653
          %v683 = vunpack.c.h.b16 %v653
          %v684 = vpack.c.b16 %v674, %v672
          %v685 = vpack.c.b16 %v675, %v673
          %v686 = vpack.c.b16 %v678, %v676
          %v687 = vpack.c.b16 %v679, %v677
          %v688 = vpack.c.b16 %v682, %v680
          %v689 = vpack.c.b16 %v683, %v681
          %vm696 = vcmask 392192
          %v698 = vsel %vm696, %v647, 0
          %700 = vmatprep.subr.bf16.mxu0 %v685
          %701 = vmatpush1.bf16.msra.mxu0 %v684
          %702 = vmatprep.subr.bf16.mxu0 %v687
          %703 = vmatpush1.bf16.msra.mxu0 %v686
          %704 = vmatprep.subr.bf16.mxu0 %v689
          %705 = vmatpush1.bf16.msra.mxu0 %v688
          %706 = vmatprep.subr.bf16.mxu0 0
          %707 = vmatpush1.bf16.msra.mxu0 0
          %708 = vmatprep.subr.bf16.mxu0 0
          %709 = vmatpush1.bf16.msra.mxu0 0
          %710 = vmatprep.subr.bf16.mxu0 0
          %711 = vmatpush1.bf16.msra.mxu0 0
          %712 = vmatprep.subr.bf16.mxu0 0
          %713 = vmatpush1.bf16.msra.mxu0 0
          %714 = vmatprep.subr.bf16.mxu0 0
          %715 = vmatpush1.bf16.msra.mxu0 0
          %716 = vmatprep.subr.bf16.mxu0 0
          %717 = vmatpush1.bf16.msra.mxu0 0
          %718 = vmatprep.subr.bf16.mxu0 0
          %719 = vmatpush1.bf16.msra.mxu0 0
          %720 = vmatprep.subr.bf16.mxu0 0
          %721 = vmatpush1.bf16.msra.mxu0 0
          %722 = vmatprep.subr.bf16.mxu0 0
          %723 = vmatpush1.bf16.msra.mxu0 0
          %724 = vmatprep.subr.bf16.mxu0 0
          %725 = vmatpush1.bf16.msra.mxu0 0
          %726 = vmatprep.subr.bf16.mxu0 0
          %727 = vmatpush1.bf16.msra.mxu0 0
          %728 = vmatprep.subr.bf16.mxu0 0
          %729 = vmatpush1.bf16.msra.mxu0 0
          %730 = vmatprep.subr.bf16.mxu0 0
          %731 = vmatpush1.bf16.msra.mxu0 0
          %732 = vmatprep.mubr.bf16.mxu0 0
          %733 = vmatmul.mubr.bf16.gmra.mrb[0].mxu0 %v698
          %v734 = vpop.f32.mrb[0].mxu0
          %v735 = vadd.f32 %v659, %v734
          %v736 = vpop.f32.mrb[0].mxu0
          %v737 = vadd.f32 %v663, %v736
          %v738 = vpop.f32.mrb[0].mxu0
          %v739 = vadd.f32 %v659, %v738
          %v740 = vpop.f32.mrb[0].mxu0
          %v741 = vadd.f32 %v663, %v740
          %742 = vdwg.mxu0
          %v743 = vmax.f32 %v735, 0.0
          %v744 = vmax.f32 %v737, 0.0
          %v745 = vmax.f32 %v739, 0.0
          %v746 = vmax.f32 %v741, 0.0
          %v747 = vrot.slane %v743, 7
          %v748 = vrot.slane %v744, 7
          %v749 = vrot.slane %v745, 7
          %v750 = vrot.slane %v746, 7
          %v751 = vsel %vm605, %v747, %v749
          %v752 = vsel %vm605, %v748, %v750
          %v753 = vsel %vm605, %v749, %v747
          %v754 = vsel %vm605, %v750, %v748
          %v755 = vsel %vm610, 0.0, %v753
          %v756 = vsel %vm610, 0.0, %v754
          %v757 = vsel %vm611, 0.0, %v751
          %v758 = vsel %vm611, 0.0, %v752
          %v759 = vrot.slane %v743, 1
          %v760 = vrot.slane %v744, 1
          %v761 = vrot.slane %v745, 1
          %v762 = vrot.slane %v746, 1
          %v763 = vsel %vm616, %v759, %v761
          %v764 = vsel %vm616, %v760, %v762
          %v765 = vsel %vm616, %v761, %v759
          %v766 = vsel %vm616, %v762, %v760
          %v767 = vsel %vm621, 0.0, %v763
          %v768 = vsel %vm621, 0.0, %v764
          %v769 = vsel %vm622, 0.0, %v765
          %v770 = vsel %vm622, 0.0, %v766
          %v771 = vpack.c.bf16 %v757, %v755
          %v772 = vpack.c.bf16 %v758, %v756
          %v773 = vpack.c.bf16 %v745, %v743
          %v774 = vpack.c.bf16 %v746, %v744
          %v775 = vpack.c.bf16 %v769, %v767
          %v776 = vpack.c.bf16 %v770, %v768
          %v777 = vld [vmem:[#allocation9] sm:$0xff]
          %v778 = vld [vmem:[#allocation9 + $0x8] sm:$0xff]
          %v779 = vld [vmem:[#allocation9 + $0x10] sm:$0xff]
          %v780 = vld [vmem:[#allocation9 + $0x18] sm:$0xff]
          %v781 = vld [vmem:[#allocation9 + $0x20] sm:$0xff]
          %v782 = vld [vmem:[#allocation9 + $0x28] sm:$0xff]
          %v783 = vld [vmem:[#allocation9 + $0x30] sm:$0xff]
          %v784 = vld [vmem:[#allocation9 + $0x38] sm:$0xff]
          %v785 = vld [vmem:[#allocation9 + $0x40] sm:$0xff]
          %v786 = vld [vmem:[#allocation9 + $0x48] sm:$0xff]
          %v787 = vld [vmem:[#allocation9 + $0x50] sm:$0xff]
          %v788 = vld [vmem:[#allocation9 + $0x58] sm:$0xff]
          %v789 = vld [vmem:[#allocation9 + $0x60] sm:$0xff]
          %v790 = vld [vmem:[#allocation9 + $0x68] sm:$0xff]
          %v791 = vld [vmem:[#allocation9 + $0x70] sm:$0xff]
          %v792 = vld [vmem:[#allocation9 + $0x78] sm:$0xff]
          %v793 = vld [vmem:[#allocation9 + $0x80] sm:$0xff]
          %v794 = vld [vmem:[#allocation9 + $0x88] sm:$0xff]
          %v795 = vld [vmem:[#allocation9 + $0x90] sm:$0xff]
          %v796 = vld [vmem:[#allocation9 + $0x98] sm:$0xff]
          %v797 = vld [vmem:[#allocation9 + $0xa0] sm:$0xff]
          %v798 = vld [vmem:[#allocation9 + $0xa8] sm:$0xff]
          %v799 = vld [vmem:[#allocation9 + $0xb0] sm:$0xff]
          %v800 = vld [vmem:[#allocation9 + $0xb8] sm:$0xff]
          %v801 = vld [vmem:[#allocation9 + $0xc0] sm:$0xff]
          %v802 = vld [vmem:[#allocation9 + $0xc8] sm:$0xff]
          %v803 = vld [vmem:[#allocation9 + $0xd0] sm:$0xff]
          %v804 = vld [vmem:[#allocation9 + $0xd8] sm:$0xff]
          %v805 = vld [vmem:[#allocation9 + $0xe0] sm:$0xff]
          %v806 = vld [vmem:[#allocation9 + $0xe8] sm:$0xff]
          %v807 = vld [vmem:[#allocation9 + $0xf0] sm:$0xff]
          %v808 = vld [vmem:[#allocation9 + $0xf8] sm:$0xff]
          %v809 = vld [vmem:[#allocation9 + $0x100] sm:$0xff]
          %v810 = vld [vmem:[#allocation9 + $0x108] sm:$0xff]
          %v811 = vld [vmem:[#allocation9 + $0x110] sm:$0xff]
          %v812 = vld [vmem:[#allocation9 + $0x118] sm:$0xff]
          %v813 = vld [vmem:[#allocation9 + $0x120] sm:$0xff]
          %v814 = vld [vmem:[#allocation9 + $0x128] sm:$0xff]
          %v815 = vld [vmem:[#allocation9 + $0x130] sm:$0xff]
          %v816 = vld [vmem:[#allocation9 + $0x138] sm:$0xff]
          %v817 = vld [vmem:[#allocation9 + $0x140] sm:$0xff]
          %v818 = vld [vmem:[#allocation9 + $0x148] sm:$0xff]
          %v819 = vld [vmem:[#allocation9 + $0x150] sm:$0xff]
          %v820 = vld [vmem:[#allocation9 + $0x158] sm:$0xff]
          %v821 = vld [vmem:[#allocation9 + $0x160] sm:$0xff]
          %v822 = vld [vmem:[#allocation9 + $0x168] sm:$0xff]
          %v823 = vld [vmem:[#allocation9 + $0x170] sm:$0xff]
          %v824 = vld [vmem:[#allocation9 + $0x178] sm:$0xff]
          %v825 = vld [vmem:[#allocation9 + $0x180] sm:$0xff]
          %v826 = vld [vmem:[#allocation9 + $0x188] sm:$0xff]
          %v827 = vld [vmem:[#allocation9 + $0x190] sm:$0xff]
          %v828 = vld [vmem:[#allocation9 + $0x198] sm:$0xff]
          %v829 = vld [vmem:[#allocation9 + $0x1a0] sm:$0xff]
          %v830 = vld [vmem:[#allocation9 + $0x1a8] sm:$0xff]
          %v831 = vld [vmem:[#allocation9 + $0x1b0] sm:$0xff]
          %v832 = vld [vmem:[#allocation9 + $0x1b8] sm:$0xff]
          %v833 = vld [vmem:[#allocation9 + $0x1c0] sm:$0xff]
          %v834 = vld [vmem:[#allocation9 + $0x1c8] sm:$0xff]
          %v835 = vld [vmem:[#allocation9 + $0x1d0] sm:$0xff]
          %v836 = vld [vmem:[#allocation9 + $0x1d8] sm:$0xff]
          %v837 = vld [vmem:[#allocation9 + $0x1e0] sm:$0xff]
          %v838 = vld [vmem:[#allocation9 + $0x1e8] sm:$0xff]
          %v839 = vld [vmem:[#allocation9 + $0x1f0] sm:$0xff]
          %v840 = vld [vmem:[#allocation9 + $0x1f8] sm:$0xff]
          %v841 = vld [vmem:[#allocation9 + $0x200] sm:$0xff]
          %v842 = vld [vmem:[#allocation9 + $0x208] sm:$0xff]
          %v843 = vld [vmem:[#allocation9 + $0x210] sm:$0xff]
          %v844 = vld [vmem:[#allocation9 + $0x218] sm:$0xff]
          %v845 = vld [vmem:[#allocation9 + $0x220] sm:$0xff]
          %v846 = vld [vmem:[#allocation9 + $0x228] sm:$0xff]
          %v847 = vld [vmem:[#allocation9 + $0x230] sm:$0xff]
          %v848 = vld [vmem:[#allocation9 + $0x238] sm:$0xff]
          %v849 = vld [vmem:[#allocation9 + $0x240] sm:$0xff]
          %v850 = vld [vmem:[#allocation9 + $0x248] sm:$0xff]
          %v851 = vld [vmem:[#allocation9 + $0x250] sm:$0xff]
          %v852 = vld [vmem:[#allocation9 + $0x258] sm:$0xff]
          %v853 = vld [vmem:[#allocation9 + $0x260] sm:$0xff]
          %v854 = vld [vmem:[#allocation9 + $0x268] sm:$0xff]
          %v855 = vld [vmem:[#allocation9 + $0x270] sm:$0xff]
          %v856 = vld [vmem:[#allocation9 + $0x278] sm:$0xff]
          %v857 = vld [vmem:[#allocation9 + $0x280] sm:$0xff]
          %v858 = vld [vmem:[#allocation9 + $0x288] sm:$0xff]
          %v859 = vld [vmem:[#allocation9 + $0x290] sm:$0xff]
          %v860 = vld [vmem:[#allocation9 + $0x298] sm:$0xff]
          %v861 = vld [vmem:[#allocation9 + $0x2a0] sm:$0xff]
          %v862 = vld [vmem:[#allocation9 + $0x2a8] sm:$0xff]
          %v863 = vld [vmem:[#allocation9 + $0x2b0] sm:$0xff]
          %v864 = vld [vmem:[#allocation9 + $0x2b8] sm:$0xff]
          %v865 = vld [vmem:[#allocation9 + $0x2c0] sm:$0xff]
          %v866 = vld [vmem:[#allocation9 + $0x2c8] sm:$0xff]
          %v867 = vld [vmem:[#allocation9 + $0x2d0] sm:$0xff]
          %v868 = vld [vmem:[#allocation9 + $0x2d8] sm:$0xff]
          %v869 = vld [vmem:[#allocation9 + $0x2e0] sm:$0xff]
          %v870 = vld [vmem:[#allocation9 + $0x2e8] sm:$0xff]
          %v871 = vld [vmem:[#allocation9 + $0x2f0] sm:$0xff]
          %v872 = vld [vmem:[#allocation9 + $0x2f8] sm:$0xff]
          %v873 = vld [vmem:[#allocation9 + $0x300] sm:$0xff]
          %v874 = vld [vmem:[#allocation9 + $0x308] sm:$0xff]
          %v875 = vld [vmem:[#allocation9 + $0x310] sm:$0xff]
          %v876 = vld [vmem:[#allocation9 + $0x318] sm:$0xff]
          %v877 = vld [vmem:[#allocation9 + $0x320] sm:$0xff]
          %v878 = vld [vmem:[#allocation9 + $0x328] sm:$0xff]
          %v879 = vld [vmem:[#allocation9 + $0x330] sm:$0xff]
          %v880 = vld [vmem:[#allocation9 + $0x338] sm:$0xff]
          %v881 = vld [vmem:[#allocation9 + $0x340] sm:$0xff]
          %v882 = vld [vmem:[#allocation9 + $0x348] sm:$0xff]
          %v883 = vld [vmem:[#allocation9 + $0x350] sm:$0xff]
          %v884 = vld [vmem:[#allocation9 + $0x358] sm:$0xff]
          %v885 = vld [vmem:[#allocation9 + $0x360] sm:$0xff]
          %v886 = vld [vmem:[#allocation9 + $0x368] sm:$0xff]
          %v887 = vld [vmem:[#allocation9 + $0x370] sm:$0xff]
          %v888 = vld [vmem:[#allocation9 + $0x378] sm:$0xff]
          %v889 = vld [vmem:[#allocation9 + $0x380] sm:$0xff]
          %v890 = vld [vmem:[#allocation9 + $0x388] sm:$0xff]
          %v891 = vld [vmem:[#allocation9 + $0x390] sm:$0xff]
          %v892 = vld [vmem:[#allocation9 + $0x398] sm:$0xff]
          %v893 = vld [vmem:[#allocation9 + $0x3a0] sm:$0xff]
          %v894 = vld [vmem:[#allocation9 + $0x3a8] sm:$0xff]
          %v895 = vld [vmem:[#allocation9 + $0x3b0] sm:$0xff]
          %v896 = vld [vmem:[#allocation9 + $0x3b8] sm:$0xff]
          %v897 = vld [vmem:[#allocation9 + $0x3c0] sm:$0xff]
          %v898 = vld [vmem:[#allocation9 + $0x3c8] sm:$0xff]
          %v899 = vld [vmem:[#allocation9 + $0x3d0] sm:$0xff]
          %v900 = vld [vmem:[#allocation9 + $0x3d8] sm:$0xff]
          %v901 = vld [vmem:[#allocation9 + $0x3e0] sm:$0xff]
          %v902 = vld [vmem:[#allocation9 + $0x3e8] sm:$0xff]
          %v903 = vld [vmem:[#allocation9 + $0x3f0] sm:$0xff]
          %v904 = vld [vmem:[#allocation9 + $0x3f8] sm:$0xff]
          %v905 = vld [vmem:[#allocation9 + $0x400] sm:$0xff]
          %v906 = vld [vmem:[#allocation9 + $0x408] sm:$0xff]
          %v907 = vld [vmem:[#allocation9 + $0x410] sm:$0xff]
          %v908 = vld [vmem:[#allocation9 + $0x418] sm:$0xff]
          %v909 = vld [vmem:[#allocation9 + $0x420] sm:$0xff]
          %v910 = vld [vmem:[#allocation9 + $0x428] sm:$0xff]
          %v911 = vld [vmem:[#allocation9 + $0x430] sm:$0xff]
          %v912 = vld [vmem:[#allocation9 + $0x438] sm:$0xff]
          %v913 = vld [vmem:[#allocation9 + $0x440] sm:$0xff]
          %v914 = vld [vmem:[#allocation9 + $0x448] sm:$0xff]
          %v915 = vld [vmem:[#allocation9 + $0x450] sm:$0xff]
          %v916 = vld [vmem:[#allocation9 + $0x458] sm:$0xff]
          %v917 = vld [vmem:[#allocation9 + $0x460] sm:$0xff]
          %v918 = vld [vmem:[#allocation9 + $0x468] sm:$0xff]
          %v919 = vld [vmem:[#allocation9 + $0x470] sm:$0xff]
          %v920 = vld [vmem:[#allocation9 + $0x478] sm:$0xff]
          %v921 = vld [vmem:[#allocation9 + $0x480] sm:$0xff]
          %v922 = vld [vmem:[#allocation9 + $0x488] sm:$0xff]
          %v923 = vld [vmem:[#allocation9 + $0x490] sm:$0xff]
          %v924 = vld [vmem:[#allocation9 + $0x498] sm:$0xff]
          %v925 = vld [vmem:[#allocation9 + $0x4a0] sm:$0xff]
          %v926 = vld [vmem:[#allocation9 + $0x4a8] sm:$0xff]
          %v927 = vld [vmem:[#allocation9 + $0x4b0] sm:$0xff]
          %v928 = vld [vmem:[#allocation9 + $0x4b8] sm:$0xff]
          %v929 = vld [vmem:[#allocation9 + $0x4c0] sm:$0xff]
          %v930 = vld [vmem:[#allocation9 + $0x4c8] sm:$0xff]
          %v931 = vld [vmem:[#allocation9 + $0x4d0] sm:$0xff]
          %v932 = vld [vmem:[#allocation9 + $0x4d8] sm:$0xff]
          %v933 = vld [vmem:[#allocation9 + $0x4e0] sm:$0xff]
          %v934 = vld [vmem:[#allocation9 + $0x4e8] sm:$0xff]
          %v935 = vld [vmem:[#allocation9 + $0x4f0] sm:$0xff]
          %v936 = vld [vmem:[#allocation9 + $0x4f8] sm:$0xff]
          %v937 = vld [vmem:[#allocation9 + $0x500] sm:$0xff]
          %v938 = vld [vmem:[#allocation9 + $0x508] sm:$0xff]
          %v939 = vld [vmem:[#allocation9 + $0x510] sm:$0xff]
          %v940 = vld [vmem:[#allocation9 + $0x518] sm:$0xff]
          %v941 = vld [vmem:[#allocation9 + $0x520] sm:$0xff]
          %v942 = vld [vmem:[#allocation9 + $0x528] sm:$0xff]
          %v943 = vld [vmem:[#allocation9 + $0x530] sm:$0xff]
          %v944 = vld [vmem:[#allocation9 + $0x538] sm:$0xff]
          %v945 = vld [vmem:[#allocation9 + $0x540] sm:$0xff]
          %v946 = vld [vmem:[#allocation9 + $0x548] sm:$0xff]
          %v947 = vld [vmem:[#allocation9 + $0x550] sm:$0xff]
          %v948 = vld [vmem:[#allocation9 + $0x558] sm:$0xff]
          %v949 = vld [vmem:[#allocation9 + $0x560] sm:$0xff]
          %v950 = vld [vmem:[#allocation9 + $0x568] sm:$0xff]
          %v951 = vld [vmem:[#allocation9 + $0x570] sm:$0xff]
          %v952 = vld [vmem:[#allocation9 + $0x578] sm:$0xff]
          %v953 = vld [vmem:[#allocation9 + $0x580] sm:$0xff]
          %v954 = vld [vmem:[#allocation9 + $0x588] sm:$0xff]
          %v955 = vld [vmem:[#allocation9 + $0x590] sm:$0xff]
          %v956 = vld [vmem:[#allocation9 + $0x598] sm:$0xff]
          %v957 = vld [vmem:[#allocation9 + $0x5a0] sm:$0xff]
          %v958 = vld [vmem:[#allocation9 + $0x5a8] sm:$0xff]
          %v959 = vld [vmem:[#allocation9 + $0x5b0] sm:$0xff]
          %v960 = vld [vmem:[#allocation9 + $0x5b8] sm:$0xff]
          %v961 = vld [vmem:[#allocation9 + $0x5c0] sm:$0xff]
          %v962 = vld [vmem:[#allocation9 + $0x5c8] sm:$0xff]
          %v963 = vld [vmem:[#allocation9 + $0x5d0] sm:$0xff]
          %v964 = vld [vmem:[#allocation9 + $0x5d8] sm:$0xff]
          %v965 = vld [vmem:[#allocation9 + $0x5e0] sm:$0xff]
          %v966 = vld [vmem:[#allocation9 + $0x5e8] sm:$0xff]
          %v967 = vld [vmem:[#allocation9 + $0x5f0] sm:$0xff]
          %v968 = vld [vmem:[#allocation9 + $0x5f8] sm:$0xff]
          %v969 = vld [vmem:[#allocation11] sm:$0xf]
          %v971 = vlaneseq
          %v972 = vshrl.u32 %v971, 7
          %v973 = vsub.s32 0, %v972
          %v974 = vrot.slane %v969, %v973
          %v975 = vlaneseq
          %v976 = vshrl.u32 %v975, 7
          %v977 = vsub.s32 1, %v976
          %v978 = vrot.slane %v969, %v977
          %v979 = vlaneseq
          %v980 = vshrl.u32 %v979, 7
          %v981 = vsub.s32 2, %v980
          %v982 = vrot.slane %v969, %v981
          %v983 = vlaneseq
          %v984 = vshrl.u32 %v983, 7
          %v985 = vsub.s32 3, %v984
          %v986 = vrot.slane %v969, %v985
          %v1183 = vunpack.c.l.b16 %v777
          %v1184 = vunpack.c.h.b16 %v777
          %v1185 = vunpack.c.l.b16 %v778
          %v1186 = vunpack.c.h.b16 %v778
          %v1187 = vunpack.c.l.b16 %v779
          %v1188 = vunpack.c.h.b16 %v779
          %v1189 = vunpack.c.l.b16 %v780
          %v1190 = vunpack.c.h.b16 %v780
          %v1191 = vunpack.c.l.b16 %v781
          %v1192 = vunpack.c.h.b16 %v781
          %v1193 = vunpack.c.l.b16 %v782
          %v1194 = vunpack.c.h.b16 %v782
          %v1195 = vunpack.c.l.b16 %v783
          %v1196 = vunpack.c.h.b16 %v783
          %v1197 = vunpack.c.l.b16 %v784
          %v1198 = vunpack.c.h.b16 %v784
          %v1199 = vunpack.c.l.b16 %v785
          %v1200 = vunpack.c.h.b16 %v785
          %v1201 = vunpack.c.l.b16 %v786
          %v1202 = vunpack.c.h.b16 %v786
          %v1203 = vunpack.c.l.b16 %v787
          %v1204 = vunpack.c.h.b16 %v787
          %v1205 = vunpack.c.l.b16 %v788
          %v1206 = vunpack.c.h.b16 %v788
          %v1207 = vunpack.c.l.b16 %v789
          %v1208 = vunpack.c.h.b16 %v789
          %v1209 = vunpack.c.l.b16 %v790
          %v1210 = vunpack.c.h.b16 %v790
          %v1211 = vunpack.c.l.b16 %v791
          %v1212 = vunpack.c.h.b16 %v791
          %v1213 = vunpack.c.l.b16 %v792
          %v1214 = vunpack.c.h.b16 %v792
          %v1215 = vunpack.c.l.b16 %v793
          %v1216 = vunpack.c.h.b16 %v793
          %v1217 = vunpack.c.l.b16 %v794
          %v1218 = vunpack.c.h.b16 %v794
          %v1219 = vunpack.c.l.b16 %v795
          %v1220 = vunpack.c.h.b16 %v795
          %v1221 = vunpack.c.l.b16 %v796
          %v1222 = vunpack.c.h.b16 %v796
          %v1223 = vunpack.c.l.b16 %v797
          %v1224 = vunpack.c.h.b16 %v797
          %v1225 = vunpack.c.l.b16 %v798
          %v1226 = vunpack.c.h.b16 %v798
          %v1227 = vunpack.c.l.b16 %v799
          %v1228 = vunpack.c.h.b16 %v799
          %v1229 = vunpack.c.l.b16 %v800
          %v1230 = vunpack.c.h.b16 %v800
          %v1231 = vunpack.c.l.b16 %v801
          %v1232 = vunpack.c.h.b16 %v801
          %v1233 = vunpack.c.l.b16 %v802
          %v1234 = vunpack.c.h.b16 %v802
          %v1235 = vunpack.c.l.b16 %v803
          %v1236 = vunpack.c.h.b16 %v803
          %v1237 = vunpack.c.l.b16 %v804
          %v1238 = vunpack.c.h.b16 %v804
          %v1239 = vunpack.c.l.b16 %v805
          %v1240 = vunpack.c.h.b16 %v805
          %v1241 = vunpack.c.l.b16 %v806
          %v1242 = vunpack.c.h.b16 %v806
          %v1243 = vunpack.c.l.b16 %v807
          %v1244 = vunpack.c.h.b16 %v807
          %v1245 = vunpack.c.l.b16 %v808
          %v1246 = vunpack.c.h.b16 %v808
          %v1247 = vunpack.c.l.b16 %v809
          %v1248 = vunpack.c.h.b16 %v809
          %v1249 = vunpack.c.l.b16 %v810
          %v1250 = vunpack.c.h.b16 %v810
          %v1251 = vunpack.c.l.b16 %v811
          %v1252 = vunpack.c.h.b16 %v811
          %v1253 = vunpack.c.l.b16 %v812
          %v1254 = vunpack.c.h.b16 %v812
          %v1255 = vunpack.c.l.b16 %v813
          %v1256 = vunpack.c.h.b16 %v813
          %v1257 = vunpack.c.l.b16 %v814
          %v1258 = vunpack.c.h.b16 %v814
          %v1259 = vunpack.c.l.b16 %v815
          %v1260 = vunpack.c.h.b16 %v815
          %v1261 = vunpack.c.l.b16 %v816
          %v1262 = vunpack.c.h.b16 %v816
          %v1263 = vunpack.c.l.b16 %v817
          %v1264 = vunpack.c.h.b16 %v817
          %v1265 = vunpack.c.l.b16 %v818
          %v1266 = vunpack.c.h.b16 %v818
          %v1267 = vunpack.c.l.b16 %v819
          %v1268 = vunpack.c.h.b16 %v819
          %v1269 = vunpack.c.l.b16 %v820
          %v1270 = vunpack.c.h.b16 %v820
          %v1271 = vunpack.c.l.b16 %v821
          %v1272 = vunpack.c.h.b16 %v821
          %v1273 = vunpack.c.l.b16 %v822
          %v1274 = vunpack.c.h.b16 %v822
          %v1275 = vunpack.c.l.b16 %v823
          %v1276 = vunpack.c.h.b16 %v823
          %v1277 = vunpack.c.l.b16 %v824
          %v1278 = vunpack.c.h.b16 %v824
          %v1279 = vunpack.c.l.b16 %v825
          %v1280 = vunpack.c.h.b16 %v825
          %v1281 = vunpack.c.l.b16 %v826
          %v1282 = vunpack.c.h.b16 %v826
          %v1283 = vunpack.c.l.b16 %v827
          %v1284 = vunpack.c.h.b16 %v827
          %v1285 = vunpack.c.l.b16 %v828
          %v1286 = vunpack.c.h.b16 %v828
          %v1287 = vunpack.c.l.b16 %v829
          %v1288 = vunpack.c.h.b16 %v829
          %v1289 = vunpack.c.l.b16 %v830
          %v1290 = vunpack.c.h.b16 %v830
          %v1291 = vunpack.c.l.b16 %v831
          %v1292 = vunpack.c.h.b16 %v831
          %v1293 = vunpack.c.l.b16 %v832
          %v1294 = vunpack.c.h.b16 %v832
          %v1295 = vunpack.c.l.b16 %v833
          %v1296 = vunpack.c.h.b16 %v833
          %v1297 = vunpack.c.l.b16 %v834
          %v1298 = vunpack.c.h.b16 %v834
          %v1299 = vunpack.c.l.b16 %v835
          %v1300 = vunpack.c.h.b16 %v835
          %v1301 = vunpack.c.l.b16 %v836
          %v1302 = vunpack.c.h.b16 %v836
          %v1303 = vunpack.c.l.b16 %v837
          %v1304 = vunpack.c.h.b16 %v837
          %v1305 = vunpack.c.l.b16 %v838
          %v1306 = vunpack.c.h.b16 %v838
          %v1307 = vunpack.c.l.b16 %v839
          %v1308 = vunpack.c.h.b16 %v839
          %v1309 = vunpack.c.l.b16 %v840
          %v1310 = vunpack.c.h.b16 %v840
          %v1311 = vunpack.c.l.b16 %v841
          %v1312 = vunpack.c.h.b16 %v841
          %v1313 = vunpack.c.l.b16 %v842
          %v1314 = vunpack.c.h.b16 %v842
          %v1315 = vunpack.c.l.b16 %v843
          %v1316 = vunpack.c.h.b16 %v843
          %v1317 = vunpack.c.l.b16 %v844
          %v1318 = vunpack.c.h.b16 %v844
          %v1319 = vunpack.c.l.b16 %v845
          %v1320 = vunpack.c.h.b16 %v845
          %v1321 = vunpack.c.l.b16 %v846
          %v1322 = vunpack.c.h.b16 %v846
          %v1323 = vunpack.c.l.b16 %v847
          %v1324 = vunpack.c.h.b16 %v847
          %v1325 = vunpack.c.l.b16 %v848
          %v1326 = vunpack.c.h.b16 %v848
          %v1327 = vunpack.c.l.b16 %v849
          %v1328 = vunpack.c.h.b16 %v849
          %v1329 = vunpack.c.l.b16 %v850
          %v1330 = vunpack.c.h.b16 %v850
          %v1331 = vunpack.c.l.b16 %v851
          %v1332 = vunpack.c.h.b16 %v851
          %v1333 = vunpack.c.l.b16 %v852
          %v1334 = vunpack.c.h.b16 %v852
          %v1335 = vunpack.c.l.b16 %v853
          %v1336 = vunpack.c.h.b16 %v853
          %v1337 = vunpack.c.l.b16 %v854
          %v1338 = vunpack.c.h.b16 %v854
          %v1339 = vunpack.c.l.b16 %v855
          %v1340 = vunpack.c.h.b16 %v855
          %v1341 = vunpack.c.l.b16 %v856
          %v1342 = vunpack.c.h.b16 %v856
          %v1343 = vunpack.c.l.b16 %v857
          %v1344 = vunpack.c.h.b16 %v857
          %v1345 = vunpack.c.l.b16 %v858
          %v1346 = vunpack.c.h.b16 %v858
          %v1347 = vunpack.c.l.b16 %v859
          %v1348 = vunpack.c.h.b16 %v859
          %v1349 = vunpack.c.l.b16 %v860
          %v1350 = vunpack.c.h.b16 %v860
          %v1351 = vunpack.c.l.b16 %v861
          %v1352 = vunpack.c.h.b16 %v861
          %v1353 = vunpack.c.l.b16 %v862
          %v1354 = vunpack.c.h.b16 %v862
          %v1355 = vunpack.c.l.b16 %v863
          %v1356 = vunpack.c.h.b16 %v863
          %v1357 = vunpack.c.l.b16 %v864
          %v1358 = vunpack.c.h.b16 %v864
          %v1359 = vunpack.c.l.b16 %v865
          %v1360 = vunpack.c.h.b16 %v865
          %v1361 = vunpack.c.l.b16 %v866
          %v1362 = vunpack.c.h.b16 %v866
          %v1363 = vunpack.c.l.b16 %v867
          %v1364 = vunpack.c.h.b16 %v867
          %v1365 = vunpack.c.l.b16 %v868
          %v1366 = vunpack.c.h.b16 %v868
          %v1367 = vunpack.c.l.b16 %v869
          %v1368 = vunpack.c.h.b16 %v869
          %v1369 = vunpack.c.l.b16 %v870
          %v1370 = vunpack.c.h.b16 %v870
          %v1371 = vunpack.c.l.b16 %v871
          %v1372 = vunpack.c.h.b16 %v871
          %v1373 = vunpack.c.l.b16 %v872
          %v1374 = vunpack.c.h.b16 %v872
          %v1375 = vunpack.c.l.b16 %v873
          %v1376 = vunpack.c.h.b16 %v873
          %v1377 = vunpack.c.l.b16 %v874
          %v1378 = vunpack.c.h.b16 %v874
          %v1379 = vunpack.c.l.b16 %v875
          %v1380 = vunpack.c.h.b16 %v875
          %v1381 = vunpack.c.l.b16 %v876
          %v1382 = vunpack.c.h.b16 %v876
          %v1383 = vunpack.c.l.b16 %v877
          %v1384 = vunpack.c.h.b16 %v877
          %v1385 = vunpack.c.l.b16 %v878
          %v1386 = vunpack.c.h.b16 %v878
          %v1387 = vunpack.c.l.b16 %v879
          %v1388 = vunpack.c.h.b16 %v879
          %v1389 = vunpack.c.l.b16 %v880
          %v1390 = vunpack.c.h.b16 %v880
          %v1391 = vunpack.c.l.b16 %v881
          %v1392 = vunpack.c.h.b16 %v881
          %v1393 = vunpack.c.l.b16 %v882
          %v1394 = vunpack.c.h.b16 %v882
          %v1395 = vunpack.c.l.b16 %v883
          %v1396 = vunpack.c.h.b16 %v883
          %v1397 = vunpack.c.l.b16 %v884
          %v1398 = vunpack.c.h.b16 %v884
          %v1399 = vunpack.c.l.b16 %v885
          %v1400 = vunpack.c.h.b16 %v885
          %v1401 = vunpack.c.l.b16 %v886
          %v1402 = vunpack.c.h.b16 %v886
          %v1403 = vunpack.c.l.b16 %v887
          %v1404 = vunpack.c.h.b16 %v887
          %v1405 = vunpack.c.l.b16 %v888
          %v1406 = vunpack.c.h.b16 %v888
          %v1407 = vunpack.c.l.b16 %v889
          %v1408 = vunpack.c.h.b16 %v889
          %v1409 = vunpack.c.l.b16 %v890
          %v1410 = vunpack.c.h.b16 %v890
          %v1411 = vunpack.c.l.b16 %v891
          %v1412 = vunpack.c.h.b16 %v891
          %v1413 = vunpack.c.l.b16 %v892
          %v1414 = vunpack.c.h.b16 %v892
          %v1415 = vunpack.c.l.b16 %v893
          %v1416 = vunpack.c.h.b16 %v893
          %v1417 = vunpack.c.l.b16 %v894
          %v1418 = vunpack.c.h.b16 %v894
          %v1419 = vunpack.c.l.b16 %v895
          %v1420 = vunpack.c.h.b16 %v895
          %v1421 = vunpack.c.l.b16 %v896
          %v1422 = vunpack.c.h.b16 %v896
          %v1423 = vunpack.c.l.b16 %v897
          %v1424 = vunpack.c.h.b16 %v897
          %v1425 = vunpack.c.l.b16 %v898
          %v1426 = vunpack.c.h.b16 %v898
          %v1427 = vunpack.c.l.b16 %v899
          %v1428 = vunpack.c.h.b16 %v899
          %v1429 = vunpack.c.l.b16 %v900
          %v1430 = vunpack.c.h.b16 %v900
          %v1431 = vunpack.c.l.b16 %v901
          %v1432 = vunpack.c.h.b16 %v901
          %v1433 = vunpack.c.l.b16 %v902
          %v1434 = vunpack.c.h.b16 %v902
          %v1435 = vunpack.c.l.b16 %v903
          %v1436 = vunpack.c.h.b16 %v903
          %v1437 = vunpack.c.l.b16 %v904
          %v1438 = vunpack.c.h.b16 %v904
          %v1439 = vunpack.c.l.b16 %v905
          %v1440 = vunpack.c.h.b16 %v905
          %v1441 = vunpack.c.l.b16 %v906
          %v1442 = vunpack.c.h.b16 %v906
          %v1443 = vunpack.c.l.b16 %v907
          %v1444 = vunpack.c.h.b16 %v907
          %v1445 = vunpack.c.l.b16 %v908
          %v1446 = vunpack.c.h.b16 %v908
          %v1447 = vunpack.c.l.b16 %v909
          %v1448 = vunpack.c.h.b16 %v909
          %v1449 = vunpack.c.l.b16 %v910
          %v1450 = vunpack.c.h.b16 %v910
          %v1451 = vunpack.c.l.b16 %v911
          %v1452 = vunpack.c.h.b16 %v911
          %v1453 = vunpack.c.l.b16 %v912
          %v1454 = vunpack.c.h.b16 %v912
          %v1455 = vunpack.c.l.b16 %v913
          %v1456 = vunpack.c.h.b16 %v913
          %v1457 = vunpack.c.l.b16 %v914
          %v1458 = vunpack.c.h.b16 %v914
          %v1459 = vunpack.c.l.b16 %v915
          %v1460 = vunpack.c.h.b16 %v915
          %v1461 = vunpack.c.l.b16 %v916
          %v1462 = vunpack.c.h.b16 %v916
          %v1463 = vunpack.c.l.b16 %v917
          %v1464 = vunpack.c.h.b16 %v917
          %v1465 = vunpack.c.l.b16 %v918
          %v1466 = vunpack.c.h.b16 %v918
          %v1467 = vunpack.c.l.b16 %v919
          %v1468 = vunpack.c.h.b16 %v919
          %v1469 = vunpack.c.l.b16 %v920
          %v1470 = vunpack.c.h.b16 %v920
          %v1471 = vunpack.c.l.b16 %v921
          %v1472 = vunpack.c.h.b16 %v921
          %v1473 = vunpack.c.l.b16 %v922
          %v1474 = vunpack.c.h.b16 %v922
          %v1475 = vunpack.c.l.b16 %v923
          %v1476 = vunpack.c.h.b16 %v923
          %v1477 = vunpack.c.l.b16 %v924
          %v1478 = vunpack.c.h.b16 %v924
          %v1479 = vunpack.c.l.b16 %v925
          %v1480 = vunpack.c.h.b16 %v925
          %v1481 = vunpack.c.l.b16 %v926
          %v1482 = vunpack.c.h.b16 %v926
          %v1483 = vunpack.c.l.b16 %v927
          %v1484 = vunpack.c.h.b16 %v927
          %v1485 = vunpack.c.l.b16 %v928
          %v1486 = vunpack.c.h.b16 %v928
          %v1487 = vunpack.c.l.b16 %v929
          %v1488 = vunpack.c.h.b16 %v929
          %v1489 = vunpack.c.l.b16 %v930
          %v1490 = vunpack.c.h.b16 %v930
          %v1491 = vunpack.c.l.b16 %v931
          %v1492 = vunpack.c.h.b16 %v931
          %v1493 = vunpack.c.l.b16 %v932
          %v1494 = vunpack.c.h.b16 %v932
          %v1495 = vunpack.c.l.b16 %v933
          %v1496 = vunpack.c.h.b16 %v933
          %v1497 = vunpack.c.l.b16 %v934
          %v1498 = vunpack.c.h.b16 %v934
          %v1499 = vunpack.c.l.b16 %v935
          %v1500 = vunpack.c.h.b16 %v935
          %v1501 = vunpack.c.l.b16 %v936
          %v1502 = vunpack.c.h.b16 %v936
          %v1503 = vunpack.c.l.b16 %v937
          %v1504 = vunpack.c.h.b16 %v937
          %v1505 = vunpack.c.l.b16 %v938
          %v1506 = vunpack.c.h.b16 %v938
          %v1507 = vunpack.c.l.b16 %v939
          %v1508 = vunpack.c.h.b16 %v939
          %v1509 = vunpack.c.l.b16 %v940
          %v1510 = vunpack.c.h.b16 %v940
          %v1511 = vunpack.c.l.b16 %v941
          %v1512 = vunpack.c.h.b16 %v941
          %v1513 = vunpack.c.l.b16 %v942
          %v1514 = vunpack.c.h.b16 %v942
          %v1515 = vunpack.c.l.b16 %v943
          %v1516 = vunpack.c.h.b16 %v943
          %v1517 = vunpack.c.l.b16 %v944
          %v1518 = vunpack.c.h.b16 %v944
          %v1519 = vunpack.c.l.b16 %v945
          %v1520 = vunpack.c.h.b16 %v945
          %v1521 = vunpack.c.l.b16 %v946
          %v1522 = vunpack.c.h.b16 %v946
          %v1523 = vunpack.c.l.b16 %v947
          %v1524 = vunpack.c.h.b16 %v947
          %v1525 = vunpack.c.l.b16 %v948
          %v1526 = vunpack.c.h.b16 %v948
          %v1527 = vunpack.c.l.b16 %v949
          %v1528 = vunpack.c.h.b16 %v949
          %v1529 = vunpack.c.l.b16 %v950
          %v1530 = vunpack.c.h.b16 %v950
          %v1531 = vunpack.c.l.b16 %v951
          %v1532 = vunpack.c.h.b16 %v951
          %v1533 = vunpack.c.l.b16 %v952
          %v1534 = vunpack.c.h.b16 %v952
          %v1535 = vunpack.c.l.b16 %v953
          %v1536 = vunpack.c.h.b16 %v953
          %v1537 = vunpack.c.l.b16 %v954
          %v1538 = vunpack.c.h.b16 %v954
          %v1539 = vunpack.c.l.b16 %v955
          %v1540 = vunpack.c.h.b16 %v955
          %v1541 = vunpack.c.l.b16 %v956
          %v1542 = vunpack.c.h.b16 %v956
          %v1543 = vunpack.c.l.b16 %v957
          %v1544 = vunpack.c.h.b16 %v957
          %v1545 = vunpack.c.l.b16 %v958
          %v1546 = vunpack.c.h.b16 %v958
          %v1547 = vunpack.c.l.b16 %v959
          %v1548 = vunpack.c.h.b16 %v959
          %v1549 = vunpack.c.l.b16 %v960
          %v1550 = vunpack.c.h.b16 %v960
          %v1551 = vunpack.c.l.b16 %v961
          %v1552 = vunpack.c.h.b16 %v961
          %v1553 = vunpack.c.l.b16 %v962
          %v1554 = vunpack.c.h.b16 %v962
          %v1555 = vunpack.c.l.b16 %v963
          %v1556 = vunpack.c.h.b16 %v963
          %v1557 = vunpack.c.l.b16 %v964
          %v1558 = vunpack.c.h.b16 %v964
          %v1559 = vunpack.c.l.b16 %v965
          %v1560 = vunpack.c.h.b16 %v965
          %v1561 = vunpack.c.l.b16 %v966
          %v1562 = vunpack.c.h.b16 %v966
          %v1563 = vunpack.c.l.b16 %v967
          %v1564 = vunpack.c.h.b16 %v967
          %v1565 = vunpack.c.l.b16 %v968
          %v1566 = vunpack.c.h.b16 %v968
          %v1567 = vpack.c.b16 %v1187, %v1183
          %v1568 = vpack.c.b16 %v1188, %v1184
          %v1569 = vpack.c.b16 %v1189, %v1185
          %v1570 = vpack.c.b16 %v1190, %v1186
          %v1571 = vpack.c.b16 %v1195, %v1191
          %v1572 = vpack.c.b16 %v1196, %v1192
          %v1573 = vpack.c.b16 %v1197, %v1193
          %v1574 = vpack.c.b16 %v1198, %v1194
          %v1575 = vpack.c.b16 %v1203, %v1199
          %v1576 = vpack.c.b16 %v1204, %v1200
          %v1577 = vpack.c.b16 %v1205, %v1201
          %v1578 = vpack.c.b16 %v1206, %v1202
          %v1579 = vpack.c.b16 %v1211, %v1207
          %v1580 = vpack.c.b16 %v1212, %v1208
          %v1581 = vpack.c.b16 %v1213, %v1209
          %v1582 = vpack.c.b16 %v1214, %v1210
          %v1583 = vpack.c.b16 %v1219, %v1215
          %v1584 = vpack.c.b16 %v1220, %v1216
          %v1585 = vpack.c.b16 %v1221, %v1217
          %v1586 = vpack.c.b16 %v1222, %v1218
          %v1587 = vpack.c.b16 %v1227, %v1223
          %v1588 = vpack.c.b16 %v1228, %v1224
          %v1589 = vpack.c.b16 %v1229, %v1225
          %v1590 = vpack.c.b16 %v1230, %v1226
          %v1591 = vpack.c.b16 %v1235, %v1231
          %v1592 = vpack.c.b16 %v1236, %v1232
          %v1593 = vpack.c.b16 %v1237, %v1233
          %v1594 = vpack.c.b16 %v1238, %v1234
          %v1595 = vpack.c.b16 %v1243, %v1239
          %v1596 = vpack.c.b16 %v1244, %v1240
          %v1597 = vpack.c.b16 %v1245, %v1241
          %v1598 = vpack.c.b16 %v1246, %v1242
          %v1599 = vpack.c.b16 %v1251, %v1247
          %v1600 = vpack.c.b16 %v1252, %v1248
          %v1601 = vpack.c.b16 %v1253, %v1249
          %v1602 = vpack.c.b16 %v1254, %v1250
          %v1603 = vpack.c.b16 %v1259, %v1255
          %v1604 = vpack.c.b16 %v1260, %v1256
          %v1605 = vpack.c.b16 %v1261, %v1257
          %v1606 = vpack.c.b16 %v1262, %v1258
          %v1607 = vpack.c.b16 %v1267, %v1263
          %v1608 = vpack.c.b16 %v1268, %v1264
          %v1609 = vpack.c.b16 %v1269, %v1265
          %v1610 = vpack.c.b16 %v1270, %v1266
          %v1611 = vpack.c.b16 %v1275, %v1271
          %v1612 = vpack.c.b16 %v1276, %v1272
          %v1613 = vpack.c.b16 %v1277, %v1273
          %v1614 = vpack.c.b16 %v1278, %v1274
          %v1615 = vpack.c.b16 %v1283, %v1279
          %v1616 = vpack.c.b16 %v1284, %v1280
          %v1617 = vpack.c.b16 %v1285, %v1281
          %v1618 = vpack.c.b16 %v1286, %v1282
          %v1619 = vpack.c.b16 %v1291, %v1287
          %v1620 = vpack.c.b16 %v1292, %v1288
          %v1621 = vpack.c.b16 %v1293, %v1289
          %v1622 = vpack.c.b16 %v1294, %v1290
          %v1623 = vpack.c.b16 %v1299, %v1295
          %v1624 = vpack.c.b16 %v1300, %v1296
          %v1625 = vpack.c.b16 %v1301, %v1297
          %v1626 = vpack.c.b16 %v1302, %v1298
          %v1627 = vpack.c.b16 %v1307, %v1303
          %v1628 = vpack.c.b16 %v1308, %v1304
          %v1629 = vpack.c.b16 %v1309, %v1305
          %v1630 = vpack.c.b16 %v1310, %v1306
          %v1631 = vpack.c.b16 %v1315, %v1311
          %v1632 = vpack.c.b16 %v1316, %v1312
          %v1633 = vpack.c.b16 %v1317, %v1313
          %v1634 = vpack.c.b16 %v1318, %v1314
          %v1635 = vpack.c.b16 %v1323, %v1319
          %v1636 = vpack.c.b16 %v1324, %v1320
          %v1637 = vpack.c.b16 %v1325, %v1321
          %v1638 = vpack.c.b16 %v1326, %v1322
          %v1639 = vpack.c.b16 %v1331, %v1327
          %v1640 = vpack.c.b16 %v1332, %v1328
          %v1641 = vpack.c.b16 %v1333, %v1329
          %v1642 = vpack.c.b16 %v1334, %v1330
          %v1643 = vpack.c.b16 %v1339, %v1335
          %v1644 = vpack.c.b16 %v1340, %v1336
          %v1645 = vpack.c.b16 %v1341, %v1337
          %v1646 = vpack.c.b16 %v1342, %v1338
          %v1647 = vpack.c.b16 %v1347, %v1343
          %v1648 = vpack.c.b16 %v1348, %v1344
          %v1649 = vpack.c.b16 %v1349, %v1345
          %v1650 = vpack.c.b16 %v1350, %v1346
          %v1651 = vpack.c.b16 %v1355, %v1351
          %v1652 = vpack.c.b16 %v1356, %v1352
          %v1653 = vpack.c.b16 %v1357, %v1353
          %v1654 = vpack.c.b16 %v1358, %v1354
          %v1655 = vpack.c.b16 %v1363, %v1359
          %v1656 = vpack.c.b16 %v1364, %v1360
          %v1657 = vpack.c.b16 %v1365, %v1361
          %v1658 = vpack.c.b16 %v1366, %v1362
          %v1659 = vpack.c.b16 %v1371, %v1367
          %v1660 = vpack.c.b16 %v1372, %v1368
          %v1661 = vpack.c.b16 %v1373, %v1369
          %v1662 = vpack.c.b16 %v1374, %v1370
          %v1663 = vpack.c.b16 %v1379, %v1375
          %v1664 = vpack.c.b16 %v1380, %v1376
          %v1665 = vpack.c.b16 %v1381, %v1377
          %v1666 = vpack.c.b16 %v1382, %v1378
          %v1667 = vpack.c.b16 %v1387, %v1383
          %v1668 = vpack.c.b16 %v1388, %v1384
          %v1669 = vpack.c.b16 %v1389, %v1385
          %v1670 = vpack.c.b16 %v1390, %v1386
          %v1671 = vpack.c.b16 %v1395, %v1391
          %v1672 = vpack.c.b16 %v1396, %v1392
          %v1673 = vpack.c.b16 %v1397, %v1393
          %v1674 = vpack.c.b16 %v1398, %v1394
          %v1675 = vpack.c.b16 %v1403, %v1399
          %v1676 = vpack.c.b16 %v1404, %v1400
          %v1677 = vpack.c.b16 %v1405, %v1401
          %v1678 = vpack.c.b16 %v1406, %v1402
          %v1679 = vpack.c.b16 %v1411, %v1407
          %v1680 = vpack.c.b16 %v1412, %v1408
          %v1681 = vpack.c.b16 %v1413, %v1409
          %v1682 = vpack.c.b16 %v1414, %v1410
          %v1683 = vpack.c.b16 %v1419, %v1415
          %v1684 = vpack.c.b16 %v1420, %v1416
          %v1685 = vpack.c.b16 %v1421, %v1417
          %v1686 = vpack.c.b16 %v1422, %v1418
          %v1687 = vpack.c.b16 %v1427, %v1423
          %v1688 = vpack.c.b16 %v1428, %v1424
          %v1689 = vpack.c.b16 %v1429, %v1425
          %v1690 = vpack.c.b16 %v1430, %v1426
          %v1691 = vpack.c.b16 %v1435, %v1431
          %v1692 = vpack.c.b16 %v1436, %v1432
          %v1693 = vpack.c.b16 %v1437, %v1433
          %v1694 = vpack.c.b16 %v1438, %v1434
          %v1695 = vpack.c.b16 %v1443, %v1439
          %v1696 = vpack.c.b16 %v1444, %v1440
          %v1697 = vpack.c.b16 %v1445, %v1441
          %v1698 = vpack.c.b16 %v1446, %v1442
          %v1699 = vpack.c.b16 %v1451, %v1447
          %v1700 = vpack.c.b16 %v1452, %v1448
          %v1701 = vpack.c.b16 %v1453, %v1449
          %v1702 = vpack.c.b16 %v1454, %v1450
          %v1703 = vpack.c.b16 %v1459, %v1455
          %v1704 = vpack.c.b16 %v1460, %v1456
          %v1705 = vpack.c.b16 %v1461, %v1457
          %v1706 = vpack.c.b16 %v1462, %v1458
          %v1707 = vpack.c.b16 %v1467, %v1463
          %v1708 = vpack.c.b16 %v1468, %v1464
          %v1709 = vpack.c.b16 %v1469, %v1465
          %v1710 = vpack.c.b16 %v1470, %v1466
          %v1711 = vpack.c.b16 %v1475, %v1471
          %v1712 = vpack.c.b16 %v1476, %v1472
          %v1713 = vpack.c.b16 %v1477, %v1473
          %v1714 = vpack.c.b16 %v1478, %v1474
          %v1715 = vpack.c.b16 %v1483, %v1479
          %v1716 = vpack.c.b16 %v1484, %v1480
          %v1717 = vpack.c.b16 %v1485, %v1481
          %v1718 = vpack.c.b16 %v1486, %v1482
          %v1719 = vpack.c.b16 %v1491, %v1487
          %v1720 = vpack.c.b16 %v1492, %v1488
          %v1721 = vpack.c.b16 %v1493, %v1489
          %v1722 = vpack.c.b16 %v1494, %v1490
          %v1723 = vpack.c.b16 %v1499, %v1495
          %v1724 = vpack.c.b16 %v1500, %v1496
          %v1725 = vpack.c.b16 %v1501, %v1497
          %v1726 = vpack.c.b16 %v1502, %v1498
          %v1727 = vpack.c.b16 %v1507, %v1503
          %v1728 = vpack.c.b16 %v1508, %v1504
          %v1729 = vpack.c.b16 %v1509, %v1505
          %v1730 = vpack.c.b16 %v1510, %v1506
          %v1731 = vpack.c.b16 %v1515, %v1511
          %v1732 = vpack.c.b16 %v1516, %v1512
          %v1733 = vpack.c.b16 %v1517, %v1513
          %v1734 = vpack.c.b16 %v1518, %v1514
          %v1735 = vpack.c.b16 %v1523, %v1519
          %v1736 = vpack.c.b16 %v1524, %v1520
          %v1737 = vpack.c.b16 %v1525, %v1521
          %v1738 = vpack.c.b16 %v1526, %v1522
          %v1739 = vpack.c.b16 %v1531, %v1527
          %v1740 = vpack.c.b16 %v1532, %v1528
          %v1741 = vpack.c.b16 %v1533, %v1529
          %v1742 = vpack.c.b16 %v1534, %v1530
          %v1743 = vpack.c.b16 %v1539, %v1535
          %v1744 = vpack.c.b16 %v1540, %v1536
          %v1745 = vpack.c.b16 %v1541, %v1537
          %v1746 = vpack.c.b16 %v1542, %v1538
          %v1747 = vpack.c.b16 %v1547, %v1543
          %v1748 = vpack.c.b16 %v1548, %v1544
          %v1749 = vpack.c.b16 %v1549, %v1545
          %v1750 = vpack.c.b16 %v1550, %v1546
          %v1751 = vpack.c.b16 %v1555, %v1551
          %v1752 = vpack.c.b16 %v1556, %v1552
          %v1753 = vpack.c.b16 %v1557, %v1553
          %v1754 = vpack.c.b16 %v1558, %v1554
          %v1755 = vpack.c.b16 %v1563, %v1559
          %v1756 = vpack.c.b16 %v1564, %v1560
          %v1757 = vpack.c.b16 %v1565, %v1561
          %v1758 = vpack.c.b16 %v1566, %v1562
          %1951 = vmatprep.subr.bf16.mxu0 %v1568
          %1952 = vmatpush1.bf16.msra.mxu0 %v1567
          %1953 = vmatprep.subr.bf16.mxu0 %v1572
          %1954 = vmatpush1.bf16.msra.mxu0 %v1571
          %1955 = vmatprep.subr.bf16.mxu0 %v1576
          %1956 = vmatpush1.bf16.msra.mxu0 %v1575
          %1957 = vmatprep.subr.bf16.mxu0 %v1580
          %1958 = vmatpush1.bf16.msra.mxu0 %v1579
          %1959 = vmatprep.subr.bf16.mxu0 %v1584
          %1960 = vmatpush1.bf16.msra.mxu0 %v1583
          %1961 = vmatprep.subr.bf16.mxu0 %v1588
          %1962 = vmatpush1.bf16.msra.mxu0 %v1587
          %1963 = vmatprep.subr.bf16.mxu0 %v1592
          %1964 = vmatpush1.bf16.msra.mxu0 %v1591
          %1965 = vmatprep.subr.bf16.mxu0 %v1596
          %1966 = vmatpush1.bf16.msra.mxu0 %v1595
          %1967 = vmatprep.subr.bf16.mxu0 %v1600
          %1968 = vmatpush1.bf16.msra.mxu0 %v1599
          %1969 = vmatprep.subr.bf16.mxu0 %v1604
          %1970 = vmatpush1.bf16.msra.mxu0 %v1603
          %1971 = vmatprep.subr.bf16.mxu0 %v1608
          %1972 = vmatpush1.bf16.msra.mxu0 %v1607
          %1973 = vmatprep.subr.bf16.mxu0 %v1612
          %1974 = vmatpush1.bf16.msra.mxu0 %v1611
          %1975 = vmatprep.subr.bf16.mxu0 %v1616
          %1976 = vmatpush1.bf16.msra.mxu0 %v1615
          %1977 = vmatprep.subr.bf16.mxu0 %v1620
          %1978 = vmatpush1.bf16.msra.mxu0 %v1619
          %1979 = vmatprep.subr.bf16.mxu0 %v1624
          %1980 = vmatpush1.bf16.msra.mxu0 %v1623
          %1981 = vmatprep.subr.bf16.mxu0 %v1628
          %1982 = vmatpush1.bf16.msra.mxu0 %v1627
          %1983 = vmatprep.mubr.bf16.mxu0 %v772
          %1984 = vmatmul.mubr.bf16.gmra.mrb[0].mxu0 %v771
          %v1985 = vpop.f32.mrb[0].mxu0
          %v1986 = vadd.f32 %v974, %v1985
          %v1987 = vpop.f32.mrb[0].mxu0
          %v1988 = vadd.f32 %v978, %v1987
          %v1989 = vpop.f32.mrb[0].mxu0
          %v1990 = vadd.f32 %v974, %v1989
          %v1991 = vpop.f32.mrb[0].mxu0
          %v1992 = vadd.f32 %v978, %v1991
          %1993 = vdwg.mxu0
          %1994 = vmatprep.subr.bf16.mxu0 %v1632
          %1995 = vmatpush1.bf16.msra.mxu0 %v1631
          %1996 = vmatprep.subr.bf16.mxu0 %v1636
          %1997 = vmatpush1.bf16.msra.mxu0 %v1635
          %1998 = vmatprep.subr.bf16.mxu0 %v1640
          %1999 = vmatpush1.bf16.msra.mxu0 %v1639
          %2000 = vmatprep.subr.bf16.mxu0 %v1644
          %2001 = vmatpush1.bf16.msra.mxu0 %v1643
          %2002 = vmatprep.subr.bf16.mxu0 %v1648
          %2003 = vmatpush1.bf16.msra.mxu0 %v1647
          %2004 = vmatprep.subr.bf16.mxu0 %v1652
          %2005 = vmatpush1.bf16.msra.mxu0 %v1651
          %2006 = vmatprep.subr.bf16.mxu0 %v1656
          %2007 = vmatpush1.bf16.msra.mxu0 %v1655
          %2008 = vmatprep.subr.bf16.mxu0 %v1660
          %2009 = vmatpush1.bf16.msra.mxu0 %v1659
          %2010 = vmatprep.subr.bf16.mxu0 %v1664
          %2011 = vmatpush1.bf16.msra.mxu0 %v1663
          %2012 = vmatprep.subr.bf16.mxu0 %v1668
          %2013 = vmatpush1.bf16.msra.mxu0 %v1667
          %2014 = vmatprep.subr.bf16.mxu0 %v1672
          %2015 = vmatpush1.bf16.msra.mxu0 %v1671
          %2016 = vmatprep.subr.bf16.mxu0 %v1676
          %2017 = vmatpush1.bf16.msra.mxu0 %v1675
          %2018 = vmatprep.subr.bf16.mxu0 %v1680
          %2019 = vmatpush1.bf16.msra.mxu0 %v1679
          %2020 = vmatprep.subr.bf16.mxu0 %v1684
          %2021 = vmatpush1.bf16.msra.mxu0 %v1683
          %2022 = vmatprep.subr.bf16.mxu0 %v1688
          %2023 = vmatpush1.bf16.msra.mxu0 %v1687
          %2024 = vmatprep.subr.bf16.mxu0 %v1692
          %2025 = vmatpush1.bf16.msra.mxu0 %v1691
          %2026 = vmatprep.mubr.bf16.mxu0 %v774
          %2027 = vmatmul.mubr.bf16.gmra.mrb[0].mxu0 %v773
          %v2028 = vpop.f32.mrb[0].mxu0
          %v2029 = vadd.f32 %v1986, %v2028
          %v2030 = vpop.f32.mrb[0].mxu0
          %v2031 = vadd.f32 %v1988, %v2030
          %v2032 = vpop.f32.mrb[0].mxu0
          %v2033 = vadd.f32 %v1990, %v2032
          %v2034 = vpop.f32.mrb[0].mxu0
          %v2035 = vadd.f32 %v1992, %v2034
          %2036 = vdwg.mxu0
          %2037 = vmatprep.subr.bf16.mxu0 %v1696
          %2038 = vmatpush1.bf16.msra.mxu0 %v1695
          %2039 = vmatprep.subr.bf16.mxu0 %v1700
          %2040 = vmatpush1.bf16.msra.mxu0 %v1699
          %2041 = vmatprep.subr.bf16.mxu0 %v1704
          %2042 = vmatpush1.bf16.msra.mxu0 %v1703
          %2043 = vmatprep.subr.bf16.mxu0 %v1708
          %2044 = vmatpush1.bf16.msra.mxu0 %v1707
          %2045 = vmatprep.subr.bf16.mxu0 %v1712
          %2046 = vmatpush1.bf16.msra.mxu0 %v1711
          %2047 = vmatprep.subr.bf16.mxu0 %v1716
          %2048 = vmatpush1.bf16.msra.mxu0 %v1715
          %2049 = vmatprep.subr.bf16.mxu0 %v1720
          %2050 = vmatpush1.bf16.msra.mxu0 %v1719
          %2051 = vmatprep.subr.bf16.mxu0 %v1724
          %2052 = vmatpush1.bf16.msra.mxu0 %v1723
          %2053 = vmatprep.subr.bf16.mxu0 %v1728
          %2054 = vmatpush1.bf16.msra.mxu0 %v1727
          %2055 = vmatprep.subr.bf16.mxu0 %v1732
          %2056 = vmatpush1.bf16.msra.mxu0 %v1731
          %2057 = vmatprep.subr.bf16.mxu0 %v1736
          %2058 = vmatpush1.bf16.msra.mxu0 %v1735
          %2059 = vmatprep.subr.bf16.mxu0 %v1740
          %2060 = vmatpush1.bf16.msra.mxu0 %v1739
          %2061 = vmatprep.subr.bf16.mxu0 %v1744
          %2062 = vmatpush1.bf16.msra.mxu0 %v1743
          %2063 = vmatprep.subr.bf16.mxu0 %v1748
          %2064 = vmatpush1.bf16.msra.mxu0 %v1747
          %2065 = vmatprep.subr.bf16.mxu0 %v1752
          %2066 = vmatpush1.bf16.msra.mxu0 %v1751
          %2067 = vmatprep.subr.bf16.mxu0 %v1756
          %2068 = vmatpush1.bf16.msra.mxu0 %v1755
          %2069 = vmatprep.mubr.bf16.mxu0 %v776
          %2070 = vmatmul.mubr.bf16.gmra.mrb[0].mxu0 %v775
          %v2071 = vpop.f32.mrb[0].mxu0
          %v2072 = vadd.f32 %v2029, %v2071
          %v2073 = vpop.f32.mrb[0].mxu0
          %v2074 = vadd.f32 %v2031, %v2073
          %v2075 = vpop.f32.mrb[0].mxu0
          %v2076 = vadd.f32 %v2033, %v2075
          %v2077 = vpop.f32.mrb[0].mxu0
          %v2078 = vadd.f32 %v2035, %v2077
          %2079 = vdwg.mxu0
          %2080 = vmatprep.subr.bf16.mxu0 %v1570
          %2081 = vmatpush1.bf16.msra.mxu0 %v1569
          %2082 = vmatprep.subr.bf16.mxu0 %v1574
          %2083 = vmatpush1.bf16.msra.mxu0 %v1573
          %2084 = vmatprep.subr.bf16.mxu0 %v1578
          %2085 = vmatpush1.bf16.msra.mxu0 %v1577
          %2086 = vmatprep.subr.bf16.mxu0 %v1582
          %2087 = vmatpush1.bf16.msra.mxu0 %v1581
          %2088 = vmatprep.subr.bf16.mxu0 %v1586
          %2089 = vmatpush1.bf16.msra.mxu0 %v1585
          %2090 = vmatprep.subr.bf16.mxu0 %v1590
          %2091 = vmatpush1.bf16.msra.mxu0 %v1589
          %2092 = vmatprep.subr.bf16.mxu0 %v1594
          %2093 = vmatpush1.bf16.msra.mxu0 %v1593
          %2094 = vmatprep.subr.bf16.mxu0 %v1598
          %2095 = vmatpush1.bf16.msra.mxu0 %v1597
          %2096 = vmatprep.subr.bf16.mxu0 %v1602
          %2097 = vmatpush1.bf16.msra.mxu0 %v1601
          %2098 = vmatprep.subr.bf16.mxu0 %v1606
          %2099 = vmatpush1.bf16.msra.mxu0 %v1605
          %2100 = vmatprep.subr.bf16.mxu0 %v1610
          %2101 = vmatpush1.bf16.msra.mxu0 %v1609
          %2102 = vmatprep.subr.bf16.mxu0 %v1614
          %2103 = vmatpush1.bf16.msra.mxu0 %v1613
          %2104 = vmatprep.subr.bf16.mxu0 %v1618
          %2105 = vmatpush1.bf16.msra.mxu0 %v1617
          %2106 = vmatprep.subr.bf16.mxu0 %v1622
          %2107 = vmatpush1.bf16.msra.mxu0 %v1621
          %2108 = vmatprep.subr.bf16.mxu0 %v1626
          %2109 = vmatpush1.bf16.msra.mxu0 %v1625
          %2110 = vmatprep.subr.bf16.mxu0 %v1630
          %2111 = vmatpush1.bf16.msra.mxu0 %v1629
          %2112 = vmatprep.mubr.bf16.mxu0 %v772
          %2113 = vmatmul.mubr.bf16.gmra.mrb[0].mxu0 %v771
          %v2114 = vpop.f32.mrb[0].mxu0
          %v2115 = vadd.f32 %v982, %v2114
          %v2116 = vpop.f32.mrb[0].mxu0
          %v2117 = vadd.f32 %v986, %v2116
          %v2118 = vpop.f32.mrb[0].mxu0
          %v2119 = vadd.f32 %v982, %v2118
          %v2120 = vpop.f32.mrb[0].mxu0
          %v2121 = vadd.f32 %v986, %v2120
          %2122 = vdwg.mxu0
          %2123 = vmatprep.subr.bf16.mxu0 %v1634
          %2124 = vmatpush1.bf16.msra.mxu0 %v1633
          %2125 = vmatprep.subr.bf16.mxu0 %v1638
          %2126 = vmatpush1.bf16.msra.mxu0 %v1637
          %2127 = vmatprep.subr.bf16.mxu0 %v1642
          %2128 = vmatpush1.bf16.msra.mxu0 %v1641
          %2129 = vmatprep.subr.bf16.mxu0 %v1646
          %2130 = vmatpush1.bf16.msra.mxu0 %v1645
          %2131 = vmatprep.subr.bf16.mxu0 %v1650
          %2132 = vmatpush1.bf16.msra.mxu0 %v1649
          %2133 = vmatprep.subr.bf16.mxu0 %v1654
          %2134 = vmatpush1.bf16.msra.mxu0 %v1653
          %2135 = vmatprep.subr.bf16.mxu0 %v1658
          %2136 = vmatpush1.bf16.msra.mxu0 %v1657
          %2137 = vmatprep.subr.bf16.mxu0 %v1662
          %2138 = vmatpush1.bf16.msra.mxu0 %v1661
          %2139 = vmatprep.subr.bf16.mxu0 %v1666
          %2140 = vmatpush1.bf16.msra.mxu0 %v1665
          %2141 = vmatprep.subr.bf16.mxu0 %v1670
          %2142 = vmatpush1.bf16.msra.mxu0 %v1669
          %2143 = vmatprep.subr.bf16.mxu0 %v1674
          %2144 = vmatpush1.bf16.msra.mxu0 %v1673
          %2145 = vmatprep.subr.bf16.mxu0 %v1678
          %2146 = vmatpush1.bf16.msra.mxu0 %v1677
          %2147 = vmatprep.subr.bf16.mxu0 %v1682
          %2148 = vmatpush1.bf16.msra.mxu0 %v1681
          %2149 = vmatprep.subr.bf16.mxu0 %v1686
          %2150 = vmatpush1.bf16.msra.mxu0 %v1685
          %2151 = vmatprep.subr.bf16.mxu0 %v1690
          %2152 = vmatpush1.bf16.msra.mxu0 %v1689
          %2153 = vmatprep.subr.bf16.mxu0 %v1694
          %2154 = vmatpush1.bf16.msra.mxu0 %v1693
          %2155 = vmatprep.mubr.bf16.mxu0 %v774
          %2156 = vmatmul.mubr.bf16.gmra.mrb[0].mxu0 %v773
          %v2157 = vpop.f32.mrb[0].mxu0
          %v2158 = vadd.f32 %v2115, %v2157
          %v2159 = vpop.f32.mrb[0].mxu0
          %v2160 = vadd.f32 %v2117, %v2159
          %v2161 = vpop.f32.mrb[0].mxu0
          %v2162 = vadd.f32 %v2119, %v2161
          %v2163 = vpop.f32.mrb[0].mxu0
          %v2164 = vadd.f32 %v2121, %v2163
          %2165 = vdwg.mxu0
          %2166 = vmatprep.subr.bf16.mxu0 %v1698
          %2167 = vmatpush1.bf16.msra.mxu0 %v1697
          %2168 = vmatprep.subr.bf16.mxu0 %v1702
          %2169 = vmatpush1.bf16.msra.mxu0 %v1701
          %2170 = vmatprep.subr.bf16.mxu0 %v1706
          %2171 = vmatpush1.bf16.msra.mxu0 %v1705
          %2172 = vmatprep.subr.bf16.mxu0 %v1710
          %2173 = vmatpush1.bf16.msra.mxu0 %v1709
          %2174 = vmatprep.subr.bf16.mxu0 %v1714
          %2175 = vmatpush1.bf16.msra.mxu0 %v1713
          %2176 = vmatprep.subr.bf16.mxu0 %v1718
          %2177 = vmatpush1.bf16.msra.mxu0 %v1717
          %2178 = vmatprep.subr.bf16.mxu0 %v1722
          %2179 = vmatpush1.bf16.msra.mxu0 %v1721
          %2180 = vmatprep.subr.bf16.mxu0 %v1726
          %2181 = vmatpush1.bf16.msra.mxu0 %v1725
          %2182 = vmatprep.subr.bf16.mxu0 %v1730
          %2183 = vmatpush1.bf16.msra.mxu0 %v1729
          %2184 = vmatprep.subr.bf16.mxu0 %v1734
          %2185 = vmatpush1.bf16.msra.mxu0 %v1733
          %2186 = vmatprep.subr.bf16.mxu0 %v1738
          %2187 = vmatpush1.bf16.msra.mxu0 %v1737
          %2188 = vmatprep.subr.bf16.mxu0 %v1742
          %2189 = vmatpush1.bf16.msra.mxu0 %v1741
          %2190 = vmatprep.subr.bf16.mxu0 %v1746
          %2191 = vmatpush1.bf16.msra.mxu0 %v1745
          %2192 = vmatprep.subr.bf16.mxu0 %v1750
          %2193 = vmatpush1.bf16.msra.mxu0 %v1749
          %2194 = vmatprep.subr.bf16.mxu0 %v1754
          %2195 = vmatpush1.bf16.msra.mxu0 %v1753
          %2196 = vmatprep.subr.bf16.mxu0 %v1758
          %2197 = vmatpush1.bf16.msra.mxu0 %v1757
          %2198 = vmatprep.mubr.bf16.mxu0 %v776
          %2199 = vmatmul.mubr.bf16.gmra.mrb[0].mxu0 %v775
          %v2200 = vpop.f32.mrb[0].mxu0
          %v2201 = vadd.f32 %v2158, %v2200
          %v2202 = vpop.f32.mrb[0].mxu0
          %v2203 = vadd.f32 %v2160, %v2202
          %v2204 = vpop.f32.mrb[0].mxu0
          %v2205 = vadd.f32 %v2162, %v2204
          %v2206 = vpop.f32.mrb[0].mxu0
          %v2207 = vadd.f32 %v2164, %v2206
          %2208 = vdwg.mxu0
          %v2209 = vmax.f32 %v2072, 0.0
          %v2210 = vmax.f32 %v2074, 0.0
          %v2211 = vmax.f32 %v2201, 0.0
          %v2212 = vmax.f32 %v2203, 0.0
          %v2213 = vmax.f32 %v2076, 0.0
          %v2214 = vmax.f32 %v2078, 0.0
          %v2215 = vmax.f32 %v2205, 0.0
          %v2216 = vmax.f32 %v2207, 0.0
          %v2217 = vrot.slane %v2209, 7
          %v2218 = vrot.slane %v2210, 7
          %v2219 = vrot.slane %v2211, 7
          %v2220 = vrot.slane %v2212, 7
          %v2221 = vrot.slane %v2213, 7
          %v2222 = vrot.slane %v2214, 7
          %v2223 = vrot.slane %v2215, 7
          %v2224 = vrot.slane %v2216, 7
          %v2225 = vsel %vm605, %v2217, %v2221
          %v2226 = vsel %vm605, %v2218, %v2222
          %v2227 = vsel %vm605, %v2219, %v2223
          %v2228 = vsel %vm605, %v2220, %v2224
          %v2229 = vsel %vm605, %v2221, %v2217
          %v2230 = vsel %vm605, %v2222, %v2218
          %v2231 = vsel %vm605, %v2223, %v2219
          %v2232 = vsel %vm605, %v2224, %v2220
          %v2233 = vsel %vm610, 0.0, %v2229
          %v2234 = vsel %vm610, 0.0, %v2230
          %v2235 = vsel %vm610, 0.0, %v2231
          %v2236 = vsel %vm610, 0.0, %v2232
          %v2237 = vsel %vm611, 0.0, %v2225
          %v2238 = vsel %vm611, 0.0, %v2226
          %v2239 = vsel %vm611, 0.0, %v2227
          %v2240 = vsel %vm611, 0.0, %v2228
          %v2241 = vrot.slane %v2209, 1
          %v2242 = vrot.slane %v2210, 1
          %v2243 = vrot.slane %v2211, 1
          %v2244 = vrot.slane %v2212, 1
          %v2245 = vrot.slane %v2213, 1
          %v2246 = vrot.slane %v2214, 1
          %v2247 = vrot.slane %v2215, 1
          %v2248 = vrot.slane %v2216, 1
          %v2249 = vsel %vm616, %v2241, %v2245
          %v2250 = vsel %vm616, %v2242, %v2246
          %v2251 = vsel %vm616, %v2243, %v2247
          %v2252 = vsel %vm616, %v2244, %v2248
          %v2253 = vsel %vm616, %v2245, %v2241
          %v2254 = vsel %vm616, %v2246, %v2242
          %v2255 = vsel %vm616, %v2247, %v2243
          %v2256 = vsel %vm616, %v2248, %v2244
          %v2257 = vsel %vm621, 0.0, %v2249
          %v2258 = vsel %vm621, 0.0, %v2250
          %v2259 = vsel %vm621, 0.0, %v2251
          %v2260 = vsel %vm621, 0.0, %v2252
          %v2261 = vsel %vm622, 0.0, %v2253
          %v2262 = vsel %vm622, 0.0, %v2254
          %v2263 = vsel %vm622, 0.0, %v2255
          %v2264 = vsel %vm622, 0.0, %v2256
          %v2265 = vpack.c.bf16 %v2237, %v2233
          %v2266 = vpack.c.bf16 %v2238, %v2234
          %v2267 = vpack.c.bf16 %v2239, %v2235
          %v2268 = vpack.c.bf16 %v2240, %v2236
          %v2269 = vpack.c.bf16 %v2213, %v2209
          %v2270 = vpack.c.bf16 %v2214, %v2210
          %v2271 = vpack.c.bf16 %v2215, %v2211
          %v2272 = vpack.c.bf16 %v2216, %v2212
          %v2273 = vpack.c.bf16 %v2261, %v2257
          %v2274 = vpack.c.bf16 %v2262, %v2258
          %v2275 = vpack.c.bf16 %v2263, %v2259
          %v2276 = vpack.c.bf16 %v2264, %v2260
          %v2277 = vld [vmem:[#allocation12] sm:$0xff]
          %v2278 = vld [vmem:[#allocation12 + $0x8] sm:$0xff]
          %v2279 = vld [vmem:[#allocation12 + $0x10] sm:$0xff]
          %v2280 = vld [vmem:[#allocation12 + $0x18] sm:$0xff]
          %v2281 = vld [vmem:[#allocation12 + $0x20] sm:$0xff]
          %v2282 = vld [vmem:[#allocation12 + $0x28] sm:$0xff]
          %v2283 = vld [vmem:[#allocation12 + $0x30] sm:$0xff]
          %v2284 = vld [vmem:[#allocation12 + $0x38] sm:$0xff]
          %v2285 = vld [vmem:[#allocation12 + $0x40] sm:$0xff]
          %v2286 = vld [vmem:[#allocation12 + $0x48] sm:$0xff]
          %v2287 = vld [vmem:[#allocation12 + $0x50] sm:$0xff]
          %v2288 = vld [vmem:[#allocation12 + $0x58] sm:$0xff]
          %v2289 = vld [vmem:[#allocation12 + $0x60] sm:$0xff]
          %v2290 = vld [vmem:[#allocation12 + $0x68] sm:$0xff]
          %v2291 = vld [vmem:[#allocation12 + $0x70] sm:$0xff]
          %v2292 = vld [vmem:[#allocation12 + $0x78] sm:$0xff]
          %v2293 = vld [vmem:[#allocation12 + $0x80] sm:$0xff]
          %v2294 = vld [vmem:[#allocation12 + $0x88] sm:$0xff]
          %v2295 = vld [vmem:[#allocation12 + $0x90] sm:$0xff]
          %v2296 = vld [vmem:[#allocation12 + $0x98] sm:$0xff]
          %v2297 = vld [vmem:[#allocation12 + $0xa0] sm:$0xff]
          %v2298 = vld [vmem:[#allocation12 + $0xa8] sm:$0xff]
          %v2299 = vld [vmem:[#allocation12 + $0xb0] sm:$0xff]
          %v2300 = vld [vmem:[#allocation12 + $0xb8] sm:$0xff]
          %v2301 = vld [vmem:[#allocation12 + $0xc0] sm:$0xff]
          %v2302 = vld [vmem:[#allocation12 + $0xc8] sm:$0xff]
          %v2303 = vld [vmem:[#allocation12 + $0xd0] sm:$0xff]
          %v2304 = vld [vmem:[#allocation12 + $0xd8] sm:$0xff]
          %v2305 = vld [vmem:[#allocation12 + $0xe0] sm:$0xff]
          %v2306 = vld [vmem:[#allocation12 + $0xe8] sm:$0xff]
          %v2307 = vld [vmem:[#allocation12 + $0xf0] sm:$0xff]
          %v2308 = vld [vmem:[#allocation12 + $0xf8] sm:$0xff]
          %v2309 = vld [vmem:[#allocation12 + $0x100] sm:$0xff]
          %v2310 = vld [vmem:[#allocation12 + $0x108] sm:$0xff]
          %v2311 = vld [vmem:[#allocation12 + $0x110] sm:$0xff]
          %v2312 = vld [vmem:[#allocation12 + $0x118] sm:$0xff]
          %v2313 = vld [vmem:[#allocation12 + $0x120] sm:$0xff]
          %v2314 = vld [vmem:[#allocation12 + $0x128] sm:$0xff]
          %v2315 = vld [vmem:[#allocation12 + $0x130] sm:$0xff]
          %v2316 = vld [vmem:[#allocation12 + $0x138] sm:$0xff]
          %v2317 = vld [vmem:[#allocation12 + $0x140] sm:$0xff]
          %v2318 = vld [vmem:[#allocation12 + $0x148] sm:$0xff]
          %v2319 = vld [vmem:[#allocation12 + $0x150] sm:$0xff]
          %v2320 = vld [vmem:[#allocation12 + $0x158] sm:$0xff]
          %v2321 = vld [vmem:[#allocation12 + $0x160] sm:$0xff]
          %v2322 = vld [vmem:[#allocation12 + $0x168] sm:$0xff]
          %v2323 = vld [vmem:[#allocation12 + $0x170] sm:$0xff]
          %v2324 = vld [vmem:[#allocation12 + $0x178] sm:$0xff]
          %v2325 = vld [vmem:[#allocation12 + $0x180] sm:$0xff]
          %v2326 = vld [vmem:[#allocation12 + $0x188] sm:$0xff]
          %v2327 = vld [vmem:[#allocation12 + $0x190] sm:$0xff]
          %v2328 = vld [vmem:[#allocation12 + $0x198] sm:$0xff]
          %v2329 = vld [vmem:[#allocation12 + $0x1a0] sm:$0xff]
          %v2330 = vld [vmem:[#allocation12 + $0x1a8] sm:$0xff]
          %v2331 = vld [vmem:[#allocation12 + $0x1b0] sm:$0xff]
          %v2332 = vld [vmem:[#allocation12 + $0x1b8] sm:$0xff]
          %v2333 = vld [vmem:[#allocation12 + $0x1c0] sm:$0xff]
          %v2334 = vld [vmem:[#allocation12 + $0x1c8] sm:$0xff]
          %v2335 = vld [vmem:[#allocation12 + $0x1d0] sm:$0xff]
          %v2336 = vld [vmem:[#allocation12 + $0x1d8] sm:$0xff]
          %v2337 = vld [vmem:[#allocation12 + $0x1e0] sm:$0xff]
          %v2338 = vld [vmem:[#allocation12 + $0x1e8] sm:$0xff]
          %v2339 = vld [vmem:[#allocation12 + $0x1f0] sm:$0xff]
          %v2340 = vld [vmem:[#allocation12 + $0x1f8] sm:$0xff]
          %v2341 = vld [vmem:[#allocation12 + $0x200] sm:$0xff]
          %v2342 = vld [vmem:[#allocation12 + $0x208] sm:$0xff]
          %v2343 = vld [vmem:[#allocation12 + $0x210] sm:$0xff]
          %v2344 = vld [vmem:[#allocation12 + $0x218] sm:$0xff]
          %v2345 = vld [vmem:[#allocation12 + $0x220] sm:$0xff]
          %v2346 = vld [vmem:[#allocation12 + $0x228] sm:$0xff]
          %v2347 = vld [vmem:[#allocation12 + $0x230] sm:$0xff]
          %v2348 = vld [vmem:[#allocation12 + $0x238] sm:$0xff]
          %v2349 = vld [vmem:[#allocation12 + $0x240] sm:$0xff]
          %v2350 = vld [vmem:[#allocation12 + $0x248] sm:$0xff]
          %v2351 = vld [vmem:[#allocation12 + $0x250] sm:$0xff]
          %v2352 = vld [vmem:[#allocation12 + $0x258] sm:$0xff]
          %v2353 = vld [vmem:[#allocation12 + $0x260] sm:$0xff]
          %v2354 = vld [vmem:[#allocation12 + $0x268] sm:$0xff]
          %v2355 = vld [vmem:[#allocation12 + $0x270] sm:$0xff]
          %v2356 = vld [vmem:[#allocation12 + $0x278] sm:$0xff]
          %v2357 = vld [vmem:[#allocation12 + $0x280] sm:$0xff]
          %v2358 = vld [vmem:[#allocation12 + $0x288] sm:$0xff]
          %v2359 = vld [vmem:[#allocation12 + $0x290] sm:$0xff]
          %v2360 = vld [vmem:[#allocation12 + $0x298] sm:$0xff]
          %v2361 = vld [vmem:[#allocation12 + $0x2a0] sm:$0xff]
          %v2362 = vld [vmem:[#allocation12 + $0x2a8] sm:$0xff]
          %v2363 = vld [vmem:[#allocation12 + $0x2b0] sm:$0xff]
          %v2364 = vld [vmem:[#allocation12 + $0x2b8] sm:$0xff]
          %v2365 = vld [vmem:[#allocation12 + $0x2c0] sm:$0xff]
          %v2366 = vld [vmem:[#allocation12 + $0x2c8] sm:$0xff]
          %v2367 = vld [vmem:[#allocation12 + $0x2d0] sm:$0xff]
          %v2368 = vld [vmem:[#allocation12 + $0x2d8] sm:$0xff]
          %v2369 = vld [vmem:[#allocation12 + $0x2e0] sm:$0xff]
          %v2370 = vld [vmem:[#allocation12 + $0x2e8] sm:$0xff]
          %v2371 = vld [vmem:[#allocation12 + $0x2f0] sm:$0xff]
          %v2372 = vld [vmem:[#allocation12 + $0x2f8] sm:$0xff]
          %v2373 = vld [vmem:[#allocation12 + $0x300] sm:$0xff]
          %v2374 = vld [vmem:[#allocation12 + $0x308] sm:$0xff]
          %v2375 = vld [vmem:[#allocation12 + $0x310] sm:$0xff]
          %v2376 = vld [vmem:[#allocation12 + $0x318] sm:$0xff]
          %v2377 = vld [vmem:[#allocation12 + $0x320] sm:$0xff]
          %v2378 = vld [vmem:[#allocation12 + $0x328] sm:$0xff]
          %v2379 = vld [vmem:[#allocation12 + $0x330] sm:$0xff]
          %v2380 = vld [vmem:[#allocation12 + $0x338] sm:$0xff]
          %v2381 = vld [vmem:[#allocation12 + $0x340] sm:$0xff]
          %v2382 = vld [vmem:[#allocation12 + $0x348] sm:$0xff]
          %v2383 = vld [vmem:[#allocation12 + $0x350] sm:$0xff]
          %v2384 = vld [vmem:[#allocation12 + $0x358] sm:$0xff]
          %v2385 = vld [vmem:[#allocation12 + $0x360] sm:$0xff]
          %v2386 = vld [vmem:[#allocation12 + $0x368] sm:$0xff]
          %v2387 = vld [vmem:[#allocation12 + $0x370] sm:$0xff]
          %v2388 = vld [vmem:[#allocation12 + $0x378] sm:$0xff]
          %v2389 = vld [vmem:[#allocation12 + $0x380] sm:$0xff]
          %v2390 = vld [vmem:[#allocation12 + $0x388] sm:$0xff]
          %v2391 = vld [vmem:[#allocation12 + $0x390] sm:$0xff]
          %v2392 = vld [vmem:[#allocation12 + $0x398] sm:$0xff]
          %v2393 = vld [vmem:[#allocation12 + $0x3a0] sm:$0xff]
          %v2394 = vld [vmem:[#allocation12 + $0x3a8] sm:$0xff]
          %v2395 = vld [vmem:[#allocation12 + $0x3b0] sm:$0xff]
          %v2396 = vld [vmem:[#allocation12 + $0x3b8] sm:$0xff]
          %v2397 = vld [vmem:[#allocation12 + $0x3c0] sm:$0xff]
          %v2398 = vld [vmem:[#allocation12 + $0x3c8] sm:$0xff]
          %v2399 = vld [vmem:[#allocation12 + $0x3d0] sm:$0xff]
          %v2400 = vld [vmem:[#allocation12 + $0x3d8] sm:$0xff]
          %v2401 = vld [vmem:[#allocation12 + $0x3e0] sm:$0xff]
          %v2402 = vld [vmem:[#allocation12 + $0x3e8] sm:$0xff]
          %v2403 = vld [vmem:[#allocation12 + $0x3f0] sm:$0xff]
          %v2404 = vld [vmem:[#allocation12 + $0x3f8] sm:$0xff]
          %v2405 = vld [vmem:[#allocation12 + $0x400] sm:$0xff]
          %v2406 = vld [vmem:[#allocation12 + $0x408] sm:$0xff]
          %v2407 = vld [vmem:[#allocation12 + $0x410] sm:$0xff]
          %v2408 = vld [vmem:[#allocation12 + $0x418] sm:$0xff]
          %v2409 = vld [vmem:[#allocation12 + $0x420] sm:$0xff]
          %v2410 = vld [vmem:[#allocation12 + $0x428] sm:$0xff]
          %v2411 = vld [vmem:[#allocation12 + $0x430] sm:$0xff]
          %v2412 = vld [vmem:[#allocation12 + $0x438] sm:$0xff]
          %v2413 = vld [vmem:[#allocation12 + $0x440] sm:$0xff]
          %v2414 = vld [vmem:[#allocation12 + $0x448] sm:$0xff]
          %v2415 = vld [vmem:[#allocation12 + $0x450] sm:$0xff]
          %v2416 = vld [vmem:[#allocation12 + $0x458] sm:$0xff]
          %v2417 = vld [vmem:[#allocation12 + $0x460] sm:$0xff]
          %v2418 = vld [vmem:[#allocation12 + $0x468] sm:$0xff]
          %v2419 = vld [vmem:[#allocation12 + $0x470] sm:$0xff]
          %v2420 = vld [vmem:[#allocation12 + $0x478] sm:$0xff]
          %v2421 = vld [vmem:[#allocation12 + $0x480] sm:$0xff]
          %v2422 = vld [vmem:[#allocation12 + $0x488] sm:$0xff]
          %v2423 = vld [vmem:[#allocation12 + $0x490] sm:$0xff]
          %v2424 = vld [vmem:[#allocation12 + $0x498] sm:$0xff]
          %v2425 = vld [vmem:[#allocation12 + $0x4a0] sm:$0xff]
          %v2426 = vld [vmem:[#allocation12 + $0x4a8] sm:$0xff]
          %v2427 = vld [vmem:[#allocation12 + $0x4b0] sm:$0xff]
          %v2428 = vld [vmem:[#allocation12 + $0x4b8] sm:$0xff]
          %v2429 = vld [vmem:[#allocation12 + $0x4c0] sm:$0xff]
          %v2430 = vld [vmem:[#allocation12 + $0x4c8] sm:$0xff]
          %v2431 = vld [vmem:[#allocation12 + $0x4d0] sm:$0xff]
          %v2432 = vld [vmem:[#allocation12 + $0x4d8] sm:$0xff]
          %v2433 = vld [vmem:[#allocation12 + $0x4e0] sm:$0xff]
          %v2434 = vld [vmem:[#allocation12 + $0x4e8] sm:$0xff]
          %v2435 = vld [vmem:[#allocation12 + $0x4f0] sm:$0xff]
          %v2436 = vld [vmem:[#allocation12 + $0x4f8] sm:$0xff]
          %v2437 = vld [vmem:[#allocation12 + $0x500] sm:$0xff]
          %v2438 = vld [vmem:[#allocation12 + $0x508] sm:$0xff]
          %v2439 = vld [vmem:[#allocation12 + $0x510] sm:$0xff]
          %v2440 = vld [vmem:[#allocation12 + $0x518] sm:$0xff]
          %v2441 = vld [vmem:[#allocation12 + $0x520] sm:$0xff]
          %v2442 = vld [vmem:[#allocation12 + $0x528] sm:$0xff]
          %v2443 = vld [vmem:[#allocation12 + $0x530] sm:$0xff]
          %v2444 = vld [vmem:[#allocation12 + $0x538] sm:$0xff]
          %v2445 = vld [vmem:[#allocation12 + $0x540] sm:$0xff]
          %v2446 = vld [vmem:[#allocation12 + $0x548] sm:$0xff]
          %v2447 = vld [vmem:[#allocation12 + $0x550] sm:$0xff]
          %v2448 = vld [vmem:[#allocation12 + $0x558] sm:$0xff]
          %v2449 = vld [vmem:[#allocation12 + $0x560] sm:$0xff]
          %v2450 = vld [vmem:[#allocation12 + $0x568] sm:$0xff]
          %v2451 = vld [vmem:[#allocation12 + $0x570] sm:$0xff]
          %v2452 = vld [vmem:[#allocation12 + $0x578] sm:$0xff]
          %v2453 = vld [vmem:[#allocation12 + $0x580] sm:$0xff]
          %v2454 = vld [vmem:[#allocation12 + $0x588] sm:$0xff]
          %v2455 = vld [vmem:[#allocation12 + $0x590] sm:$0xff]
          %v2456 = vld [vmem:[#allocation12 + $0x598] sm:$0xff]
          %v2457 = vld [vmem:[#allocation12 + $0x5a0] sm:$0xff]
          %v2458 = vld [vmem:[#allocation12 + $0x5a8] sm:$0xff]
          %v2459 = vld [vmem:[#allocation12 + $0x5b0] sm:$0xff]
          %v2460 = vld [vmem:[#allocation12 + $0x5b8] sm:$0xff]
          %v2461 = vld [vmem:[#allocation12 + $0x5c0] sm:$0xff]
          %v2462 = vld [vmem:[#allocation12 + $0x5c8] sm:$0xff]
          %v2463 = vld [vmem:[#allocation12 + $0x5d0] sm:$0xff]
          %v2464 = vld [vmem:[#allocation12 + $0x5d8] sm:$0xff]
          %v2465 = vld [vmem:[#allocation12 + $0x5e0] sm:$0xff]
          %v2466 = vld [vmem:[#allocation12 + $0x5e8] sm:$0xff]
          %v2467 = vld [vmem:[#allocation12 + $0x5f0] sm:$0xff]
          %v2468 = vld [vmem:[#allocation12 + $0x5f8] sm:$0xff]
          %v2469 = vld [vmem:[#allocation12 + $0x600] sm:$0xff]
          %v2470 = vld [vmem:[#allocation12 + $0x608] sm:$0xff]
          %v2471 = vld [vmem:[#allocation12 + $0x610] sm:$0xff]
          %v2472 = vld [vmem:[#allocation12 + $0x618] sm:$0xff]
          %v2473 = vld [vmem:[#allocation12 + $0x620] sm:$0xff]
          %v2474 = vld [vmem:[#allocation12 + $0x628] sm:$0xff]
          %v2475 = vld [vmem:[#allocation12 + $0x630] sm:$0xff]
          %v2476 = vld [vmem:[#allocation12 + $0x638] sm:$0xff]
          %v2477 = vld [vmem:[#allocation12 + $0x640] sm:$0xff]
          %v2478 = vld [vmem:[#allocation12 + $0x648] sm:$0xff]
          %v2479 = vld [vmem:[#allocation12 + $0x650] sm:$0xff]
          %v2480 = vld [vmem:[#allocation12 + $0x658] sm:$0xff]
          %v2481 = vld [vmem:[#allocation12 + $0x660] sm:$0xff]
          %v2482 = vld [vmem:[#allocation12 + $0x668] sm:$0xff]
          %v2483 = vld [vmem:[#allocation12 + $0x670] sm:$0xff]
          %v2484 = vld [vmem:[#allocation12 + $0x678] sm:$0xff]
          %v2485 = vld [vmem:[#allocation12 + $0x680] sm:$0xff]
          %v2486 = vld [vmem:[#allocation12 + $0x688] sm:$0xff]
          %v2487 = vld [vmem:[#allocation12 + $0x690] sm:$0xff]
          %v2488 = vld [vmem:[#allocation12 + $0x698] sm:$0xff]
          %v2489 = vld [vmem:[#allocation12 + $0x6a0] sm:$0xff]
          %v2490 = vld [vmem:[#allocation12 + $0x6a8] sm:$0xff]
          %v2491 = vld [vmem:[#allocation12 + $0x6b0] sm:$0xff]
          %v2492 = vld [vmem:[#allocation12 + $0x6b8] sm:$0xff]
          %v2493 = vld [vmem:[#allocation12 + $0x6c0] sm:$0xff]
          %v2494 = vld [vmem:[#allocation12 + $0x6c8] sm:$0xff]
          %v2495 = vld [vmem:[#allocation12 + $0x6d0] sm:$0xff]
          %v2496 = vld [vmem:[#allocation12 + $0x6d8] sm:$0xff]
          %v2497 = vld [vmem:[#allocation12 + $0x6e0] sm:$0xff]
          %v2498 = vld [vmem:[#allocation12 + $0x6e8] sm:$0xff]
          %v2499 = vld [vmem:[#allocation12 + $0x6f0] sm:$0xff]
          %v2500 = vld [vmem:[#allocation12 + $0x6f8] sm:$0xff]
          %v2501 = vld [vmem:[#allocation12 + $0x700] sm:$0xff]
          %v2502 = vld [vmem:[#allocation12 + $0x708] sm:$0xff]
          %v2503 = vld [vmem:[#allocation12 + $0x710] sm:$0xff]
          %v2504 = vld [vmem:[#allocation12 + $0x718] sm:$0xff]
          %v2505 = vld [vmem:[#allocation12 + $0x720] sm:$0xff]
          %v2506 = vld [vmem:[#allocation12 + $0x728] sm:$0xff]
          %v2507 = vld [vmem:[#allocation12 + $0x730] sm:$0xff]
          %v2508 = vld [vmem:[#allocation12 + $0x738] sm:$0xff]
          %v2509 = vld [vmem:[#allocation12 + $0x740] sm:$0xff]
          %v2510 = vld [vmem:[#allocation12 + $0x748] sm:$0xff]
          %v2511 = vld [vmem:[#allocation12 + $0x750] sm:$0xff]
          %v2512 = vld [vmem:[#allocation12 + $0x758] sm:$0xff]
          %v2513 = vld [vmem:[#allocation12 + $0x760] sm:$0xff]
          %v2514 = vld [vmem:[#allocation12 + $0x768] sm:$0xff]
          %v2515 = vld [vmem:[#allocation12 + $0x770] sm:$0xff]
          %v2516 = vld [vmem:[#allocation12 + $0x778] sm:$0xff]
          %v2517 = vld [vmem:[#allocation12 + $0x780] sm:$0xff]
          %v2518 = vld [vmem:[#allocation12 + $0x788] sm:$0xff]
          %v2519 = vld [vmem:[#allocation12 + $0x790] sm:$0xff]
          %v2520 = vld [vmem:[#allocation12 + $0x798] sm:$0xff]
          %v2521 = vld [vmem:[#allocation12 + $0x7a0] sm:$0xff]
          %v2522 = vld [vmem:[#allocation12 + $0x7a8] sm:$0xff]
          %v2523 = vld [vmem:[#allocation12 + $0x7b0] sm:$0xff]
          %v2524 = vld [vmem:[#allocation12 + $0x7b8] sm:$0xff]
          %v2525 = vld [vmem:[#allocation12 + $0x7c0] sm:$0xff]
          %v2526 = vld [vmem:[#allocation12 + $0x7c8] sm:$0xff]
          %v2527 = vld [vmem:[#allocation12 + $0x7d0] sm:$0xff]
          %v2528 = vld [vmem:[#allocation12 + $0x7d8] sm:$0xff]
          %v2529 = vld [vmem:[#allocation12 + $0x7e0] sm:$0xff]
          %v2530 = vld [vmem:[#allocation12 + $0x7e8] sm:$0xff]
          %v2531 = vld [vmem:[#allocation12 + $0x7f0] sm:$0xff]
          %v2532 = vld [vmem:[#allocation12 + $0x7f8] sm:$0xff]
          %v2533 = vld [vmem:[#allocation12 + $0x800] sm:$0xff]
          %v2534 = vld [vmem:[#allocation12 + $0x808] sm:$0xff]
          %v2535 = vld [vmem:[#allocation12 + $0x810] sm:$0xff]
          %v2536 = vld [vmem:[#allocation12 + $0x818] sm:$0xff]
          %v2537 = vld [vmem:[#allocation12 + $0x820] sm:$0xff]
          %v2538 = vld [vmem:[#allocation12 + $0x828] sm:$0xff]
          %v2539 = vld [vmem:[#allocation12 + $0x830] sm:$0xff]
          %v2540 = vld [vmem:[#allocation12 + $0x838] sm:$0xff]
          %v2541 = vld [vmem:[#allocation12 + $0x840] sm:$0xff]
          %v2542 = vld [vmem:[#allocation12 + $0x848] sm:$0xff]
          %v2543 = vld [vmem:[#allocation12 + $0x850] sm:$0xff]
          %v2544 = vld [vmem:[#allocation12 + $0x858] sm:$0xff]
          %v2545 = vld [vmem:[#allocation12 + $0x860] sm:$0xff]
          %v2546 = vld [vmem:[#allocation12 + $0x868] sm:$0xff]
          %v2547 = vld [vmem:[#allocation12 + $0x870] sm:$0xff]
          %v2548 = vld [vmem:[#allocation12 + $0x878] sm:$0xff]
          %v2549 = vld [vmem:[#allocation12 + $0x880] sm:$0xff]
          %v2550 = vld [vmem:[#allocation12 + $0x888] sm:$0xff]
          %v2551 = vld [vmem:[#allocation12 + $0x890] sm:$0xff]
          %v2552 = vld [vmem:[#allocation12 + $0x898] sm:$0xff]
          %v2553 = vld [vmem:[#allocation12 + $0x8a0] sm:$0xff]
          %v2554 = vld [vmem:[#allocation12 + $0x8a8] sm:$0xff]
          %v2555 = vld [vmem:[#allocation12 + $0x8b0] sm:$0xff]
          %v2556 = vld [vmem:[#allocation12 + $0x8b8] sm:$0xff]
          %v2557 = vld [vmem:[#allocation12 + $0x8c0] sm:$0xff]
          %v2558 = vld [vmem:[#allocation12 + $0x8c8] sm:$0xff]
          %v2559 = vld [vmem:[#allocation12 + $0x8d0] sm:$0xff]
          %v2560 = vld [vmem:[#allocation12 + $0x8d8] sm:$0xff]
          %v2561 = vld [vmem:[#allocation12 + $0x8e0] sm:$0xff]
          %v2562 = vld [vmem:[#allocation12 + $0x8e8] sm:$0xff]
          %v2563 = vld [vmem:[#allocation12 + $0x8f0] sm:$0xff]
          %v2564 = vld [vmem:[#allocation12 + $0x8f8] sm:$0xff]
          %v2565 = vld [vmem:[#allocation12 + $0x900] sm:$0xff]
          %v2566 = vld [vmem:[#allocation12 + $0x908] sm:$0xff]
          %v2567 = vld [vmem:[#allocation12 + $0x910] sm:$0xff]
          %v2568 = vld [vmem:[#allocation12 + $0x918] sm:$0xff]
          %v2569 = vld [vmem:[#allocation12 + $0x920] sm:$0xff]
          %v2570 = vld [vmem:[#allocation12 + $0x928] sm:$0xff]
          %v2571 = vld [vmem:[#allocation12 + $0x930] sm:$0xff]
          %v2572 = vld [vmem:[#allocation12 + $0x938] sm:$0xff]
          %v2573 = vld [vmem:[#allocation12 + $0x940] sm:$0xff]
          %v2574 = vld [vmem:[#allocation12 + $0x948] sm:$0xff]
          %v2575 = vld [vmem:[#allocation12 + $0x950] sm:$0xff]
          %v2576 = vld [vmem:[#allocation12 + $0x958] sm:$0xff]
          %v2577 = vld [vmem:[#allocation12 + $0x960] sm:$0xff]
          %v2578 = vld [vmem:[#allocation12 + $0x968] sm:$0xff]
          %v2579 = vld [vmem:[#allocation12 + $0x970] sm:$0xff]
          %v2580 = vld [vmem:[#allocation12 + $0x978] sm:$0xff]
          %v2581 = vld [vmem:[#allocation12 + $0x980] sm:$0xff]
          %v2582 = vld [vmem:[#allocation12 + $0x988] sm:$0xff]
          %v2583 = vld [vmem:[#allocation12 + $0x990] sm:$0xff]
          %v2584 = vld [vmem:[#allocation12 + $0x998] sm:$0xff]
          %v2585 = vld [vmem:[#allocation12 + $0x9a0] sm:$0xff]
          %v2586 = vld [vmem:[#allocation12 + $0x9a8] sm:$0xff]
          %v2587 = vld [vmem:[#allocation12 + $0x9b0] sm:$0xff]
          %v2588 = vld [vmem:[#allocation12 + $0x9b8] sm:$0xff]
          %v2589 = vld [vmem:[#allocation12 + $0x9c0] sm:$0xff]
          %v2590 = vld [vmem:[#allocation12 + $0x9c8] sm:$0xff]
          %v2591 = vld [vmem:[#allocation12 + $0x9d0] sm:$0xff]
          %v2592 = vld [vmem:[#allocation12 + $0x9d8] sm:$0xff]
          %v2593 = vld [vmem:[#allocation12 + $0x9e0] sm:$0xff]
          %v2594 = vld [vmem:[#allocation12 + $0x9e8] sm:$0xff]
          %v2595 = vld [vmem:[#allocation12 + $0x9f0] sm:$0xff]
          %v2596 = vld [vmem:[#allocation12 + $0x9f8] sm:$0xff]
          %v2597 = vld [vmem:[#allocation12 + $0xa00] sm:$0xff]
          %v2598 = vld [vmem:[#allocation12 + $0xa08] sm:$0xff]
          %v2599 = vld [vmem:[#allocation12 + $0xa10] sm:$0xff]
          %v2600 = vld [vmem:[#allocation12 + $0xa18] sm:$0xff]
          %v2601 = vld [vmem:[#allocation12 + $0xa20] sm:$0xff]
          %v2602 = vld [vmem:[#allocation12 + $0xa28] sm:$0xff]
          %v2603 = vld [vmem:[#allocation12 + $0xa30] sm:$0xff]
          %v2604 = vld [vmem:[#allocation12 + $0xa38] sm:$0xff]
          %v2605 = vld [vmem:[#allocation12 + $0xa40] sm:$0xff]
          %v2606 = vld [vmem:[#allocation12 + $0xa48] sm:$0xff]
          %v2607 = vld [vmem:[#allocation12 + $0xa50] sm:$0xff]
          %v2608 = vld [vmem:[#allocation12 + $0xa58] sm:$0xff]
          %v2609 = vld [vmem:[#allocation12 + $0xa60] sm:$0xff]
          %v2610 = vld [vmem:[#allocation12 + $0xa68] sm:$0xff]
          %v2611 = vld [vmem:[#allocation12 + $0xa70] sm:$0xff]
          %v2612 = vld [vmem:[#allocation12 + $0xa78] sm:$0xff]
          %v2613 = vld [vmem:[#allocation12 + $0xa80] sm:$0xff]
          %v2614 = vld [vmem:[#allocation12 + $0xa88] sm:$0xff]
          %v2615 = vld [vmem:[#allocation12 + $0xa90] sm:$0xff]
          %v2616 = vld [vmem:[#allocation12 + $0xa98] sm:$0xff]
          %v2617 = vld [vmem:[#allocation12 + $0xaa0] sm:$0xff]
          %v2618 = vld [vmem:[#allocation12 + $0xaa8] sm:$0xff]
          %v2619 = vld [vmem:[#allocation12 + $0xab0] sm:$0xff]
          %v2620 = vld [vmem:[#allocation12 + $0xab8] sm:$0xff]
          %v2621 = vld [vmem:[#allocation12 + $0xac0] sm:$0xff]
          %v2622 = vld [vmem:[#allocation12 + $0xac8] sm:$0xff]
          %v2623 = vld [vmem:[#allocation12 + $0xad0] sm:$0xff]
          %v2624 = vld [vmem:[#allocation12 + $0xad8] sm:$0xff]
          %v2625 = vld [vmem:[#allocation12 + $0xae0] sm:$0xff]
          %v2626 = vld [vmem:[#allocation12 + $0xae8] sm:$0xff]
          %v2627 = vld [vmem:[#allocation12 + $0xaf0] sm:$0xff]
          %v2628 = vld [vmem:[#allocation12 + $0xaf8] sm:$0xff]
          %v2629 = vld [vmem:[#allocation12 + $0xb00] sm:$0xff]
          %v2630 = vld [vmem:[#allocation12 + $0xb08] sm:$0xff]
          %v2631 = vld [vmem:[#allocation12 + $0xb10] sm:$0xff]
          %v2632 = vld [vmem:[#allocation12 + $0xb18] sm:$0xff]
          %v2633 = vld [vmem:[#allocation12 + $0xb20] sm:$0xff]
          %v2634 = vld [vmem:[#allocation12 + $0xb28] sm:$0xff]
          %v2635 = vld [vmem:[#allocation12 + $0xb30] sm:$0xff]
          %v2636 = vld [vmem:[#allocation12 + $0xb38] sm:$0xff]
          %v2637 = vld [vmem:[#allocation12 + $0xb40] sm:$0xff]
          %v2638 = vld [vmem:[#allocation12 + $0xb48] sm:$0xff]
          %v2639 = vld [vmem:[#allocation12 + $0xb50] sm:$0xff]
          %v2640 = vld [vmem:[#allocation12 + $0xb58] sm:$0xff]
          %v2641 = vld [vmem:[#allocation12 + $0xb60] sm:$0xff]
          %v2642 = vld [vmem:[#allocation12 + $0xb68] sm:$0xff]
          %v2643 = vld [vmem:[#allocation12 + $0xb70] sm:$0xff]
          %v2644 = vld [vmem:[#allocation12 + $0xb78] sm:$0xff]
          %v2645 = vld [vmem:[#allocation12 + $0xb80] sm:$0xff]
          %v2646 = vld [vmem:[#allocation12 + $0xb88] sm:$0xff]
          %v2647 = vld [vmem:[#allocation12 + $0xb90] sm:$0xff]
          %v2648 = vld [vmem:[#allocation12 + $0xb98] sm:$0xff]
          %v2649 = vld [vmem:[#allocation12 + $0xba0] sm:$0xff]
          %v2650 = vld [vmem:[#allocation12 + $0xba8] sm:$0xff]
          %v2651 = vld [vmem:[#allocation12 + $0xbb0] sm:$0xff]
          %v2652 = vld [vmem:[#allocation12 + $0xbb8] sm:$0xff]
          %v2653 = vld [vmem:[#allocation12 + $0xbc0] sm:$0xff]
          %v2654 = vld [vmem:[#allocation12 + $0xbc8] sm:$0xff]
          %v2655 = vld [vmem:[#allocation12 + $0xbd0] sm:$0xff]
          %v2656 = vld [vmem:[#allocation12 + $0xbd8] sm:$0xff]
          %v2657 = vld [vmem:[#allocation12 + $0xbe0] sm:$0xff]
          %v2658 = vld [vmem:[#allocation12 + $0xbe8] sm:$0xff]
          %v2659 = vld [vmem:[#allocation12 + $0xbf0] sm:$0xff]
          %v2660 = vld [vmem:[#allocation12 + $0xbf8] sm:$0xff]
          %v2661 = vld [vmem:[#allocation12 + $0xc00] sm:$0xff]
          %v2662 = vld [vmem:[#allocation12 + $0xc08] sm:$0xff]
          %v2663 = vld [vmem:[#allocation12 + $0xc10] sm:$0xff]
          %v2664 = vld [vmem:[#allocation12 + $0xc18] sm:$0xff]
          %v2665 = vld [vmem:[#allocation12 + $0xc20] sm:$0xff]
          %v2666 = vld [vmem:[#allocation12 + $0xc28] sm:$0xff]
          %v2667 = vld [vmem:[#allocation12 + $0xc30] sm:$0xff]
          %v2668 = vld [vmem:[#allocation12 + $0xc38] sm:$0xff]
          %v2669 = vld [vmem:[#allocation12 + $0xc40] sm:$0xff]
          %v2670 = vld [vmem:[#allocation12 + $0xc48] sm:$0xff]
          %v2671 = vld [vmem:[#allocation12 + $0xc50] sm:$0xff]
          %v2672 = vld [vmem:[#allocation12 + $0xc58] sm:$0xff]
          %v2673 = vld [vmem:[#allocation12 + $0xc60] sm:$0xff]
          %v2674 = vld [vmem:[#allocation12 + $0xc68] sm:$0xff]
          %v2675 = vld [vmem:[#allocation12 + $0xc70] sm:$0xff]
          %v2676 = vld [vmem:[#allocation12 + $0xc78] sm:$0xff]
          %v2677 = vld [vmem:[#allocation12 + $0xc80] sm:$0xff]
          %v2678 = vld [vmem:[#allocation12 + $0xc88] sm:$0xff]
          %v2679 = vld [vmem:[#allocation12 + $0xc90] sm:$0xff]
          %v2680 = vld [vmem:[#allocation12 + $0xc98] sm:$0xff]
          %v2681 = vld [vmem:[#allocation12 + $0xca0] sm:$0xff]
          %v2682 = vld [vmem:[#allocation12 + $0xca8] sm:$0xff]
          %v2683 = vld [vmem:[#allocation12 + $0xcb0] sm:$0xff]
          %v2684 = vld [vmem:[#allocation12 + $0xcb8] sm:$0xff]
          %v2685 = vld [vmem:[#allocation12 + $0xcc0] sm:$0xff]
          %v2686 = vld [vmem:[#allocation12 + $0xcc8] sm:$0xff]
          %v2687 = vld [vmem:[#allocation12 + $0xcd0] sm:$0xff]
          %v2688 = vld [vmem:[#allocation12 + $0xcd8] sm:$0xff]
          %v2689 = vld [vmem:[#allocation12 + $0xce0] sm:$0xff]
          %v2690 = vld [vmem:[#allocation12 + $0xce8] sm:$0xff]
          %v2691 = vld [vmem:[#allocation12 + $0xcf0] sm:$0xff]
          %v2692 = vld [vmem:[#allocation12 + $0xcf8] sm:$0xff]
          %v2693 = vld [vmem:[#allocation12 + $0xd00] sm:$0xff]
          %v2694 = vld [vmem:[#allocation12 + $0xd08] sm:$0xff]
          %v2695 = vld [vmem:[#allocation12 + $0xd10] sm:$0xff]
          %v2696 = vld [vmem:[#allocation12 + $0xd18] sm:$0xff]
          %v2697 = vld [vmem:[#allocation12 + $0xd20] sm:$0xff]
          %v2698 = vld [vmem:[#allocation12 + $0xd28] sm:$0xff]
          %v2699 = vld [vmem:[#allocation12 + $0xd30] sm:$0xff]
          %v2700 = vld [vmem:[#allocation12 + $0xd38] sm:$0xff]
          %v2701 = vld [vmem:[#allocation12 + $0xd40] sm:$0xff]
          %v2702 = vld [vmem:[#allocation12 + $0xd48] sm:$0xff]
          %v2703 = vld [vmem:[#allocation12 + $0xd50] sm:$0xff]
          %v2704 = vld [vmem:[#allocation12 + $0xd58] sm:$0xff]
          %v2705 = vld [vmem:[#allocation12 + $0xd60] sm:$0xff]
          %v2706 = vld [vmem:[#allocation12 + $0xd68] sm:$0xff]
          %v2707 = vld [vmem:[#allocation12 + $0xd70] sm:$0xff]
          %v2708 = vld [vmem:[#allocation12 + $0xd78] sm:$0xff]
          %v2709 = vld [vmem:[#allocation12 + $0xd80] sm:$0xff]
          %v2710 = vld [vmem:[#allocation12 + $0xd88] sm:$0xff]
          %v2711 = vld [vmem:[#allocation12 + $0xd90] sm:$0xff]
          %v2712 = vld [vmem:[#allocation12 + $0xd98] sm:$0xff]
          %v2713 = vld [vmem:[#allocation12 + $0xda0] sm:$0xff]
          %v2714 = vld [vmem:[#allocation12 + $0xda8] sm:$0xff]
          %v2715 = vld [vmem:[#allocation12 + $0xdb0] sm:$0xff]
          %v2716 = vld [vmem:[#allocation12 + $0xdb8] sm:$0xff]
          %v2717 = vld [vmem:[#allocation12 + $0xdc0] sm:$0xff]
          %v2718 = vld [vmem:[#allocation12 + $0xdc8] sm:$0xff]
          %v2719 = vld [vmem:[#allocation12 + $0xdd0] sm:$0xff]
          %v2720 = vld [vmem:[#allocation12 + $0xdd8] sm:$0xff]
          %v2721 = vld [vmem:[#allocation12 + $0xde0] sm:$0xff]
          %v2722 = vld [vmem:[#allocation12 + $0xde8] sm:$0xff]
          %v2723 = vld [vmem:[#allocation12 + $0xdf0] sm:$0xff]
          %v2724 = vld [vmem:[#allocation12 + $0xdf8] sm:$0xff]
          %v2725 = vld [vmem:[#allocation12 + $0xe00] sm:$0xff]
          %v2726 = vld [vmem:[#allocation12 + $0xe08] sm:$0xff]
          %v2727 = vld [vmem:[#allocation12 + $0xe10] sm:$0xff]
          %v2728 = vld [vmem:[#allocation12 + $0xe18] sm:$0xff]
          %v2729 = vld [vmem:[#allocation12 + $0xe20] sm:$0xff]
          %v2730 = vld [vmem:[#allocation12 + $0xe28] sm:$0xff]
          %v2731 = vld [vmem:[#allocation12 + $0xe30] sm:$0xff]
          %v2732 = vld [vmem:[#allocation12 + $0xe38] sm:$0xff]
          %v2733 = vld [vmem:[#allocation12 + $0xe40] sm:$0xff]
          %v2734 = vld [vmem:[#allocation12 + $0xe48] sm:$0xff]
          %v2735 = vld [vmem:[#allocation12 + $0xe50] sm:$0xff]
          %v2736 = vld [vmem:[#allocation12 + $0xe58] sm:$0xff]
          %v2737 = vld [vmem:[#allocation12 + $0xe60] sm:$0xff]
          %v2738 = vld [vmem:[#allocation12 + $0xe68] sm:$0xff]
          %v2739 = vld [vmem:[#allocation12 + $0xe70] sm:$0xff]
          %v2740 = vld [vmem:[#allocation12 + $0xe78] sm:$0xff]
          %v2741 = vld [vmem:[#allocation12 + $0xe80] sm:$0xff]
          %v2742 = vld [vmem:[#allocation12 + $0xe88] sm:$0xff]
          %v2743 = vld [vmem:[#allocation12 + $0xe90] sm:$0xff]
          %v2744 = vld [vmem:[#allocation12 + $0xe98] sm:$0xff]
          %v2745 = vld [vmem:[#allocation12 + $0xea0] sm:$0xff]
          %v2746 = vld [vmem:[#allocation12 + $0xea8] sm:$0xff]
          %v2747 = vld [vmem:[#allocation12 + $0xeb0] sm:$0xff]
          %v2748 = vld [vmem:[#allocation12 + $0xeb8] sm:$0xff]
          %v2749 = vld [vmem:[#allocation12 + $0xec0] sm:$0xff]
          %v2750 = vld [vmem:[#allocation12 + $0xec8] sm:$0xff]
          %v2751 = vld [vmem:[#allocation12 + $0xed0] sm:$0xff]
          %v2752 = vld [vmem:[#allocation12 + $0xed8] sm:$0xff]
          %v2753 = vld [vmem:[#allocation12 + $0xee0] sm:$0xff]
          %v2754 = vld [vmem:[#allocation12 + $0xee8] sm:$0xff]
          %v2755 = vld [vmem:[#allocation12 + $0xef0] sm:$0xff]
          %v2756 = vld [vmem:[#allocation12 + $0xef8] sm:$0xff]
          %v2757 = vld [vmem:[#allocation12 + $0xf00] sm:$0xff]
          %v2758 = vld [vmem:[#allocation12 + $0xf08] sm:$0xff]
          %v2759 = vld [vmem:[#allocation12 + $0xf10] sm:$0xff]
          %v2760 = vld [vmem:[#allocation12 + $0xf18] sm:$0xff]
          %v2761 = vld [vmem:[#allocation12 + $0xf20] sm:$0xff]
          %v2762 = vld [vmem:[#allocation12 + $0xf28] sm:$0xff]
          %v2763 = vld [vmem:[#allocation12 + $0xf30] sm:$0xff]
          %v2764 = vld [vmem:[#allocation12 + $0xf38] sm:$0xff]
          %v2765 = vld [vmem:[#allocation12 + $0xf40] sm:$0xff]
          %v2766 = vld [vmem:[#allocation12 + $0xf48] sm:$0xff]
          %v2767 = vld [vmem:[#allocation12 + $0xf50] sm:$0xff]
          %v2768 = vld [vmem:[#allocation12 + $0xf58] sm:$0xff]
          %v2769 = vld [vmem:[#allocation12 + $0xf60] sm:$0xff]
          %v2770 = vld [vmem:[#allocation12 + $0xf68] sm:$0xff]
          %v2771 = vld [vmem:[#allocation12 + $0xf70] sm:$0xff]
          %v2772 = vld [vmem:[#allocation12 + $0xf78] sm:$0xff]
          %v2773 = vld [vmem:[#allocation12 + $0xf80] sm:$0xff]
          %v2774 = vld [vmem:[#allocation12 + $0xf88] sm:$0xff]
          %v2775 = vld [vmem:[#allocation12 + $0xf90] sm:$0xff]
          %v2776 = vld [vmem:[#allocation12 + $0xf98] sm:$0xff]
          %v2777 = vld [vmem:[#allocation12 + $0xfa0] sm:$0xff]
          %v2778 = vld [vmem:[#allocation12 + $0xfa8] sm:$0xff]
          %v2779 = vld [vmem:[#allocation12 + $0xfb0] sm:$0xff]
          %v2780 = vld [vmem:[#allocation12 + $0xfb8] sm:$0xff]
          %v2781 = vld [vmem:[#allocation12 + $0xfc0] sm:$0xff]
          %v2782 = vld [vmem:[#allocation12 + $0xfc8] sm:$0xff]
          %v2783 = vld [vmem:[#allocation12 + $0xfd0] sm:$0xff]
          %v2784 = vld [vmem:[#allocation12 + $0xfd8] sm:$0xff]
          %v2785 = vld [vmem:[#allocation12 + $0xfe0] sm:$0xff]
          %v2786 = vld [vmem:[#allocation12 + $0xfe8] sm:$0xff]
          %v2787 = vld [vmem:[#allocation12 + $0xff0] sm:$0xff]
          %v2788 = vld [vmem:[#allocation12 + $0xff8] sm:$0xff]
          %v2789 = vld [vmem:[#allocation12 + $0x1000] sm:$0xff]
          %v2790 = vld [vmem:[#allocation12 + $0x1008] sm:$0xff]
          %v2791 = vld [vmem:[#allocation12 + $0x1010] sm:$0xff]
          %v2792 = vld [vmem:[#allocation12 + $0x1018] sm:$0xff]
          %v2793 = vld [vmem:[#allocation12 + $0x1020] sm:$0xff]
          %v2794 = vld [vmem:[#allocation12 + $0x1028] sm:$0xff]
          %v2795 = vld [vmem:[#allocation12 + $0x1030] sm:$0xff]
          %v2796 = vld [vmem:[#allocation12 + $0x1038] sm:$0xff]
          %v2797 = vld [vmem:[#allocation12 + $0x1040] sm:$0xff]
          %v2798 = vld [vmem:[#allocation12 + $0x1048] sm:$0xff]
          %v2799 = vld [vmem:[#allocation12 + $0x1050] sm:$0xff]
          %v2800 = vld [vmem:[#allocation12 + $0x1058] sm:$0xff]
          %v2801 = vld [vmem:[#allocation12 + $0x1060] sm:$0xff]
          %v2802 = vld [vmem:[#allocation12 + $0x1068] sm:$0xff]
          %v2803 = vld [vmem:[#allocation12 + $0x1070] sm:$0xff]
          %v2804 = vld [vmem:[#allocation12 + $0x1078] sm:$0xff]
          %v2805 = vld [vmem:[#allocation12 + $0x1080] sm:$0xff]
          %v2806 = vld [vmem:[#allocation12 + $0x1088] sm:$0xff]
          %v2807 = vld [vmem:[#allocation12 + $0x1090] sm:$0xff]
          %v2808 = vld [vmem:[#allocation12 + $0x1098] sm:$0xff]
          %v2809 = vld [vmem:[#allocation12 + $0x10a0] sm:$0xff]
          %v2810 = vld [vmem:[#allocation12 + $0x10a8] sm:$0xff]
          %v2811 = vld [vmem:[#allocation12 + $0x10b0] sm:$0xff]
          %v2812 = vld [vmem:[#allocation12 + $0x10b8] sm:$0xff]
          %v2813 = vld [vmem:[#allocation12 + $0x10c0] sm:$0xff]
          %v2814 = vld [vmem:[#allocation12 + $0x10c8] sm:$0xff]
          %v2815 = vld [vmem:[#allocation12 + $0x10d0] sm:$0xff]
          %v2816 = vld [vmem:[#allocation12 + $0x10d8] sm:$0xff]
          %v2817 = vld [vmem:[#allocation12 + $0x10e0] sm:$0xff]
          %v2818 = vld [vmem:[#allocation12 + $0x10e8] sm:$0xff]
          %v2819 = vld [vmem:[#allocation12 + $0x10f0] sm:$0xff]
          %v2820 = vld [vmem:[#allocation12 + $0x10f8] sm:$0xff]
          %v2821 = vld [vmem:[#allocation12 + $0x1100] sm:$0xff]
          %v2822 = vld [vmem:[#allocation12 + $0x1108] sm:$0xff]
          %v2823 = vld [vmem:[#allocation12 + $0x1110] sm:$0xff]
          %v2824 = vld [vmem:[#allocation12 + $0x1118] sm:$0xff]
          %v2825 = vld [vmem:[#allocation12 + $0x1120] sm:$0xff]
          %v2826 = vld [vmem:[#allocation12 + $0x1128] sm:$0xff]
          %v2827 = vld [vmem:[#allocation12 + $0x1130] sm:$0xff]
          %v2828 = vld [vmem:[#allocation12 + $0x1138] sm:$0xff]
          %v2829 = vld [vmem:[#allocation12 + $0x1140] sm:$0xff]
          %v2830 = vld [vmem:[#allocation12 + $0x1148] sm:$0xff]
          %v2831 = vld [vmem:[#allocation12 + $0x1150] sm:$0xff]
          %v2832 = vld [vmem:[#allocation12 + $0x1158] sm:$0xff]
          %v2833 = vld [vmem:[#allocation12 + $0x1160] sm:$0xff]
          %v2834 = vld [vmem:[#allocation12 + $0x1168] sm:$0xff]
          %v2835 = vld [vmem:[#allocation12 + $0x1170] sm:$0xff]
          %v2836 = vld [vmem:[#allocation12 + $0x1178] sm:$0xff]
          %v2837 = vld [vmem:[#allocation12 + $0x1180] sm:$0xff]
          %v2838 = vld [vmem:[#allocation12 + $0x1188] sm:$0xff]
          %v2839 = vld [vmem:[#allocation12 + $0x1190] sm:$0xff]
          %v2840 = vld [vmem:[#allocation12 + $0x1198] sm:$0xff]
          %v2841 = vld [vmem:[#allocation12 + $0x11a0] sm:$0xff]
          %v2842 = vld [vmem:[#allocation12 + $0x11a8] sm:$0xff]
          %v2843 = vld [vmem:[#allocation12 + $0x11b0] sm:$0xff]
          %v2844 = vld [vmem:[#allocation12 + $0x11b8] sm:$0xff]
          %v2845 = vld [vmem:[#allocation12 + $0x11c0] sm:$0xff]
          %v2846 = vld [vmem:[#allocation12 + $0x11c8] sm:$0xff]
          %v2847 = vld [vmem:[#allocation12 + $0x11d0] sm:$0xff]
          %v2848 = vld [vmem:[#allocation12 + $0x11d8] sm:$0xff]
          %v2849 = vld [vmem:[#allocation12 + $0x11e0] sm:$0xff]
          %v2850 = vld [vmem:[#allocation12 + $0x11e8] sm:$0xff]
          %v2851 = vld [vmem:[#allocation12 + $0x11f0] sm:$0xff]
          %v2852 = vld [vmem:[#allocation12 + $0x11f8] sm:$0xff]
          %v2853 = vld [vmem:[#allocation14] sm:$0x3f]
          %v2855 = vlaneseq
          %v2856 = vshrl.u32 %v2855, 7
          %v2857 = vsub.s32 0, %v2856
          %v2858 = vrot.slane %v2853, %v2857
          %v2859 = vlaneseq
          %v2860 = vshrl.u32 %v2859, 7
          %v2861 = vsub.s32 1, %v2860
          %v2862 = vrot.slane %v2853, %v2861
          %v2863 = vlaneseq
          %v2864 = vshrl.u32 %v2863, 7
          %v2865 = vsub.s32 2, %v2864
          %v2866 = vrot.slane %v2853, %v2865
          %v2867 = vlaneseq
          %v2868 = vshrl.u32 %v2867, 7
          %v2869 = vsub.s32 3, %v2868
          %v2870 = vrot.slane %v2853, %v2869
          %v2871 = vlaneseq
          %v2872 = vshrl.u32 %v2871, 7
          %v2873 = vsub.s32 4, %v2872
          %v2874 = vrot.slane %v2853, %v2873
          %v2875 = vlaneseq
          %v2876 = vshrl.u32 %v2875, 7
          %v2877 = vsub.s32 5, %v2876
          %v2878 = vrot.slane %v2853, %v2877
          %v3461 = vunpack.c.l.b16 %v2277
          %v3462 = vunpack.c.h.b16 %v2277
          %v3463 = vunpack.c.l.b16 %v2278
          %v3464 = vunpack.c.h.b16 %v2278
          %v3465 = vunpack.c.l.b16 %v2279
          %v3466 = vunpack.c.h.b16 %v2279
          %v3467 = vunpack.c.l.b16 %v2280
          %v3468 = vunpack.c.h.b16 %v2280
          %v3469 = vunpack.c.l.b16 %v2281
          %v3470 = vunpack.c.h.b16 %v2281
          %v3471 = vunpack.c.l.b16 %v2282
          %v3472 = vunpack.c.h.b16 %v2282
          %v3473 = vunpack.c.l.b16 %v2283
          %v3474 = vunpack.c.h.b16 %v2283
          %v3475 = vunpack.c.l.b16 %v2284
          %v3476 = vunpack.c.h.b16 %v2284
          %v3477 = vunpack.c.l.b16 %v2285
          %v3478 = vunpack.c.h.b16 %v2285
          %v3479 = vunpack.c.l.b16 %v2286
          %v3480 = vunpack.c.h.b16 %v2286
          %v3481 = vunpack.c.l.b16 %v2287
          %v3482 = vunpack.c.h.b16 %v2287
          %v3483 = vunpack.c.l.b16 %v2288
          %v3484 = vunpack.c.h.b16 %v2288
          %v3485 = vunpack.c.l.b16 %v2289
          %v3486 = vunpack.c.h.b16 %v2289
          %v3487 = vunpack.c.l.b16 %v2290
          %v3488 = vunpack.c.h.b16 %v2290
          %v3489 = vunpack.c.l.b16 %v2291
          %v3490 = vunpack.c.h.b16 %v2291
          %v3491 = vunpack.c.l.b16 %v2292
          %v3492 = vunpack.c.h.b16 %v2292
          %v3493 = vunpack.c.l.b16 %v2293
          %v3494 = vunpack.c.h.b16 %v2293
          %v3495 = vunpack.c.l.b16 %v2294
          %v3496 = vunpack.c.h.b16 %v2294
          %v3497 = vunpack.c.l.b16 %v2295
          %v3498 = vunpack.c.h.b16 %v2295
          %v3499 = vunpack.c.l.b16 %v2296
          %v3500 = vunpack.c.h.b16 %v2296
          %v3501 = vunpack.c.l.b16 %v2297
          %v3502 = vunpack.c.h.b16 %v2297
          %v3503 = vunpack.c.l.b16 %v2298
          %v3504 = vunpack.c.h.b16 %v2298
          %v3505 = vunpack.c.l.b16 %v2299
          %v3506 = vunpack.c.h.b16 %v2299
          %v3507 = vunpack.c.l.b16 %v2300
          %v3508 = vunpack.c.h.b16 %v2300
          %v3509 = vunpack.c.l.b16 %v2301
          %v3510 = vunpack.c.h.b16 %v2301
          %v3511 = vunpack.c.l.b16 %v2302
          %v3512 = vunpack.c.h.b16 %v2302
          %v3513 = vunpack.c.l.b16 %v2303
          %v3514 = vunpack.c.h.b16 %v2303
          %v3515 = vunpack.c.l.b16 %v2304
          %v3516 = vunpack.c.h.b16 %v2304
          %v3517 = vunpack.c.l.b16 %v2305
          %v3518 = vunpack.c.h.b16 %v2305
          %v3519 = vunpack.c.l.b16 %v2306
          %v3520 = vunpack.c.h.b16 %v2306
          %v3521 = vunpack.c.l.b16 %v2307
          %v3522 = vunpack.c.h.b16 %v2307
          %v3523 = vunpack.c.l.b16 %v2308
          %v3524 = vunpack.c.h.b16 %v2308
          %v3525 = vunpack.c.l.b16 %v2309
          %v3526 = vunpack.c.h.b16 %v2309
          %v3527 = vunpack.c.l.b16 %v2310
          %v3528 = vunpack.c.h.b16 %v2310
          %v3529 = vunpack.c.l.b16 %v2311
          %v3530 = vunpack.c.h.b16 %v2311
          %v3531 = vunpack.c.l.b16 %v2312
          %v3532 = vunpack.c.h.b16 %v2312
          %v3533 = vunpack.c.l.b16 %v2313
          %v3534 = vunpack.c.h.b16 %v2313
          %v3535 = vunpack.c.l.b16 %v2314
          %v3536 = vunpack.c.h.b16 %v2314
          %v3537 = vunpack.c.l.b16 %v2315
          %v3538 = vunpack.c.h.b16 %v2315
          %v3539 = vunpack.c.l.b16 %v2316
          %v3540 = vunpack.c.h.b16 %v2316
          %v3541 = vunpack.c.l.b16 %v2317
          %v3542 = vunpack.c.h.b16 %v2317
          %v3543 = vunpack.c.l.b16 %v2318
          %v3544 = vunpack.c.h.b16 %v2318
          %v3545 = vunpack.c.l.b16 %v2319
          %v3546 = vunpack.c.h.b16 %v2319
          %v3547 = vunpack.c.l.b16 %v2320
          %v3548 = vunpack.c.h.b16 %v2320
          %v3549 = vunpack.c.l.b16 %v2321
          %v3550 = vunpack.c.h.b16 %v2321
          %v3551 = vunpack.c.l.b16 %v2322
          %v3552 = vunpack.c.h.b16 %v2322
          %v3553 = vunpack.c.l.b16 %v2323
          %v3554 = vunpack.c.h.b16 %v2323
          %v3555 = vunpack.c.l.b16 %v2324
          %v3556 = vunpack.c.h.b16 %v2324
          %v3557 = vunpack.c.l.b16 %v2325
          %v3558 = vunpack.c.h.b16 %v2325
          %v3559 = vunpack.c.l.b16 %v2326
          %v3560 = vunpack.c.h.b16 %v2326
          %v3561 = vunpack.c.l.b16 %v2327
          %v3562 = vunpack.c.h.b16 %v2327
          %v3563 = vunpack.c.l.b16 %v2328
          %v3564 = vunpack.c.h.b16 %v2328
          %v3565 = vunpack.c.l.b16 %v2329
          %v3566 = vunpack.c.h.b16 %v2329
          %v3567 = vunpack.c.l.b16 %v2330
          %v3568 = vunpack.c.h.b16 %v2330
          %v3569 = vunpack.c.l.b16 %v2331
          %v3570 = vunpack.c.h.b16 %v2331
          %v3571 = vunpack.c.l.b16 %v2332
          %v3572 = vunpack.c.h.b16 %v2332
          %v3573 = vunpack.c.l.b16 %v2333
          %v3574 = vunpack.c.h.b16 %v2333
          %v3575 = vunpack.c.l.b16 %v2334
          %v3576 = vunpack.c.h.b16 %v2334
          %v3577 = vunpack.c.l.b16 %v2335
          %v3578 = vunpack.c.h.b16 %v2335
          %v3579 = vunpack.c.l.b16 %v2336
          %v3580 = vunpack.c.h.b16 %v2336
          %v3581 = vunpack.c.l.b16 %v2337
          %v3582 = vunpack.c.h.b16 %v2337
          %v3583 = vunpack.c.l.b16 %v2338
          %v3584 = vunpack.c.h.b16 %v2338
          %v3585 = vunpack.c.l.b16 %v2339
          %v3586 = vunpack.c.h.b16 %v2339
          %v3587 = vunpack.c.l.b16 %v2340
          %v3588 = vunpack.c.h.b16 %v2340
          %v3589 = vunpack.c.l.b16 %v2341
          %v3590 = vunpack.c.h.b16 %v2341
          %v3591 = vunpack.c.l.b16 %v2342
          %v3592 = vunpack.c.h.b16 %v2342
          %v3593 = vunpack.c.l.b16 %v2343
          %v3594 = vunpack.c.h.b16 %v2343
          %v3595 = vunpack.c.l.b16 %v2344
          %v3596 = vunpack.c.h.b16 %v2344
          %v3597 = vunpack.c.l.b16 %v2345
          %v3598 = vunpack.c.h.b16 %v2345
          %v3599 = vunpack.c.l.b16 %v2346
          %v3600 = vunpack.c.h.b16 %v2346
          %v3601 = vunpack.c.l.b16 %v2347
          %v3602 = vunpack.c.h.b16 %v2347
          %v3603 = vunpack.c.l.b16 %v2348
          %v3604 = vunpack.c.h.b16 %v2348
          %v3605 = vunpack.c.l.b16 %v2349
          %v3606 = vunpack.c.h.b16 %v2349
          %v3607 = vunpack.c.l.b16 %v2350
          %v3608 = vunpack.c.h.b16 %v2350
          %v3609 = vunpack.c.l.b16 %v2351
          %v3610 = vunpack.c.h.b16 %v2351
          %v3611 = vunpack.c.l.b16 %v2352
          %v3612 = vunpack.c.h.b16 %v2352
          %v3613 = vunpack.c.l.b16 %v2353
          %v3614 = vunpack.c.h.b16 %v2353
          %v3615 = vunpack.c.l.b16 %v2354
          %v3616 = vunpack.c.h.b16 %v2354
          %v3617 = vunpack.c.l.b16 %v2355
          %v3618 = vunpack.c.h.b16 %v2355
          %v3619 = vunpack.c.l.b16 %v2356
          %v3620 = vunpack.c.h.b16 %v2356
          %v3621 = vunpack.c.l.b16 %v2357
          %v3622 = vunpack.c.h.b16 %v2357
          %v3623 = vunpack.c.l.b16 %v2358
          %v3624 = vunpack.c.h.b16 %v2358
          %v3625 = vunpack.c.l.b16 %v2359
          %v3626 = vunpack.c.h.b16 %v2359
          %v3627 = vunpack.c.l.b16 %v2360
          %v3628 = vunpack.c.h.b16 %v2360
          %v3629 = vunpack.c.l.b16 %v2361
          %v3630 = vunpack.c.h.b16 %v2361
          %v3631 = vunpack.c.l.b16 %v2362
          %v3632 = vunpack.c.h.b16 %v2362
          %v3633 = vunpack.c.l.b16 %v2363
          %v3634 = vunpack.c.h.b16 %v2363
          %v3635 = vunpack.c.l.b16 %v2364
          %v3636 = vunpack.c.h.b16 %v2364
          %v3637 = vunpack.c.l.b16 %v2365
          %v3638 = vunpack.c.h.b16 %v2365
          %v3639 = vunpack.c.l.b16 %v2366
          %v3640 = vunpack.c.h.b16 %v2366
          %v3641 = vunpack.c.l.b16 %v2367
          %v3642 = vunpack.c.h.b16 %v2367
          %v3643 = vunpack.c.l.b16 %v2368
          %v3644 = vunpack.c.h.b16 %v2368
          %v3645 = vunpack.c.l.b16 %v2369
          %v3646 = vunpack.c.h.b16 %v2369
          %v3647 = vunpack.c.l.b16 %v2370
          %v3648 = vunpack.c.h.b16 %v2370
          %v3649 = vunpack.c.l.b16 %v2371
          %v3650 = vunpack.c.h.b16 %v2371
          %v3651 = vunpack.c.l.b16 %v2372
          %v3652 = vunpack.c.h.b16 %v2372
          %v3653 = vunpack.c.l.b16 %v2373
          %v3654 = vunpack.c.h.b16 %v2373
          %v3655 = vunpack.c.l.b16 %v2374
          %v3656 = vunpack.c.h.b16 %v2374
          %v3657 = vunpack.c.l.b16 %v2375
          %v3658 = vunpack.c.h.b16 %v2375
          %v3659 = vunpack.c.l.b16 %v2376
          %v3660 = vunpack.c.h.b16 %v2376
          %v3661 = vunpack.c.l.b16 %v2377
          %v3662 = vunpack.c.h.b16 %v2377
          %v3663 = vunpack.c.l.b16 %v2378
          %v3664 = vunpack.c.h.b16 %v2378
          %v3665 = vunpack.c.l.b16 %v2379
          %v3666 = vunpack.c.h.b16 %v2379
          %v3667 = vunpack.c.l.b16 %v2380
          %v3668 = vunpack.c.h.b16 %v2380
          %v3669 = vunpack.c.l.b16 %v2381
          %v3670 = vunpack.c.h.b16 %v2381
          %v3671 = vunpack.c.l.b16 %v2382
          %v3672 = vunpack.c.h.b16 %v2382
          %v3673 = vunpack.c.l.b16 %v2383
          %v3674 = vunpack.c.h.b16 %v2383
          %v3675 = vunpack.c.l.b16 %v2384
          %v3676 = vunpack.c.h.b16 %v2384
          %v3677 = vunpack.c.l.b16 %v2385
          %v3678 = vunpack.c.h.b16 %v2385
          %v3679 = vunpack.c.l.b16 %v2386
          %v3680 = vunpack.c.h.b16 %v2386
          %v3681 = vunpack.c.l.b16 %v2387
          %v3682 = vunpack.c.h.b16 %v2387
          %v3683 = vunpack.c.l.b16 %v2388
          %v3684 = vunpack.c.h.b16 %v2388
          %v3685 = vunpack.c.l.b16 %v2389
          %v3686 = vunpack.c.h.b16 %v2389
          %v3687 = vunpack.c.l.b16 %v2390
          %v3688 = vunpack.c.h.b16 %v2390
          %v3689 = vunpack.c.l.b16 %v2391
          %v3690 = vunpack.c.h.b16 %v2391
          %v3691 = vunpack.c.l.b16 %v2392
          %v3692 = vunpack.c.h.b16 %v2392
          %v3693 = vunpack.c.l.b16 %v2393
          %v3694 = vunpack.c.h.b16 %v2393
          %v3695 = vunpack.c.l.b16 %v2394
          %v3696 = vunpack.c.h.b16 %v2394
          %v3697 = vunpack.c.l.b16 %v2395
          %v3698 = vunpack.c.h.b16 %v2395
          %v3699 = vunpack.c.l.b16 %v2396
          %v3700 = vunpack.c.h.b16 %v2396
          %v3701 = vunpack.c.l.b16 %v2397
          %v3702 = vunpack.c.h.b16 %v2397
          %v3703 = vunpack.c.l.b16 %v2398
          %v3704 = vunpack.c.h.b16 %v2398
          %v3705 = vunpack.c.l.b16 %v2399
          %v3706 = vunpack.c.h.b16 %v2399
          %v3707 = vunpack.c.l.b16 %v2400
          %v3708 = vunpack.c.h.b16 %v2400
          %v3709 = vunpack.c.l.b16 %v2401
          %v3710 = vunpack.c.h.b16 %v2401
          %v3711 = vunpack.c.l.b16 %v2402
          %v3712 = vunpack.c.h.b16 %v2402
          %v3713 = vunpack.c.l.b16 %v2403
          %v3714 = vunpack.c.h.b16 %v2403
          %v3715 = vunpack.c.l.b16 %v2404
          %v3716 = vunpack.c.h.b16 %v2404
          %v3717 = vunpack.c.l.b16 %v2405
          %v3718 = vunpack.c.h.b16 %v2405
          %v3719 = vunpack.c.l.b16 %v2406
          %v3720 = vunpack.c.h.b16 %v2406
          %v3721 = vunpack.c.l.b16 %v2407
          %v3722 = vunpack.c.h.b16 %v2407
          %v3723 = vunpack.c.l.b16 %v2408
          %v3724 = vunpack.c.h.b16 %v2408
          %v3725 = vunpack.c.l.b16 %v2409
          %v3726 = vunpack.c.h.b16 %v2409
          %v3727 = vunpack.c.l.b16 %v2410
          %v3728 = vunpack.c.h.b16 %v2410
          %v3729 = vunpack.c.l.b16 %v2411
          %v3730 = vunpack.c.h.b16 %v2411
          %v3731 = vunpack.c.l.b16 %v2412
          %v3732 = vunpack.c.h.b16 %v2412
          %v3733 = vunpack.c.l.b16 %v2413
          %v3734 = vunpack.c.h.b16 %v2413
          %v3735 = vunpack.c.l.b16 %v2414
          %v3736 = vunpack.c.h.b16 %v2414
          %v3737 = vunpack.c.l.b16 %v2415
          %v3738 = vunpack.c.h.b16 %v2415
          %v3739 = vunpack.c.l.b16 %v2416
          %v3740 = vunpack.c.h.b16 %v2416
          %v3741 = vunpack.c.l.b16 %v2417
          %v3742 = vunpack.c.h.b16 %v2417
          %v3743 = vunpack.c.l.b16 %v2418
          %v3744 = vunpack.c.h.b16 %v2418
          %v3745 = vunpack.c.l.b16 %v2419
          %v3746 = vunpack.c.h.b16 %v2419
          %v3747 = vunpack.c.l.b16 %v2420
          %v3748 = vunpack.c.h.b16 %v2420
          %v3749 = vunpack.c.l.b16 %v2421
          %v3750 = vunpack.c.h.b16 %v2421
          %v3751 = vunpack.c.l.b16 %v2422
          %v3752 = vunpack.c.h.b16 %v2422
          %v3753 = vunpack.c.l.b16 %v2423
          %v3754 = vunpack.c.h.b16 %v2423
          %v3755 = vunpack.c.l.b16 %v2424
          %v3756 = vunpack.c.h.b16 %v2424
          %v3757 = vunpack.c.l.b16 %v2425
          %v3758 = vunpack.c.h.b16 %v2425
          %v3759 = vunpack.c.l.b16 %v2426
          %v3760 = vunpack.c.h.b16 %v2426
          %v3761 = vunpack.c.l.b16 %v2427
          %v3762 = vunpack.c.h.b16 %v2427
          %v3763 = vunpack.c.l.b16 %v2428
          %v3764 = vunpack.c.h.b16 %v2428
          %v3765 = vunpack.c.l.b16 %v2429
          %v3766 = vunpack.c.h.b16 %v2429
          %v3767 = vunpack.c.l.b16 %v2430
          %v3768 = vunpack.c.h.b16 %v2430
          %v3769 = vunpack.c.l.b16 %v2431
          %v3770 = vunpack.c.h.b16 %v2431
          %v3771 = vunpack.c.l.b16 %v2432
          %v3772 = vunpack.c.h.b16 %v2432
          %v3773 = vunpack.c.l.b16 %v2433
          %v3774 = vunpack.c.h.b16 %v2433
          %v3775 = vunpack.c.l.b16 %v2434
          %v3776 = vunpack.c.h.b16 %v2434
          %v3777 = vunpack.c.l.b16 %v2435
          %v3778 = vunpack.c.h.b16 %v2435
          %v3779 = vunpack.c.l.b16 %v2436
          %v3780 = vunpack.c.h.b16 %v2436
          %v3781 = vunpack.c.l.b16 %v2437
          %v3782 = vunpack.c.h.b16 %v2437
          %v3783 = vunpack.c.l.b16 %v2438
          %v3784 = vunpack.c.h.b16 %v2438
          %v3785 = vunpack.c.l.b16 %v2439
          %v3786 = vunpack.c.h.b16 %v2439
          %v3787 = vunpack.c.l.b16 %v2440
          %v3788 = vunpack.c.h.b16 %v2440
          %v3789 = vunpack.c.l.b16 %v2441
          %v3790 = vunpack.c.h.b16 %v2441
          %v3791 = vunpack.c.l.b16 %v2442
          %v3792 = vunpack.c.h.b16 %v2442
          %v3793 = vunpack.c.l.b16 %v2443
          %v3794 = vunpack.c.h.b16 %v2443
          %v3795 = vunpack.c.l.b16 %v2444
          %v3796 = vunpack.c.h.b16 %v2444
          %v3797 = vunpack.c.l.b16 %v2445
          %v3798 = vunpack.c.h.b16 %v2445
          %v3799 = vunpack.c.l.b16 %v2446
          %v3800 = vunpack.c.h.b16 %v2446
          %v3801 = vunpack.c.l.b16 %v2447
          %v3802 = vunpack.c.h.b16 %v2447
          %v3803 = vunpack.c.l.b16 %v2448
          %v3804 = vunpack.c.h.b16 %v2448
          %v3805 = vunpack.c.l.b16 %v2449
          %v3806 = vunpack.c.h.b16 %v2449
          %v3807 = vunpack.c.l.b16 %v2450
          %v3808 = vunpack.c.h.b16 %v2450
          %v3809 = vunpack.c.l.b16 %v2451
          %v3810 = vunpack.c.h.b16 %v2451
          %v3811 = vunpack.c.l.b16 %v2452
          %v3812 = vunpack.c.h.b16 %v2452
          %v3813 = vunpack.c.l.b16 %v2453
          %v3814 = vunpack.c.h.b16 %v2453
          %v3815 = vunpack.c.l.b16 %v2454
          %v3816 = vunpack.c.h.b16 %v2454
          %v3817 = vunpack.c.l.b16 %v2455
          %v3818 = vunpack.c.h.b16 %v2455
          %v3819 = vunpack.c.l.b16 %v2456
          %v3820 = vunpack.c.h.b16 %v2456
          %v3821 = vunpack.c.l.b16 %v2457
          %v3822 = vunpack.c.h.b16 %v2457
          %v3823 = vunpack.c.l.b16 %v2458
          %v3824 = vunpack.c.h.b16 %v2458
          %v3825 = vunpack.c.l.b16 %v2459
          %v3826 = vunpack.c.h.b16 %v2459
          %v3827 = vunpack.c.l.b16 %v2460
          %v3828 = vunpack.c.h.b16 %v2460
          %v3829 = vunpack.c.l.b16 %v2461
          %v3830 = vunpack.c.h.b16 %v2461
          %v3831 = vunpack.c.l.b16 %v2462
          %v3832 = vunpack.c.h.b16 %v2462
          %v3833 = vunpack.c.l.b16 %v2463
          %v3834 = vunpack.c.h.b16 %v2463
          %v3835 = vunpack.c.l.b16 %v2464
          %v3836 = vunpack.c.h.b16 %v2464
          %v3837 = vunpack.c.l.b16 %v2465
          %v3838 = vunpack.c.h.b16 %v2465
          %v3839 = vunpack.c.l.b16 %v2466
          %v3840 = vunpack.c.h.b16 %v2466
          %v3841 = vunpack.c.l.b16 %v2467
          %v3842 = vunpack.c.h.b16 %v2467
          %v3843 = vunpack.c.l.b16 %v2468
          %v3844 = vunpack.c.h.b16 %v2468
          %v3845 = vunpack.c.l.b16 %v2469
          %v3846 = vunpack.c.h.b16 %v2469
          %v3847 = vunpack.c.l.b16 %v2470
          %v3848 = vunpack.c.h.b16 %v2470
          %v3849 = vunpack.c.l.b16 %v2471
          %v3850 = vunpack.c.h.b16 %v2471
          %v3851 = vunpack.c.l.b16 %v2472
          %v3852 = vunpack.c.h.b16 %v2472
          %v3853 = vunpack.c.l.b16 %v2473
          %v3854 = vunpack.c.h.b16 %v2473
          %v3855 = vunpack.c.l.b16 %v2474
          %v3856 = vunpack.c.h.b16 %v2474
          %v3857 = vunpack.c.l.b16 %v2475
          %v3858 = vunpack.c.h.b16 %v2475
          %v3859 = vunpack.c.l.b16 %v2476
          %v3860 = vunpack.c.h.b16 %v2476
          %v3861 = vunpack.c.l.b16 %v2477
          %v3862 = vunpack.c.h.b16 %v2477
          %v3863 = vunpack.c.l.b16 %v2478
          %v3864 = vunpack.c.h.b16 %v2478
          %v3865 = vunpack.c.l.b16 %v2479
          %v3866 = vunpack.c.h.b16 %v2479
          %v3867 = vunpack.c.l.b16 %v2480
          %v3868 = vunpack.c.h.b16 %v2480
          %v3869 = vunpack.c.l.b16 %v2481
          %v3870 = vunpack.c.h.b16 %v2481
          %v3871 = vunpack.c.l.b16 %v2482
          %v3872 = vunpack.c.h.b16 %v2482
          %v3873 = vunpack.c.l.b16 %v2483
          %v3874 = vunpack.c.h.b16 %v2483
          %v3875 = vunpack.c.l.b16 %v2484
          %v3876 = vunpack.c.h.b16 %v2484
          %v3877 = vunpack.c.l.b16 %v2485
          %v3878 = vunpack.c.h.b16 %v2485
          %v3879 = vunpack.c.l.b16 %v2486
          %v3880 = vunpack.c.h.b16 %v2486
          %v3881 = vunpack.c.l.b16 %v2487
          %v3882 = vunpack.c.h.b16 %v2487
          %v3883 = vunpack.c.l.b16 %v2488
          %v3884 = vunpack.c.h.b16 %v2488
          %v3885 = vunpack.c.l.b16 %v2489
          %v3886 = vunpack.c.h.b16 %v2489
          %v3887 = vunpack.c.l.b16 %v2490
          %v3888 = vunpack.c.h.b16 %v2490
          %v3889 = vunpack.c.l.b16 %v2491
          %v3890 = vunpack.c.h.b16 %v2491
          %v3891 = vunpack.c.l.b16 %v2492
          %v3892 = vunpack.c.h.b16 %v2492
          %v3893 = vunpack.c.l.b16 %v2493
          %v3894 = vunpack.c.h.b16 %v2493
          %v3895 = vunpack.c.l.b16 %v2494
          %v3896 = vunpack.c.h.b16 %v2494
          %v3897 = vunpack.c.l.b16 %v2495
          %v3898 = vunpack.c.h.b16 %v2495
          %v3899 = vunpack.c.l.b16 %v2496
          %v3900 = vunpack.c.h.b16 %v2496
          %v3901 = vunpack.c.l.b16 %v2497
          %v3902 = vunpack.c.h.b16 %v2497
          %v3903 = vunpack.c.l.b16 %v2498
          %v3904 = vunpack.c.h.b16 %v2498
          %v3905 = vunpack.c.l.b16 %v2499
          %v3906 = vunpack.c.h.b16 %v2499
          %v3907 = vunpack.c.l.b16 %v2500
          %v3908 = vunpack.c.h.b16 %v2500
          %v3909 = vunpack.c.l.b16 %v2501
          %v3910 = vunpack.c.h.b16 %v2501
          %v3911 = vunpack.c.l.b16 %v2502
          %v3912 = vunpack.c.h.b16 %v2502
          %v3913 = vunpack.c.l.b16 %v2503
          %v3914 = vunpack.c.h.b16 %v2503
          %v3915 = vunpack.c.l.b16 %v2504
          %v3916 = vunpack.c.h.b16 %v2504
          %v3917 = vunpack.c.l.b16 %v2505
          %v3918 = vunpack.c.h.b16 %v2505
          %v3919 = vunpack.c.l.b16 %v2506
          %v3920 = vunpack.c.h.b16 %v2506
          %v3921 = vunpack.c.l.b16 %v2507
          %v3922 = vunpack.c.h.b16 %v2507
          %v3923 = vunpack.c.l.b16 %v2508
          %v3924 = vunpack.c.h.b16 %v2508
          %v3925 = vunpack.c.l.b16 %v2509
          %v3926 = vunpack.c.h.b16 %v2509
          %v3927 = vunpack.c.l.b16 %v2510
          %v3928 = vunpack.c.h.b16 %v2510
          %v3929 = vunpack.c.l.b16 %v2511
          %v3930 = vunpack.c.h.b16 %v2511
          %v3931 = vunpack.c.l.b16 %v2512
          %v3932 = vunpack.c.h.b16 %v2512
          %v3933 = vunpack.c.l.b16 %v2513
          %v3934 = vunpack.c.h.b16 %v2513
          %v3935 = vunpack.c.l.b16 %v2514
          %v3936 = vunpack.c.h.b16 %v2514
          %v3937 = vunpack.c.l.b16 %v2515
          %v3938 = vunpack.c.h.b16 %v2515
          %v3939 = vunpack.c.l.b16 %v2516
          %v3940 = vunpack.c.h.b16 %v2516
          %v3941 = vunpack.c.l.b16 %v2517
          %v3942 = vunpack.c.h.b16 %v2517
          %v3943 = vunpack.c.l.b16 %v2518
          %v3944 = vunpack.c.h.b16 %v2518
          %v3945 = vunpack.c.l.b16 %v2519
          %v3946 = vunpack.c.h.b16 %v2519
          %v3947 = vunpack.c.l.b16 %v2520
          %v3948 = vunpack.c.h.b16 %v2520
          %v3949 = vunpack.c.l.b16 %v2521
          %v3950 = vunpack.c.h.b16 %v2521
          %v3951 = vunpack.c.l.b16 %v2522
          %v3952 = vunpack.c.h.b16 %v2522
          %v3953 = vunpack.c.l.b16 %v2523
          %v3954 = vunpack.c.h.b16 %v2523
          %v3955 = vunpack.c.l.b16 %v2524
          %v3956 = vunpack.c.h.b16 %v2524
          %v3957 = vunpack.c.l.b16 %v2525
          %v3958 = vunpack.c.h.b16 %v2525
          %v3959 = vunpack.c.l.b16 %v2526
          %v3960 = vunpack.c.h.b16 %v2526
          %v3961 = vunpack.c.l.b16 %v2527
          %v3962 = vunpack.c.h.b16 %v2527
          %v3963 = vunpack.c.l.b16 %v2528
          %v3964 = vunpack.c.h.b16 %v2528
          %v3965 = vunpack.c.l.b16 %v2529
          %v3966 = vunpack.c.h.b16 %v2529
          %v3967 = vunpack.c.l.b16 %v2530
          %v3968 = vunpack.c.h.b16 %v2530
          %v3969 = vunpack.c.l.b16 %v2531
          %v3970 = vunpack.c.h.b16 %v2531
          %v3971 = vunpack.c.l.b16 %v2532
          %v3972 = vunpack.c.h.b16 %v2532
          %v3973 = vunpack.c.l.b16 %v2533
          %v3974 = vunpack.c.h.b16 %v2533
          %v3975 = vunpack.c.l.b16 %v2534
          %v3976 = vunpack.c.h.b16 %v2534
          %v3977 = vunpack.c.l.b16 %v2535
          %v3978 = vunpack.c.h.b16 %v2535
          %v3979 = vunpack.c.l.b16 %v2536
          %v3980 = vunpack.c.h.b16 %v2536
          %v3981 = vunpack.c.l.b16 %v2537
          %v3982 = vunpack.c.h.b16 %v2537
          %v3983 = vunpack.c.l.b16 %v2538
          %v3984 = vunpack.c.h.b16 %v2538
          %v3985 = vunpack.c.l.b16 %v2539
          %v3986 = vunpack.c.h.b16 %v2539
          %v3987 = vunpack.c.l.b16 %v2540
          %v3988 = vunpack.c.h.b16 %v2540
          %v3989 = vunpack.c.l.b16 %v2541
          %v3990 = vunpack.c.h.b16 %v2541
          %v3991 = vunpack.c.l.b16 %v2542
          %v3992 = vunpack.c.h.b16 %v2542
          %v3993 = vunpack.c.l.b16 %v2543
          %v3994 = vunpack.c.h.b16 %v2543
          %v3995 = vunpack.c.l.b16 %v2544
          %v3996 = vunpack.c.h.b16 %v2544
          %v3997 = vunpack.c.l.b16 %v2545
          %v3998 = vunpack.c.h.b16 %v2545
          %v3999 = vunpack.c.l.b16 %v2546
          %v4000 = vunpack.c.h.b16 %v2546
          %v4001 = vunpack.c.l.b16 %v2547
          %v4002 = vunpack.c.h.b16 %v2547
          %v4003 = vunpack.c.l.b16 %v2548
          %v4004 = vunpack.c.h.b16 %v2548
          %v4005 = vunpack.c.l.b16 %v2549
          %v4006 = vunpack.c.h.b16 %v2549
          %v4007 = vunpack.c.l.b16 %v2550
          %v4008 = vunpack.c.h.b16 %v2550
          %v4009 = vunpack.c.l.b16 %v2551
          %v4010 = vunpack.c.h.b16 %v2551
          %v4011 = vunpack.c.l.b16 %v2552
          %v4012 = vunpack.c.h.b16 %v2552
          %v4013 = vunpack.c.l.b16 %v2553
          %v4014 = vunpack.c.h.b16 %v2553
          %v4015 = vunpack.c.l.b16 %v2554
          %v4016 = vunpack.c.h.b16 %v2554
          %v4017 = vunpack.c.l.b16 %v2555
          %v4018 = vunpack.c.h.b16 %v2555
          %v4019 = vunpack.c.l.b16 %v2556
          %v4020 = vunpack.c.h.b16 %v2556
          %v4021 = vunpack.c.l.b16 %v2557
          %v4022 = vunpack.c.h.b16 %v2557
          %v4023 = vunpack.c.l.b16 %v2558
          %v4024 = vunpack.c.h.b16 %v2558
          %v4025 = vunpack.c.l.b16 %v2559
          %v4026 = vunpack.c.h.b16 %v2559
          %v4027 = vunpack.c.l.b16 %v2560
          %v4028 = vunpack.c.h.b16 %v2560
          %v4029 = vunpack.c.l.b16 %v2561
          %v4030 = vunpack.c.h.b16 %v2561
          %v4031 = vunpack.c.l.b16 %v2562
          %v4032 = vunpack.c.h.b16 %v2562
          %v4033 = vunpack.c.l.b16 %v2563
          %v4034 = vunpack.c.h.b16 %v2563
          %v4035 = vunpack.c.l.b16 %v2564
          %v4036 = vunpack.c.h.b16 %v2564
          %v4037 = vunpack.c.l.b16 %v2565
          %v4038 = vunpack.c.h.b16 %v2565
          %v4039 = vunpack.c.l.b16 %v2566
          %v4040 = vunpack.c.h.b16 %v2566
          %v4041 = vunpack.c.l.b16 %v2567
          %v4042 = vunpack.c.h.b16 %v2567
          %v4043 = vunpack.c.l.b16 %v2568
          %v4044 = vunpack.c.h.b16 %v2568
          %v4045 = vunpack.c.l.b16 %v2569
          %v4046 = vunpack.c.h.b16 %v2569
          %v4047 = vunpack.c.l.b16 %v2570
          %v4048 = vunpack.c.h.b16 %v2570
          %v4049 = vunpack.c.l.b16 %v2571
          %v4050 = vunpack.c.h.b16 %v2571
          %v4051 = vunpack.c.l.b16 %v2572
          %v4052 = vunpack.c.h.b16 %v2572
          %v4053 = vunpack.c.l.b16 %v2573
          %v4054 = vunpack.c.h.b16 %v2573
          %v4055 = vunpack.c.l.b16 %v2574
          %v4056 = vunpack.c.h.b16 %v2574
          %v4057 = vunpack.c.l.b16 %v2575
          %v4058 = vunpack.c.h.b16 %v2575
          %v4059 = vunpack.c.l.b16 %v2576
          %v4060 = vunpack.c.h.b16 %v2576
          %v4061 = vunpack.c.l.b16 %v2577
          %v4062 = vunpack.c.h.b16 %v2577
          %v4063 = vunpack.c.l.b16 %v2578
          %v4064 = vunpack.c.h.b16 %v2578
          %v4065 = vunpack.c.l.b16 %v2579
          %v4066 = vunpack.c.h.b16 %v2579
          %v4067 = vunpack.c.l.b16 %v2580
          %v4068 = vunpack.c.h.b16 %v2580
          %v4069 = vunpack.c.l.b16 %v2581
          %v4070 = vunpack.c.h.b16 %v2581
          %v4071 = vunpack.c.l.b16 %v2582
          %v4072 = vunpack.c.h.b16 %v2582
          %v4073 = vunpack.c.l.b16 %v2583
          %v4074 = vunpack.c.h.b16 %v2583
          %v4075 = vunpack.c.l.b16 %v2584
          %v4076 = vunpack.c.h.b16 %v2584
          %v4077 = vunpack.c.l.b16 %v2585
          %v4078 = vunpack.c.h.b16 %v2585
          %v4079 = vunpack.c.l.b16 %v2586
          %v4080 = vunpack.c.h.b16 %v2586
          %v4081 = vunpack.c.l.b16 %v2587
          %v4082 = vunpack.c.h.b16 %v2587
          %v4083 = vunpack.c.l.b16 %v2588
          %v4084 = vunpack.c.h.b16 %v2588
          %v4085 = vunpack.c.l.b16 %v2589
          %v4086 = vunpack.c.h.b16 %v2589
          %v4087 = vunpack.c.l.b16 %v2590
          %v4088 = vunpack.c.h.b16 %v2590
          %v4089 = vunpack.c.l.b16 %v2591
          %v4090 = vunpack.c.h.b16 %v2591
          %v4091 = vunpack.c.l.b16 %v2592
          %v4092 = vunpack.c.h.b16 %v2592
          %v4093 = vunpack.c.l.b16 %v2593
          %v4094 = vunpack.c.h.b16 %v2593
          %v4095 = vunpack.c.l.b16 %v2594
          %v4096 = vunpack.c.h.b16 %v2594
          %v4097 = vunpack.c.l.b16 %v2595
          %v4098 = vunpack.c.h.b16 %v2595
          %v4099 = vunpack.c.l.b16 %v2596
          %v4100 = vunpack.c.h.b16 %v2596
          %v4101 = vunpack.c.l.b16 %v2597
          %v4102 = vunpack.c.h.b16 %v2597
          %v4103 = vunpack.c.l.b16 %v2598
          %v4104 = vunpack.c.h.b16 %v2598
          %v4105 = vunpack.c.l.b16 %v2599
          %v4106 = vunpack.c.h.b16 %v2599
          %v4107 = vunpack.c.l.b16 %v2600
          %v4108 = vunpack.c.h.b16 %v2600
          %v4109 = vunpack.c.l.b16 %v2601
          %v4110 = vunpack.c.h.b16 %v2601
          %v4111 = vunpack.c.l.b16 %v2602
          %v4112 = vunpack.c.h.b16 %v2602
          %v4113 = vunpack.c.l.b16 %v2603
          %v4114 = vunpack.c.h.b16 %v2603
          %v4115 = vunpack.c.l.b16 %v2604
          %v4116 = vunpack.c.h.b16 %v2604
          %v4117 = vunpack.c.l.b16 %v2605
          %v4118 = vunpack.c.h.b16 %v2605
          %v4119 = vunpack.c.l.b16 %v2606
          %v4120 = vunpack.c.h.b16 %v2606
          %v4121 = vunpack.c.l.b16 %v2607
          %v4122 = vunpack.c.h.b16 %v2607
          %v4123 = vunpack.c.l.b16 %v2608
          %v4124 = vunpack.c.h.b16 %v2608
          %v4125 = vunpack.c.l.b16 %v2609
          %v4126 = vunpack.c.h.b16 %v2609
          %v4127 = vunpack.c.l.b16 %v2610
          %v4128 = vunpack.c.h.b16 %v2610
          %v4129 = vunpack.c.l.b16 %v2611
          %v4130 = vunpack.c.h.b16 %v2611
          %v4131 = vunpack.c.l.b16 %v2612
          %v4132 = vunpack.c.h.b16 %v2612
          %v4133 = vunpack.c.l.b16 %v2613
          %v4134 = vunpack.c.h.b16 %v2613
          %v4135 = vunpack.c.l.b16 %v2614
          %v4136 = vunpack.c.h.b16 %v2614
          %v4137 = vunpack.c.l.b16 %v2615
          %v4138 = vunpack.c.h.b16 %v2615
          %v4139 = vunpack.c.l.b16 %v2616
          %v4140 = vunpack.c.h.b16 %v2616
          %v4141 = vunpack.c.l.b16 %v2617
          %v4142 = vunpack.c.h.b16 %v2617
          %v4143 = vunpack.c.l.b16 %v2618
          %v4144 = vunpack.c.h.b16 %v2618
          %v4145 = vunpack.c.l.b16 %v2619
          %v4146 = vunpack.c.h.b16 %v2619
          %v4147 = vunpack.c.l.b16 %v2620
          %v4148 = vunpack.c.h.b16 %v2620
          %v4149 = vunpack.c.l.b16 %v2621
          %v4150 = vunpack.c.h.b16 %v2621
          %v4151 = vunpack.c.l.b16 %v2622
          %v4152 = vunpack.c.h.b16 %v2622
          %v4153 = vunpack.c.l.b16 %v2623
          %v4154 = vunpack.c.h.b16 %v2623
          %v4155 = vunpack.c.l.b16 %v2624
          %v4156 = vunpack.c.h.b16 %v2624
          %v4157 = vunpack.c.l.b16 %v2625
          %v4158 = vunpack.c.h.b16 %v2625
          %v4159 = vunpack.c.l.b16 %v2626
          %v4160 = vunpack.c.h.b16 %v2626
          %v4161 = vunpack.c.l.b16 %v2627
          %v4162 = vunpack.c.h.b16 %v2627
          %v4163 = vunpack.c.l.b16 %v2628
          %v4164 = vunpack.c.h.b16 %v2628
          %v4165 = vunpack.c.l.b16 %v2629
          %v4166 = vunpack.c.h.b16 %v2629
          %v4167 = vunpack.c.l.b16 %v2630
          %v4168 = vunpack.c.h.b16 %v2630
          %v4169 = vunpack.c.l.b16 %v2631
          %v4170 = vunpack.c.h.b16 %v2631
          %v4171 = vunpack.c.l.b16 %v2632
          %v4172 = vunpack.c.h.b16 %v2632
          %v4173 = vunpack.c.l.b16 %v2633
          %v4174 = vunpack.c.h.b16 %v2633
          %v4175 = vunpack.c.l.b16 %v2634
          %v4176 = vunpack.c.h.b16 %v2634
          %v4177 = vunpack.c.l.b16 %v2635
          %v4178 = vunpack.c.h.b16 %v2635
          %v4179 = vunpack.c.l.b16 %v2636
          %v4180 = vunpack.c.h.b16 %v2636
          %v4181 = vunpack.c.l.b16 %v2637
          %v4182 = vunpack.c.h.b16 %v2637
          %v4183 = vunpack.c.l.b16 %v2638
          %v4184 = vunpack.c.h.b16 %v2638
          %v4185 = vunpack.c.l.b16 %v2639
          %v4186 = vunpack.c.h.b16 %v2639
          %v4187 = vunpack.c.l.b16 %v2640
          %v4188 = vunpack.c.h.b16 %v2640
          %v4189 = vunpack.c.l.b16 %v2641
          %v4190 = vunpack.c.h.b16 %v2641
          %v4191 = vunpack.c.l.b16 %v2642
          %v4192 = vunpack.c.h.b16 %v2642
          %v4193 = vunpack.c.l.b16 %v2643
          %v4194 = vunpack.c.h.b16 %v2643
          %v4195 = vunpack.c.l.b16 %v2644
          %v4196 = vunpack.c.h.b16 %v2644
          %v4197 = vunpack.c.l.b16 %v2645
          %v4198 = vunpack.c.h.b16 %v2645
          %v4199 = vunpack.c.l.b16 %v2646
          %v4200 = vunpack.c.h.b16 %v2646
          %v4201 = vunpack.c.l.b16 %v2647
          %v4202 = vunpack.c.h.b16 %v2647
          %v4203 = vunpack.c.l.b16 %v2648
          %v4204 = vunpack.c.h.b16 %v2648
          %v4205 = vunpack.c.l.b16 %v2649
          %v4206 = vunpack.c.h.b16 %v2649
          %v4207 = vunpack.c.l.b16 %v2650
          %v4208 = vunpack.c.h.b16 %v2650
          %v4209 = vunpack.c.l.b16 %v2651
          %v4210 = vunpack.c.h.b16 %v2651
          %v4211 = vunpack.c.l.b16 %v2652
          %v4212 = vunpack.c.h.b16 %v2652
          %v4213 = vunpack.c.l.b16 %v2653
          %v4214 = vunpack.c.h.b16 %v2653
          %v4215 = vunpack.c.l.b16 %v2654
          %v4216 = vunpack.c.h.b16 %v2654
          %v4217 = vunpack.c.l.b16 %v2655
          %v4218 = vunpack.c.h.b16 %v2655
          %v4219 = vunpack.c.l.b16 %v2656
          %v4220 = vunpack.c.h.b16 %v2656
          %v4221 = vunpack.c.l.b16 %v2657
          %v4222 = vunpack.c.h.b16 %v2657
          %v4223 = vunpack.c.l.b16 %v2658
          %v4224 = vunpack.c.h.b16 %v2658
          %v4225 = vunpack.c.l.b16 %v2659
          %v4226 = vunpack.c.h.b16 %v2659
          %v4227 = vunpack.c.l.b16 %v2660
          %v4228 = vunpack.c.h.b16 %v2660
          %v4229 = vunpack.c.l.b16 %v2661
          %v4230 = vunpack.c.h.b16 %v2661
          %v4231 = vunpack.c.l.b16 %v2662
          %v4232 = vunpack.c.h.b16 %v2662
          %v4233 = vunpack.c.l.b16 %v2663
          %v4234 = vunpack.c.h.b16 %v2663
          %v4235 = vunpack.c.l.b16 %v2664
          %v4236 = vunpack.c.h.b16 %v2664
          %v4237 = vunpack.c.l.b16 %v2665
          %v4238 = vunpack.c.h.b16 %v2665
          %v4239 = vunpack.c.l.b16 %v2666
          %v4240 = vunpack.c.h.b16 %v2666
          %v4241 = vunpack.c.l.b16 %v2667
          %v4242 = vunpack.c.h.b16 %v2667
          %v4243 = vunpack.c.l.b16 %v2668
          %v4244 = vunpack.c.h.b16 %v2668
          %v4245 = vunpack.c.l.b16 %v2669
          %v4246 = vunpack.c.h.b16 %v2669
          %v4247 = vunpack.c.l.b16 %v2670
          %v4248 = vunpack.c.h.b16 %v2670
          %v4249 = vunpack.c.l.b16 %v2671
          %v4250 = vunpack.c.h.b16 %v2671
          %v4251 = vunpack.c.l.b16 %v2672
          %v4252 = vunpack.c.h.b16 %v2672
          %v4253 = vunpack.c.l.b16 %v2673
          %v4254 = vunpack.c.h.b16 %v2673
          %v4255 = vunpack.c.l.b16 %v2674
          %v4256 = vunpack.c.h.b16 %v2674
          %v4257 = vunpack.c.l.b16 %v2675
          %v4258 = vunpack.c.h.b16 %v2675
          %v4259 = vunpack.c.l.b16 %v2676
          %v4260 = vunpack.c.h.b16 %v2676
          %v4261 = vunpack.c.l.b16 %v2677
          %v4262 = vunpack.c.h.b16 %v2677
          %v4263 = vunpack.c.l.b16 %v2678
          %v4264 = vunpack.c.h.b16 %v2678
          %v4265 = vunpack.c.l.b16 %v2679
          %v4266 = vunpack.c.h.b16 %v2679
          %v4267 = vunpack.c.l.b16 %v2680
          %v4268 = vunpack.c.h.b16 %v2680
          %v4269 = vunpack.c.l.b16 %v2681
          %v4270 = vunpack.c.h.b16 %v2681
          %v4271 = vunpack.c.l.b16 %v2682
          %v4272 = vunpack.c.h.b16 %v2682
          %v4273 = vunpack.c.l.b16 %v2683
          %v4274 = vunpack.c.h.b16 %v2683
          %v4275 = vunpack.c.l.b16 %v2684
          %v4276 = vunpack.c.h.b16 %v2684
          %v4277 = vunpack.c.l.b16 %v2685
          %v4278 = vunpack.c.h.b16 %v2685
          %v4279 = vunpack.c.l.b16 %v2686
          %v4280 = vunpack.c.h.b16 %v2686
          %v4281 = vunpack.c.l.b16 %v2687
          %v4282 = vunpack.c.h.b16 %v2687
          %v4283 = vunpack.c.l.b16 %v2688
          %v4284 = vunpack.c.h.b16 %v2688
          %v4285 = vunpack.c.l.b16 %v2689
          %v4286 = vunpack.c.h.b16 %v2689
          %v4287 = vunpack.c.l.b16 %v2690
          %v4288 = vunpack.c.h.b16 %v2690
          %v4289 = vunpack.c.l.b16 %v2691
          %v4290 = vunpack.c.h.b16 %v2691
          %v4291 = vunpack.c.l.b16 %v2692
          %v4292 = vunpack.c.h.b16 %v2692
          %v4293 = vunpack.c.l.b16 %v2693
          %v4294 = vunpack.c.h.b16 %v2693
          %v4295 = vunpack.c.l.b16 %v2694
          %v4296 = vunpack.c.h.b16 %v2694
          %v4297 = vunpack.c.l.b16 %v2695
          %v4298 = vunpack.c.h.b16 %v2695
          %v4299 = vunpack.c.l.b16 %v2696
          %v4300 = vunpack.c.h.b16 %v2696
          %v4301 = vunpack.c.l.b16 %v2697
          %v4302 = vunpack.c.h.b16 %v2697
          %v4303 = vunpack.c.l.b16 %v2698
          %v4304 = vunpack.c.h.b16 %v2698
          %v4305 = vunpack.c.l.b16 %v2699
          %v4306 = vunpack.c.h.b16 %v2699
          %v4307 = vunpack.c.l.b16 %v2700
          %v4308 = vunpack.c.h.b16 %v2700
          %v4309 = vunpack.c.l.b16 %v2701
          %v4310 = vunpack.c.h.b16 %v2701
          %v4311 = vunpack.c.l.b16 %v2702
          %v4312 = vunpack.c.h.b16 %v2702
          %v4313 = vunpack.c.l.b16 %v2703
          %v4314 = vunpack.c.h.b16 %v2703
          %v4315 = vunpack.c.l.b16 %v2704
          %v4316 = vunpack.c.h.b16 %v2704
          %v4317 = vunpack.c.l.b16 %v2705
          %v4318 = vunpack.c.h.b16 %v2705
          %v4319 = vunpack.c.l.b16 %v2706
          %v4320 = vunpack.c.h.b16 %v2706
          %v4321 = vunpack.c.l.b16 %v2707
          %v4322 = vunpack.c.h.b16 %v2707
          %v4323 = vunpack.c.l.b16 %v2708
          %v4324 = vunpack.c.h.b16 %v2708
          %v4325 = vunpack.c.l.b16 %v2709
          %v4326 = vunpack.c.h.b16 %v2709
          %v4327 = vunpack.c.l.b16 %v2710
          %v4328 = vunpack.c.h.b16 %v2710
          %v4329 = vunpack.c.l.b16 %v2711
          %v4330 = vunpack.c.h.b16 %v2711
          %v4331 = vunpack.c.l.b16 %v2712
          %v4332 = vunpack.c.h.b16 %v2712
          %v4333 = vunpack.c.l.b16 %v2713
          %v4334 = vunpack.c.h.b16 %v2713
          %v4335 = vunpack.c.l.b16 %v2714
          %v4336 = vunpack.c.h.b16 %v2714
          %v4337 = vunpack.c.l.b16 %v2715
          %v4338 = vunpack.c.h.b16 %v2715
          %v4339 = vunpack.c.l.b16 %v2716
          %v4340 = vunpack.c.h.b16 %v2716
          %v4341 = vunpack.c.l.b16 %v2717
          %v4342 = vunpack.c.h.b16 %v2717
          %v4343 = vunpack.c.l.b16 %v2718
          %v4344 = vunpack.c.h.b16 %v2718
          %v4345 = vunpack.c.l.b16 %v2719
          %v4346 = vunpack.c.h.b16 %v2719
          %v4347 = vunpack.c.l.b16 %v2720
          %v4348 = vunpack.c.h.b16 %v2720
          %v4349 = vunpack.c.l.b16 %v2721
          %v4350 = vunpack.c.h.b16 %v2721
          %v4351 = vunpack.c.l.b16 %v2722
          %v4352 = vunpack.c.h.b16 %v2722
          %v4353 = vunpack.c.l.b16 %v2723
          %v4354 = vunpack.c.h.b16 %v2723
          %v4355 = vunpack.c.l.b16 %v2724
          %v4356 = vunpack.c.h.b16 %v2724
          %v4357 = vunpack.c.l.b16 %v2725
          %v4358 = vunpack.c.h.b16 %v2725
          %v4359 = vunpack.c.l.b16 %v2726
          %v4360 = vunpack.c.h.b16 %v2726
          %v4361 = vunpack.c.l.b16 %v2727
          %v4362 = vunpack.c.h.b16 %v2727
          %v4363 = vunpack.c.l.b16 %v2728
          %v4364 = vunpack.c.h.b16 %v2728
          %v4365 = vunpack.c.l.b16 %v2729
          %v4366 = vunpack.c.h.b16 %v2729
          %v4367 = vunpack.c.l.b16 %v2730
          %v4368 = vunpack.c.h.b16 %v2730
          %v4369 = vunpack.c.l.b16 %v2731
          %v4370 = vunpack.c.h.b16 %v2731
          %v4371 = vunpack.c.l.b16 %v2732
          %v4372 = vunpack.c.h.b16 %v2732
          %v4373 = vunpack.c.l.b16 %v2733
          %v4374 = vunpack.c.h.b16 %v2733
          %v4375 = vunpack.c.l.b16 %v2734
          %v4376 = vunpack.c.h.b16 %v2734
          %v4377 = vunpack.c.l.b16 %v2735
          %v4378 = vunpack.c.h.b16 %v2735
          %v4379 = vunpack.c.l.b16 %v2736
          %v4380 = vunpack.c.h.b16 %v2736
          %v4381 = vunpack.c.l.b16 %v2737
          %v4382 = vunpack.c.h.b16 %v2737
          %v4383 = vunpack.c.l.b16 %v2738
          %v4384 = vunpack.c.h.b16 %v2738
          %v4385 = vunpack.c.l.b16 %v2739
          %v4386 = vunpack.c.h.b16 %v2739
          %v4387 = vunpack.c.l.b16 %v2740
          %v4388 = vunpack.c.h.b16 %v2740
          %v4389 = vunpack.c.l.b16 %v2741
          %v4390 = vunpack.c.h.b16 %v2741
          %v4391 = vunpack.c.l.b16 %v2742
          %v4392 = vunpack.c.h.b16 %v2742
          %v4393 = vunpack.c.l.b16 %v2743
          %v4394 = vunpack.c.h.b16 %v2743
          %v4395 = vunpack.c.l.b16 %v2744
          %v4396 = vunpack.c.h.b16 %v2744
          %v4397 = vunpack.c.l.b16 %v2745
          %v4398 = vunpack.c.h.b16 %v2745
          %v4399 = vunpack.c.l.b16 %v2746
          %v4400 = vunpack.c.h.b16 %v2746
          %v4401 = vunpack.c.l.b16 %v2747
          %v4402 = vunpack.c.h.b16 %v2747
          %v4403 = vunpack.c.l.b16 %v2748
          %v4404 = vunpack.c.h.b16 %v2748
          %v4405 = vunpack.c.l.b16 %v2749
          %v4406 = vunpack.c.h.b16 %v2749
          %v4407 = vunpack.c.l.b16 %v2750
          %v4408 = vunpack.c.h.b16 %v2750
          %v4409 = vunpack.c.l.b16 %v2751
          %v4410 = vunpack.c.h.b16 %v2751
          %v4411 = vunpack.c.l.b16 %v2752
          %v4412 = vunpack.c.h.b16 %v2752
          %v4413 = vunpack.c.l.b16 %v2753
          %v4414 = vunpack.c.h.b16 %v2753
          %v4415 = vunpack.c.l.b16 %v2754
          %v4416 = vunpack.c.h.b16 %v2754
          %v4417 = vunpack.c.l.b16 %v2755
          %v4418 = vunpack.c.h.b16 %v2755
          %v4419 = vunpack.c.l.b16 %v2756
          %v4420 = vunpack.c.h.b16 %v2756
          %v4421 = vunpack.c.l.b16 %v2757
          %v4422 = vunpack.c.h.b16 %v2757
          %v4423 = vunpack.c.l.b16 %v2758
          %v4424 = vunpack.c.h.b16 %v2758
          %v4425 = vunpack.c.l.b16 %v2759
          %v4426 = vunpack.c.h.b16 %v2759
          %v4427 = vunpack.c.l.b16 %v2760
          %v4428 = vunpack.c.h.b16 %v2760
          %v4429 = vunpack.c.l.b16 %v2761
          %v4430 = vunpack.c.h.b16 %v2761
          %v4431 = vunpack.c.l.b16 %v2762
          %v4432 = vunpack.c.h.b16 %v2762
          %v4433 = vunpack.c.l.b16 %v2763
          %v4434 = vunpack.c.h.b16 %v2763
          %v4435 = vunpack.c.l.b16 %v2764
          %v4436 = vunpack.c.h.b16 %v2764
          %v4437 = vunpack.c.l.b16 %v2765
          %v4438 = vunpack.c.h.b16 %v2765
          %v4439 = vunpack.c.l.b16 %v2766
          %v4440 = vunpack.c.h.b16 %v2766
          %v4441 = vunpack.c.l.b16 %v2767
          %v4442 = vunpack.c.h.b16 %v2767
          %v4443 = vunpack.c.l.b16 %v2768
          %v4444 = vunpack.c.h.b16 %v2768
          %v4445 = vunpack.c.l.b16 %v2769
          %v4446 = vunpack.c.h.b16 %v2769
          %v4447 = vunpack.c.l.b16 %v2770
          %v4448 = vunpack.c.h.b16 %v2770
          %v4449 = vunpack.c.l.b16 %v2771
          %v4450 = vunpack.c.h.b16 %v2771
          %v4451 = vunpack.c.l.b16 %v2772
          %v4452 = vunpack.c.h.b16 %v2772
          %v4453 = vunpack.c.l.b16 %v2773
          %v4454 = vunpack.c.h.b16 %v2773
          %v4455 = vunpack.c.l.b16 %v2774
          %v4456 = vunpack.c.h.b16 %v2774
          %v4457 = vunpack.c.l.b16 %v2775
          %v4458 = vunpack.c.h.b16 %v2775
          %v4459 = vunpack.c.l.b16 %v2776
          %v4460 = vunpack.c.h.b16 %v2776
          %v4461 = vunpack.c.l.b16 %v2777
          %v4462 = vunpack.c.h.b16 %v2777
          %v4463 = vunpack.c.l.b16 %v2778
          %v4464 = vunpack.c.h.b16 %v2778
          %v4465 = vunpack.c.l.b16 %v2779
          %v4466 = vunpack.c.h.b16 %v2779
          %v4467 = vunpack.c.l.b16 %v2780
          %v4468 = vunpack.c.h.b16 %v2780
          %v4469 = vunpack.c.l.b16 %v2781
          %v4470 = vunpack.c.h.b16 %v2781
          %v4471 = vunpack.c.l.b16 %v2782
          %v4472 = vunpack.c.h.b16 %v2782
          %v4473 = vunpack.c.l.b16 %v2783
          %v4474 = vunpack.c.h.b16 %v2783
          %v4475 = vunpack.c.l.b16 %v2784
          %v4476 = vunpack.c.h.b16 %v2784
          %v4477 = vunpack.c.l.b16 %v2785
          %v4478 = vunpack.c.h.b16 %v2785
          %v4479 = vunpack.c.l.b16 %v2786
          %v4480 = vunpack.c.h.b16 %v2786
          %v4481 = vunpack.c.l.b16 %v2787
          %v4482 = vunpack.c.h.b16 %v2787
          %v4483 = vunpack.c.l.b16 %v2788
          %v4484 = vunpack.c.h.b16 %v2788
          %v4485 = vunpack.c.l.b16 %v2789
          %v4486 = vunpack.c.h.b16 %v2789
          %v4487 = vunpack.c.l.b16 %v2790
          %v4488 = vunpack.c.h.b16 %v2790
          %v4489 = vunpack.c.l.b16 %v2791
          %v4490 = vunpack.c.h.b16 %v2791
          %v4491 = vunpack.c.l.b16 %v2792
          %v4492 = vunpack.c.h.b16 %v2792
          %v4493 = vunpack.c.l.b16 %v2793
          %v4494 = vunpack.c.h.b16 %v2793
          %v4495 = vunpack.c.l.b16 %v2794
          %v4496 = vunpack.c.h.b16 %v2794
          %v4497 = vunpack.c.l.b16 %v2795
          %v4498 = vunpack.c.h.b16 %v2795
          %v4499 = vunpack.c.l.b16 %v2796
          %v4500 = vunpack.c.h.b16 %v2796
          %v4501 = vunpack.c.l.b16 %v2797
          %v4502 = vunpack.c.h.b16 %v2797
          %v4503 = vunpack.c.l.b16 %v2798
          %v4504 = vunpack.c.h.b16 %v2798
          %v4505 = vunpack.c.l.b16 %v2799
          %v4506 = vunpack.c.h.b16 %v2799
          %v4507 = vunpack.c.l.b16 %v2800
          %v4508 = vunpack.c.h.b16 %v2800
          %v4509 = vunpack.c.l.b16 %v2801
          %v4510 = vunpack.c.h.b16 %v2801
          %v4511 = vunpack.c.l.b16 %v2802
          %v4512 = vunpack.c.h.b16 %v2802
          %v4513 = vunpack.c.l.b16 %v2803
          %v4514 = vunpack.c.h.b16 %v2803
          %v4515 = vunpack.c.l.b16 %v2804
          %v4516 = vunpack.c.h.b16 %v2804
          %v4517 = vunpack.c.l.b16 %v2805
          %v4518 = vunpack.c.h.b16 %v2805
          %v4519 = vunpack.c.l.b16 %v2806
          %v4520 = vunpack.c.h.b16 %v2806
          %v4521 = vunpack.c.l.b16 %v2807
          %v4522 = vunpack.c.h.b16 %v2807
          %v4523 = vunpack.c.l.b16 %v2808
          %v4524 = vunpack.c.h.b16 %v2808
          %v4525 = vunpack.c.l.b16 %v2809
          %v4526 = vunpack.c.h.b16 %v2809
          %v4527 = vunpack.c.l.b16 %v2810
          %v4528 = vunpack.c.h.b16 %v2810
          %v4529 = vunpack.c.l.b16 %v2811
          %v4530 = vunpack.c.h.b16 %v2811
          %v4531 = vunpack.c.l.b16 %v2812
          %v4532 = vunpack.c.h.b16 %v2812
          %v4533 = vunpack.c.l.b16 %v2813
          %v4534 = vunpack.c.h.b16 %v2813
          %v4535 = vunpack.c.l.b16 %v2814
          %v4536 = vunpack.c.h.b16 %v2814
          %v4537 = vunpack.c.l.b16 %v2815
          %v4538 = vunpack.c.h.b16 %v2815
          %v4539 = vunpack.c.l.b16 %v2816
          %v4540 = vunpack.c.h.b16 %v2816
          %v4541 = vunpack.c.l.b16 %v2817
          %v4542 = vunpack.c.h.b16 %v2817
          %v4543 = vunpack.c.l.b16 %v2818
          %v4544 = vunpack.c.h.b16 %v2818
          %v4545 = vunpack.c.l.b16 %v2819
          %v4546 = vunpack.c.h.b16 %v2819
          %v4547 = vunpack.c.l.b16 %v2820
          %v4548 = vunpack.c.h.b16 %v2820
          %v4549 = vunpack.c.l.b16 %v2821
          %v4550 = vunpack.c.h.b16 %v2821
          %v4551 = vunpack.c.l.b16 %v2822
          %v4552 = vunpack.c.h.b16 %v2822
          %v4553 = vunpack.c.l.b16 %v2823
          %v4554 = vunpack.c.h.b16 %v2823
          %v4555 = vunpack.c.l.b16 %v2824
          %v4556 = vunpack.c.h.b16 %v2824
          %v4557 = vunpack.c.l.b16 %v2825
          %v4558 = vunpack.c.h.b16 %v2825
          %v4559 = vunpack.c.l.b16 %v2826
          %v4560 = vunpack.c.h.b16 %v2826
          %v4561 = vunpack.c.l.b16 %v2827
          %v4562 = vunpack.c.h.b16 %v2827
          %v4563 = vunpack.c.l.b16 %v2828
          %v4564 = vunpack.c.h.b16 %v2828
          %v4565 = vunpack.c.l.b16 %v2829
          %v4566 = vunpack.c.h.b16 %v2829
          %v4567 = vunpack.c.l.b16 %v2830
          %v4568 = vunpack.c.h.b16 %v2830
          %v4569 = vunpack.c.l.b16 %v2831
          %v4570 = vunpack.c.h.b16 %v2831
          %v4571 = vunpack.c.l.b16 %v2832
          %v4572 = vunpack.c.h.b16 %v2832
          %v4573 = vunpack.c.l.b16 %v2833
          %v4574 = vunpack.c.h.b16 %v2833
          %v4575 = vunpack.c.l.b16 %v2834
          %v4576 = vunpack.c.h.b16 %v2834
          %v4577 = vunpack.c.l.b16 %v2835
          %v4578 = vunpack.c.h.b16 %v2835
          %v4579 = vunpack.c.l.b16 %v2836
          %v4580 = vunpack.c.h.b16 %v2836
          %v4581 = vunpack.c.l.b16 %v2837
          %v4582 = vunpack.c.h.b16 %v2837
          %v4583 = vunpack.c.l.b16 %v2838
          %v4584 = vunpack.c.h.b16 %v2838
          %v4585 = vunpack.c.l.b16 %v2839
          %v4586 = vunpack.c.h.b16 %v2839
          %v4587 = vunpack.c.l.b16 %v2840
          %v4588 = vunpack.c.h.b16 %v2840
          %v4589 = vunpack.c.l.b16 %v2841
          %v4590 = vunpack.c.h.b16 %v2841
          %v4591 = vunpack.c.l.b16 %v2842
          %v4592 = vunpack.c.h.b16 %v2842
          %v4593 = vunpack.c.l.b16 %v2843
          %v4594 = vunpack.c.h.b16 %v2843
          %v4595 = vunpack.c.l.b16 %v2844
          %v4596 = vunpack.c.h.b16 %v2844
          %v4597 = vunpack.c.l.b16 %v2845
          %v4598 = vunpack.c.h.b16 %v2845
          %v4599 = vunpack.c.l.b16 %v2846
          %v4600 = vunpack.c.h.b16 %v2846
          %v4601 = vunpack.c.l.b16 %v2847
          %v4602 = vunpack.c.h.b16 %v2847
          %v4603 = vunpack.c.l.b16 %v2848
          %v4604 = vunpack.c.h.b16 %v2848
          %v4605 = vunpack.c.l.b16 %v2849
          %v4606 = vunpack.c.h.b16 %v2849
          %v4607 = vunpack.c.l.b16 %v2850
          %v4608 = vunpack.c.h.b16 %v2850
          %v4609 = vunpack.c.l.b16 %v2851
          %v4610 = vunpack.c.h.b16 %v2851
          %v4611 = vunpack.c.l.b16 %v2852
          %v4612 = vunpack.c.h.b16 %v2852
          %v4613 = vpack.c.b16 %v3467, %v3461
          %v4614 = vpack.c.b16 %v3468, %v3462
          %v4615 = vpack.c.b16 %v3469, %v3463
          %v4616 = vpack.c.b16 %v3470, %v3464
          %v4617 = vpack.c.b16 %v3471, %v3465
          %v4618 = vpack.c.b16 %v3472, %v3466
          %v4619 = vpack.c.b16 %v3479, %v3473
          %v4620 = vpack.c.b16 %v3480, %v3474
          %v4621 = vpack.c.b16 %v3481, %v3475
          %v4622 = vpack.c.b16 %v3482, %v3476
          %v4623 = vpack.c.b16 %v3483, %v3477
          %v4624 = vpack.c.b16 %v3484, %v3478
          %v4625 = vpack.c.b16 %v3491, %v3485
          %v4626 = vpack.c.b16 %v3492, %v3486
          %v4627 = vpack.c.b16 %v3493, %v3487
          %v4628 = vpack.c.b16 %v3494, %v3488
          %v4629 = vpack.c.b16 %v3495, %v3489
          %v4630 = vpack.c.b16 %v3496, %v3490
          %v4631 = vpack.c.b16 %v3503, %v3497
          %v4632 = vpack.c.b16 %v3504, %v3498
          %v4633 = vpack.c.b16 %v3505, %v3499
          %v4634 = vpack.c.b16 %v3506, %v3500
          %v4635 = vpack.c.b16 %v3507, %v3501
          %v4636 = vpack.c.b16 %v3508, %v3502
          %v4637 = vpack.c.b16 %v3515, %v3509
          %v4638 = vpack.c.b16 %v3516, %v3510
          %v4639 = vpack.c.b16 %v3517, %v3511
          %v4640 = vpack.c.b16 %v3518, %v3512
          %v4641 = vpack.c.b16 %v3519, %v3513
          %v4642 = vpack.c.b16 %v3520, %v3514
          %v4643 = vpack.c.b16 %v3527, %v3521
          %v4644 = vpack.c.b16 %v3528, %v3522
          %v4645 = vpack.c.b16 %v3529, %v3523
          %v4646 = vpack.c.b16 %v3530, %v3524
          %v4647 = vpack.c.b16 %v3531, %v3525
          %v4648 = vpack.c.b16 %v3532, %v3526
          %v4649 = vpack.c.b16 %v3539, %v3533
          %v4650 = vpack.c.b16 %v3540, %v3534
          %v4651 = vpack.c.b16 %v3541, %v3535
          %v4652 = vpack.c.b16 %v3542, %v3536
          %v4653 = vpack.c.b16 %v3543, %v3537
          %v4654 = vpack.c.b16 %v3544, %v3538
          %v4655 = vpack.c.b16 %v3551, %v3545
          %v4656 = vpack.c.b16 %v3552, %v3546
          %v4657 = vpack.c.b16 %v3553, %v3547
          %v4658 = vpack.c.b16 %v3554, %v3548
          %v4659 = vpack.c.b16 %v3555, %v3549
          %v4660 = vpack.c.b16 %v3556, %v3550
          %v4661 = vpack.c.b16 %v3563, %v3557
          %v4662 = vpack.c.b16 %v3564, %v3558
          %v4663 = vpack.c.b16 %v3565, %v3559
          %v4664 = vpack.c.b16 %v3566, %v3560
          %v4665 = vpack.c.b16 %v3567, %v3561
          %v4666 = vpack.c.b16 %v3568, %v3562
          %v4667 = vpack.c.b16 %v3575, %v3569
          %v4668 = vpack.c.b16 %v3576, %v3570
          %v4669 = vpack.c.b16 %v3577, %v3571
          %v4670 = vpack.c.b16 %v3578, %v3572
          %v4671 = vpack.c.b16 %v3579, %v3573
          %v4672 = vpack.c.b16 %v3580, %v3574
          %v4673 = vpack.c.b16 %v3587, %v3581
          %v4674 = vpack.c.b16 %v3588, %v3582
          %v4675 = vpack.c.b16 %v3589, %v3583
          %v4676 = vpack.c.b16 %v3590, %v3584
          %v4677 = vpack.c.b16 %v3591, %v3585
          %v4678 = vpack.c.b16 %v3592, %v3586
          %v4679 = vpack.c.b16 %v3599, %v3593
          %v4680 = vpack.c.b16 %v3600, %v3594
          %v4681 = vpack.c.b16 %v3601, %v3595
          %v4682 = vpack.c.b16 %v3602, %v3596
          %v4683 = vpack.c.b16 %v3603, %v3597
          %v4684 = vpack.c.b16 %v3604, %v3598
          %v4685 = vpack.c.b16 %v3611, %v3605
          %v4686 = vpack.c.b16 %v3612, %v3606
          %v4687 = vpack.c.b16 %v3613, %v3607
          %v4688 = vpack.c.b16 %v3614, %v3608
          %v4689 = vpack.c.b16 %v3615, %v3609
          %v4690 = vpack.c.b16 %v3616, %v3610
          %v4691 = vpack.c.b16 %v3623, %v3617
          %v4692 = vpack.c.b16 %v3624, %v3618
          %v4693 = vpack.c.b16 %v3625, %v3619
          %v4694 = vpack.c.b16 %v3626, %v3620
          %v4695 = vpack.c.b16 %v3627, %v3621
          %v4696 = vpack.c.b16 %v3628, %v3622
          %v4697 = vpack.c.b16 %v3635, %v3629
          %v4698 = vpack.c.b16 %v3636, %v3630
          %v4699 = vpack.c.b16 %v3637, %v3631
          %v4700 = vpack.c.b16 %v3638, %v3632
          %v4701 = vpack.c.b16 %v3639, %v3633
          %v4702 = vpack.c.b16 %v3640, %v3634
          %v4703 = vpack.c.b16 %v3647, %v3641
          %v4704 = vpack.c.b16 %v3648, %v3642
          %v4705 = vpack.c.b16 %v3649, %v3643
          %v4706 = vpack.c.b16 %v3650, %v3644
          %v4707 = vpack.c.b16 %v3651, %v3645
          %v4708 = vpack.c.b16 %v3652, %v3646
          %v4709 = vpack.c.b16 %v3659, %v3653
          %v4710 = vpack.c.b16 %v3660, %v3654
          %v4711 = vpack.c.b16 %v3661, %v3655
          %v4712 = vpack.c.b16 %v3662, %v3656
          %v4713 = vpack.c.b16 %v3663, %v3657
          %v4714 = vpack.c.b16 %v3664, %v3658
          %v4715 = vpack.c.b16 %v3671, %v3665
          %v4716 = vpack.c.b16 %v3672, %v3666
          %v4717 = vpack.c.b16 %v3673, %v3667
          %v4718 = vpack.c.b16 %v3674, %v3668
          %v4719 = vpack.c.b16 %v3675, %v3669
          %v4720 = vpack.c.b16 %v3676, %v3670
          %v4721 = vpack.c.b16 %v3683, %v3677
          %v4722 = vpack.c.b16 %v3684, %v3678
          %v4723 = vpack.c.b16 %v3685, %v3679
          %v4724 = vpack.c.b16 %v3686, %v3680
          %v4725 = vpack.c.b16 %v3687, %v3681
          %v4726 = vpack.c.b16 %v3688, %v3682
          %v4727 = vpack.c.b16 %v3695, %v3689
          %v4728 = vpack.c.b16 %v3696, %v3690
          %v4729 = vpack.c.b16 %v3697, %v3691
          %v4730 = vpack.c.b16 %v3698, %v3692
          %v4731 = vpack.c.b16 %v3699, %v3693
          %v4732 = vpack.c.b16 %v3700, %v3694
          %v4733 = vpack.c.b16 %v3707, %v3701
          %v4734 = vpack.c.b16 %v3708, %v3702
          %v4735 = vpack.c.b16 %v3709, %v3703
          %v4736 = vpack.c.b16 %v3710, %v3704
          %v4737 = vpack.c.b16 %v3711, %v3705
          %v4738 = vpack.c.b16 %v3712, %v3706
          %v4739 = vpack.c.b16 %v3719, %v3713
          %v4740 = vpack.c.b16 %v3720, %v3714
          %v4741 = vpack.c.b16 %v3721, %v3715
          %v4742 = vpack.c.b16 %v3722, %v3716
          %v4743 = vpack.c.b16 %v3723, %v3717
          %v4744 = vpack.c.b16 %v3724, %v3718
          %v4745 = vpack.c.b16 %v3731, %v3725
          %v4746 = vpack.c.b16 %v3732, %v3726
          %v4747 = vpack.c.b16 %v3733, %v3727
          %v4748 = vpack.c.b16 %v3734, %v3728
          %v4749 = vpack.c.b16 %v3735, %v3729
          %v4750 = vpack.c.b16 %v3736, %v3730
          %v4751 = vpack.c.b16 %v3743, %v3737
          %v4752 = vpack.c.b16 %v3744, %v3738
          %v4753 = vpack.c.b16 %v3745, %v3739
          %v4754 = vpack.c.b16 %v3746, %v3740
          %v4755 = vpack.c.b16 %v3747, %v3741
          %v4756 = vpack.c.b16 %v3748, %v3742
          %v4757 = vpack.c.b16 %v3755, %v3749
          %v4758 = vpack.c.b16 %v3756, %v3750
          %v4759 = vpack.c.b16 %v3757, %v3751
          %v4760 = vpack.c.b16 %v3758, %v3752
          %v4761 = vpack.c.b16 %v3759, %v3753
          %v4762 = vpack.c.b16 %v3760, %v3754
          %v4763 = vpack.c.b16 %v3767, %v3761
          %v4764 = vpack.c.b16 %v3768, %v3762
          %v4765 = vpack.c.b16 %v3769, %v3763
          %v4766 = vpack.c.b16 %v3770, %v3764
          %v4767 = vpack.c.b16 %v3771, %v3765
          %v4768 = vpack.c.b16 %v3772, %v3766
          %v4769 = vpack.c.b16 %v3779, %v3773
          %v4770 = vpack.c.b16 %v3780, %v3774
          %v4771 = vpack.c.b16 %v3781, %v3775
          %v4772 = vpack.c.b16 %v3782, %v3776
          %v4773 = vpack.c.b16 %v3783, %v3777
          %v4774 = vpack.c.b16 %v3784, %v3778
          %v4775 = vpack.c.b16 %v3791, %v3785
          %v4776 = vpack.c.b16 %v3792, %v3786
          %v4777 = vpack.c.b16 %v3793, %v3787
          %v4778 = vpack.c.b16 %v3794, %v3788
          %v4779 = vpack.c.b16 %v3795, %v3789
          %v4780 = vpack.c.b16 %v3796, %v3790
          %v4781 = vpack.c.b16 %v3803, %v3797
          %v4782 = vpack.c.b16 %v3804, %v3798
          %v4783 = vpack.c.b16 %v3805, %v3799
          %v4784 = vpack.c.b16 %v3806, %v3800
          %v4785 = vpack.c.b16 %v3807, %v3801
          %v4786 = vpack.c.b16 %v3808, %v3802
          %v4787 = vpack.c.b16 %v3815, %v3809
          %v4788 = vpack.c.b16 %v3816, %v3810
          %v4789 = vpack.c.b16 %v3817, %v3811
          %v4790 = vpack.c.b16 %v3818, %v3812
          %v4791 = vpack.c.b16 %v3819, %v3813
          %v4792 = vpack.c.b16 %v3820, %v3814
          %v4793 = vpack.c.b16 %v3827, %v3821
          %v4794 = vpack.c.b16 %v3828, %v3822
          %v4795 = vpack.c.b16 %v3829, %v3823
          %v4796 = vpack.c.b16 %v3830, %v3824
          %v4797 = vpack.c.b16 %v3831, %v3825
          %v4798 = vpack.c.b16 %v3832, %v3826
          %v4799 = vpack.c.b16 %v3839, %v3833
          %v4800 = vpack.c.b16 %v3840, %v3834
          %v4801 = vpack.c.b16 %v3841, %v3835
          %v4802 = vpack.c.b16 %v3842, %v3836
          %v4803 = vpack.c.b16 %v3843, %v3837
          %v4804 = vpack.c.b16 %v3844, %v3838
          %v4805 = vpack.c.b16 %v3851, %v3845
          %v4806 = vpack.c.b16 %v3852, %v3846
          %v4807 = vpack.c.b16 %v3853, %v3847
          %v4808 = vpack.c.b16 %v3854, %v3848
          %v4809 = vpack.c.b16 %v3855, %v3849
          %v4810 = vpack.c.b16 %v3856, %v3850
          %v4811 = vpack.c.b16 %v3863, %v3857
          %v4812 = vpack.c.b16 %v3864, %v3858
          %v4813 = vpack.c.b16 %v3865, %v3859
          %v4814 = vpack.c.b16 %v3866, %v3860
          %v4815 = vpack.c.b16 %v3867, %v3861
          %v4816 = vpack.c.b16 %v3868, %v3862
          %v4817 = vpack.c.b16 %v3875, %v3869
          %v4818 = vpack.c.b16 %v3876, %v3870
          %v4819 = vpack.c.b16 %v3877, %v3871
          %v4820 = vpack.c.b16 %v3878, %v3872
          %v4821 = vpack.c.b16 %v3879, %v3873
          %v4822 = vpack.c.b16 %v3880, %v3874
          %v4823 = vpack.c.b16 %v3887, %v3881
          %v4824 = vpack.c.b16 %v3888, %v3882
          %v4825 = vpack.c.b16 %v3889, %v3883
          %v4826 = vpack.c.b16 %v3890, %v3884
          %v4827 = vpack.c.b16 %v3891, %v3885
          %v4828 = vpack.c.b16 %v3892, %v3886
          %v4829 = vpack.c.b16 %v3899, %v3893
          %v4830 = vpack.c.b16 %v3900, %v3894
          %v4831 = vpack.c.b16 %v3901, %v3895
          %v4832 = vpack.c.b16 %v3902, %v3896
          %v4833 = vpack.c.b16 %v3903, %v3897
          %v4834 = vpack.c.b16 %v3904, %v3898
          %v4835 = vpack.c.b16 %v3911, %v3905
          %v4836 = vpack.c.b16 %v3912, %v3906
          %v4837 = vpack.c.b16 %v3913, %v3907
          %v4838 = vpack.c.b16 %v3914, %v3908
          %v4839 = vpack.c.b16 %v3915, %v3909
          %v4840 = vpack.c.b16 %v3916, %v3910
          %v4841 = vpack.c.b16 %v3923, %v3917
          %v4842 = vpack.c.b16 %v3924, %v3918
          %v4843 = vpack.c.b16 %v3925, %v3919
          %v4844 = vpack.c.b16 %v3926, %v3920
          %v4845 = vpack.c.b16 %v3927, %v3921
          %v4846 = vpack.c.b16 %v3928, %v3922
          %v4847 = vpack.c.b16 %v3935, %v3929
          %v4848 = vpack.c.b16 %v3936, %v3930
          %v4849 = vpack.c.b16 %v3937, %v3931
          %v4850 = vpack.c.b16 %v3938, %v3932
          %v4851 = vpack.c.b16 %v3939, %v3933
          %v4852 = vpack.c.b16 %v3940, %v3934
          %v4853 = vpack.c.b16 %v3947, %v3941
          %v4854 = vpack.c.b16 %v3948, %v3942
          %v4855 = vpack.c.b16 %v3949, %v3943
          %v4856 = vpack.c.b16 %v3950, %v3944
          %v4857 = vpack.c.b16 %v3951, %v3945
          %v4858 = vpack.c.b16 %v3952, %v3946
          %v4859 = vpack.c.b16 %v3959, %v3953
          %v4860 = vpack.c.b16 %v3960, %v3954
          %v4861 = vpack.c.b16 %v3961, %v3955
          %v4862 = vpack.c.b16 %v3962, %v3956
          %v4863 = vpack.c.b16 %v3963, %v3957
          %v4864 = vpack.c.b16 %v3964, %v3958
          %v4865 = vpack.c.b16 %v3971, %v3965
          %v4866 = vpack.c.b16 %v3972, %v3966
          %v4867 = vpack.c.b16 %v3973, %v3967
          %v4868 = vpack.c.b16 %v3974, %v3968
          %v4869 = vpack.c.b16 %v3975, %v3969
          %v4870 = vpack.c.b16 %v3976, %v3970
          %v4871 = vpack.c.b16 %v3983, %v3977
          %v4872 = vpack.c.b16 %v3984, %v3978
          %v4873 = vpack.c.b16 %v3985, %v3979
          %v4874 = vpack.c.b16 %v3986, %v3980
          %v4875 = vpack.c.b16 %v3987, %v3981
          %v4876 = vpack.c.b16 %v3988, %v3982
          %v4877 = vpack.c.b16 %v3995, %v3989
          %v4878 = vpack.c.b16 %v3996, %v3990
          %v4879 = vpack.c.b16 %v3997, %v3991
          %v4880 = vpack.c.b16 %v3998, %v3992
          %v4881 = vpack.c.b16 %v3999, %v3993
          %v4882 = vpack.c.b16 %v4000, %v3994
          %v4883 = vpack.c.b16 %v4007, %v4001
          %v4884 = vpack.c.b16 %v4008, %v4002
          %v4885 = vpack.c.b16 %v4009, %v4003
          %v4886 = vpack.c.b16 %v4010, %v4004
          %v4887 = vpack.c.b16 %v4011, %v4005
          %v4888 = vpack.c.b16 %v4012, %v4006
          %v4889 = vpack.c.b16 %v4019, %v4013
          %v4890 = vpack.c.b16 %v4020, %v4014
          %v4891 = vpack.c.b16 %v4021, %v4015
          %v4892 = vpack.c.b16 %v4022, %v4016
          %v4893 = vpack.c.b16 %v4023, %v4017
          %v4894 = vpack.c.b16 %v4024, %v4018
          %v4895 = vpack.c.b16 %v4031, %v4025
          %v4896 = vpack.c.b16 %v4032, %v4026
          %v4897 = vpack.c.b16 %v4033, %v4027
          %v4898 = vpack.c.b16 %v4034, %v4028
          %v4899 = vpack.c.b16 %v4035, %v4029
          %v4900 = vpack.c.b16 %v4036, %v4030
          %v4901 = vpack.c.b16 %v4043, %v4037
          %v4902 = vpack.c.b16 %v4044, %v4038
          %v4903 = vpack.c.b16 %v4045, %v4039
          %v4904 = vpack.c.b16 %v4046, %v4040
          %v4905 = vpack.c.b16 %v4047, %v4041
          %v4906 = vpack.c.b16 %v4048, %v4042
          %v4907 = vpack.c.b16 %v4055, %v4049
          %v4908 = vpack.c.b16 %v4056, %v4050
          %v4909 = vpack.c.b16 %v4057, %v4051
          %v4910 = vpack.c.b16 %v4058, %v4052
          %v4911 = vpack.c.b16 %v4059, %v4053
          %v4912 = vpack.c.b16 %v4060, %v4054
          %v4913 = vpack.c.b16 %v4067, %v4061
          %v4914 = vpack.c.b16 %v4068, %v4062
          %v4915 = vpack.c.b16 %v4069, %v4063
          %v4916 = vpack.c.b16 %v4070, %v4064
          %v4917 = vpack.c.b16 %v4071, %v4065
          %v4918 = vpack.c.b16 %v4072, %v4066
          %v4919 = vpack.c.b16 %v4079, %v4073
          %v4920 = vpack.c.b16 %v4080, %v4074
          %v4921 = vpack.c.b16 %v4081, %v4075
          %v4922 = vpack.c.b16 %v4082, %v4076
          %v4923 = vpack.c.b16 %v4083, %v4077
          %v4924 = vpack.c.b16 %v4084, %v4078
          %v4925 = vpack.c.b16 %v4091, %v4085
          %v4926 = vpack.c.b16 %v4092, %v4086
          %v4927 = vpack.c.b16 %v4093, %v4087
          %v4928 = vpack.c.b16 %v4094, %v4088
          %v4929 = vpack.c.b16 %v4095, %v4089
          %v4930 = vpack.c.b16 %v4096, %v4090
          %v4931 = vpack.c.b16 %v4103, %v4097
          %v4932 = vpack.c.b16 %v4104, %v4098
          %v4933 = vpack.c.b16 %v4105, %v4099
          %v4934 = vpack.c.b16 %v4106, %v4100
          %v4935 = vpack.c.b16 %v4107, %v4101
          %v4936 = vpack.c.b16 %v4108, %v4102
          %v4937 = vpack.c.b16 %v4115, %v4109
          %v4938 = vpack.c.b16 %v4116, %v4110
          %v4939 = vpack.c.b16 %v4117, %v4111
          %v4940 = vpack.c.b16 %v4118, %v4112
          %v4941 = vpack.c.b16 %v4119, %v4113
          %v4942 = vpack.c.b16 %v4120, %v4114
          %v4943 = vpack.c.b16 %v4127, %v4121
          %v4944 = vpack.c.b16 %v4128, %v4122
          %v4945 = vpack.c.b16 %v4129, %v4123
          %v4946 = vpack.c.b16 %v4130, %v4124
          %v4947 = vpack.c.b16 %v4131, %v4125
          %v4948 = vpack.c.b16 %v4132, %v4126
          %v4949 = vpack.c.b16 %v4139, %v4133
          %v4950 = vpack.c.b16 %v4140, %v4134
          %v4951 = vpack.c.b16 %v4141, %v4135
          %v4952 = vpack.c.b16 %v4142, %v4136
          %v4953 = vpack.c.b16 %v4143, %v4137
          %v4954 = vpack.c.b16 %v4144, %v4138
          %v4955 = vpack.c.b16 %v4151, %v4145
          %v4956 = vpack.c.b16 %v4152, %v4146
          %v4957 = vpack.c.b16 %v4153, %v4147
          %v4958 = vpack.c.b16 %v4154, %v4148
          %v4959 = vpack.c.b16 %v4155, %v4149
          %v4960 = vpack.c.b16 %v4156, %v4150
          %v4961 = vpack.c.b16 %v4163, %v4157
          %v4962 = vpack.c.b16 %v4164, %v4158
          %v4963 = vpack.c.b16 %v4165, %v4159
          %v4964 = vpack.c.b16 %v4166, %v4160
          %v4965 = vpack.c.b16 %v4167, %v4161
          %v4966 = vpack.c.b16 %v4168, %v4162
          %v4967 = vpack.c.b16 %v4175, %v4169
          %v4968 = vpack.c.b16 %v4176, %v4170
          %v4969 = vpack.c.b16 %v4177, %v4171
          %v4970 = vpack.c.b16 %v4178, %v4172
          %v4971 = vpack.c.b16 %v4179, %v4173
          %v4972 = vpack.c.b16 %v4180, %v4174
          %v4973 = vpack.c.b16 %v4187, %v4181
          %v4974 = vpack.c.b16 %v4188, %v4182
          %v4975 = vpack.c.b16 %v4189, %v4183
          %v4976 = vpack.c.b16 %v4190, %v4184
          %v4977 = vpack.c.b16 %v4191, %v4185
          %v4978 = vpack.c.b16 %v4192, %v4186
          %v4979 = vpack.c.b16 %v4199, %v4193
          %v4980 = vpack.c.b16 %v4200, %v4194
          %v4981 = vpack.c.b16 %v4201, %v4195
          %v4982 = vpack.c.b16 %v4202, %v4196
          %v4983 = vpack.c.b16 %v4203, %v4197
          %v4984 = vpack.c.b16 %v4204, %v4198
          %v4985 = vpack.c.b16 %v4211, %v4205
          %v4986 = vpack.c.b16 %v4212, %v4206
          %v4987 = vpack.c.b16 %v4213, %v4207
          %v4988 = vpack.c.b16 %v4214, %v4208
          %v4989 = vpack.c.b16 %v4215, %v4209
          %v4990 = vpack.c.b16 %v4216, %v4210
          %v4991 = vpack.c.b16 %v4223, %v4217
          %v4992 = vpack.c.b16 %v4224, %v4218
          %v4993 = vpack.c.b16 %v4225, %v4219
          %v4994 = vpack.c.b16 %v4226, %v4220
          %v4995 = vpack.c.b16 %v4227, %v4221
          %v4996 = vpack.c.b16 %v4228, %v4222
          %v4997 = vpack.c.b16 %v4235, %v4229
          %v4998 = vpack.c.b16 %v4236, %v4230
          %v4999 = vpack.c.b16 %v4237, %v4231
          %v5000 = vpack.c.b16 %v4238, %v4232
          %v5001 = vpack.c.b16 %v4239, %v4233
          %v5002 = vpack.c.b16 %v4240, %v4234
          %v5003 = vpack.c.b16 %v4247, %v4241
          %v5004 = vpack.c.b16 %v4248, %v4242
          %v5005 = vpack.c.b16 %v4249, %v4243
          %v5006 = vpack.c.b16 %v4250, %v4244
          %v5007 = vpack.c.b16 %v4251, %v4245
          %v5008 = vpack.c.b16 %v4252, %v4246
          %v5009 = vpack.c.b16 %v4259, %v4253
          %v5010 = vpack.c.b16 %v4260, %v4254
          %v5011 = vpack.c.b16 %v4261, %v4255
          %v5012 = vpack.c.b16 %v4262, %v4256
          %v5013 = vpack.c.b16 %v4263, %v4257
          %v5014 = vpack.c.b16 %v4264, %v4258
          %v5015 = vpack.c.b16 %v4271, %v4265
          %v5016 = vpack.c.b16 %v4272, %v4266
          %v5017 = vpack.c.b16 %v4273, %v4267
          %v5018 = vpack.c.b16 %v4274, %v4268
          %v5019 = vpack.c.b16 %v4275, %v4269
          %v5020 = vpack.c.b16 %v4276, %v4270
          %v5021 = vpack.c.b16 %v4283, %v4277
          %v5022 = vpack.c.b16 %v4284, %v4278
          %v5023 = vpack.c.b16 %v4285, %v4279
          %v5024 = vpack.c.b16 %v4286, %v4280
          %v5025 = vpack.c.b16 %v4287, %v4281
          %v5026 = vpack.c.b16 %v4288, %v4282
          %v5027 = vpack.c.b16 %v4295, %v4289
          %v5028 = vpack.c.b16 %v4296, %v4290
          %v5029 = vpack.c.b16 %v4297, %v4291
          %v5030 = vpack.c.b16 %v4298, %v4292
          %v5031 = vpack.c.b16 %v4299, %v4293
          %v5032 = vpack.c.b16 %v4300, %v4294
          %v5033 = vpack.c.b16 %v4307, %v4301
          %v5034 = vpack.c.b16 %v4308, %v4302
          %v5035 = vpack.c.b16 %v4309, %v4303
          %v5036 = vpack.c.b16 %v4310, %v4304
          %v5037 = vpack.c.b16 %v4311, %v4305
          %v5038 = vpack.c.b16 %v4312, %v4306
          %v5039 = vpack.c.b16 %v4319, %v4313
          %v5040 = vpack.c.b16 %v4320, %v4314
          %v5041 = vpack.c.b16 %v4321, %v4315
          %v5042 = vpack.c.b16 %v4322, %v4316
          %v5043 = vpack.c.b16 %v4323, %v4317
          %v5044 = vpack.c.b16 %v4324, %v4318
          %v5045 = vpack.c.b16 %v4331, %v4325
          %v5046 = vpack.c.b16 %v4332, %v4326
          %v5047 = vpack.c.b16 %v4333, %v4327
          %v5048 = vpack.c.b16 %v4334, %v4328
          %v5049 = vpack.c.b16 %v4335, %v4329
          %v5050 = vpack.c.b16 %v4336, %v4330
          %v5051 = vpack.c.b16 %v4343, %v4337
          %v5052 = vpack.c.b16 %v4344, %v4338
          %v5053 = vpack.c.b16 %v4345, %v4339
          %v5054 = vpack.c.b16 %v4346, %v4340
          %v5055 = vpack.c.b16 %v4347, %v4341
          %v5056 = vpack.c.b16 %v4348, %v4342
          %v5057 = vpack.c.b16 %v4355, %v4349
          %v5058 = vpack.c.b16 %v4356, %v4350
          %v5059 = vpack.c.b16 %v4357, %v4351
          %v5060 = vpack.c.b16 %v4358, %v4352
          %v5061 = vpack.c.b16 %v4359, %v4353
          %v5062 = vpack.c.b16 %v4360, %v4354
          %v5063 = vpack.c.b16 %v4367, %v4361
          %v5064 = vpack.c.b16 %v4368, %v4362
          %v5065 = vpack.c.b16 %v4369, %v4363
          %v5066 = vpack.c.b16 %v4370, %v4364
          %v5067 = vpack.c.b16 %v4371, %v4365
          %v5068 = vpack.c.b16 %v4372, %v4366
          %v5069 = vpack.c.b16 %v4379, %v4373
          %v5070 = vpack.c.b16 %v4380, %v4374
          %v5071 = vpack.c.b16 %v4381, %v4375
          %v5072 = vpack.c.b16 %v4382, %v4376
          %v5073 = vpack.c.b16 %v4383, %v4377
          %v5074 = vpack.c.b16 %v4384, %v4378
          %v5075 = vpack.c.b16 %v4391, %v4385
          %v5076 = vpack.c.b16 %v4392, %v4386
          %v5077 = vpack.c.b16 %v4393, %v4387
          %v5078 = vpack.c.b16 %v4394, %v4388
          %v5079 = vpack.c.b16 %v4395, %v4389
          %v5080 = vpack.c.b16 %v4396, %v4390
          %v5081 = vpack.c.b16 %v4403, %v4397
          %v5082 = vpack.c.b16 %v4404, %v4398
          %v5083 = vpack.c.b16 %v4405, %v4399
          %v5084 = vpack.c.b16 %v4406, %v4400
          %v5085 = vpack.c.b16 %v4407, %v4401
          %v5086 = vpack.c.b16 %v4408, %v4402
          %v5087 = vpack.c.b16 %v4415, %v4409
          %v5088 = vpack.c.b16 %v4416, %v4410
          %v5089 = vpack.c.b16 %v4417, %v4411
          %v5090 = vpack.c.b16 %v4418, %v4412
          %v5091 = vpack.c.b16 %v4419, %v4413
          %v5092 = vpack.c.b16 %v4420, %v4414
          %v5093 = vpack.c.b16 %v4427, %v4421
          %v5094 = vpack.c.b16 %v4428, %v4422
          %v5095 = vpack.c.b16 %v4429, %v4423
          %v5096 = vpack.c.b16 %v4430, %v4424
          %v5097 = vpack.c.b16 %v4431, %v4425
          %v5098 = vpack.c.b16 %v4432, %v4426
          %v5099 = vpack.c.b16 %v4439, %v4433
          %v5100 = vpack.c.b16 %v4440, %v4434
          %v5101 = vpack.c.b16 %v4441, %v4435
          %v5102 = vpack.c.b16 %v4442, %v4436
          %v5103 = vpack.c.b16 %v4443, %v4437
          %v5104 = vpack.c.b16 %v4444, %v4438
          %v5105 = vpack.c.b16 %v4451, %v4445
          %v5106 = vpack.c.b16 %v4452, %v4446
          %v5107 = vpack.c.b16 %v4453, %v4447
          %v5108 = vpack.c.b16 %v4454, %v4448
          %v5109 = vpack.c.b16 %v4455, %v4449
          %v5110 = vpack.c.b16 %v4456, %v4450
          %v5111 = vpack.c.b16 %v4463, %v4457
          %v5112 = vpack.c.b16 %v4464, %v4458
          %v5113 = vpack.c.b16 %v4465, %v4459
          %v5114 = vpack.c.b16 %v4466, %v4460
          %v5115 = vpack.c.b16 %v4467, %v4461
          %v5116 = vpack.c.b16 %v4468, %v4462
          %v5117 = vpack.c.b16 %v4475, %v4469
          %v5118 = vpack.c.b16 %v4476, %v4470
          %v5119 = vpack.c.b16 %v4477, %v4471
          %v5120 = vpack.c.b16 %v4478, %v4472
          %v5121 = vpack.c.b16 %v4479, %v4473
          %v5122 = vpack.c.b16 %v4480, %v4474
          %v5123 = vpack.c.b16 %v4487, %v4481
          %v5124 = vpack.c.b16 %v4488, %v4482
          %v5125 = vpack.c.b16 %v4489, %v4483
          %v5126 = vpack.c.b16 %v4490, %v4484
          %v5127 = vpack.c.b16 %v4491, %v4485
          %v5128 = vpack.c.b16 %v4492, %v4486
          %v5129 = vpack.c.b16 %v4499, %v4493
          %v5130 = vpack.c.b16 %v4500, %v4494
          %v5131 = vpack.c.b16 %v4501, %v4495
          %v5132 = vpack.c.b16 %v4502, %v4496
          %v5133 = vpack.c.b16 %v4503, %v4497
          %v5134 = vpack.c.b16 %v4504, %v4498
          %v5135 = vpack.c.b16 %v4511, %v4505
          %v5136 = vpack.c.b16 %v4512, %v4506
          %v5137 = vpack.c.b16 %v4513, %v4507
          %v5138 = vpack.c.b16 %v4514, %v4508
          %v5139 = vpack.c.b16 %v4515, %v4509
          %v5140 = vpack.c.b16 %v4516, %v4510
          %v5141 = vpack.c.b16 %v4523, %v4517
          %v5142 = vpack.c.b16 %v4524, %v4518
          %v5143 = vpack.c.b16 %v4525, %v4519
          %v5144 = vpack.c.b16 %v4526, %v4520
          %v5145 = vpack.c.b16 %v4527, %v4521
          %v5146 = vpack.c.b16 %v4528, %v4522
          %v5147 = vpack.c.b16 %v4535, %v4529
          %v5148 = vpack.c.b16 %v4536, %v4530
          %v5149 = vpack.c.b16 %v4537, %v4531
          %v5150 = vpack.c.b16 %v4538, %v4532
          %v5151 = vpack.c.b16 %v4539, %v4533
          %v5152 = vpack.c.b16 %v4540, %v4534
          %v5153 = vpack.c.b16 %v4547, %v4541
          %v5154 = vpack.c.b16 %v4548, %v4542
          %v5155 = vpack.c.b16 %v4549, %v4543
          %v5156 = vpack.c.b16 %v4550, %v4544
          %v5157 = vpack.c.b16 %v4551, %v4545
          %v5158 = vpack.c.b16 %v4552, %v4546
          %v5159 = vpack.c.b16 %v4559, %v4553
          %v5160 = vpack.c.b16 %v4560, %v4554
          %v5161 = vpack.c.b16 %v4561, %v4555
          %v5162 = vpack.c.b16 %v4562, %v4556
          %v5163 = vpack.c.b16 %v4563, %v4557
          %v5164 = vpack.c.b16 %v4564, %v4558
          %v5165 = vpack.c.b16 %v4571, %v4565
          %v5166 = vpack.c.b16 %v4572, %v4566
          %v5167 = vpack.c.b16 %v4573, %v4567
          %v5168 = vpack.c.b16 %v4574, %v4568
          %v5169 = vpack.c.b16 %v4575, %v4569
          %v5170 = vpack.c.b16 %v4576, %v4570
          %v5171 = vpack.c.b16 %v4583, %v4577
          %v5172 = vpack.c.b16 %v4584, %v4578
          %v5173 = vpack.c.b16 %v4585, %v4579
          %v5174 = vpack.c.b16 %v4586, %v4580
          %v5175 = vpack.c.b16 %v4587, %v4581
          %v5176 = vpack.c.b16 %v4588, %v4582
          %v5177 = vpack.c.b16 %v4595, %v4589
          %v5178 = vpack.c.b16 %v4596, %v4590
          %v5179 = vpack.c.b16 %v4597, %v4591
          %v5180 = vpack.c.b16 %v4598, %v4592
          %v5181 = vpack.c.b16 %v4599, %v4593
          %v5182 = vpack.c.b16 %v4600, %v4594
          %v5183 = vpack.c.b16 %v4607, %v4601
          %v5184 = vpack.c.b16 %v4608, %v4602
          %v5185 = vpack.c.b16 %v4609, %v4603
          %v5186 = vpack.c.b16 %v4610, %v4604
          %v5187 = vpack.c.b16 %v4611, %v4605
          %v5188 = vpack.c.b16 %v4612, %v4606
          %5765 = vmatprep.subr.bf16.mxu0 %v4614
          %5766 = vmatpush1.bf16.msra.mxu0 %v4613
          %5767 = vmatprep.subr.bf16.mxu0 %v4620
          %5768 = vmatpush1.bf16.msra.mxu0 %v4619
          %5769 = vmatprep.subr.bf16.mxu0 %v4626
          %5770 = vmatpush1.bf16.msra.mxu0 %v4625
          %5771 = vmatprep.subr.bf16.mxu0 %v4632
          %5772 = vmatpush1.bf16.msra.mxu0 %v4631
          %5773 = vmatprep.subr.bf16.mxu0 %v4638
          %5774 = vmatpush1.bf16.msra.mxu0 %v4637
          %5775 = vmatprep.subr.bf16.mxu0 %v4644
          %5776 = vmatpush1.bf16.msra.mxu0 %v4643
          %5777 = vmatprep.subr.bf16.mxu0 %v4650
          %5778 = vmatpush1.bf16.msra.mxu0 %v4649
          %5779 = vmatprep.subr.bf16.mxu0 %v4656
          %5780 = vmatpush1.bf16.msra.mxu0 %v4655
          %5781 = vmatprep.subr.bf16.mxu0 %v4662
          %5782 = vmatpush1.bf16.msra.mxu0 %v4661
          %5783 = vmatprep.subr.bf16.mxu0 %v4668
          %5784 = vmatpush1.bf16.msra.mxu0 %v4667
          %5785 = vmatprep.subr.bf16.mxu0 %v4674
          %5786 = vmatpush1.bf16.msra.mxu0 %v4673
          %5787 = vmatprep.subr.bf16.mxu0 %v4680
          %5788 = vmatpush1.bf16.msra.mxu0 %v4679
          %5789 = vmatprep.subr.bf16.mxu0 %v4686
          %5790 = vmatpush1.bf16.msra.mxu0 %v4685
          %5791 = vmatprep.subr.bf16.mxu0 %v4692
          %5792 = vmatpush1.bf16.msra.mxu0 %v4691
          %5793 = vmatprep.subr.bf16.mxu0 %v4698
          %5794 = vmatpush1.bf16.msra.mxu0 %v4697
          %5795 = vmatprep.subr.bf16.mxu0 %v4704
          %5796 = vmatpush1.bf16.msra.mxu0 %v4703
          %5797 = vmatprep.mubr.bf16.mxu0 %v2266
          %5798 = vmatmul.mubr.bf16.gmra.mrb[0].mxu0 %v2265
          %v5799 = vpop.f32.mrb[0].mxu0
          %v5800 = vadd.f32 %v2858, %v5799
          %v5801 = vpop.f32.mrb[0].mxu0
          %v5802 = vadd.f32 %v2862, %v5801
          %v5803 = vpop.f32.mrb[0].mxu0
          %v5804 = vadd.f32 %v2858, %v5803
          %v5805 = vpop.f32.mrb[0].mxu0
          %v5806 = vadd.f32 %v2862, %v5805
          %5807 = vdwg.mxu0
          %5808 = vmatprep.subr.bf16.mxu0 %v4710
          %5809 = vmatpush1.bf16.msra.mxu0 %v4709
          %5810 = vmatprep.subr.bf16.mxu0 %v4716
          %5811 = vmatpush1.bf16.msra.mxu0 %v4715
          %5812 = vmatprep.subr.bf16.mxu0 %v4722
          %5813 = vmatpush1.bf16.msra.mxu0 %v4721
          %5814 = vmatprep.subr.bf16.mxu0 %v4728
          %5815 = vmatpush1.bf16.msra.mxu0 %v4727
          %5816 = vmatprep.subr.bf16.mxu0 %v4734
          %5817 = vmatpush1.bf16.msra.mxu0 %v4733
          %5818 = vmatprep.subr.bf16.mxu0 %v4740
          %5819 = vmatpush1.bf16.msra.mxu0 %v4739
          %5820 = vmatprep.subr.bf16.mxu0 %v4746
          %5821 = vmatpush1.bf16.msra.mxu0 %v4745
          %5822 = vmatprep.subr.bf16.mxu0 %v4752
          %5823 = vmatpush1.bf16.msra.mxu0 %v4751
          %5824 = vmatprep.subr.bf16.mxu0 %v4758
          %5825 = vmatpush1.bf16.msra.mxu0 %v4757
          %5826 = vmatprep.subr.bf16.mxu0 %v4764
          %5827 = vmatpush1.bf16.msra.mxu0 %v4763
          %5828 = vmatprep.subr.bf16.mxu0 %v4770
          %5829 = vmatpush1.bf16.msra.mxu0 %v4769
          %5830 = vmatprep.subr.bf16.mxu0 %v4776
          %5831 = vmatpush1.bf16.msra.mxu0 %v4775
          %5832 = vmatprep.subr.bf16.mxu0 %v4782
          %5833 = vmatpush1.bf16.msra.mxu0 %v4781
          %5834 = vmatprep.subr.bf16.mxu0 %v4788
          %5835 = vmatpush1.bf16.msra.mxu0 %v4787
          %5836 = vmatprep.subr.bf16.mxu0 %v4794
          %5837 = vmatpush1.bf16.msra.mxu0 %v4793
          %5838 = vmatprep.subr.bf16.mxu0 %v4800
          %5839 = vmatpush1.bf16.msra.mxu0 %v4799
          %5840 = vmatprep.mubr.bf16.mxu0 %v2268
          %5841 = vmatmul.mubr.bf16.gmra.mrb[0].mxu0 %v2267
          %v5842 = vpop.f32.mrb[0].mxu0
          %v5843 = vadd.f32 %v5800, %v5842
          %v5844 = vpop.f32.mrb[0].mxu0
          %v5845 = vadd.f32 %v5802, %v5844
          %v5846 = vpop.f32.mrb[0].mxu0
          %v5847 = vadd.f32 %v5804, %v5846
          %v5848 = vpop.f32.mrb[0].mxu0
          %v5849 = vadd.f32 %v5806, %v5848
          %5850 = vdwg.mxu0
          %5851 = vmatprep.subr.bf16.mxu0 %v4806
          %5852 = vmatpush1.bf16.msra.mxu0 %v4805
          %5853 = vmatprep.subr.bf16.mxu0 %v4812
          %5854 = vmatpush1.bf16.msra.mxu0 %v4811
          %5855 = vmatprep.subr.bf16.mxu0 %v4818
          %5856 = vmatpush1.bf16.msra.mxu0 %v4817
          %5857 = vmatprep.subr.bf16.mxu0 %v4824
          %5858 = vmatpush1.bf16.msra.mxu0 %v4823
          %5859 = vmatprep.subr.bf16.mxu0 %v4830
          %5860 = vmatpush1.bf16.msra.mxu0 %v4829
          %5861 = vmatprep.subr.bf16.mxu0 %v4836
          %5862 = vmatpush1.bf16.msra.mxu0 %v4835
          %5863 = vmatprep.subr.bf16.mxu0 %v4842
          %5864 = vmatpush1.bf16.msra.mxu0 %v4841
          %5865 = vmatprep.subr.bf16.mxu0 %v4848
          %5866 = vmatpush1.bf16.msra.mxu0 %v4847
          %5867 = vmatprep.subr.bf16.mxu0 %v4854
          %5868 = vmatpush1.bf16.msra.mxu0 %v4853
          %5869 = vmatprep.subr.bf16.mxu0 %v4860
          %5870 = vmatpush1.bf16.msra.mxu0 %v4859
          %5871 = vmatprep.subr.bf16.mxu0 %v4866
          %5872 = vmatpush1.bf16.msra.mxu0 %v4865
          %5873 = vmatprep.subr.bf16.mxu0 %v4872
          %5874 = vmatpush1.bf16.msra.mxu0 %v4871
          %5875 = vmatprep.subr.bf16.mxu0 %v4878
          %5876 = vmatpush1.bf16.msra.mxu0 %v4877
          %5877 = vmatprep.subr.bf16.mxu0 %v4884
          %5878 = vmatpush1.bf16.msra.mxu0 %v4883
          %5879 = vmatprep.subr.bf16.mxu0 %v4890
          %5880 = vmatpush1.bf16.msra.mxu0 %v4889
          %5881 = vmatprep.subr.bf16.mxu0 %v4896
          %5882 = vmatpush1.bf16.msra.mxu0 %v4895
          %5883 = vmatprep.mubr.bf16.mxu0 %v2270
          %5884 = vmatmul.mubr.bf16.gmra.mrb[0].mxu0 %v2269
          %v5885 = vpop.f32.mrb[0].mxu0
          %v5886 = vadd.f32 %v5843, %v5885
          %v5887 = vpop.f32.mrb[0].mxu0
          %v5888 = vadd.f32 %v5845, %v5887
          %v5889 = vpop.f32.mrb[0].mxu0
          %v5890 = vadd.f32 %v5847, %v5889
          %v5891 = vpop.f32.mrb[0].mxu0
          %v5892 = vadd.f32 %v5849, %v5891
          %5893 = vdwg.mxu0
          %5894 = vmatprep.subr.bf16.mxu0 %v4902
          %5895 = vmatpush1.bf16.msra.mxu0 %v4901
          %5896 = vmatprep.subr.bf16.mxu0 %v4908
          %5897 = vmatpush1.bf16.msra.mxu0 %v4907
          %5898 = vmatprep.subr.bf16.mxu0 %v4914
          %5899 = vmatpush1.bf16.msra.mxu0 %v4913
          %5900 = vmatprep.subr.bf16.mxu0 %v4920
          %5901 = vmatpush1.bf16.msra.mxu0 %v4919
          %5902 = vmatprep.subr.bf16.mxu0 %v4926
          %5903 = vmatpush1.bf16.msra.mxu0 %v4925
          %5904 = vmatprep.subr.bf16.mxu0 %v4932
          %5905 = vmatpush1.bf16.msra.mxu0 %v4931
          %5906 = vmatprep.subr.bf16.mxu0 %v4938
          %5907 = vmatpush1.bf16.msra.mxu0 %v4937
          %5908 = vmatprep.subr.bf16.mxu0 %v4944
          %5909 = vmatpush1.bf16.msra.mxu0 %v4943
          %5910 = vmatprep.subr.bf16.mxu0 %v4950
          %5911 = vmatpush1.bf16.msra.mxu0 %v4949
          %5912 = vmatprep.subr.bf16.mxu0 %v4956
          %5913 = vmatpush1.bf16.msra.mxu0 %v4955
          %5914 = vmatprep.subr.bf16.mxu0 %v4962
          %5915 = vmatpush1.bf16.msra.mxu0 %v4961
          %5916 = vmatprep.subr.bf16.mxu0 %v4968
          %5917 = vmatpush1.bf16.msra.mxu0 %v4967
          %5918 = vmatprep.subr.bf16.mxu0 %v4974
          %5919 = vmatpush1.bf16.msra.mxu0 %v4973
          %5920 = vmatprep.subr.bf16.mxu0 %v4980
          %5921 = vmatpush1.bf16.msra.mxu0 %v4979
          %5922 = vmatprep.subr.bf16.mxu0 %v4986
          %5923 = vmatpush1.bf16.msra.mxu0 %v4985
          %5924 = vmatprep.subr.bf16.mxu0 %v4992
          %5925 = vmatpush1.bf16.msra.mxu0 %v4991
          %5926 = vmatprep.mubr.bf16.mxu0 %v2272
          %5927 = vmatmul.mubr.bf16.gmra.mrb[0].mxu0 %v2271
          %v5928 = vpop.f32.mrb[0].mxu0
          %v5929 = vadd.f32 %v5886, %v5928
          %v5930 = vpop.f32.mrb[0].mxu0
          %v5931 = vadd.f32 %v5888, %v5930
          %v5932 = vpop.f32.mrb[0].mxu0
          %v5933 = vadd.f32 %v5890, %v5932
          %v5934 = vpop.f32.mrb[0].mxu0
          %v5935 = vadd.f32 %v5892, %v5934
          %5936 = vdwg.mxu0
          %5937 = vmatprep.subr.bf16.mxu0 %v4998
          %5938 = vmatpush1.bf16.msra.mxu0 %v4997
          %5939 = vmatprep.subr.bf16.mxu0 %v5004
          %5940 = vmatpush1.bf16.msra.mxu0 %v5003
          %5941 = vmatprep.subr.bf16.mxu0 %v5010
          %5942 = vmatpush1.bf16.msra.mxu0 %v5009
          %5943 = vmatprep.subr.bf16.mxu0 %v5016
          %5944 = vmatpush1.bf16.msra.mxu0 %v5015
          %5945 = vmatprep.subr.bf16.mxu0 %v5022
          %5946 = vmatpush1.bf16.msra.mxu0 %v5021
          %5947 = vmatprep.subr.bf16.mxu0 %v5028
          %5948 = vmatpush1.bf16.msra.mxu0 %v5027
          %5949 = vmatprep.subr.bf16.mxu0 %v5034
          %5950 = vmatpush1.bf16.msra.mxu0 %v5033
          %5951 = vmatprep.subr.bf16.mxu0 %v5040
          %5952 = vmatpush1.bf16.msra.mxu0 %v5039
          %5953 = vmatprep.subr.bf16.mxu0 %v5046
          %5954 = vmatpush1.bf16.msra.mxu0 %v5045
          %5955 = vmatprep.subr.bf16.mxu0 %v5052
          %5956 = vmatpush1.bf16.msra.mxu0 %v5051
          %5957 = vmatprep.subr.bf16.mxu0 %v5058
          %5958 = vmatpush1.bf16.msra.mxu0 %v5057
          %5959 = vmatprep.subr.bf16.mxu0 %v5064
          %5960 = vmatpush1.bf16.msra.mxu0 %v5063
          %5961 = vmatprep.subr.bf16.mxu0 %v5070
          %5962 = vmatpush1.bf16.msra.mxu0 %v5069
          %5963 = vmatprep.subr.bf16.mxu0 %v5076
          %5964 = vmatpush1.bf16.msra.mxu0 %v5075
          %5965 = vmatprep.subr.bf16.mxu0 %v5082
          %5966 = vmatpush1.bf16.msra.mxu0 %v5081
          %5967 = vmatprep.subr.bf16.mxu0 %v5088
          %5968 = vmatpush1.bf16.msra.mxu0 %v5087
          %5969 = vmatprep.mubr.bf16.mxu0 %v2274
          %5970 = vmatmul.mubr.bf16.gmra.mrb[0].mxu0 %v2273
          %v5971 = vpop.f32.mrb[0].mxu0
          %v5972 = vadd.f32 %v5929, %v5971
          %v5973 = vpop.f32.mrb[0].mxu0
          %v5974 = vadd.f32 %v5931, %v5973
          %v5975 = vpop.f32.mrb[0].mxu0
          %v5976 = vadd.f32 %v5933, %v5975
          %v5977 = vpop.f32.mrb[0].mxu0
          %v5978 = vadd.f32 %v5935, %v5977
          %5979 = vdwg.mxu0
          %5980 = vmatprep.subr.bf16.mxu0 %v5094
          %5981 = vmatpush1.bf16.msra.mxu0 %v5093
          %5982 = vmatprep.subr.bf16.mxu0 %v5100
          %5983 = vmatpush1.bf16.msra.mxu0 %v5099
          %5984 = vmatprep.subr.bf16.mxu0 %v5106
          %5985 = vmatpush1.bf16.msra.mxu0 %v5105
          %5986 = vmatprep.subr.bf16.mxu0 %v5112
          %5987 = vmatpush1.bf16.msra.mxu0 %v5111
          %5988 = vmatprep.subr.bf16.mxu0 %v5118
          %5989 = vmatpush1.bf16.msra.mxu0 %v5117
          %5990 = vmatprep.subr.bf16.mxu0 %v5124
          %5991 = vmatpush1.bf16.msra.mxu0 %v5123
          %5992 = vmatprep.subr.bf16.mxu0 %v5130
          %5993 = vmatpush1.bf16.msra.mxu0 %v5129
          %5994 = vmatprep.subr.bf16.mxu0 %v5136
          %5995 = vmatpush1.bf16.msra.mxu0 %v5135
          %5996 = vmatprep.subr.bf16.mxu0 %v5142
          %5997 = vmatpush1.bf16.msra.mxu0 %v5141
          %5998 = vmatprep.subr.bf16.mxu0 %v5148
          %5999 = vmatpush1.bf16.msra.mxu0 %v5147
          %6000 = vmatprep.subr.bf16.mxu0 %v5154
          %6001 = vmatpush1.bf16.msra.mxu0 %v5153
          %6002 = vmatprep.subr.bf16.mxu0 %v5160
          %6003 = vmatpush1.bf16.msra.mxu0 %v5159
          %6004 = vmatprep.subr.bf16.mxu0 %v5166
          %6005 = vmatpush1.bf16.msra.mxu0 %v5165
          %6006 = vmatprep.subr.bf16.mxu0 %v5172
          %6007 = vmatpush1.bf16.msra.mxu0 %v5171
          %6008 = vmatprep.subr.bf16.mxu0 %v5178
          %6009 = vmatpush1.bf16.msra.mxu0 %v5177
          %6010 = vmatprep.subr.bf16.mxu0 %v5184
          %6011 = vmatpush1.bf16.msra.mxu0 %v5183
          %6012 = vmatprep.mubr.bf16.mxu0 %v2276
          %6013 = vmatmul.mubr.bf16.gmra.mrb[0].mxu0 %v2275
          %v6014 = vpop.f32.mrb[0].mxu0
          %v6015 = vadd.f32 %v5972, %v6014
          %v6016 = vpop.f32.mrb[0].mxu0
          %v6017 = vadd.f32 %v5974, %v6016
          %v6018 = vpop.f32.mrb[0].mxu0
          %v6019 = vadd.f32 %v5976, %v6018
          %v6020 = vpop.f32.mrb[0].mxu0
          %v6021 = vadd.f32 %v5978, %v6020
          %6022 = vdwg.mxu0
          %6023 = vmatprep.subr.bf16.mxu0 %v4616
          %6024 = vmatpush1.bf16.msra.mxu0 %v4615
          %6025 = vmatprep.subr.bf16.mxu0 %v4622
          %6026 = vmatpush1.bf16.msra.mxu0 %v4621
          %6027 = vmatprep.subr.bf16.mxu0 %v4628
          %6028 = vmatpush1.bf16.msra.mxu0 %v4627
          %6029 = vmatprep.subr.bf16.mxu0 %v4634
          %6030 = vmatpush1.bf16.msra.mxu0 %v4633
          %6031 = vmatprep.subr.bf16.mxu0 %v4640
          %6032 = vmatpush1.bf16.msra.mxu0 %v4639
          %6033 = vmatprep.subr.bf16.mxu0 %v4646
          %6034 = vmatpush1.bf16.msra.mxu0 %v4645
          %6035 = vmatprep.subr.bf16.mxu0 %v4652
          %6036 = vmatpush1.bf16.msra.mxu0 %v4651
          %6037 = vmatprep.subr.bf16.mxu0 %v4658
          %6038 = vmatpush1.bf16.msra.mxu0 %v4657
          %6039 = vmatprep.subr.bf16.mxu0 %v4664
          %6040 = vmatpush1.bf16.msra.mxu0 %v4663
          %6041 = vmatprep.subr.bf16.mxu0 %v4670
          %6042 = vmatpush1.bf16.msra.mxu0 %v4669
          %6043 = vmatprep.subr.bf16.mxu0 %v4676
          %6044 = vmatpush1.bf16.msra.mxu0 %v4675
          %6045 = vmatprep.subr.bf16.mxu0 %v4682
          %6046 = vmatpush1.bf16.msra.mxu0 %v4681
          %6047 = vmatprep.subr.bf16.mxu0 %v4688
          %6048 = vmatpush1.bf16.msra.mxu0 %v4687
          %6049 = vmatprep.subr.bf16.mxu0 %v4694
          %6050 = vmatpush1.bf16.msra.mxu0 %v4693
          %6051 = vmatprep.subr.bf16.mxu0 %v4700
          %6052 = vmatpush1.bf16.msra.mxu0 %v4699
          %6053 = vmatprep.subr.bf16.mxu0 %v4706
          %6054 = vmatpush1.bf16.msra.mxu0 %v4705
          %6055 = vmatprep.mubr.bf16.mxu0 %v2266
          %6056 = vmatmul.mubr.bf16.gmra.mrb[0].mxu0 %v2265
          %v6057 = vpop.f32.mrb[0].mxu0
          %v6058 = vadd.f32 %v2866, %v6057
          %v6059 = vpop.f32.mrb[0].mxu0
          %v6060 = vadd.f32 %v2870, %v6059
          %v6061 = vpop.f32.mrb[0].mxu0
          %v6062 = vadd.f32 %v2866, %v6061
          %v6063 = vpop.f32.mrb[0].mxu0
          %v6064 = vadd.f32 %v2870, %v6063
          %6065 = vdwg.mxu0
          %6066 = vmatprep.subr.bf16.mxu0 %v4712
          %6067 = vmatpush1.bf16.msra.mxu0 %v4711
          %6068 = vmatprep.subr.bf16.mxu0 %v4718
          %6069 = vmatpush1.bf16.msra.mxu0 %v4717
          %6070 = vmatprep.subr.bf16.mxu0 %v4724
          %6071 = vmatpush1.bf16.msra.mxu0 %v4723
          %6072 = vmatprep.subr.bf16.mxu0 %v4730
          %6073 = vmatpush1.bf16.msra.mxu0 %v4729
          %6074 = vmatprep.subr.bf16.mxu0 %v4736
          %6075 = vmatpush1.bf16.msra.mxu0 %v4735
          %6076 = vmatprep.subr.bf16.mxu0 %v4742
          %6077 = vmatpush1.bf16.msra.mxu0 %v4741
          %6078 = vmatprep.subr.bf16.mxu0 %v4748
          %6079 = vmatpush1.bf16.msra.mxu0 %v4747
          %6080 = vmatprep.subr.bf16.mxu0 %v4754
          %6081 = vmatpush1.bf16.msra.mxu0 %v4753
          %6082 = vmatprep.subr.bf16.mxu0 %v4760
          %6083 = vmatpush1.bf16.msra.mxu0 %v4759
          %6084 = vmatprep.subr.bf16.mxu0 %v4766
          %6085 = vmatpush1.bf16.msra.mxu0 %v4765
          %6086 = vmatprep.subr.bf16.mxu0 %v4772
          %6087 = vmatpush1.bf16.msra.mxu0 %v4771
          %6088 = vmatprep.subr.bf16.mxu0 %v4778
          %6089 = vmatpush1.bf16.msra.mxu0 %v4777
          %6090 = vmatprep.subr.bf16.mxu0 %v4784
          %6091 = vmatpush1.bf16.msra.mxu0 %v4783
          %6092 = vmatprep.subr.bf16.mxu0 %v4790
          %6093 = vmatpush1.bf16.msra.mxu0 %v4789
          %6094 = vmatprep.subr.bf16.mxu0 %v4796
          %6095 = vmatpush1.bf16.msra.mxu0 %v4795
          %6096 = vmatprep.subr.bf16.mxu0 %v4802
          %6097 = vmatpush1.bf16.msra.mxu0 %v4801
          %6098 = vmatprep.mubr.bf16.mxu0 %v2268
          %6099 = vmatmul.mubr.bf16.gmra.mrb[0].mxu0 %v2267
          %v6100 = vpop.f32.mrb[0].mxu0
          %v6101 = vadd.f32 %v6058, %v6100
          %v6102 = vpop.f32.mrb[0].mxu0
          %v6103 = vadd.f32 %v6060, %v6102
          %v6104 = vpop.f32.mrb[0].mxu0
          %v6105 = vadd.f32 %v6062, %v6104
          %v6106 = vpop.f32.mrb[0].mxu0
          %v6107 = vadd.f32 %v6064, %v6106
          %6108 = vdwg.mxu0
          %6109 = vmatprep.subr.bf16.mxu0 %v4808
          %6110 = vmatpush1.bf16.msra.mxu0 %v4807
          %6111 = vmatprep.subr.bf16.mxu0 %v4814
          %6112 = vmatpush1.bf16.msra.mxu0 %v4813
          %6113 = vmatprep.subr.bf16.mxu0 %v4820
          %6114 = vmatpush1.bf16.msra.mxu0 %v4819
          %6115 = vmatprep.subr.bf16.mxu0 %v4826
          %6116 = vmatpush1.bf16.msra.mxu0 %v4825
          %6117 = vmatprep.subr.bf16.mxu0 %v4832
          %6118 = vmatpush1.bf16.msra.mxu0 %v4831
          %6119 = vmatprep.subr.bf16.mxu0 %v4838
          %6120 = vmatpush1.bf16.msra.mxu0 %v4837
          %6121 = vmatprep.subr.bf16.mxu0 %v4844
          %6122 = vmatpush1.bf16.msra.mxu0 %v4843
          %6123 = vmatprep.subr.bf16.mxu0 %v4850
          %6124 = vmatpush1.bf16.msra.mxu0 %v4849
          %6125 = vmatprep.subr.bf16.mxu0 %v4856
          %6126 = vmatpush1.bf16.msra.mxu0 %v4855
          %6127 = vmatprep.subr.bf16.mxu0 %v4862
          %6128 = vmatpush1.bf16.msra.mxu0 %v4861
          %6129 = vmatprep.subr.bf16.mxu0 %v4868
          %6130 = vmatpush1.bf16.msra.mxu0 %v4867
          %6131 = vmatprep.subr.bf16.mxu0 %v4874
          %6132 = vmatpush1.bf16.msra.mxu0 %v4873
          %6133 = vmatprep.subr.bf16.mxu0 %v4880
          %6134 = vmatpush1.bf16.msra.mxu0 %v4879
          %6135 = vmatprep.subr.bf16.mxu0 %v4886
          %6136 = vmatpush1.bf16.msra.mxu0 %v4885
          %6137 = vmatprep.subr.bf16.mxu0 %v4892
          %6138 = vmatpush1.bf16.msra.mxu0 %v4891
          %6139 = vmatprep.subr.bf16.mxu0 %v4898
          %6140 = vmatpush1.bf16.msra.mxu0 %v4897
          %6141 = vmatprep.mubr.bf16.mxu0 %v2270
          %6142 = vmatmul.mubr.bf16.gmra.mrb[0].mxu0 %v2269
          %v6143 = vpop.f32.mrb[0].mxu0
          %v6144 = vadd.f32 %v6101, %v6143
          %v6145 = vpop.f32.mrb[0].mxu0
          %v6146 = vadd.f32 %v6103, %v6145
          %v6147 = vpop.f32.mrb[0].mxu0
          %v6148 = vadd.f32 %v6105, %v6147
          %v6149 = vpop.f32.mrb[0].mxu0
          %v6150 = vadd.f32 %v6107, %v6149
          %6151 = vdwg.mxu0
          %6152 = vmatprep.subr.bf16.mxu0 %v4904
          %6153 = vmatpush1.bf16.msra.mxu0 %v4903
          %6154 = vmatprep.subr.bf16.mxu0 %v4910
          %6155 = vmatpush1.bf16.msra.mxu0 %v4909
          %6156 = vmatprep.subr.bf16.mxu0 %v4916
          %6157 = vmatpush1.bf16.msra.mxu0 %v4915
          %6158 = vmatprep.subr.bf16.mxu0 %v4922
          %6159 = vmatpush1.bf16.msra.mxu0 %v4921
          %6160 = vmatprep.subr.bf16.mxu0 %v4928
          %6161 = vmatpush1.bf16.msra.mxu0 %v4927
          %6162 = vmatprep.subr.bf16.mxu0 %v4934
          %6163 = vmatpush1.bf16.msra.mxu0 %v4933
          %6164 = vmatprep.subr.bf16.mxu0 %v4940
          %6165 = vmatpush1.bf16.msra.mxu0 %v4939
          %6166 = vmatprep.subr.bf16.mxu0 %v4946
          %6167 = vmatpush1.bf16.msra.mxu0 %v4945
          %6168 = vmatprep.subr.bf16.mxu0 %v4952
          %6169 = vmatpush1.bf16.msra.mxu0 %v4951
          %6170 = vmatprep.subr.bf16.mxu0 %v4958
          %6171 = vmatpush1.bf16.msra.mxu0 %v4957
          %6172 = vmatprep.subr.bf16.mxu0 %v4964
          %6173 = vmatpush1.bf16.msra.mxu0 %v4963
          %6174 = vmatprep.subr.bf16.mxu0 %v4970
          %6175 = vmatpush1.bf16.msra.mxu0 %v4969
          %6176 = vmatprep.subr.bf16.mxu0 %v4976
          %6177 = vmatpush1.bf16.msra.mxu0 %v4975
          %6178 = vmatprep.subr.bf16.mxu0 %v4982
          %6179 = vmatpush1.bf16.msra.mxu0 %v4981
          %6180 = vmatprep.subr.bf16.mxu0 %v4988
          %6181 = vmatpush1.bf16.msra.mxu0 %v4987
          %6182 = vmatprep.subr.bf16.mxu0 %v4994
          %6183 = vmatpush1.bf16.msra.mxu0 %v4993
          %6184 = vmatprep.mubr.bf16.mxu0 %v2272
          %6185 = vmatmul.mubr.bf16.gmra.mrb[0].mxu0 %v2271
          %v6186 = vpop.f32.mrb[0].mxu0
          %v6187 = vadd.f32 %v6144, %v6186
          %v6188 = vpop.f32.mrb[0].mxu0
          %v6189 = vadd.f32 %v6146, %v6188
          %v6190 = vpop.f32.mrb[0].mxu0
          %v6191 = vadd.f32 %v6148, %v6190
          %v6192 = vpop.f32.mrb[0].mxu0
          %v6193 = vadd.f32 %v6150, %v6192
          %6194 = vdwg.mxu0
          %6195 = vmatprep.subr.bf16.mxu0 %v5000
          %6196 = vmatpush1.bf16.msra.mxu0 %v4999
          %6197 = vmatprep.subr.bf16.mxu0 %v5006
          %6198 = vmatpush1.bf16.msra.mxu0 %v5005
          %6199 = vmatprep.subr.bf16.mxu0 %v5012
          %6200 = vmatpush1.bf16.msra.mxu0 %v5011
          %6201 = vmatprep.subr.bf16.mxu0 %v5018
          %6202 = vmatpush1.bf16.msra.mxu0 %v5017
          %6203 = vmatprep.subr.bf16.mxu0 %v5024
          %6204 = vmatpush1.bf16.msra.mxu0 %v5023
          %6205 = vmatprep.subr.bf16.mxu0 %v5030
          %6206 = vmatpush1.bf16.msra.mxu0 %v5029
          %6207 = vmatprep.subr.bf16.mxu0 %v5036
          %6208 = vmatpush1.bf16.msra.mxu0 %v5035
          %6209 = vmatprep.subr.bf16.mxu0 %v5042
          %6210 = vmatpush1.bf16.msra.mxu0 %v5041
          %6211 = vmatprep.subr.bf16.mxu0 %v5048
          %6212 = vmatpush1.bf16.msra.mxu0 %v5047
          %6213 = vmatprep.subr.bf16.mxu0 %v5054
          %6214 = vmatpush1.bf16.msra.mxu0 %v5053
          %6215 = vmatprep.subr.bf16.mxu0 %v5060
          %6216 = vmatpush1.bf16.msra.mxu0 %v5059
          %6217 = vmatprep.subr.bf16.mxu0 %v5066
          %6218 = vmatpush1.bf16.msra.mxu0 %v5065
          %6219 = vmatprep.subr.bf16.mxu0 %v5072
          %6220 = vmatpush1.bf16.msra.mxu0 %v5071
          %6221 = vmatprep.subr.bf16.mxu0 %v5078
          %6222 = vmatpush1.bf16.msra.mxu0 %v5077
          %6223 = vmatprep.subr.bf16.mxu0 %v5084
          %6224 = vmatpush1.bf16.msra.mxu0 %v5083
          %6225 = vmatprep.subr.bf16.mxu0 %v5090
          %6226 = vmatpush1.bf16.msra.mxu0 %v5089
          %6227 = vmatprep.mubr.bf16.mxu0 %v2274
          %6228 = vmatmul.mubr.bf16.gmra.mrb[0].mxu0 %v2273
          %v6229 = vpop.f32.mrb[0].mxu0
          %v6230 = vadd.f32 %v6187, %v6229
          %v6231 = vpop.f32.mrb[0].mxu0
          %v6232 = vadd.f32 %v6189, %v6231
          %v6233 = vpop.f32.mrb[0].mxu0
          %v6234 = vadd.f32 %v6191, %v6233
          %v6235 = vpop.f32.mrb[0].mxu0
          %v6236 = vadd.f32 %v6193, %v6235
          %6237 = vdwg.mxu0
          %6238 = vmatprep.subr.bf16.mxu0 %v5096
          %6239 = vmatpush1.bf16.msra.mxu0 %v5095
          %6240 = vmatprep.subr.bf16.mxu0 %v5102
          %6241 = vmatpush1.bf16.msra.mxu0 %v5101
          %6242 = vmatprep.subr.bf16.mxu0 %v5108
          %6243 = vmatpush1.bf16.msra.mxu0 %v5107
          %6244 = vmatprep.subr.bf16.mxu0 %v5114
          %6245 = vmatpush1.bf16.msra.mxu0 %v5113
          %6246 = vmatprep.subr.bf16.mxu0 %v5120
          %6247 = vmatpush1.bf16.msra.mxu0 %v5119
          %6248 = vmatprep.subr.bf16.mxu0 %v5126
          %6249 = vmatpush1.bf16.msra.mxu0 %v5125
          %6250 = vmatprep.subr.bf16.mxu0 %v5132
          %6251 = vmatpush1.bf16.msra.mxu0 %v5131
          %6252 = vmatprep.subr.bf16.mxu0 %v5138
          %6253 = vmatpush1.bf16.msra.mxu0 %v5137
          %6254 = vmatprep.subr.bf16.mxu0 %v5144
          %6255 = vmatpush1.bf16.msra.mxu0 %v5143
          %6256 = vmatprep.subr.bf16.mxu0 %v5150
          %6257 = vmatpush1.bf16.msra.mxu0 %v5149
          %6258 = vmatprep.subr.bf16.mxu0 %v5156
          %6259 = vmatpush1.bf16.msra.mxu0 %v5155
          %6260 = vmatprep.subr.bf16.mxu0 %v5162
          %6261 = vmatpush1.bf16.msra.mxu0 %v5161
          %6262 = vmatprep.subr.bf16.mxu0 %v5168
          %6263 = vmatpush1.bf16.msra.mxu0 %v5167
          %6264 = vmatprep.subr.bf16.mxu0 %v5174
          %6265 = vmatpush1.bf16.msra.mxu0 %v5173
          %6266 = vmatprep.subr.bf16.mxu0 %v5180
          %6267 = vmatpush1.bf16.msra.mxu0 %v5179
          %6268 = vmatprep.subr.bf16.mxu0 %v5186
          %6269 = vmatpush1.bf16.msra.mxu0 %v5185
          %6270 = vmatprep.mubr.bf16.mxu0 %v2276
          %6271 = vmatmul.mubr.bf16.gmra.mrb[0].mxu0 %v2275
          %v6272 = vpop.f32.mrb[0].mxu0
          %v6273 = vadd.f32 %v6230, %v6272
          %v6274 = vpop.f32.mrb[0].mxu0
          %v6275 = vadd.f32 %v6232, %v6274
          %v6276 = vpop.f32.mrb[0].mxu0
          %v6277 = vadd.f32 %v6234, %v6276
          %v6278 = vpop.f32.mrb[0].mxu0
          %v6279 = vadd.f32 %v6236, %v6278
          %6280 = vdwg.mxu0
          %6281 = vmatprep.subr.bf16.mxu0 %v4618
          %6282 = vmatpush1.bf16.msra.mxu0 %v4617
          %6283 = vmatprep.subr.bf16.mxu0 %v4624
          %6284 = vmatpush1.bf16.msra.mxu0 %v4623
          %6285 = vmatprep.subr.bf16.mxu0 %v4630
          %6286 = vmatpush1.bf16.msra.mxu0 %v4629
          %6287 = vmatprep.subr.bf16.mxu0 %v4636
          %6288 = vmatpush1.bf16.msra.mxu0 %v4635
          %6289 = vmatprep.subr.bf16.mxu0 %v4642
          %6290 = vmatpush1.bf16.msra.mxu0 %v4641
          %6291 = vmatprep.subr.bf16.mxu0 %v4648
          %6292 = vmatpush1.bf16.msra.mxu0 %v4647
          %6293 = vmatprep.subr.bf16.mxu0 %v4654
          %6294 = vmatpush1.bf16.msra.mxu0 %v4653
          %6295 = vmatprep.subr.bf16.mxu0 %v4660
          %6296 = vmatpush1.bf16.msra.mxu0 %v4659
          %6297 = vmatprep.subr.bf16.mxu0 %v4666
          %6298 = vmatpush1.bf16.msra.mxu0 %v4665
          %6299 = vmatprep.subr.bf16.mxu0 %v4672
          %6300 = vmatpush1.bf16.msra.mxu0 %v4671
          %6301 = vmatprep.subr.bf16.mxu0 %v4678
          %6302 = vmatpush1.bf16.msra.mxu0 %v4677
          %6303 = vmatprep.subr.bf16.mxu0 %v4684
          %6304 = vmatpush1.bf16.msra.mxu0 %v4683
          %6305 = vmatprep.subr.bf16.mxu0 %v4690
          %6306 = vmatpush1.bf16.msra.mxu0 %v4689
          %6307 = vmatprep.subr.bf16.mxu0 %v4696
          %6308 = vmatpush1.bf16.msra.mxu0 %v4695
          %6309 = vmatprep.subr.bf16.mxu0 %v4702
          %6310 = vmatpush1.bf16.msra.mxu0 %v4701
          %6311 = vmatprep.subr.bf16.mxu0 %v4708
          %6312 = vmatpush1.bf16.msra.mxu0 %v4707
          %6313 = vmatprep.mubr.bf16.mxu0 %v2266
          %6314 = vmatmul.mubr.bf16.gmra.mrb[0].mxu0 %v2265
          %v6315 = vpop.f32.mrb[0].mxu0
          %v6316 = vadd.f32 %v2874, %v6315
          %v6317 = vpop.f32.mrb[0].mxu0
          %v6318 = vadd.f32 %v2878, %v6317
          %v6319 = vpop.f32.mrb[0].mxu0
          %v6320 = vadd.f32 %v2874, %v6319
          %v6321 = vpop.f32.mrb[0].mxu0
          %v6322 = vadd.f32 %v2878, %v6321
          %6323 = vdwg.mxu0
          %6324 = vmatprep.subr.bf16.mxu0 %v4714
          %6325 = vmatpush1.bf16.msra.mxu0 %v4713
          %6326 = vmatprep.subr.bf16.mxu0 %v4720
          %6327 = vmatpush1.bf16.msra.mxu0 %v4719
          %6328 = vmatprep.subr.bf16.mxu0 %v4726
          %6329 = vmatpush1.bf16.msra.mxu0 %v4725
          %6330 = vmatprep.subr.bf16.mxu0 %v4732
          %6331 = vmatpush1.bf16.msra.mxu0 %v4731
          %6332 = vmatprep.subr.bf16.mxu0 %v4738
          %6333 = vmatpush1.bf16.msra.mxu0 %v4737
          %6334 = vmatprep.subr.bf16.mxu0 %v4744
          %6335 = vmatpush1.bf16.msra.mxu0 %v4743
          %6336 = vmatprep.subr.bf16.mxu0 %v4750
          %6337 = vmatpush1.bf16.msra.mxu0 %v4749
          %6338 = vmatprep.subr.bf16.mxu0 %v4756
          %6339 = vmatpush1.bf16.msra.mxu0 %v4755
          %6340 = vmatprep.subr.bf16.mxu0 %v4762
          %6341 = vmatpush1.bf16.msra.mxu0 %v4761
          %6342 = vmatprep.subr.bf16.mxu0 %v4768
          %6343 = vmatpush1.bf16.msra.mxu0 %v4767
          %6344 = vmatprep.subr.bf16.mxu0 %v4774
          %6345 = vmatpush1.bf16.msra.mxu0 %v4773
          %6346 = vmatprep.subr.bf16.mxu0 %v4780
          %6347 = vmatpush1.bf16.msra.mxu0 %v4779
          %6348 = vmatprep.subr.bf16.mxu0 %v4786
          %6349 = vmatpush1.bf16.msra.mxu0 %v4785
          %6350 = vmatprep.subr.bf16.mxu0 %v4792
          %6351 = vmatpush1.bf16.msra.mxu0 %v4791
          %6352 = vmatprep.subr.bf16.mxu0 %v4798
          %6353 = vmatpush1.bf16.msra.mxu0 %v4797
          %6354 = vmatprep.subr.bf16.mxu0 %v4804
          %6355 = vmatpush1.bf16.msra.mxu0 %v4803
          %6356 = vmatprep.mubr.bf16.mxu0 %v2268
          %6357 = vmatmul.mubr.bf16.gmra.mrb[0].mxu0 %v2267
          %v6358 = vpop.f32.mrb[0].mxu0
          %v6359 = vadd.f32 %v6316, %v6358
          %v6360 = vpop.f32.mrb[0].mxu0
          %v6361 = vadd.f32 %v6318, %v6360
          %v6362 = vpop.f32.mrb[0].mxu0
          %v6363 = vadd.f32 %v6320, %v6362
          %v6364 = vpop.f32.mrb[0].mxu0
          %v6365 = vadd.f32 %v6322, %v6364
          %6366 = vdwg.mxu0
          %6367 = vmatprep.subr.bf16.mxu0 %v4810
          %6368 = vmatpush1.bf16.msra.mxu0 %v4809
          %6369 = vmatprep.subr.bf16.mxu0 %v4816
          %6370 = vmatpush1.bf16.msra.mxu0 %v4815
          %6371 = vmatprep.subr.bf16.mxu0 %v4822
          %6372 = vmatpush1.bf16.msra.mxu0 %v4821
          %6373 = vmatprep.subr.bf16.mxu0 %v4828
          %6374 = vmatpush1.bf16.msra.mxu0 %v4827
          %6375 = vmatprep.subr.bf16.mxu0 %v4834
          %6376 = vmatpush1.bf16.msra.mxu0 %v4833
          %6377 = vmatprep.subr.bf16.mxu0 %v4840
          %6378 = vmatpush1.bf16.msra.mxu0 %v4839
          %6379 = vmatprep.subr.bf16.mxu0 %v4846
          %6380 = vmatpush1.bf16.msra.mxu0 %v4845
          %6381 = vmatprep.subr.bf16.mxu0 %v4852
          %6382 = vmatpush1.bf16.msra.mxu0 %v4851
          %6383 = vmatprep.subr.bf16.mxu0 %v4858
          %6384 = vmatpush1.bf16.msra.mxu0 %v4857
          %6385 = vmatprep.subr.bf16.mxu0 %v4864
          %6386 = vmatpush1.bf16.msra.mxu0 %v4863
          %6387 = vmatprep.subr.bf16.mxu0 %v4870
          %6388 = vmatpush1.bf16.msra.mxu0 %v4869
          %6389 = vmatprep.subr.bf16.mxu0 %v4876
          %6390 = vmatpush1.bf16.msra.mxu0 %v4875
          %6391 = vmatprep.subr.bf16.mxu0 %v4882
          %6392 = vmatpush1.bf16.msra.mxu0 %v4881
          %6393 = vmatprep.subr.bf16.mxu0 %v4888
          %6394 = vmatpush1.bf16.msra.mxu0 %v4887
          %6395 = vmatprep.subr.bf16.mxu0 %v4894
          %6396 = vmatpush1.bf16.msra.mxu0 %v4893
          %6397 = vmatprep.subr.bf16.mxu0 %v4900
          %6398 = vmatpush1.bf16.msra.mxu0 %v4899
          %6399 = vmatprep.mubr.bf16.mxu0 %v2270
          %6400 = vmatmul.mubr.bf16.gmra.mrb[0].mxu0 %v2269
          %v6401 = vpop.f32.mrb[0].mxu0
          %v6402 = vadd.f32 %v6359, %v6401
          %v6403 = vpop.f32.mrb[0].mxu0
          %v6404 = vadd.f32 %v6361, %v6403
          %v6405 = vpop.f32.mrb[0].mxu0
          %v6406 = vadd.f32 %v6363, %v6405
          %v6407 = vpop.f32.mrb[0].mxu0
          %v6408 = vadd.f32 %v6365, %v6407
          %6409 = vdwg.mxu0
          %6410 = vmatprep.subr.bf16.mxu0 %v4906
          %6411 = vmatpush1.bf16.msra.mxu0 %v4905
          %6412 = vmatprep.subr.bf16.mxu0 %v4912
          %6413 = vmatpush1.bf16.msra.mxu0 %v4911
          %6414 = vmatprep.subr.bf16.mxu0 %v4918
          %6415 = vmatpush1.bf16.msra.mxu0 %v4917
          %6416 = vmatprep.subr.bf16.mxu0 %v4924
          %6417 = vmatpush1.bf16.msra.mxu0 %v4923
          %6418 = vmatprep.subr.bf16.mxu0 %v4930
          %6419 = vmatpush1.bf16.msra.mxu0 %v4929
          %6420 = vmatprep.subr.bf16.mxu0 %v4936
          %6421 = vmatpush1.bf16.msra.mxu0 %v4935
          %6422 = vmatprep.subr.bf16.mxu0 %v4942
          %6423 = vmatpush1.bf16.msra.mxu0 %v4941
          %6424 = vmatprep.subr.bf16.mxu0 %v4948
          %6425 = vmatpush1.bf16.msra.mxu0 %v4947
          %6426 = vmatprep.subr.bf16.mxu0 %v4954
          %6427 = vmatpush1.bf16.msra.mxu0 %v4953
          %6428 = vmatprep.subr.bf16.mxu0 %v4960
          %6429 = vmatpush1.bf16.msra.mxu0 %v4959
          %6430 = vmatprep.subr.bf16.mxu0 %v4966
          %6431 = vmatpush1.bf16.msra.mxu0 %v4965
          %6432 = vmatprep.subr.bf16.mxu0 %v4972
          %6433 = vmatpush1.bf16.msra.mxu0 %v4971
          %6434 = vmatprep.subr.bf16.mxu0 %v4978
          %6435 = vmatpush1.bf16.msra.mxu0 %v4977
          %6436 = vmatprep.subr.bf16.mxu0 %v4984
          %6437 = vmatpush1.bf16.msra.mxu0 %v4983
          %6438 = vmatprep.subr.bf16.mxu0 %v4990
          %6439 = vmatpush1.bf16.msra.mxu0 %v4989
          %6440 = vmatprep.subr.bf16.mxu0 %v4996
          %6441 = vmatpush1.bf16.msra.mxu0 %v4995
          %6442 = vmatprep.mubr.bf16.mxu0 %v2272
          %6443 = vmatmul.mubr.bf16.gmra.mrb[0].mxu0 %v2271
          %v6444 = vpop.f32.mrb[0].mxu0
          %v6445 = vadd.f32 %v6402, %v6444
          %v6446 = vpop.f32.mrb[0].mxu0
          %v6447 = vadd.f32 %v6404, %v6446
          %v6448 = vpop.f32.mrb[0].mxu0
          %v6449 = vadd.f32 %v6406, %v6448
          %v6450 = vpop.f32.mrb[0].mxu0
          %v6451 = vadd.f32 %v6408, %v6450
          %6452 = vdwg.mxu0
          %6453 = vmatprep.subr.bf16.mxu0 %v5002
          %6454 = vmatpush1.bf16.msra.mxu0 %v5001
          %6455 = vmatprep.subr.bf16.mxu0 %v5008
          %6456 = vmatpush1.bf16.msra.mxu0 %v5007
          %6457 = vmatprep.subr.bf16.mxu0 %v5014
          %6458 = vmatpush1.bf16.msra.mxu0 %v5013
          %6459 = vmatprep.subr.bf16.mxu0 %v5020
          %6460 = vmatpush1.bf16.msra.mxu0 %v5019
          %6461 = vmatprep.subr.bf16.mxu0 %v5026
          %6462 = vmatpush1.bf16.msra.mxu0 %v5025
          %6463 = vmatprep.subr.bf16.mxu0 %v5032
          %6464 = vmatpush1.bf16.msra.mxu0 %v5031
          %6465 = vmatprep.subr.bf16.mxu0 %v5038
          %6466 = vmatpush1.bf16.msra.mxu0 %v5037
          %6467 = vmatprep.subr.bf16.mxu0 %v5044
          %6468 = vmatpush1.bf16.msra.mxu0 %v5043
          %6469 = vmatprep.subr.bf16.mxu0 %v5050
          %6470 = vmatpush1.bf16.msra.mxu0 %v5049
          %6471 = vmatprep.subr.bf16.mxu0 %v5056
          %6472 = vmatpush1.bf16.msra.mxu0 %v5055
          %6473 = vmatprep.subr.bf16.mxu0 %v5062
          %6474 = vmatpush1.bf16.msra.mxu0 %v5061
          %6475 = vmatprep.subr.bf16.mxu0 %v5068
          %6476 = vmatpush1.bf16.msra.mxu0 %v5067
          %6477 = vmatprep.subr.bf16.mxu0 %v5074
          %6478 = vmatpush1.bf16.msra.mxu0 %v5073
          %6479 = vmatprep.subr.bf16.mxu0 %v5080
          %6480 = vmatpush1.bf16.msra.mxu0 %v5079
          %6481 = vmatprep.subr.bf16.mxu0 %v5086
          %6482 = vmatpush1.bf16.msra.mxu0 %v5085
          %6483 = vmatprep.subr.bf16.mxu0 %v5092
          %6484 = vmatpush1.bf16.msra.mxu0 %v5091
          %6485 = vmatprep.mubr.bf16.mxu0 %v2274
          %6486 = vmatmul.mubr.bf16.gmra.mrb[0].mxu0 %v2273
          %v6487 = vpop.f32.mrb[0].mxu0
          %v6488 = vadd.f32 %v6445, %v6487
          %v6489 = vpop.f32.mrb[0].mxu0
          %v6490 = vadd.f32 %v6447, %v6489
          %v6491 = vpop.f32.mrb[0].mxu0
          %v6492 = vadd.f32 %v6449, %v6491
          %v6493 = vpop.f32.mrb[0].mxu0
          %v6494 = vadd.f32 %v6451, %v6493
          %6495 = vdwg.mxu0
          %6496 = vmatprep.subr.bf16.mxu0 %v5098
          %6497 = vmatpush1.bf16.msra.mxu0 %v5097
          %6498 = vmatprep.subr.bf16.mxu0 %v5104
          %6499 = vmatpush1.bf16.msra.mxu0 %v5103
          %6500 = vmatprep.subr.bf16.mxu0 %v5110
          %6501 = vmatpush1.bf16.msra.mxu0 %v5109
          %6502 = vmatprep.subr.bf16.mxu0 %v5116
          %6503 = vmatpush1.bf16.msra.mxu0 %v5115
          %6504 = vmatprep.subr.bf16.mxu0 %v5122
          %6505 = vmatpush1.bf16.msra.mxu0 %v5121
          %6506 = vmatprep.subr.bf16.mxu0 %v5128
          %6507 = vmatpush1.bf16.msra.mxu0 %v5127
          %6508 = vmatprep.subr.bf16.mxu0 %v5134
          %6509 = vmatpush1.bf16.msra.mxu0 %v5133
          %6510 = vmatprep.subr.bf16.mxu0 %v5140
          %6511 = vmatpush1.bf16.msra.mxu0 %v5139
          %6512 = vmatprep.subr.bf16.mxu0 %v5146
          %6513 = vmatpush1.bf16.msra.mxu0 %v5145
          %6514 = vmatprep.subr.bf16.mxu0 %v5152
          %6515 = vmatpush1.bf16.msra.mxu0 %v5151
          %6516 = vmatprep.subr.bf16.mxu0 %v5158
          %6517 = vmatpush1.bf16.msra.mxu0 %v5157
          %6518 = vmatprep.subr.bf16.mxu0 %v5164
          %6519 = vmatpush1.bf16.msra.mxu0 %v5163
          %6520 = vmatprep.subr.bf16.mxu0 %v5170
          %6521 = vmatpush1.bf16.msra.mxu0 %v5169
          %6522 = vmatprep.subr.bf16.mxu0 %v5176
          %6523 = vmatpush1.bf16.msra.mxu0 %v5175
          %6524 = vmatprep.subr.bf16.mxu0 %v5182
          %6525 = vmatpush1.bf16.msra.mxu0 %v5181
          %6526 = vmatprep.subr.bf16.mxu0 %v5188
          %6527 = vmatpush1.bf16.msra.mxu0 %v5187
          %6528 = vmatprep.mubr.bf16.mxu0 %v2276
          %6529 = vmatmul.mubr.bf16.gmra.mrb[0].mxu0 %v2275
          %v6530 = vpop.f32.mrb[0].mxu0
          %v6531 = vadd.f32 %v6488, %v6530
          %v6532 = vpop.f32.mrb[0].mxu0
          %v6533 = vadd.f32 %v6490, %v6532
          %v6534 = vpop.f32.mrb[0].mxu0
          %v6535 = vadd.f32 %v6492, %v6534
          %v6536 = vpop.f32.mrb[0].mxu0
          %v6537 = vadd.f32 %v6494, %v6536
          %6538 = vdwg.mxu0
          %v6539 = vtanh.pop %v6015
          %v6540 = vtanh.pop %v6017
          %v6541 = vtanh.pop %v6273
          %v6542 = vtanh.pop %v6275
          %v6543 = vtanh.pop %v6531
          %v6544 = vtanh.pop %v6533
          %v6545 = vtanh.pop %v6019
          %v6546 = vtanh.pop %v6021
          %v6547 = vtanh.pop %v6277
          %v6548 = vtanh.pop %v6279
          %v6549 = vtanh.pop %v6535
          %v6550 = vtanh.pop %v6537
          %6551 = vst [vmem:[#allocation2] sm:$0xff] %v6539
          %6552 = vst [vmem:[#allocation2 + $0x8] sm:$0xff] %v6540
          %6553 = vst [vmem:[#allocation2 + $0x10] sm:$0xff] %v6541
          %6554 = vst [vmem:[#allocation2 + $0x18] sm:$0xff] %v6542
          %6555 = vst [vmem:[#allocation2 + $0x20] sm:$0xff] %v6543
          %6556 = vst [vmem:[#allocation2 + $0x28] sm:$0xff] %v6544
          %6557 = vst [vmem:[#allocation2 + $0x30] sm:$0xff] %v6545
          %6558 = vst [vmem:[#allocation2 + $0x38] sm:$0xff] %v6546
          %6559 = vst [vmem:[#allocation2 + $0x40] sm:$0xff] %v6547
          %6560 = vst [vmem:[#allocation2 + $0x48] sm:$0xff] %v6548
          %6561 = vst [vmem:[#allocation2 + $0x50] sm:$0xff] %v6549
          %6562 = vst [vmem:[#allocation2 + $0x58] sm:$0xff] %v6550
          %6563 = vst [vmem:[%s558] sm:$0xff] %v6539
          %6564 = vst [vmem:[%s558 + $0x8] sm:$0xff] %v6540
          %6565 = vst [vmem:[%s558 + $0x10] sm:$0xff] %v6541
          %6566 = vst [vmem:[%s558 + $0x18] sm:$0xff] %v6542
          %6567 = vst [vmem:[%s558 + $0x20] sm:$0xff] %v6543
          %6568 = vst [vmem:[%s558 + $0x28] sm:$0xff] %v6544
          %6569 = vst [vmem:[%s558 + $0x30] sm:$0xff] %v6545
          %6570 = vst [vmem:[%s558 + $0x38] sm:$0xff] %v6546
          %6571 = vst [vmem:[%s558 + $0x40] sm:$0xff] %v6547
          %6572 = vst [vmem:[%s558 + $0x48] sm:$0xff] %v6548
          %6573 = vst [vmem:[%s558 + $0x50] sm:$0xff] %v6549
          %6574 = vst [vmem:[%s558 + $0x58] sm:$0xff] %v6550
        $region96: #{tpu_custom_call.1} parent=55 // pred_fallthru
          _
        %v6575 = vld [vmem:[#allocation2] sm:$0xff]
        %v6576 = vld [vmem:[#allocation2 + $0x8] sm:$0xff]
        %v6577 = vld [vmem:[#allocation2 + $0x10] sm:$0xff]
        %v6578 = vld [vmem:[#allocation2 + $0x18] sm:$0xff]
        %v6579 = vld [vmem:[#allocation2 + $0x20] sm:$0xff]
        %v6580 = vld [vmem:[#allocation2 + $0x28] sm:$0xff]
        %v6581 = vld [vmem:[#allocation2 + $0x30] sm:$0xff]
        %v6582 = vld [vmem:[#allocation2 + $0x38] sm:$0xff]
        %v6583 = vld [vmem:[#allocation2 + $0x40] sm:$0xff]
        %v6584 = vld [vmem:[#allocation2 + $0x48] sm:$0xff]
        %v6585 = vld [vmem:[#allocation2 + $0x50] sm:$0xff]
        %v6586 = vld [vmem:[#allocation2 + $0x58] sm:$0xff]
        %v6587 = vpack.c.bf16 %v6581, %v6575
        %v6588 = vpack.c.bf16 %v6582, %v6576
        %v6589 = vpack.c.bf16 %v6583, %v6577
        %v6590 = vpack.c.bf16 %v6584, %v6578
        %v6591 = vpack.c.bf16 %v6585, %v6579
        %v6592 = vpack.c.bf16 %v6586, %v6580
        %v6593 = vld [vmem:[%s498] sm:$0xff]
        %v6594 = vld [vmem:[%s498 + $0x8] sm:$0xff]
        %v6595 = vld [vmem:[%s498 + $0x10] sm:$0xff]
        %v6596 = vld [vmem:[%s498 + $0x18] sm:$0xff]
        %v6597 = vld [vmem:[%s498 + $0x20] sm:$0xff]
        %v6598 = vld [vmem:[%s498 + $0x28] sm:$0xff]
        %v6599 = vld [vmem:[%s498 + $0x30] sm:$0xff]
        %v6600 = vld [vmem:[%s498 + $0x38] sm:$0xff]
        %v6601 = vld [vmem:[%s498 + $0x40] sm:$0xff]
        %v6602 = vld [vmem:[%s498 + $0x48] sm:$0xff]
        %v6603 = vld [vmem:[%s498 + $0x50] sm:$0xff]
        %v6604 = vld [vmem:[%s498 + $0x58] sm:$0xff]
        %v6605 = vld [vmem:[%s498 + $0x60] sm:$0xff]
        %v6606 = vld [vmem:[%s498 + $0x68] sm:$0xff]
        %v6607 = vld [vmem:[%s498 + $0x70] sm:$0xff]
        %v6608 = vld [vmem:[%s498 + $0x78] sm:$0xff]
        %v6609 = vld [vmem:[%s498 + $0x80] sm:$0xff]
        %v6610 = vld [vmem:[%s498 + $0x88] sm:$0xff]
        %v6611 = vld [vmem:[%s498 + $0x90] sm:$0xff]
        %v6612 = vld [vmem:[%s498 + $0x98] sm:$0xff]
        %v6613 = vld [vmem:[%s498 + $0xa0] sm:$0xff]
        %v6614 = vld [vmem:[%s498 + $0xa8] sm:$0xff]
        %v6615 = vld [vmem:[%s498 + $0xb0] sm:$0xff]
        %v6616 = vld [vmem:[%s498 + $0xb8] sm:$0xff]
        %v6617 = vld [vmem:[%s498 + $0xc0] sm:$0xff]
        %v6618 = vld [vmem:[%s498 + $0xc8] sm:$0xff]
        %v6619 = vld [vmem:[%s498 + $0xd0] sm:$0xff]
        %v6620 = vld [vmem:[%s498 + $0xd8] sm:$0xff]
        %v6621 = vld [vmem:[%s498 + $0xe0] sm:$0xff]
        %v6622 = vld [vmem:[%s498 + $0xe8] sm:$0xff]
        %v6623 = vld [vmem:[%s498 + $0xf0] sm:$0xff]
        %v6624 = vld [vmem:[%s498 + $0xf8] sm:$0xff]
        %v6625 = vld [vmem:[%s498 + $0x100] sm:$0xff]
        %v6626 = vld [vmem:[%s498 + $0x108] sm:$0xff]
        %v6627 = vld [vmem:[%s498 + $0x110] sm:$0xff]
        %v6628 = vld [vmem:[%s498 + $0x118] sm:$0xff]
        %v6629 = vld [vmem:[%s498 + $0x120] sm:$0xff]
        %v6630 = vld [vmem:[%s498 + $0x128] sm:$0xff]
        %v6631 = vld [vmem:[%s498 + $0x130] sm:$0xff]
        %v6632 = vld [vmem:[%s498 + $0x138] sm:$0xff]
        %v6633 = vld [vmem:[%s498 + $0x140] sm:$0xff]
        %v6634 = vld [vmem:[%s498 + $0x148] sm:$0xff]
        %v6635 = vld [vmem:[%s498 + $0x150] sm:$0xff]
        %v6636 = vld [vmem:[%s498 + $0x158] sm:$0xff]
        %v6637 = vld [vmem:[%s498 + $0x160] sm:$0xff]
        %v6638 = vld [vmem:[%s498 + $0x168] sm:$0xff]
        %v6639 = vld [vmem:[%s498 + $0x170] sm:$0xff]
        %v6640 = vld [vmem:[%s498 + $0x178] sm:$0xff]
        %v6641 = vld [vmem:[%s498 + $0x180] sm:$0xff]
        %v6642 = vld [vmem:[%s498 + $0x188] sm:$0xff]
        %v6643 = vld [vmem:[%s498 + $0x190] sm:$0xff]
        %v6644 = vld [vmem:[%s498 + $0x198] sm:$0xff]
        %v6645 = vld [vmem:[%s498 + $0x1a0] sm:$0xff]
        %v6646 = vld [vmem:[%s498 + $0x1a8] sm:$0xff]
        %v6647 = vld [vmem:[%s498 + $0x1b0] sm:$0xff]
        %v6648 = vld [vmem:[%s498 + $0x1b8] sm:$0xff]
        %v6649 = vld [vmem:[%s498 + $0x1c0] sm:$0xff]
        %v6650 = vld [vmem:[%s498 + $0x1c8] sm:$0xff]
        %v6651 = vld [vmem:[%s498 + $0x1d0] sm:$0xff]
        %v6652 = vld [vmem:[%s498 + $0x1d8] sm:$0xff]
        %v6653 = vld [vmem:[%s498 + $0x1e0] sm:$0xff]
        %v6654 = vld [vmem:[%s498 + $0x1e8] sm:$0xff]
        %v6655 = vld [vmem:[%s498 + $0x1f0] sm:$0xff]
        %v6656 = vld [vmem:[%s498 + $0x1f8] sm:$0xff]
        %v6657 = vld [vmem:[%s498 + $0x200] sm:$0xff]
        %v6658 = vld [vmem:[%s498 + $0x208] sm:$0xff]
        %v6659 = vld [vmem:[%s498 + $0x210] sm:$0xff]
        %v6660 = vld [vmem:[%s498 + $0x218] sm:$0xff]
        %v6661 = vld [vmem:[%s498 + $0x220] sm:$0xff]
        %v6662 = vld [vmem:[%s498 + $0x228] sm:$0xff]
        %v6663 = vld [vmem:[%s498 + $0x230] sm:$0xff]
        %v6664 = vld [vmem:[%s498 + $0x238] sm:$0xff]
        %v6665 = vld [vmem:[%s498 + $0x240] sm:$0xff]
        %v6666 = vld [vmem:[%s498 + $0x248] sm:$0xff]
        %v6667 = vld [vmem:[%s498 + $0x250] sm:$0xff]
        %v6668 = vld [vmem:[%s498 + $0x258] sm:$0xff]
        %v6669 = vld [vmem:[%s498 + $0x260] sm:$0xff]
        %v6670 = vld [vmem:[%s498 + $0x268] sm:$0xff]
        %v6671 = vld [vmem:[%s498 + $0x270] sm:$0xff]
        %v6672 = vld [vmem:[%s498 + $0x278] sm:$0xff]
        %v6673 = vld [vmem:[%s498 + $0x280] sm:$0xff]
        %v6674 = vld [vmem:[%s498 + $0x288] sm:$0xff]
        %v6675 = vld [vmem:[%s498 + $0x290] sm:$0xff]
        %v6676 = vld [vmem:[%s498 + $0x298] sm:$0xff]
        %v6677 = vld [vmem:[%s498 + $0x2a0] sm:$0xff]
        %v6678 = vld [vmem:[%s498 + $0x2a8] sm:$0xff]
        %v6679 = vld [vmem:[%s498 + $0x2b0] sm:$0xff]
        %v6680 = vld [vmem:[%s498 + $0x2b8] sm:$0xff]
        %v6681 = vld [vmem:[%s498 + $0x2c0] sm:$0xff]
        %v6682 = vld [vmem:[%s498 + $0x2c8] sm:$0xff]
        %v6683 = vld [vmem:[%s498 + $0x2d0] sm:$0xff]
        %v6684 = vld [vmem:[%s498 + $0x2d8] sm:$0xff]
        %v6685 = vld [vmem:[%s498 + $0x2e0] sm:$0xff]
        %v6686 = vld [vmem:[%s498 + $0x2e8] sm:$0xff]
        %v6687 = vld [vmem:[%s498 + $0x2f0] sm:$0xff]
        %v6688 = vld [vmem:[%s498 + $0x2f8] sm:$0xff]
        %v6689 = vld [vmem:[%s498 + $0x300] sm:$0xff]
        %v6690 = vld [vmem:[%s498 + $0x308] sm:$0xff]
        %v6691 = vld [vmem:[%s498 + $0x310] sm:$0xff]
        %v6692 = vld [vmem:[%s498 + $0x318] sm:$0xff]
        %v6693 = vld [vmem:[%s498 + $0x320] sm:$0xff]
        %v6694 = vld [vmem:[%s498 + $0x328] sm:$0xff]
        %v6695 = vld [vmem:[%s498 + $0x330] sm:$0xff]
        %v6696 = vld [vmem:[%s498 + $0x338] sm:$0xff]
        %v6697 = vld [vmem:[%s498 + $0x340] sm:$0xff]
        %v6698 = vld [vmem:[%s498 + $0x348] sm:$0xff]
        %v6699 = vld [vmem:[%s498 + $0x350] sm:$0xff]
        %v6700 = vld [vmem:[%s498 + $0x358] sm:$0xff]
        %v6701 = vld [vmem:[%s498 + $0x360] sm:$0xff]
        %v6702 = vld [vmem:[%s498 + $0x368] sm:$0xff]
        %v6703 = vld [vmem:[%s498 + $0x370] sm:$0xff]
        %v6704 = vld [vmem:[%s498 + $0x378] sm:$0xff]
        %v6705 = vld [vmem:[%s498 + $0x380] sm:$0xff]
        %v6706 = vld [vmem:[%s498 + $0x388] sm:$0xff]
        %v6707 = vld [vmem:[%s498 + $0x390] sm:$0xff]
        %v6708 = vld [vmem:[%s498 + $0x398] sm:$0xff]
        %v6709 = vld [vmem:[%s498 + $0x3a0] sm:$0xff]
        %v6710 = vld [vmem:[%s498 + $0x3a8] sm:$0xff]
        %v6711 = vld [vmem:[%s498 + $0x3b0] sm:$0xff]
        %v6712 = vld [vmem:[%s498 + $0x3b8] sm:$0xff]
        %v6713 = vld [vmem:[%s498 + $0x3c0] sm:$0xff]
        %v6714 = vld [vmem:[%s498 + $0x3c8] sm:$0xff]
        %v6715 = vld [vmem:[%s498 + $0x3d0] sm:$0xff]
        %v6716 = vld [vmem:[%s498 + $0x3d8] sm:$0xff]
        %v6717 = vld [vmem:[%s498 + $0x3e0] sm:$0xff]
        %v6718 = vld [vmem:[%s498 + $0x3e8] sm:$0xff]
        %v6719 = vld [vmem:[%s498 + $0x3f0] sm:$0xff]
        %v6720 = vld [vmem:[%s498 + $0x3f8] sm:$0xff]
        %v6721 = vld [vmem:[%s498 + $0x400] sm:$0xff]
        %v6722 = vld [vmem:[%s498 + $0x408] sm:$0xff]
        %v6723 = vld [vmem:[%s498 + $0x410] sm:$0xff]
        %v6724 = vld [vmem:[%s498 + $0x418] sm:$0xff]
        %v6725 = vld [vmem:[%s498 + $0x420] sm:$0xff]
        %v6726 = vld [vmem:[%s498 + $0x428] sm:$0xff]
        %v6727 = vld [vmem:[%s498 + $0x430] sm:$0xff]
        %v6728 = vld [vmem:[%s498 + $0x438] sm:$0xff]
        %v6729 = vld [vmem:[%s498 + $0x440] sm:$0xff]
        %v6730 = vld [vmem:[%s498 + $0x448] sm:$0xff]
        %v6731 = vld [vmem:[%s498 + $0x450] sm:$0xff]
        %v6732 = vld [vmem:[%s498 + $0x458] sm:$0xff]
        %v6733 = vld [vmem:[%s498 + $0x460] sm:$0xff]
        %v6734 = vld [vmem:[%s498 + $0x468] sm:$0xff]
        %v6735 = vld [vmem:[%s498 + $0x470] sm:$0xff]
        %v6736 = vld [vmem:[%s498 + $0x478] sm:$0xff]
        %v6737 = vld [vmem:[%s498 + $0x480] sm:$0xff]
        %v6738 = vld [vmem:[%s498 + $0x488] sm:$0xff]
        %v6739 = vld [vmem:[%s498 + $0x490] sm:$0xff]
        %v6740 = vld [vmem:[%s498 + $0x498] sm:$0xff]
        %v6741 = vld [vmem:[%s498 + $0x4a0] sm:$0xff]
        %v6742 = vld [vmem:[%s498 + $0x4a8] sm:$0xff]
        %v6743 = vld [vmem:[%s498 + $0x4b0] sm:$0xff]
        %v6744 = vld [vmem:[%s498 + $0x4b8] sm:$0xff]
        %v6745 = vld [vmem:[%s498 + $0x4c0] sm:$0xff]
        %v6746 = vld [vmem:[%s498 + $0x4c8] sm:$0xff]
        %v6747 = vld [vmem:[%s498 + $0x4d0] sm:$0xff]
        %v6748 = vld [vmem:[%s498 + $0x4d8] sm:$0xff]
        %v6749 = vld [vmem:[%s498 + $0x4e0] sm:$0xff]
        %v6750 = vld [vmem:[%s498 + $0x4e8] sm:$0xff]
        %v6751 = vld [vmem:[%s498 + $0x4f0] sm:$0xff]
        %v6752 = vld [vmem:[%s498 + $0x4f8] sm:$0xff]
        %v6753 = vld [vmem:[%s498 + $0x500] sm:$0xff]
        %v6754 = vld [vmem:[%s498 + $0x508] sm:$0xff]
        %v6755 = vld [vmem:[%s498 + $0x510] sm:$0xff]
        %v6756 = vld [vmem:[%s498 + $0x518] sm:$0xff]
        %v6757 = vld [vmem:[%s498 + $0x520] sm:$0xff]
        %v6758 = vld [vmem:[%s498 + $0x528] sm:$0xff]
        %v6759 = vld [vmem:[%s498 + $0x530] sm:$0xff]
        %v6760 = vld [vmem:[%s498 + $0x538] sm:$0xff]
        %v6761 = vld [vmem:[%s498 + $0x540] sm:$0xff]
        %v6762 = vld [vmem:[%s498 + $0x548] sm:$0xff]
        %v6763 = vld [vmem:[%s498 + $0x550] sm:$0xff]
        %v6764 = vld [vmem:[%s498 + $0x558] sm:$0xff]
        %v6765 = vld [vmem:[%s498 + $0x560] sm:$0xff]
        %v6766 = vld [vmem:[%s498 + $0x568] sm:$0xff]
        %v6767 = vld [vmem:[%s498 + $0x570] sm:$0xff]
        %v6768 = vld [vmem:[%s498 + $0x578] sm:$0xff]
        %v6769 = vld [vmem:[%s498 + $0x580] sm:$0xff]
        %v6770 = vld [vmem:[%s498 + $0x588] sm:$0xff]
        %v6771 = vld [vmem:[%s498 + $0x590] sm:$0xff]
        %v6772 = vld [vmem:[%s498 + $0x598] sm:$0xff]
        %v6773 = vld [vmem:[%s498 + $0x5a0] sm:$0xff]
        %v6774 = vld [vmem:[%s498 + $0x5a8] sm:$0xff]
        %v6775 = vld [vmem:[%s498 + $0x5b0] sm:$0xff]
        %v6776 = vld [vmem:[%s498 + $0x5b8] sm:$0xff]
        %v6777 = vld [vmem:[%s498 + $0x5c0] sm:$0xff]
        %v6778 = vld [vmem:[%s498 + $0x5c8] sm:$0xff]
        %v6779 = vld [vmem:[%s498 + $0x5d0] sm:$0xff]
        %v6780 = vld [vmem:[%s498 + $0x5d8] sm:$0xff]
        %v6781 = vld [vmem:[%s498 + $0x5e0] sm:$0xff]
        %v6782 = vld [vmem:[%s498 + $0x5e8] sm:$0xff]
        %v6783 = vld [vmem:[%s498 + $0x5f0] sm:$0xff]
        %v6784 = vld [vmem:[%s498 + $0x5f8] sm:$0xff]
        %v6785 = vld [vmem:[%s507] sm:$0xf]
        %v6787 = vlaneseq
        %v6788 = vshrl.u32 %v6787, 7
        %v6789 = vsub.s32 0, %v6788
        %v6790 = vrot.slane %v6785, %v6789
        %v6791 = vlaneseq
        %v6792 = vshrl.u32 %v6791, 7
        %v6793 = vsub.s32 1, %v6792
        %v6794 = vrot.slane %v6785, %v6793
        %v6795 = vlaneseq
        %v6796 = vshrl.u32 %v6795, 7
        %v6797 = vsub.s32 2, %v6796
        %v6798 = vrot.slane %v6785, %v6797
        %v6799 = vlaneseq
        %v6800 = vshrl.u32 %v6799, 7
        %v6801 = vsub.s32 3, %v6800
        %v6802 = vrot.slane %v6785, %v6801
        %v6999 = vunpack.c.l.b16 %v6593
        %v7000 = vunpack.c.h.b16 %v6593
        %v7001 = vunpack.c.l.b16 %v6594
        %v7002 = vunpack.c.h.b16 %v6594
        %v7003 = vunpack.c.l.b16 %v6595
        %v7004 = vunpack.c.h.b16 %v6595
        %v7005 = vunpack.c.l.b16 %v6596
        %v7006 = vunpack.c.h.b16 %v6596
        %v7007 = vunpack.c.l.b16 %v6597
        %v7008 = vunpack.c.h.b16 %v6597
        %v7009 = vunpack.c.l.b16 %v6598
        %v7010 = vunpack.c.h.b16 %v6598
        %v7011 = vunpack.c.l.b16 %v6599
        %v7012 = vunpack.c.h.b16 %v6599
        %v7013 = vunpack.c.l.b16 %v6600
        %v7014 = vunpack.c.h.b16 %v6600
        %v7015 = vunpack.c.l.b16 %v6601
        %v7016 = vunpack.c.h.b16 %v6601
        %v7017 = vunpack.c.l.b16 %v6602
        %v7018 = vunpack.c.h.b16 %v6602
        %v7019 = vunpack.c.l.b16 %v6603
        %v7020 = vunpack.c.h.b16 %v6603
        %v7021 = vunpack.c.l.b16 %v6604
        %v7022 = vunpack.c.h.b16 %v6604
        %v7023 = vunpack.c.l.b16 %v6605
        %v7024 = vunpack.c.h.b16 %v6605
        %v7025 = vunpack.c.l.b16 %v6606
        %v7026 = vunpack.c.h.b16 %v6606
        %v7027 = vunpack.c.l.b16 %v6607
        %v7028 = vunpack.c.h.b16 %v6607
        %v7029 = vunpack.c.l.b16 %v6608
        %v7030 = vunpack.c.h.b16 %v6608
        %v7031 = vunpack.c.l.b16 %v6609
        %v7032 = vunpack.c.h.b16 %v6609
        %v7033 = vunpack.c.l.b16 %v6610
        %v7034 = vunpack.c.h.b16 %v6610
        %v7035 = vunpack.c.l.b16 %v6611
        %v7036 = vunpack.c.h.b16 %v6611
        %v7037 = vunpack.c.l.b16 %v6612
        %v7038 = vunpack.c.h.b16 %v6612
        %v7039 = vunpack.c.l.b16 %v6613
        %v7040 = vunpack.c.h.b16 %v6613
        %v7041 = vunpack.c.l.b16 %v6614
        %v7042 = vunpack.c.h.b16 %v6614
        %v7043 = vunpack.c.l.b16 %v6615
        %v7044 = vunpack.c.h.b16 %v6615
        %v7045 = vunpack.c.l.b16 %v6616
        %v7046 = vunpack.c.h.b16 %v6616
        %v7047 = vunpack.c.l.b16 %v6617
        %v7048 = vunpack.c.h.b16 %v6617
        %v7049 = vunpack.c.l.b16 %v6618
        %v7050 = vunpack.c.h.b16 %v6618
        %v7051 = vunpack.c.l.b16 %v6619
        %v7052 = vunpack.c.h.b16 %v6619
        %v7053 = vunpack.c.l.b16 %v6620
        %v7054 = vunpack.c.h.b16 %v6620
        %v7055 = vunpack.c.l.b16 %v6621
        %v7056 = vunpack.c.h.b16 %v6621
        %v7057 = vunpack.c.l.b16 %v6622
        %v7058 = vunpack.c.h.b16 %v6622
        %v7059 = vunpack.c.l.b16 %v6623
        %v7060 = vunpack.c.h.b16 %v6623
        %v7061 = vunpack.c.l.b16 %v6624
        %v7062 = vunpack.c.h.b16 %v6624
        %v7063 = vunpack.c.l.b16 %v6625
        %v7064 = vunpack.c.h.b16 %v6625
        %v7065 = vunpack.c.l.b16 %v6626
        %v7066 = vunpack.c.h.b16 %v6626
        %v7067 = vunpack.c.l.b16 %v6627
        %v7068 = vunpack.c.h.b16 %v6627
        %v7069 = vunpack.c.l.b16 %v6628
        %v7070 = vunpack.c.h.b16 %v6628
        %v7071 = vunpack.c.l.b16 %v6629
        %v7072 = vunpack.c.h.b16 %v6629
        %v7073 = vunpack.c.l.b16 %v6630
        %v7074 = vunpack.c.h.b16 %v6630
        %v7075 = vunpack.c.l.b16 %v6631
        %v7076 = vunpack.c.h.b16 %v6631
        %v7077 = vunpack.c.l.b16 %v6632
        %v7078 = vunpack.c.h.b16 %v6632
        %v7079 = vunpack.c.l.b16 %v6633
        %v7080 = vunpack.c.h.b16 %v6633
        %v7081 = vunpack.c.l.b16 %v6634
        %v7082 = vunpack.c.h.b16 %v6634
        %v7083 = vunpack.c.l.b16 %v6635
        %v7084 = vunpack.c.h.b16 %v6635
        %v7085 = vunpack.c.l.b16 %v6636
        %v7086 = vunpack.c.h.b16 %v6636
        %v7087 = vunpack.c.l.b16 %v6637
        %v7088 = vunpack.c.h.b16 %v6637
        %v7089 = vunpack.c.l.b16 %v6638
        %v7090 = vunpack.c.h.b16 %v6638
        %v7091 = vunpack.c.l.b16 %v6639
        %v7092 = vunpack.c.h.b16 %v6639
        %v7093 = vunpack.c.l.b16 %v6640
        %v7094 = vunpack.c.h.b16 %v6640
        %v7095 = vunpack.c.l.b16 %v6641
        %v7096 = vunpack.c.h.b16 %v6641
        %v7097 = vunpack.c.l.b16 %v6642
        %v7098 = vunpack.c.h.b16 %v6642
        %v7099 = vunpack.c.l.b16 %v6643
        %v7100 = vunpack.c.h.b16 %v6643
        %v7101 = vunpack.c.l.b16 %v6644
        %v7102 = vunpack.c.h.b16 %v6644
        %v7103 = vunpack.c.l.b16 %v6645
        %v7104 = vunpack.c.h.b16 %v6645
        %v7105 = vunpack.c.l.b16 %v6646
        %v7106 = vunpack.c.h.b16 %v6646
        %v7107 = vunpack.c.l.b16 %v6647
        %v7108 = vunpack.c.h.b16 %v6647
        %v7109 = vunpack.c.l.b16 %v6648
        %v7110 = vunpack.c.h.b16 %v6648
        %v7111 = vunpack.c.l.b16 %v6649
        %v7112 = vunpack.c.h.b16 %v6649
        %v7113 = vunpack.c.l.b16 %v6650
        %v7114 = vunpack.c.h.b16 %v6650
        %v7115 = vunpack.c.l.b16 %v6651
        %v7116 = vunpack.c.h.b16 %v6651
        %v7117 = vunpack.c.l.b16 %v6652
        %v7118 = vunpack.c.h.b16 %v6652
        %v7119 = vunpack.c.l.b16 %v6653
        %v7120 = vunpack.c.h.b16 %v6653
        %v7121 = vunpack.c.l.b16 %v6654
        %v7122 = vunpack.c.h.b16 %v6654
        %v7123 = vunpack.c.l.b16 %v6655
        %v7124 = vunpack.c.h.b16 %v6655
        %v7125 = vunpack.c.l.b16 %v6656
        %v7126 = vunpack.c.h.b16 %v6656
        %v7127 = vunpack.c.l.b16 %v6657
        %v7128 = vunpack.c.h.b16 %v6657
        %v7129 = vunpack.c.l.b16 %v6658
        %v7130 = vunpack.c.h.b16 %v6658
        %v7131 = vunpack.c.l.b16 %v6659
        %v7132 = vunpack.c.h.b16 %v6659
        %v7133 = vunpack.c.l.b16 %v6660
        %v7134 = vunpack.c.h.b16 %v6660
        %v7135 = vunpack.c.l.b16 %v6661
        %v7136 = vunpack.c.h.b16 %v6661
        %v7137 = vunpack.c.l.b16 %v6662
        %v7138 = vunpack.c.h.b16 %v6662
        %v7139 = vunpack.c.l.b16 %v6663
        %v7140 = vunpack.c.h.b16 %v6663
        %v7141 = vunpack.c.l.b16 %v6664
        %v7142 = vunpack.c.h.b16 %v6664
        %v7143 = vunpack.c.l.b16 %v6665
        %v7144 = vunpack.c.h.b16 %v6665
        %v7145 = vunpack.c.l.b16 %v6666
        %v7146 = vunpack.c.h.b16 %v6666
        %v7147 = vunpack.c.l.b16 %v6667
        %v7148 = vunpack.c.h.b16 %v6667
        %v7149 = vunpack.c.l.b16 %v6668
        %v7150 = vunpack.c.h.b16 %v6668
        %v7151 = vunpack.c.l.b16 %v6669
        %v7152 = vunpack.c.h.b16 %v6669
        %v7153 = vunpack.c.l.b16 %v6670
        %v7154 = vunpack.c.h.b16 %v6670
        %v7155 = vunpack.c.l.b16 %v6671
        %v7156 = vunpack.c.h.b16 %v6671
        %v7157 = vunpack.c.l.b16 %v6672
        %v7158 = vunpack.c.h.b16 %v6672
        %v7159 = vunpack.c.l.b16 %v6673
        %v7160 = vunpack.c.h.b16 %v6673
        %v7161 = vunpack.c.l.b16 %v6674
        %v7162 = vunpack.c.h.b16 %v6674
        %v7163 = vunpack.c.l.b16 %v6675
        %v7164 = vunpack.c.h.b16 %v6675
        %v7165 = vunpack.c.l.b16 %v6676
        %v7166 = vunpack.c.h.b16 %v6676
        %v7167 = vunpack.c.l.b16 %v6677
        %v7168 = vunpack.c.h.b16 %v6677
        %v7169 = vunpack.c.l.b16 %v6678
        %v7170 = vunpack.c.h.b16 %v6678
        %v7171 = vunpack.c.l.b16 %v6679
        %v7172 = vunpack.c.h.b16 %v6679
        %v7173 = vunpack.c.l.b16 %v6680
        %v7174 = vunpack.c.h.b16 %v6680
        %v7175 = vunpack.c.l.b16 %v6681
        %v7176 = vunpack.c.h.b16 %v6681
        %v7177 = vunpack.c.l.b16 %v6682
        %v7178 = vunpack.c.h.b16 %v6682
        %v7179 = vunpack.c.l.b16 %v6683
        %v7180 = vunpack.c.h.b16 %v6683
        %v7181 = vunpack.c.l.b16 %v6684
        %v7182 = vunpack.c.h.b16 %v6684
        %v7183 = vunpack.c.l.b16 %v6685
        %v7184 = vunpack.c.h.b16 %v6685
        %v7185 = vunpack.c.l.b16 %v6686
        %v7186 = vunpack.c.h.b16 %v6686
        %v7187 = vunpack.c.l.b16 %v6687
        %v7188 = vunpack.c.h.b16 %v6687
        %v7189 = vunpack.c.l.b16 %v6688
        %v7190 = vunpack.c.h.b16 %v6688
        %v7191 = vunpack.c.l.b16 %v6689
        %v7192 = vunpack.c.h.b16 %v6689
        %v7193 = vunpack.c.l.b16 %v6690
        %v7194 = vunpack.c.h.b16 %v6690
        %v7195 = vunpack.c.l.b16 %v6691
        %v7196 = vunpack.c.h.b16 %v6691
        %v7197 = vunpack.c.l.b16 %v6692
        %v7198 = vunpack.c.h.b16 %v6692
        %v7199 = vunpack.c.l.b16 %v6693
        %v7200 = vunpack.c.h.b16 %v6693
        %v7201 = vunpack.c.l.b16 %v6694
        %v7202 = vunpack.c.h.b16 %v6694
        %v7203 = vunpack.c.l.b16 %v6695
        %v7204 = vunpack.c.h.b16 %v6695
        %v7205 = vunpack.c.l.b16 %v6696
        %v7206 = vunpack.c.h.b16 %v6696
        %v7207 = vunpack.c.l.b16 %v6697
        %v7208 = vunpack.c.h.b16 %v6697
        %v7209 = vunpack.c.l.b16 %v6698
        %v7210 = vunpack.c.h.b16 %v6698
        %v7211 = vunpack.c.l.b16 %v6699
        %v7212 = vunpack.c.h.b16 %v6699
        %v7213 = vunpack.c.l.b16 %v6700
        %v7214 = vunpack.c.h.b16 %v6700
        %v7215 = vunpack.c.l.b16 %v6701
        %v7216 = vunpack.c.h.b16 %v6701
        %v7217 = vunpack.c.l.b16 %v6702
        %v7218 = vunpack.c.h.b16 %v6702
        %v7219 = vunpack.c.l.b16 %v6703
        %v7220 = vunpack.c.h.b16 %v6703
        %v7221 = vunpack.c.l.b16 %v6704
        %v7222 = vunpack.c.h.b16 %v6704
        %v7223 = vunpack.c.l.b16 %v6705
        %v7224 = vunpack.c.h.b16 %v6705
        %v7225 = vunpack.c.l.b16 %v6706
        %v7226 = vunpack.c.h.b16 %v6706
        %v7227 = vunpack.c.l.b16 %v6707
        %v7228 = vunpack.c.h.b16 %v6707
        %v7229 = vunpack.c.l.b16 %v6708
        %v7230 = vunpack.c.h.b16 %v6708
        %v7231 = vunpack.c.l.b16 %v6709
        %v7232 = vunpack.c.h.b16 %v6709
        %v7233 = vunpack.c.l.b16 %v6710
        %v7234 = vunpack.c.h.b16 %v6710
        %v7235 = vunpack.c.l.b16 %v6711
        %v7236 = vunpack.c.h.b16 %v6711
        %v7237 = vunpack.c.l.b16 %v6712
        %v7238 = vunpack.c.h.b16 %v6712
        %v7239 = vunpack.c.l.b16 %v6713
        %v7240 = vunpack.c.h.b16 %v6713
        %v7241 = vunpack.c.l.b16 %v6714
        %v7242 = vunpack.c.h.b16 %v6714
        %v7243 = vunpack.c.l.b16 %v6715
        %v7244 = vunpack.c.h.b16 %v6715
        %v7245 = vunpack.c.l.b16 %v6716
        %v7246 = vunpack.c.h.b16 %v6716
        %v7247 = vunpack.c.l.b16 %v6717
        %v7248 = vunpack.c.h.b16 %v6717
        %v7249 = vunpack.c.l.b16 %v6718
        %v7250 = vunpack.c.h.b16 %v6718
        %v7251 = vunpack.c.l.b16 %v6719
        %v7252 = vunpack.c.h.b16 %v6719
        %v7253 = vunpack.c.l.b16 %v6720
        %v7254 = vunpack.c.h.b16 %v6720
        %v7255 = vunpack.c.l.b16 %v6721
        %v7256 = vunpack.c.h.b16 %v6721
        %v7257 = vunpack.c.l.b16 %v6722
        %v7258 = vunpack.c.h.b16 %v6722
        %v7259 = vunpack.c.l.b16 %v6723
        %v7260 = vunpack.c.h.b16 %v6723
        %v7261 = vunpack.c.l.b16 %v6724
        %v7262 = vunpack.c.h.b16 %v6724
        %v7263 = vunpack.c.l.b16 %v6725
        %v7264 = vunpack.c.h.b16 %v6725
        %v7265 = vunpack.c.l.b16 %v6726
        %v7266 = vunpack.c.h.b16 %v6726
        %v7267 = vunpack.c.l.b16 %v6727
        %v7268 = vunpack.c.h.b16 %v6727
        %v7269 = vunpack.c.l.b16 %v6728
        %v7270 = vunpack.c.h.b16 %v6728
        %v7271 = vunpack.c.l.b16 %v6729
        %v7272 = vunpack.c.h.b16 %v6729
        %v7273 = vunpack.c.l.b16 %v6730
        %v7274 = vunpack.c.h.b16 %v6730
        %v7275 = vunpack.c.l.b16 %v6731
        %v7276 = vunpack.c.h.b16 %v6731
        %v7277 = vunpack.c.l.b16 %v6732
        %v7278 = vunpack.c.h.b16 %v6732
        %v7279 = vunpack.c.l.b16 %v6733
        %v7280 = vunpack.c.h.b16 %v6733
        %v7281 = vunpack.c.l.b16 %v6734
        %v7282 = vunpack.c.h.b16 %v6734
        %v7283 = vunpack.c.l.b16 %v6735
        %v7284 = vunpack.c.h.b16 %v6735
        %v7285 = vunpack.c.l.b16 %v6736
        %v7286 = vunpack.c.h.b16 %v6736
        %v7287 = vunpack.c.l.b16 %v6737
        %v7288 = vunpack.c.h.b16 %v6737
        %v7289 = vunpack.c.l.b16 %v6738
        %v7290 = vunpack.c.h.b16 %v6738
        %v7291 = vunpack.c.l.b16 %v6739
        %v7292 = vunpack.c.h.b16 %v6739
        %v7293 = vunpack.c.l.b16 %v6740
        %v7294 = vunpack.c.h.b16 %v6740
        %v7295 = vunpack.c.l.b16 %v6741
        %v7296 = vunpack.c.h.b16 %v6741
        %v7297 = vunpack.c.l.b16 %v6742
        %v7298 = vunpack.c.h.b16 %v6742
        %v7299 = vunpack.c.l.b16 %v6743
        %v7300 = vunpack.c.h.b16 %v6743
        %v7301 = vunpack.c.l.b16 %v6744
        %v7302 = vunpack.c.h.b16 %v6744
        %v7303 = vunpack.c.l.b16 %v6745
        %v7304 = vunpack.c.h.b16 %v6745
        %v7305 = vunpack.c.l.b16 %v6746
        %v7306 = vunpack.c.h.b16 %v6746
        %v7307 = vunpack.c.l.b16 %v6747
        %v7308 = vunpack.c.h.b16 %v6747
        %v7309 = vunpack.c.l.b16 %v6748
        %v7310 = vunpack.c.h.b16 %v6748
        %v7311 = vunpack.c.l.b16 %v6749
        %v7312 = vunpack.c.h.b16 %v6749
        %v7313 = vunpack.c.l.b16 %v6750
        %v7314 = vunpack.c.h.b16 %v6750
        %v7315 = vunpack.c.l.b16 %v6751
        %v7316 = vunpack.c.h.b16 %v6751
        %v7317 = vunpack.c.l.b16 %v6752
        %v7318 = vunpack.c.h.b16 %v6752
        %v7319 = vunpack.c.l.b16 %v6753
        %v7320 = vunpack.c.h.b16 %v6753
        %v7321 = vunpack.c.l.b16 %v6754
        %v7322 = vunpack.c.h.b16 %v6754
        %v7323 = vunpack.c.l.b16 %v6755
        %v7324 = vunpack.c.h.b16 %v6755
        %v7325 = vunpack.c.l.b16 %v6756
        %v7326 = vunpack.c.h.b16 %v6756
        %v7327 = vunpack.c.l.b16 %v6757
        %v7328 = vunpack.c.h.b16 %v6757
        %v7329 = vunpack.c.l.b16 %v6758
        %v7330 = vunpack.c.h.b16 %v6758
        %v7331 = vunpack.c.l.b16 %v6759
        %v7332 = vunpack.c.h.b16 %v6759
        %v7333 = vunpack.c.l.b16 %v6760
        %v7334 = vunpack.c.h.b16 %v6760
        %v7335 = vunpack.c.l.b16 %v6761
        %v7336 = vunpack.c.h.b16 %v6761
        %v7337 = vunpack.c.l.b16 %v6762
        %v7338 = vunpack.c.h.b16 %v6762
        %v7339 = vunpack.c.l.b16 %v6763
        %v7340 = vunpack.c.h.b16 %v6763
        %v7341 = vunpack.c.l.b16 %v6764
        %v7342 = vunpack.c.h.b16 %v6764
        %v7343 = vunpack.c.l.b16 %v6765
        %v7344 = vunpack.c.h.b16 %v6765
        %v7345 = vunpack.c.l.b16 %v6766
        %v7346 = vunpack.c.h.b16 %v6766
        %v7347 = vunpack.c.l.b16 %v6767
        %v7348 = vunpack.c.h.b16 %v6767
        %v7349 = vunpack.c.l.b16 %v6768
        %v7350 = vunpack.c.h.b16 %v6768
        %v7351 = vunpack.c.l.b16 %v6769
        %v7352 = vunpack.c.h.b16 %v6769
        %v7353 = vunpack.c.l.b16 %v6770
        %v7354 = vunpack.c.h.b16 %v6770
        %v7355 = vunpack.c.l.b16 %v6771
        %v7356 = vunpack.c.h.b16 %v6771
        %v7357 = vunpack.c.l.b16 %v6772
        %v7358 = vunpack.c.h.b16 %v6772
        %v7359 = vunpack.c.l.b16 %v6773
        %v7360 = vunpack.c.h.b16 %v6773
        %v7361 = vunpack.c.l.b16 %v6774
        %v7362 = vunpack.c.h.b16 %v6774
        %v7363 = vunpack.c.l.b16 %v6775
        %v7364 = vunpack.c.h.b16 %v6775
        %v7365 = vunpack.c.l.b16 %v6776
        %v7366 = vunpack.c.h.b16 %v6776
        %v7367 = vunpack.c.l.b16 %v6777
        %v7368 = vunpack.c.h.b16 %v6777
        %v7369 = vunpack.c.l.b16 %v6778
        %v7370 = vunpack.c.h.b16 %v6778
        %v7371 = vunpack.c.l.b16 %v6779
        %v7372 = vunpack.c.h.b16 %v6779
        %v7373 = vunpack.c.l.b16 %v6780
        %v7374 = vunpack.c.h.b16 %v6780
        %v7375 = vunpack.c.l.b16 %v6781
        %v7376 = vunpack.c.h.b16 %v6781
        %v7377 = vunpack.c.l.b16 %v6782
        %v7378 = vunpack.c.h.b16 %v6782
        %v7379 = vunpack.c.l.b16 %v6783
        %v7380 = vunpack.c.h.b16 %v6783
        %v7381 = vunpack.c.l.b16 %v6784
        %v7382 = vunpack.c.h.b16 %v6784
        %v7383 = vpack.c.b16 %v7003, %v6999
        %v7384 = vpack.c.b16 %v7004, %v7000
        %v7385 = vpack.c.b16 %v7005, %v7001
        %v7386 = vpack.c.b16 %v7006, %v7002
        %v7387 = vpack.c.b16 %v7011, %v7007
        %v7388 = vpack.c.b16 %v7012, %v7008
        %v7389 = vpack.c.b16 %v7013, %v7009
        %v7390 = vpack.c.b16 %v7014, %v7010
        %v7391 = vpack.c.b16 %v7019, %v7015
        %v7392 = vpack.c.b16 %v7020, %v7016
        %v7393 = vpack.c.b16 %v7021, %v7017
        %v7394 = vpack.c.b16 %v7022, %v7018
        %v7395 = vpack.c.b16 %v7027, %v7023
        %v7396 = vpack.c.b16 %v7028, %v7024
        %v7397 = vpack.c.b16 %v7029, %v7025
        %v7398 = vpack.c.b16 %v7030, %v7026
        %v7399 = vpack.c.b16 %v7035, %v7031
        %v7400 = vpack.c.b16 %v7036, %v7032
        %v7401 = vpack.c.b16 %v7037, %v7033
        %v7402 = vpack.c.b16 %v7038, %v7034
        %v7403 = vpack.c.b16 %v7043, %v7039
        %v7404 = vpack.c.b16 %v7044, %v7040
        %v7405 = vpack.c.b16 %v7045, %v7041
        %v7406 = vpack.c.b16 %v7046, %v7042
        %v7407 = vpack.c.b16 %v7051, %v7047
        %v7408 = vpack.c.b16 %v7052, %v7048
        %v7409 = vpack.c.b16 %v7053, %v7049
        %v7410 = vpack.c.b16 %v7054, %v7050
        %v7411 = vpack.c.b16 %v7059, %v7055
        %v7412 = vpack.c.b16 %v7060, %v7056
        %v7413 = vpack.c.b16 %v7061, %v7057
        %v7414 = vpack.c.b16 %v7062, %v7058
        %v7415 = vpack.c.b16 %v7067, %v7063
        %v7416 = vpack.c.b16 %v7068, %v7064
        %v7417 = vpack.c.b16 %v7069, %v7065
        %v7418 = vpack.c.b16 %v7070, %v7066
        %v7419 = vpack.c.b16 %v7075, %v7071
        %v7420 = vpack.c.b16 %v7076, %v7072
        %v7421 = vpack.c.b16 %v7077, %v7073
        %v7422 = vpack.c.b16 %v7078, %v7074
        %v7423 = vpack.c.b16 %v7083, %v7079
        %v7424 = vpack.c.b16 %v7084, %v7080
        %v7425 = vpack.c.b16 %v7085, %v7081
        %v7426 = vpack.c.b16 %v7086, %v7082
        %v7427 = vpack.c.b16 %v7091, %v7087
        %v7428 = vpack.c.b16 %v7092, %v7088
        %v7429 = vpack.c.b16 %v7093, %v7089
        %v7430 = vpack.c.b16 %v7094, %v7090
        %v7431 = vpack.c.b16 %v7099, %v7095
        %v7432 = vpack.c.b16 %v7100, %v7096
        %v7433 = vpack.c.b16 %v7101, %v7097
        %v7434 = vpack.c.b16 %v7102, %v7098
        %v7435 = vpack.c.b16 %v7107, %v7103
        %v7436 = vpack.c.b16 %v7108, %v7104
        %v7437 = vpack.c.b16 %v7109, %v7105
        %v7438 = vpack.c.b16 %v7110, %v7106
        %v7439 = vpack.c.b16 %v7115, %v7111
        %v7440 = vpack.c.b16 %v7116, %v7112
        %v7441 = vpack.c.b16 %v7117, %v7113
        %v7442 = vpack.c.b16 %v7118, %v7114
        %v7443 = vpack.c.b16 %v7123, %v7119
        %v7444 = vpack.c.b16 %v7124, %v7120
        %v7445 = vpack.c.b16 %v7125, %v7121
        %v7446 = vpack.c.b16 %v7126, %v7122
        %v7447 = vpack.c.b16 %v7131, %v7127
        %v7448 = vpack.c.b16 %v7132, %v7128
        %v7449 = vpack.c.b16 %v7133, %v7129
        %v7450 = vpack.c.b16 %v7134, %v7130
        %v7451 = vpack.c.b16 %v7139, %v7135
        %v7452 = vpack.c.b16 %v7140, %v7136
        %v7453 = vpack.c.b16 %v7141, %v7137
        %v7454 = vpack.c.b16 %v7142, %v7138
        %v7455 = vpack.c.b16 %v7147, %v7143
        %v7456 = vpack.c.b16 %v7148, %v7144
        %v7457 = vpack.c.b16 %v7149, %v7145
        %v7458 = vpack.c.b16 %v7150, %v7146
        %v7459 = vpack.c.b16 %v7155, %v7151
        %v7460 = vpack.c.b16 %v7156, %v7152
        %v7461 = vpack.c.b16 %v7157, %v7153
        %v7462 = vpack.c.b16 %v7158, %v7154
        %v7463 = vpack.c.b16 %v7163, %v7159
        %v7464 = vpack.c.b16 %v7164, %v7160
        %v7465 = vpack.c.b16 %v7165, %v7161
        %v7466 = vpack.c.b16 %v7166, %v7162
        %v7467 = vpack.c.b16 %v7171, %v7167
        %v7468 = vpack.c.b16 %v7172, %v7168
        %v7469 = vpack.c.b16 %v7173, %v7169
        %v7470 = vpack.c.b16 %v7174, %v7170
        %v7471 = vpack.c.b16 %v7179, %v7175
        %v7472 = vpack.c.b16 %v7180, %v7176
        %v7473 = vpack.c.b16 %v7181, %v7177
        %v7474 = vpack.c.b16 %v7182, %v7178
        %v7475 = vpack.c.b16 %v7187, %v7183
        %v7476 = vpack.c.b16 %v7188, %v7184
        %v7477 = vpack.c.b16 %v7189, %v7185
        %v7478 = vpack.c.b16 %v7190, %v7186
        %v7479 = vpack.c.b16 %v7195, %v7191
        %v7480 = vpack.c.b16 %v7196, %v7192
        %v7481 = vpack.c.b16 %v7197, %v7193
        %v7482 = vpack.c.b16 %v7198, %v7194
        %v7483 = vpack.c.b16 %v7203, %v7199
        %v7484 = vpack.c.b16 %v7204, %v7200
        %v7485 = vpack.c.b16 %v7205, %v7201
        %v7486 = vpack.c.b16 %v7206, %v7202
        %v7487 = vpack.c.b16 %v7211, %v7207
        %v7488 = vpack.c.b16 %v7212, %v7208
        %v7489 = vpack.c.b16 %v7213, %v7209
        %v7490 = vpack.c.b16 %v7214, %v7210
        %v7491 = vpack.c.b16 %v7219, %v7215
        %v7492 = vpack.c.b16 %v7220, %v7216
        %v7493 = vpack.c.b16 %v7221, %v7217
        %v7494 = vpack.c.b16 %v7222, %v7218
        %v7495 = vpack.c.b16 %v7227, %v7223
        %v7496 = vpack.c.b16 %v7228, %v7224
        %v7497 = vpack.c.b16 %v7229, %v7225
        %v7498 = vpack.c.b16 %v7230, %v7226
        %v7499 = vpack.c.b16 %v7235, %v7231
        %v7500 = vpack.c.b16 %v7236, %v7232
        %v7501 = vpack.c.b16 %v7237, %v7233
        %v7502 = vpack.c.b16 %v7238, %v7234
        %v7503 = vpack.c.b16 %v7243, %v7239
        %v7504 = vpack.c.b16 %v7244, %v7240
        %v7505 = vpack.c.b16 %v7245, %v7241
        %v7506 = vpack.c.b16 %v7246, %v7242
        %v7507 = vpack.c.b16 %v7251, %v7247
        %v7508 = vpack.c.b16 %v7252, %v7248
        %v7509 = vpack.c.b16 %v7253, %v7249
        %v7510 = vpack.c.b16 %v7254, %v7250
        %v7511 = vpack.c.b16 %v7259, %v7255
        %v7512 = vpack.c.b16 %v7260, %v7256
        %v7513 = vpack.c.b16 %v7261, %v7257
        %v7514 = vpack.c.b16 %v7262, %v7258
        %v7515 = vpack.c.b16 %v7267, %v7263
        %v7516 = vpack.c.b16 %v7268, %v7264
        %v7517 = vpack.c.b16 %v7269, %v7265
        %v7518 = vpack.c.b16 %v7270, %v7266
        %v7519 = vpack.c.b16 %v7275, %v7271
        %v7520 = vpack.c.b16 %v7276, %v7272
        %v7521 = vpack.c.b16 %v7277, %v7273
        %v7522 = vpack.c.b16 %v7278, %v7274
        %v7523 = vpack.c.b16 %v7283, %v7279
        %v7524 = vpack.c.b16 %v7284, %v7280
        %v7525 = vpack.c.b16 %v7285, %v7281
        %v7526 = vpack.c.b16 %v7286, %v7282
        %v7527 = vpack.c.b16 %v7291, %v7287
        %v7528 = vpack.c.b16 %v7292, %v7288
        %v7529 = vpack.c.b16 %v7293, %v7289
        %v7530 = vpack.c.b16 %v7294, %v7290
        %v7531 = vpack.c.b16 %v7299, %v7295
        %v7532 = vpack.c.b16 %v7300, %v7296
        %v7533 = vpack.c.b16 %v7301, %v7297
        %v7534 = vpack.c.b16 %v7302, %v7298
        %v7535 = vpack.c.b16 %v7307, %v7303
        %v7536 = vpack.c.b16 %v7308, %v7304
        %v7537 = vpack.c.b16 %v7309, %v7305
        %v7538 = vpack.c.b16 %v7310, %v7306
        %v7539 = vpack.c.b16 %v7315, %v7311
        %v7540 = vpack.c.b16 %v7316, %v7312
        %v7541 = vpack.c.b16 %v7317, %v7313
        %v7542 = vpack.c.b16 %v7318, %v7314
        %v7543 = vpack.c.b16 %v7323, %v7319
        %v7544 = vpack.c.b16 %v7324, %v7320
        %v7545 = vpack.c.b16 %v7325, %v7321
        %v7546 = vpack.c.b16 %v7326, %v7322
        %v7547 = vpack.c.b16 %v7331, %v7327
        %v7548 = vpack.c.b16 %v7332, %v7328
        %v7549 = vpack.c.b16 %v7333, %v7329
        %v7550 = vpack.c.b16 %v7334, %v7330
        %v7551 = vpack.c.b16 %v7339, %v7335
        %v7552 = vpack.c.b16 %v7340, %v7336
        %v7553 = vpack.c.b16 %v7341, %v7337
        %v7554 = vpack.c.b16 %v7342, %v7338
        %v7555 = vpack.c.b16 %v7347, %v7343
        %v7556 = vpack.c.b16 %v7348, %v7344
        %v7557 = vpack.c.b16 %v7349, %v7345
        %v7558 = vpack.c.b16 %v7350, %v7346
        %v7559 = vpack.c.b16 %v7355, %v7351
        %v7560 = vpack.c.b16 %v7356, %v7352
        %v7561 = vpack.c.b16 %v7357, %v7353
        %v7562 = vpack.c.b16 %v7358, %v7354
        %v7563 = vpack.c.b16 %v7363, %v7359
        %v7564 = vpack.c.b16 %v7364, %v7360
        %v7565 = vpack.c.b16 %v7365, %v7361
        %v7566 = vpack.c.b16 %v7366, %v7362
        %v7567 = vpack.c.b16 %v7371, %v7367
        %v7568 = vpack.c.b16 %v7372, %v7368
        %v7569 = vpack.c.b16 %v7373, %v7369
        %v7570 = vpack.c.b16 %v7374, %v7370
        %v7571 = vpack.c.b16 %v7379, %v7375
        %v7572 = vpack.c.b16 %v7380, %v7376
        %v7573 = vpack.c.b16 %v7381, %v7377
        %v7574 = vpack.c.b16 %v7382, %v7378
        %7767 = vmatprep.subr.bf16.mxu0 %v7384
        %7768 = vmatpush1.bf16.msra.mxu0 %v7383
        %7769 = vmatprep.subr.bf16.mxu0 %v7388
        %7770 = vmatpush1.bf16.msra.mxu0 %v7387
        %7771 = vmatprep.subr.bf16.mxu0 %v7392
        %7772 = vmatpush1.bf16.msra.mxu0 %v7391
        %7773 = vmatprep.subr.bf16.mxu0 %v7396
        %7774 = vmatpush1.bf16.msra.mxu0 %v7395
        %7775 = vmatprep.subr.bf16.mxu0 %v7400
        %7776 = vmatpush1.bf16.msra.mxu0 %v7399
        %7777 = vmatprep.subr.bf16.mxu0 %v7404
        %7778 = vmatpush1.bf16.msra.mxu0 %v7403
        %7779 = vmatprep.subr.bf16.mxu0 %v7408
        %7780 = vmatpush1.bf16.msra.mxu0 %v7407
        %7781 = vmatprep.subr.bf16.mxu0 %v7412
        %7782 = vmatpush1.bf16.msra.mxu0 %v7411
        %7783 = vmatprep.subr.bf16.mxu0 %v7416
        %7784 = vmatpush1.bf16.msra.mxu0 %v7415
        %7785 = vmatprep.subr.bf16.mxu0 %v7420
        %7786 = vmatpush1.bf16.msra.mxu0 %v7419
        %7787 = vmatprep.subr.bf16.mxu0 %v7424
        %7788 = vmatpush1.bf16.msra.mxu0 %v7423
        %7789 = vmatprep.subr.bf16.mxu0 %v7428
        %7790 = vmatpush1.bf16.msra.mxu0 %v7427
        %7791 = vmatprep.subr.bf16.mxu0 %v7432
        %7792 = vmatpush1.bf16.msra.mxu0 %v7431
        %7793 = vmatprep.subr.bf16.mxu0 %v7436
        %7794 = vmatpush1.bf16.msra.mxu0 %v7435
        %7795 = vmatprep.subr.bf16.mxu0 %v7440
        %7796 = vmatpush1.bf16.msra.mxu0 %v7439
        %7797 = vmatprep.subr.bf16.mxu0 %v7444
        %7798 = vmatpush1.bf16.msra.mxu0 %v7443
        %7799 = vmatprep.mubr.bf16.mxu0 %v6588
        %7800 = vmatmul.mubr.bf16.gmra.mrb[0].mxu0 %v6587
        %v7801 = vpop.f32.mrb[0].mxu0
        %v7802 = vadd.f32 %v6790, %v7801
        %v7803 = vpop.f32.mrb[0].mxu0
        %v7804 = vadd.f32 %v6794, %v7803
        %v7805 = vpop.f32.mrb[0].mxu0
        %v7806 = vadd.f32 %v6790, %v7805
        %v7807 = vpop.f32.mrb[0].mxu0
        %v7808 = vadd.f32 %v6794, %v7807
        %7809 = vdwg.mxu0
        %7810 = vmatprep.subr.bf16.mxu0 %v7448
        %7811 = vmatpush1.bf16.msra.mxu0 %v7447
        %7812 = vmatprep.subr.bf16.mxu0 %v7452
        %7813 = vmatpush1.bf16.msra.mxu0 %v7451
        %7814 = vmatprep.subr.bf16.mxu0 %v7456
        %7815 = vmatpush1.bf16.msra.mxu0 %v7455
        %7816 = vmatprep.subr.bf16.mxu0 %v7460
        %7817 = vmatpush1.bf16.msra.mxu0 %v7459
        %7818 = vmatprep.subr.bf16.mxu0 %v7464
        %7819 = vmatpush1.bf16.msra.mxu0 %v7463
        %7820 = vmatprep.subr.bf16.mxu0 %v7468
        %7821 = vmatpush1.bf16.msra.mxu0 %v7467
        %7822 = vmatprep.subr.bf16.mxu0 %v7472
        %7823 = vmatpush1.bf16.msra.mxu0 %v7471
        %7824 = vmatprep.subr.bf16.mxu0 %v7476
        %7825 = vmatpush1.bf16.msra.mxu0 %v7475
        %7826 = vmatprep.subr.bf16.mxu0 %v7480
        %7827 = vmatpush1.bf16.msra.mxu0 %v7479
        %7828 = vmatprep.subr.bf16.mxu0 %v7484
        %7829 = vmatpush1.bf16.msra.mxu0 %v7483
        %7830 = vmatprep.subr.bf16.mxu0 %v7488
        %7831 = vmatpush1.bf16.msra.mxu0 %v7487
        %7832 = vmatprep.subr.bf16.mxu0 %v7492
        %7833 = vmatpush1.bf16.msra.mxu0 %v7491
        %7834 = vmatprep.subr.bf16.mxu0 %v7496
        %7835 = vmatpush1.bf16.msra.mxu0 %v7495
        %7836 = vmatprep.subr.bf16.mxu0 %v7500
        %7837 = vmatpush1.bf16.msra.mxu0 %v7499
        %7838 = vmatprep.subr.bf16.mxu0 %v7504
        %7839 = vmatpush1.bf16.msra.mxu0 %v7503
        %7840 = vmatprep.subr.bf16.mxu0 %v7508
        %7841 = vmatpush1.bf16.msra.mxu0 %v7507
        %7842 = vmatprep.mubr.bf16.mxu0 %v6590
        %7843 = vmatmul.mubr.bf16.gmra.mrb[0].mxu0 %v6589
        %v7844 = vpop.f32.mrb[0].mxu0
        %v7845 = vadd.f32 %v7802, %v7844
        %v7846 = vpop.f32.mrb[0].mxu0
        %v7847 = vadd.f32 %v7804, %v7846
        %v7848 = vpop.f32.mrb[0].mxu0
        %v7849 = vadd.f32 %v7806, %v7848
        %v7850 = vpop.f32.mrb[0].mxu0
        %v7851 = vadd.f32 %v7808, %v7850
        %7852 = vdwg.mxu0
        %7853 = vmatprep.subr.bf16.mxu0 %v7512
        %7854 = vmatpush1.bf16.msra.mxu0 %v7511
        %7855 = vmatprep.subr.bf16.mxu0 %v7516
        %7856 = vmatpush1.bf16.msra.mxu0 %v7515
        %7857 = vmatprep.subr.bf16.mxu0 %v7520
        %7858 = vmatpush1.bf16.msra.mxu0 %v7519
        %7859 = vmatprep.subr.bf16.mxu0 %v7524
        %7860 = vmatpush1.bf16.msra.mxu0 %v7523
        %7861 = vmatprep.subr.bf16.mxu0 %v7528
        %7862 = vmatpush1.bf16.msra.mxu0 %v7527
        %7863 = vmatprep.subr.bf16.mxu0 %v7532
        %7864 = vmatpush1.bf16.msra.mxu0 %v7531
        %7865 = vmatprep.subr.bf16.mxu0 %v7536
        %7866 = vmatpush1.bf16.msra.mxu0 %v7535
        %7867 = vmatprep.subr.bf16.mxu0 %v7540
        %7868 = vmatpush1.bf16.msra.mxu0 %v7539
        %7869 = vmatprep.subr.bf16.mxu0 %v7544
        %7870 = vmatpush1.bf16.msra.mxu0 %v7543
        %7871 = vmatprep.subr.bf16.mxu0 %v7548
        %7872 = vmatpush1.bf16.msra.mxu0 %v7547
        %7873 = vmatprep.subr.bf16.mxu0 %v7552
        %7874 = vmatpush1.bf16.msra.mxu0 %v7551
        %7875 = vmatprep.subr.bf16.mxu0 %v7556
        %7876 = vmatpush1.bf16.msra.mxu0 %v7555
        %7877 = vmatprep.subr.bf16.mxu0 %v7560
        %7878 = vmatpush1.bf16.msra.mxu0 %v7559
        %7879 = vmatprep.subr.bf16.mxu0 %v7564
        %7880 = vmatpush1.bf16.msra.mxu0 %v7563
        %7881 = vmatprep.subr.bf16.mxu0 %v7568
        %7882 = vmatpush1.bf16.msra.mxu0 %v7567
        %7883 = vmatprep.subr.bf16.mxu0 %v7572
        %7884 = vmatpush1.bf16.msra.mxu0 %v7571
        %7885 = vmatprep.mubr.bf16.mxu0 %v6592
        %7886 = vmatmul.mubr.bf16.gmra.mrb[0].mxu0 %v6591
        %v7887 = vpop.f32.mrb[0].mxu0
        %v7888 = vadd.f32 %v7845, %v7887
        %v7889 = vpop.f32.mrb[0].mxu0
        %v7890 = vadd.f32 %v7847, %v7889
        %v7891 = vpop.f32.mrb[0].mxu0
        %v7892 = vadd.f32 %v7849, %v7891
        %v7893 = vpop.f32.mrb[0].mxu0
        %v7894 = vadd.f32 %v7851, %v7893
        %7895 = vdwg.mxu0
        %7896 = vmatprep.subr.bf16.mxu0 %v7386
        %7897 = vmatpush1.bf16.msra.mxu0 %v7385
        %7898 = vmatprep.subr.bf16.mxu0 %v7390
        %7899 = vmatpush1.bf16.msra.mxu0 %v7389
        %7900 = vmatprep.subr.bf16.mxu0 %v7394
        %7901 = vmatpush1.bf16.msra.mxu0 %v7393
        %7902 = vmatprep.subr.bf16.mxu0 %v7398
        %7903 = vmatpush1.bf16.msra.mxu0 %v7397
        %7904 = vmatprep.subr.bf16.mxu0 %v7402
        %7905 = vmatpush1.bf16.msra.mxu0 %v7401
        %7906 = vmatprep.subr.bf16.mxu0 %v7406
        %7907 = vmatpush1.bf16.msra.mxu0 %v7405
        %7908 = vmatprep.subr.bf16.mxu0 %v7410
        %7909 = vmatpush1.bf16.msra.mxu0 %v7409
        %7910 = vmatprep.subr.bf16.mxu0 %v7414
        %7911 = vmatpush1.bf16.msra.mxu0 %v7413
        %7912 = vmatprep.subr.bf16.mxu0 %v7418
        %7913 = vmatpush1.bf16.msra.mxu0 %v7417
        %7914 = vmatprep.subr.bf16.mxu0 %v7422
        %7915 = vmatpush1.bf16.msra.mxu0 %v7421
        %7916 = vmatprep.subr.bf16.mxu0 %v7426
        %7917 = vmatpush1.bf16.msra.mxu0 %v7425
        %7918 = vmatprep.subr.bf16.mxu0 %v7430
        %7919 = vmatpush1.bf16.msra.mxu0 %v7429
        %7920 = vmatprep.subr.bf16.mxu0 %v7434
        %7921 = vmatpush1.bf16.msra.mxu0 %v7433
        %7922 = vmatprep.subr.bf16.mxu0 %v7438
        %7923 = vmatpush1.bf16.msra.mxu0 %v7437
        %7924 = vmatprep.subr.bf16.mxu0 %v7442
        %7925 = vmatpush1.bf16.msra.mxu0 %v7441
        %7926 = vmatprep.subr.bf16.mxu0 %v7446
        %7927 = vmatpush1.bf16.msra.mxu0 %v7445
        %7928 = vmatprep.mubr.bf16.mxu0 %v6588
        %7929 = vmatmul.mubr.bf16.gmra.mrb[0].mxu0 %v6587
        %v7930 = vpop.f32.mrb[0].mxu0
        %v7931 = vadd.f32 %v6798, %v7930
        %v7932 = vpop.f32.mrb[0].mxu0
        %v7933 = vadd.f32 %v6802, %v7932
        %v7934 = vpop.f32.mrb[0].mxu0
        %v7935 = vadd.f32 %v6798, %v7934
        %v7936 = vpop.f32.mrb[0].mxu0
        %v7937 = vadd.f32 %v6802, %v7936
        %7938 = vdwg.mxu0
        %7939 = vmatprep.subr.bf16.mxu0 %v7450
        %7940 = vmatpush1.bf16.msra.mxu0 %v7449
        %7941 = vmatprep.subr.bf16.mxu0 %v7454
        %7942 = vmatpush1.bf16.msra.mxu0 %v7453
        %7943 = vmatprep.subr.bf16.mxu0 %v7458
        %7944 = vmatpush1.bf16.msra.mxu0 %v7457
        %7945 = vmatprep.subr.bf16.mxu0 %v7462
        %7946 = vmatpush1.bf16.msra.mxu0 %v7461
        %7947 = vmatprep.subr.bf16.mxu0 %v7466
        %7948 = vmatpush1.bf16.msra.mxu0 %v7465
        %7949 = vmatprep.subr.bf16.mxu0 %v7470
        %7950 = vmatpush1.bf16.msra.mxu0 %v7469
        %7951 = vmatprep.subr.bf16.mxu0 %v7474
        %7952 = vmatpush1.bf16.msra.mxu0 %v7473
        %7953 = vmatprep.subr.bf16.mxu0 %v7478
        %7954 = vmatpush1.bf16.msra.mxu0 %v7477
        %7955 = vmatprep.subr.bf16.mxu0 %v7482
        %7956 = vmatpush1.bf16.msra.mxu0 %v7481
        %7957 = vmatprep.subr.bf16.mxu0 %v7486
        %7958 = vmatpush1.bf16.msra.mxu0 %v7485
        %7959 = vmatprep.subr.bf16.mxu0 %v7490
        %7960 = vmatpush1.bf16.msra.mxu0 %v7489
        %7961 = vmatprep.subr.bf16.mxu0 %v7494
        %7962 = vmatpush1.bf16.msra.mxu0 %v7493
        %7963 = vmatprep.subr.bf16.mxu0 %v7498
        %7964 = vmatpush1.bf16.msra.mxu0 %v7497
        %7965 = vmatprep.subr.bf16.mxu0 %v7502
        %7966 = vmatpush1.bf16.msra.mxu0 %v7501
        %7967 = vmatprep.subr.bf16.mxu0 %v7506
        %7968 = vmatpush1.bf16.msra.mxu0 %v7505
        %7969 = vmatprep.subr.bf16.mxu0 %v7510
        %7970 = vmatpush1.bf16.msra.mxu0 %v7509
        %7971 = vmatprep.mubr.bf16.mxu0 %v6590
        %7972 = vmatmul.mubr.bf16.gmra.mrb[0].mxu0 %v6589
        %v7973 = vpop.f32.mrb[0].mxu0
        %v7974 = vadd.f32 %v7931, %v7973
        %v7975 = vpop.f32.mrb[0].mxu0
        %v7976 = vadd.f32 %v7933, %v7975
        %v7977 = vpop.f32.mrb[0].mxu0
        %v7978 = vadd.f32 %v7935, %v7977
        %v7979 = vpop.f32.mrb[0].mxu0
        %v7980 = vadd.f32 %v7937, %v7979
        %7981 = vdwg.mxu0
        %7982 = vmatprep.subr.bf16.mxu0 %v7514
        %7983 = vmatpush1.bf16.msra.mxu0 %v7513
        %7984 = vmatprep.subr.bf16.mxu0 %v7518
        %7985 = vmatpush1.bf16.msra.mxu0 %v7517
        %7986 = vmatprep.subr.bf16.mxu0 %v7522
        %7987 = vmatpush1.bf16.msra.mxu0 %v7521
        %7988 = vmatprep.subr.bf16.mxu0 %v7526
        %7989 = vmatpush1.bf16.msra.mxu0 %v7525
        %7990 = vmatprep.subr.bf16.mxu0 %v7530
        %7991 = vmatpush1.bf16.msra.mxu0 %v7529
        %7992 = vmatprep.subr.bf16.mxu0 %v7534
        %7993 = vmatpush1.bf16.msra.mxu0 %v7533
        %7994 = vmatprep.subr.bf16.mxu0 %v7538
        %7995 = vmatpush1.bf16.msra.mxu0 %v7537
        %7996 = vmatprep.subr.bf16.mxu0 %v7542
        %7997 = vmatpush1.bf16.msra.mxu0 %v7541
        %7998 = vmatprep.subr.bf16.mxu0 %v7546
        %7999 = vmatpush1.bf16.msra.mxu0 %v7545
        %8000 = vmatprep.subr.bf16.mxu0 %v7550
        %8001 = vmatpush1.bf16.msra.mxu0 %v7549
        %8002 = vmatprep.subr.bf16.mxu0 %v7554
        %8003 = vmatpush1.bf16.msra.mxu0 %v7553
        %8004 = vmatprep.subr.bf16.mxu0 %v7558
        %8005 = vmatpush1.bf16.msra.mxu0 %v7557
        %8006 = vmatprep.subr.bf16.mxu0 %v7562
        %8007 = vmatpush1.bf16.msra.mxu0 %v7561
        %8008 = vmatprep.subr.bf16.mxu0 %v7566
        %8009 = vmatpush1.bf16.msra.mxu0 %v7565
        %8010 = vmatprep.subr.bf16.mxu0 %v7570
        %8011 = vmatpush1.bf16.msra.mxu0 %v7569
        %8012 = vmatprep.subr.bf16.mxu0 %v7574
        %8013 = vmatpush1.bf16.msra.mxu0 %v7573
        %8014 = vmatprep.mubr.bf16.mxu0 %v6592
        %8015 = vmatmul.mubr.bf16.gmra.mrb[0].mxu0 %v6591
        %v8016 = vpop.f32.mrb[0].mxu0
        %v8017 = vadd.f32 %v7974, %v8016
        %v8018 = vpop.f32.mrb[0].mxu0
        %v8019 = vadd.f32 %v7976, %v8018
        %v8020 = vpop.f32.mrb[0].mxu0
        %v8021 = vadd.f32 %v7978, %v8020
        %v8022 = vpop.f32.mrb[0].mxu0
        %v8023 = vadd.f32 %v7980, %v8022
        %8024 = vdwg.mxu0
        %8025 = vst [vmem:[%s551] sm:$0xff] %v7888
        %8026 = vst [vmem:[%s551 + $0x8] sm:$0xff] %v7890
        %8027 = vst [vmem:[%s551 + $0x10] sm:$0xff] %v8017
        %8028 = vst [vmem:[%s551 + $0x18] sm:$0xff] %v8019
        %8029 = vst [vmem:[%s551 + $0x20] sm:$0xff] %v7892
        %8030 = vst [vmem:[%s551 + $0x28] sm:$0xff] %v7894
        %8031 = vst [vmem:[%s551 + $0x30] sm:$0xff] %v8021
        %8032 = vst [vmem:[%s551 + $0x38] sm:$0xff] %v8023
        %s8033 = sand.u32 %s263, 1
        %s8034 = scalar_lea.sflag [#allocation5], %s8033
        %s8035 = sand.u32 %s263, 1
        %s8036 = smul.addr %s8035, 64
        %s8037 = scalar_lea.vmem [#allocation18], %s8036
        %s8038 = sand.u32 %s289, 1
        %s8039 = scalar_lea.sflag [#allocation20], %s8038
        %s8040 = sand.u32 %s289, 1
        %s8041 = smul.addr %s8040, 96
        %s8042 = scalar_lea.vmem [#allocation19], %s8041
        // Predicated region
        $region97: #{tpu_custom_call.1} parent=55 // pred_check
          %p8043 = pneg %p273
        $region98: #{tpu_custom_call.1} parent=55 // pred_check_branch
          %8045 = sbr.rel (%p8043) target = $region100
        $region99: #{tpu_custom_call.1} parent=55 // pred_region
          %s8046 = smul.u32 2, %s41
          %s8047 = smul.u32 4, %s42
          %s8049 = ssub.s32 1024, 1024
          %8050 = vsyncadd %s8034, %s8049
          %s8051 = smul.addr %s8046, 8
          %s8052 = sadd.s32 %s8047, %s8051
          %s8053 = smul.addr %s8052, 128
          %s8054 = scalar_lea.hbm %s9, %s8053
          %s8055 = sshll.u32 %s8037, 4
          %s8056 = int_to_ptr.vmem [resolvable:$true] %s8055
          %8061 = dma.vmem_to_hbm [thread:$0]  %s8056, 1024, %s8054, %s8034, 512, 1024, 32
        $region100: #{tpu_custom_call.1} parent=55 // pred_fallthru
          _
        // Predicated region
        $region101: #{tpu_custom_call.1} parent=55 // pred_check
          %p8062 = pneg %p299
        $region102: #{tpu_custom_call.1} parent=55 // pred_check_branch
          %8064 = sbr.rel (%p8062) target = $region104
        $region103: #{tpu_custom_call.1} parent=55 // pred_region
          %s8065 = smul.u32 2, %s41
          %s8067 = ssub.s32 1536, 1536
          %8068 = vsyncadd %s8039, %s8067
          %s8069 = smul.addr %s8065, 6
          %s8070 = smul.addr %s8069, 128
          %s8071 = scalar_lea.hbm %s10, %s8070
          %s8072 = sshll.u32 %s8042, 4
          %s8073 = int_to_ptr.vmem [resolvable:$true] %s8072
          %8078 = dma.vmem_to_hbm [thread:$0]  %s8073, 1536, %s8071, %s8039, 768, 768, 48
        $region104: #{tpu_custom_call.1} parent=55 // pred_fallthru
          _
      $region56: #{tpu_custom_call.1} parent=5 // pred_fallthru
        _
      %p8079 = scmp.le.s32.totalorder 2, %s32
      // Predicated region
      $region105: #{tpu_custom_call.1} parent=5 // pred_check
        %p8080 = pneg %p8079
      $region106: #{tpu_custom_call.1} parent=5 // pred_check_branch
        %8082 = sbr.rel (%p8080) target = $region108
      $region107: #{tpu_custom_call.1} parent=5 // pred_region
        %s8083 = ssub.s32 %s32, 2
        // Predicated region
        $region109: #{tpu_custom_call.1} parent=107 // pred_check
          %p8084 = pneg %p279
        $region110: #{tpu_custom_call.1} parent=107 // pred_check_branch
          %8086 = sbr.rel (%p8084) target = $region112
        $region111: #{tpu_custom_call.1} parent=107 // pred_region
          %s8087 = sand.u32 %s264, 1
          %s8088 = scalar_lea.sflag [#allocation5], %s8087
          %s8089 = sand.u32 %s264, 1
          %s8090 = smul.addr %s8089, 64
          %s8091 = scalar_lea.vmem [#allocation18], %s8090
          %8092 = dma.done %s8088, 1024
        $region112: #{tpu_custom_call.1} parent=107 // pred_fallthru
          _
        // Predicated region
        $region113: #{tpu_custom_call.1} parent=107 // pred_check
          %p8093 = pneg %p305
        $region114: #{tpu_custom_call.1} parent=107 // pred_check_branch
          %8095 = sbr.rel (%p8093) target = $region116
        $region115: #{tpu_custom_call.1} parent=107 // pred_region
          %s8096 = sand.u32 %s290, 1
          %s8097 = scalar_lea.sflag [#allocation20], %s8096
          %s8098 = sand.u32 %s290, 1
          %s8099 = smul.addr %s8098, 96
          %s8100 = scalar_lea.vmem [#allocation19], %s8099
          %8101 = dma.done %s8097, 1536
        $region116: #{tpu_custom_call.1} parent=107 // pred_fallthru
          _
      $region108: #{tpu_custom_call.1} parent=5 // pred_fallthru
        _
    $region6: #{tpu_custom_call.1} parent=1 // loop_footer
      %s36 = sadd.s32 1, %s32
    $region7: #{tpu_custom_call.1} parent=1 // loop_footer_branch
      %31 = sbr.rel target = $region3
    $region8: #{tpu_custom_call.1} parent=1 // loop_exit
      _
    %8102 = vsyncpa [#allocation4], 1
    %s8103 = scalar_lea.sflag [#allocation4], 1
    %8104 = vsyncpa %s8103, 1
    %8105 = vsyncpa [#allocation7], 1
    %8106 = vsyncpa [#allocation10], 1
    %8107 = vsyncpa [#allocation13], 1
    %8108 = vsyncpa [#allocation16], 1
    %s8109 = scalar_lea.sflag [#allocation16], 1
    %8110 = vsyncpa %s8109, 1
    %8111 = vsyncpa [#allocation5], 1
    %s8112 = scalar_lea.sflag [#allocation5], 1
    %8113 = vsyncpa %s8112, 1
    %8114 = vsyncpa [#allocation20], 1
    %s8115 = scalar_lea.sflag [#allocation20], 1
    %8116 = vsyncpa %s8115, 1

</llo_original>
